<compile_context>
chip_gen: v7x
topology: tpu7x:2x2x1
jax: 0.10.0
libtpu: 0.0.40
codegen_flags: <defaults>
</compile_context>

<pallas_src>
import functools

import jax
import jax.numpy as jnp
from jax import lax
from jax.experimental import pallas as pl
from jax.experimental.pallas import tpu as pltpu


def _layer_norm(x, w, b, eps=1e-5):
    mu = jnp.mean(x, axis=-1, keepdims=True)
    xc = x - mu
    var = jnp.mean(xc * xc, axis=-1, keepdims=True)
    return xc * lax.rsqrt(var + eps) * w + b


def ecg_transformer_kernel(nhead, bt, seq_len,
                           x_ref, w_in_ref, b_in_ref,
                           ain_w_ref, ain_b_ref, aout_w_ref, aout_b_ref,
                           ln1_w_ref, ln1_b_ref, ff1_w_ref, ff1_b_ref,
                           ff2_w_ref, ff2_b_ref, ln2_w_ref, ln2_b_ref,
                           fc_w_ref, fc_b_ref, out_ref):
    S = seq_len
    d_model = w_in_ref.shape[1]
    dh = d_model // nhead
    scale = 1.0 / (dh ** 0.5)
    num_layers = ain_w_ref.shape[0]
    rows = bt * S

    # ---- input_linear on the whole (Bt*S, F) slab
    x = x_ref[...]                                                        # (Bt*S, F)
    h = jnp.dot(x, w_in_ref[...], preferred_element_type=jnp.float32) + b_in_ref[...]

    for l in range(num_layers):                     # static unroll (2 layers)
        # ---- multi-head self-attention (dropout = identity, eval semantics)
        qkv = jnp.dot(h, ain_w_ref[l], preferred_element_type=jnp.float32) + ain_b_ref[l]
        qkv3 = qkv.reshape(bt, S, 3 * d_model)
        q = qkv3[:, :, 0:d_model] * scale
        k = qkv3[:, :, d_model:2 * d_model]
        v = qkv3[:, :, 2 * d_model:3 * d_model]

        head_outs = []
        for hh in range(nhead):                     # static unroll (2 heads)
            lo, hi = hh * dh, (hh + 1) * dh
            qh = q[:, :, lo:hi]                                           # (Bt, S, dh)
            kh = k[:, :, lo:hi]
            vh = v[:, :, lo:hi]
            s = jnp.einsum('bqd,bkd->bqk', qh, kh,
                           preferred_element_type=jnp.float32)            # (Bt, S, S)
            s = s - jnp.max(s, axis=-1, keepdims=True)
            p = jnp.exp(s)
            p = p * pl.reciprocal(jnp.sum(p, axis=-1, keepdims=True), approx=True)
            head_outs.append(jnp.einsum('bqk,bkd->bqd', p, vh,
                                        preferred_element_type=jnp.float32))
        # concat heads -> single well-shaped output-projection matmul
        attn = jnp.concatenate(head_outs, axis=-1).reshape(rows, d_model)
        attn = jnp.dot(attn, aout_w_ref[l],
                       preferred_element_type=jnp.float32) + aout_b_ref[l]
        h = _layer_norm(h + attn, ln1_w_ref[l], ln1_b_ref[l])

        # ---- feed-forward (ReLU), post-norm; bf16 weights & activations, f32 accumulate
        f = jnp.dot(h.astype(jnp.bfloat16), ff1_w_ref[l],
                    preferred_element_type=jnp.float32) + ff1_b_ref[l]
        f = jnp.maximum(f, 0.0)
        f = jnp.dot(f.astype(jnp.bfloat16), ff2_w_ref[l],
                    preferred_element_type=jnp.float32) + ff2_b_ref[l]
        h = _layer_norm(h + f, ln2_w_ref[l], ln2_b_ref[l])

    # ---- AdaptiveAvgPool1d(1) over sequence + classifier (one matmul per batch tile)
    pooled = jnp.mean(h.reshape(bt, S, d_model), axis=1)                  # (Bt, d_model)
    logits = jnp.dot(pooled, fc_w_ref[...],
                     preferred_element_type=jnp.float32) + fc_b_ref[...]  # (Bt, C)
    out_ref[0] = logits


PARAM_ORDER = ["w_in", "b_in", "ain_w", "ain_b", "aout_w", "aout_b",
               "ln1_w", "ln1_b", "ff1_w", "ff1_b", "ff2_w", "ff2_b",
               "ln2_w", "ln2_b", "fc_w", "fc_b"]


def init_params(key, num_features=12, d_model=32, nhead=2, num_layers=2,
                num_classes=10, dim_feedforward=2048):
    del nhead
    ks = jax.random.split(key, 12)
    sc = 0.05

    def nrm(k, shape):
        return sc * jax.random.normal(k, shape, jnp.float32)

    return dict(
        w_in=nrm(ks[0], (num_features, d_model)),
        b_in=nrm(ks[1], (1, d_model)),
        ain_w=nrm(ks[2], (num_layers, d_model, 3 * d_model)),
        ain_b=nrm(ks[3], (num_layers, 1, 3 * d_model)),
        aout_w=nrm(ks[4], (num_layers, d_model, d_model)),
        aout_b=nrm(ks[5], (num_layers, 1, d_model)),
        ln1_w=jnp.ones((num_layers, 1, d_model), jnp.float32),
        ln1_b=jnp.zeros((num_layers, 1, d_model), jnp.float32),
        ff1_w=nrm(ks[6], (num_layers, d_model, dim_feedforward)),
        ff1_b=nrm(ks[7], (num_layers, 1, dim_feedforward)),
        ff2_w=nrm(ks[8], (num_layers, dim_feedforward, d_model)),
        ff2_b=nrm(ks[9], (num_layers, 1, d_model)),
        ln2_w=jnp.ones((num_layers, 1, d_model), jnp.float32),
        ln2_b=jnp.zeros((num_layers, 1, d_model), jnp.float32),
        fc_w=nrm(ks[10], (d_model, num_classes)),
        fc_b=nrm(ks[11], (1, num_classes)),
    )


def _pick_batch_tile(B, S):
    # ~256 rows fills one v6e/v7x MXU pass (>=128 already saturates v5e's 128-wide MXU).
    rows_target = 256
    bt = max(1, min(B, rows_target // max(1, S)))
    if B >= 2:
        # keep >= 2 parallel grid steps so both v7x TensorCores get work
        bt = max(1, min(bt, pl.cdiv(B, 2)))
    if (bt * S) % 8 != 0:
        # flat row-block must be a sublane multiple (or the full extent) -> one full block
        bt = B
    return bt


def ecg_transformer_forward(x, params, nhead=2):
    B, S, F = x.shape
    d_model = params["w_in"].shape[1]
    dff = params["ff1_w"].shape[-1]
    num_layers = params["ain_w"].shape[0]
    num_classes = params["fc_w"].shape[1]

    bt = _pick_batch_tile(B, S)
    n_blocks = pl.cdiv(B, bt)
    B_pad = n_blocks * bt
    if B_pad != B:
        x = jnp.concatenate([x, jnp.zeros((B_pad - B, S, F), x.dtype)], axis=0)
    x_flat = x.reshape(B_pad * S, F)

    # Cast the two big FFN weights (~85% of weight bytes) to bf16; accumulation stays f32.
    params = dict(params)
    params["ff1_w"] = params["ff1_w"].astype(jnp.bfloat16)
    params["ff2_w"] = params["ff2_w"].astype(jnp.bfloat16)
    param_list = [params[k] for k in PARAM_ORDER]

    def rep_spec(shape):
        zeros = (0,) * len(shape)
        # constant index_map -> pipeline keeps the weight resident across grid steps
        return pl.BlockSpec(shape, lambda b, _z=zeros: _z)

    in_specs = [pl.BlockSpec((bt * S, F), lambda b: (b, 0))] + \
               [rep_spec(p.shape) for p in param_list]
    out_spec = pl.BlockSpec((1, bt, num_classes), lambda b: (b, 0, 0))

    flops_per_token = (2 * F * d_model
                       + num_layers * (6 * d_model * d_model        # QKV projection
                                       + 4 * S * d_model            # scores + p@v
                                       + 2 * d_model * d_model      # output projection
                                       + 4 * d_model * dff))        # FFN
    cost = pl.CostEstimate(
        flops=int(B_pad * S * flops_per_token + 2 * B_pad * d_model * num_classes),
        transcendentals=int(B_pad * num_layers * nhead * S * S),
        bytes_accessed=int(x_flat.size * x_flat.dtype.itemsize
                           + sum(int(p.size) * p.dtype.itemsize for p in param_list)
                           + B_pad * num_classes * 4))

    out = pl.pallas_call(
        functools.partial(ecg_transformer_kernel, nhead, bt, S),
        grid=(n_blocks,),
        in_specs=in_specs,
        out_specs=out_spec,
        out_shape=jax.ShapeDtypeStruct((n_blocks, bt, num_classes), jnp.float32),
        compiler_params=pltpu.CompilerParams(
            dimension_semantics=("parallel",),
            vmem_limit_bytes=48 * 1024 * 1024),   # headroom vs v7x's 64 MiB VMEM
        cost_estimate=cost,
    )(x_flat, *param_list)
    return out.reshape(B_pad, num_classes)[:B]


def reference_forward(x, params, nhead=2):
    """Pure-JAX reference mirroring PyTorch eval-mode semantics; the FFN matmuls mirror
    the kernel's bf16-weight / bf16-activation / f32-accumulate compute."""
    d = params["w_in"].shape[1]
    dh = d // nhead
    B, S, _ = x.shape
    h = x @ params["w_in"] + params["b_in"]
    for l in range(params["ain_w"].shape[0]):
        qkv = h @ params["ain_w"][l] + params["ain_b"][l]
        q, k, v = qkv[..., :d], qkv[..., d:2 * d], qkv[..., 2 * d:]

        def split(t):
            return t.reshape(B, S, nhead, dh).transpose(0, 2, 1, 3)

        qh, kh, vh = split(q), split(k), split(v)
        s = (qh @ kh.transpose(0, 1, 3, 2)) / jnp.sqrt(jnp.float32(dh))
        p = jax.nn.softmax(s, axis=-1)
        o = (p @ vh).transpose(0, 2, 1, 3).reshape(B, S, d)
        attn = o @ params["aout_w"][l] + params["aout_b"][l]
        h = _layer_norm(h + attn, params["ln1_w"][l], params["ln1_b"][l])
        f = jnp.dot(h.astype(jnp.bfloat16), params["ff1_w"][l].astype(jnp.bfloat16),
                    preferred_element_type=jnp.float32) + params["ff1_b"][l]
        f = jnp.maximum(f, 0.0)
        f = jnp.dot(f.astype(jnp.bfloat16), params["ff2_w"][l].astype(jnp.bfloat16),
                    preferred_element_type=jnp.float32) + params["ff2_b"][l]
        h = _layer_norm(h + f, params["ln2_w"][l], params["ln2_b"][l])
    pooled = h.mean(axis=1)
    return pooled @ params["fc_w"] + params["fc_b"]


if __name__ == "__main__":
    # Small shapes consistent with the module's forward: x is (batch, seq_len, num_features).
    # B=3 also exercises the batch-tile padding path (B_pad=4, Bt=2, 2 parallel grid steps).
    B, S, F = 3, 8, 12
    key = jax.random.PRNGKey(0)
    kx, kp = jax.random.split(key)
    x = jax.random.normal(kx, (B, S, F), jnp.float32)
    params = init_params(kp, num_features=F, d_model=32, nhead=2,
                         num_layers=2, num_classes=10, dim_feedforward=2048)

    out = ecg_transformer_forward(x, params, nhead=2)
    out = jax.block_until_ready(out)

    ref = reference_forward(x, params, nhead=2)
    assert out.shape == (B, 10), out.shape
    assert bool(jnp.all(jnp.isfinite(out)))
    assert bool(jnp.allclose(out, ref, atol=5e-3, rtol=5e-3)), \
        float(jnp.max(jnp.abs(out - ref)))
    print("KERNEL_OK")
</pallas_src>

<mosaic_0001>
module attributes {stable_mosaic.version = 11 : i64} {
  func.func @ecg_transformer_kernel(%arg0: i32, %arg1: memref<16x12xf32, #tpu.memory_space<vmem>>, %arg2: memref<12x32xf32, #tpu.memory_space<vmem>>, %arg3: memref<1x32xf32, #tpu.memory_space<vmem>>, %arg4: memref<2x32x96xf32, #tpu.memory_space<vmem>>, %arg5: memref<2x1x96xf32, #tpu.memory_space<vmem>>, %arg6: memref<2x32x32xf32, #tpu.memory_space<vmem>>, %arg7: memref<2x1x32xf32, #tpu.memory_space<vmem>>, %arg8: memref<2x1x32xf32, #tpu.memory_space<vmem>>, %arg9: memref<2x1x32xf32, #tpu.memory_space<vmem>>, %arg10: memref<2x32x2048xbf16, #tpu.memory_space<vmem>>, %arg11: memref<2x1x2048xf32, #tpu.memory_space<vmem>>, %arg12: memref<2x2048x32xbf16, #tpu.memory_space<vmem>>, %arg13: memref<2x1x32xf32, #tpu.memory_space<vmem>>, %arg14: memref<2x1x32xf32, #tpu.memory_space<vmem>>, %arg15: memref<2x1x32xf32, #tpu.memory_space<vmem>>, %arg16: memref<32x10xf32, #tpu.memory_space<vmem>>, %arg17: memref<1x10xf32, #tpu.memory_space<vmem>>, %arg18: memref<1x2x10xf32, #tpu.memory_space<vmem>>) attributes {dimension_semantics = [#tpu.dimension_semantics<parallel>], iteration_bounds = array<i64: 2>, scalar_prefetch = 0 : i64, scratch_operands = 0 : i64, tpu.core_type = #tpu.core_type<tc>, window_params = [{transform_indices = @transform_0, window_bounds = array<i64: 16, 12>}, {pipeline_mode = #tpu.pipeline_mode<synchronous>, transform_indices = @transform_1, window_bounds = array<i64: 12, 32>}, {pipeline_mode = #tpu.pipeline_mode<synchronous>, transform_indices = @transform_2, window_bounds = array<i64: 1, 32>}, {pipeline_mode = #tpu.pipeline_mode<synchronous>, transform_indices = @transform_3, window_bounds = array<i64: 2, 32, 96>}, {pipeline_mode = #tpu.pipeline_mode<synchronous>, transform_indices = @transform_4, window_bounds = array<i64: 2, 1, 96>}, {pipeline_mode = #tpu.pipeline_mode<synchronous>, transform_indices = @transform_5, window_bounds = array<i64: 2, 32, 32>}, {pipeline_mode = #tpu.pipeline_mode<synchronous>, transform_indices = @transform_6, window_bounds = array<i64: 2, 1, 32>}, {pipeline_mode = #tpu.pipeline_mode<synchronous>, transform_indices = @transform_7, window_bounds = array<i64: 2, 1, 32>}, {pipeline_mode = #tpu.pipeline_mode<synchronous>, transform_indices = @transform_8, window_bounds = array<i64: 2, 1, 32>}, {pipeline_mode = #tpu.pipeline_mode<synchronous>, transform_indices = @transform_9, window_bounds = array<i64: 2, 32, 2048>}, {pipeline_mode = #tpu.pipeline_mode<synchronous>, transform_indices = @transform_10, window_bounds = array<i64: 2, 1, 2048>}, {pipeline_mode = #tpu.pipeline_mode<synchronous>, transform_indices = @transform_11, window_bounds = array<i64: 2, 2048, 32>}, {pipeline_mode = #tpu.pipeline_mode<synchronous>, transform_indices = @transform_12, window_bounds = array<i64: 2, 1, 32>}, {pipeline_mode = #tpu.pipeline_mode<synchronous>, transform_indices = @transform_13, window_bounds = array<i64: 2, 1, 32>}, {pipeline_mode = #tpu.pipeline_mode<synchronous>, transform_indices = @transform_14, window_bounds = array<i64: 2, 1, 32>}, {pipeline_mode = #tpu.pipeline_mode<synchronous>, transform_indices = @transform_15, window_bounds = array<i64: 32, 10>}, {pipeline_mode = #tpu.pipeline_mode<synchronous>, transform_indices = @transform_16, window_bounds = array<i64: 1, 10>}, {transform_indices = @transform_17, window_bounds = array<i64: 1, 2, 10>}]} {
    %c0 = arith.constant 0 : index
    %c0_0 = arith.constant 0 : index
    %0 = vector.load %arg1[%c0, %c0_0] : memref<16x12xf32, #tpu.memory_space<vmem>>, vector<16x12xf32>
    %c0_1 = arith.constant 0 : index
    %c0_2 = arith.constant 0 : index
    %1 = vector.load %arg2[%c0_1, %c0_2] : memref<12x32xf32, #tpu.memory_space<vmem>>, vector<12x32xf32>
    %cst = arith.constant dense<0.000000e+00> : vector<16x32xf32>
    %2 = tpu.matmul %0, %1, %cst {dimension_numbers = #tpu.dot_dimension_numbers<[1], [0], [0], [1], [0, 0, 1, 1], [], []>} : vector<16x12xf32>, vector<12x32xf32>, vector<16x32xf32> -> vector<16x32xf32>
    %c0_3 = arith.constant 0 : index
    %c0_4 = arith.constant 0 : index
    %3 = vector.load %arg3[%c0_3, %c0_4] : memref<1x32xf32, #tpu.memory_space<vmem>>, vector<1x32xf32>
    %4 = vector.broadcast %3 : vector<1x32xf32> to vector<16x32xf32>
    %5 = arith.addf %2, %4 : vector<16x32xf32>
    %c0_5 = arith.constant 0 : index
    %c0_6 = arith.constant 0 : index
    %c0_7 = arith.constant 0 : index
    %6 = vector.load %arg4[%c0_5, %c0_6, %c0_7] : memref<2x32x96xf32, #tpu.memory_space<vmem>>, vector<1x32x96xf32>
    %7 = vector.shape_cast %6 : vector<1x32x96xf32> to vector<32x96xf32>
    %cst_8 = arith.constant dense<0.000000e+00> : vector<16x96xf32>
    %8 = tpu.matmul %5, %7, %cst_8 {dimension_numbers = #tpu.dot_dimension_numbers<[1], [0], [0], [1], [0, 0, 1, 1], [], []>} : vector<16x32xf32>, vector<32x96xf32>, vector<16x96xf32> -> vector<16x96xf32>
    %c0_9 = arith.constant 0 : index
    %c0_10 = arith.constant 0 : index
    %c0_11 = arith.constant 0 : index
    %9 = vector.load %arg5[%c0_9, %c0_10, %c0_11] : memref<2x1x96xf32, #tpu.memory_space<vmem>>, vector<1x1x96xf32>
    %10 = vector.shape_cast %9 : vector<1x1x96xf32> to vector<1x96xf32>
    %11 = vector.broadcast %10 : vector<1x96xf32> to vector<16x96xf32>
    %12 = arith.addf %8, %11 : vector<16x96xf32>
    %13 = vector.shape_cast %12 : vector<16x96xf32> to vector<2x8x96xf32>
    %14 = vector.extract_strided_slice %13 {offsets = [0, 0, 0], sizes = [2, 8, 32], strides = [1, 1, 1]} : vector<2x8x96xf32> to vector<2x8x32xf32>
    %cst_12 = arith.constant 2.500000e-01 : f32
    %15 = vector.broadcast %cst_12 : f32 to vector<2x8x32xf32>
    %16 = arith.mulf %14, %15 : vector<2x8x32xf32>
    %17 = vector.extract_strided_slice %13 {offsets = [0, 0, 32], sizes = [2, 8, 32], strides = [1, 1, 1]} : vector<2x8x96xf32> to vector<2x8x32xf32>
    %18 = vector.extract_strided_slice %13 {offsets = [0, 0, 64], sizes = [2, 8, 32], strides = [1, 1, 1]} : vector<2x8x96xf32> to vector<2x8x32xf32>
    %19 = vector.extract_strided_slice %16 {offsets = [0, 0, 0], sizes = [2, 8, 16], strides = [1, 1, 1]} : vector<2x8x32xf32> to vector<2x8x16xf32>
    %20 = vector.extract_strided_slice %17 {offsets = [0, 0, 0], sizes = [2, 8, 16], strides = [1, 1, 1]} : vector<2x8x32xf32> to vector<2x8x16xf32>
    %21 = vector.extract_strided_slice %18 {offsets = [0, 0, 0], sizes = [2, 8, 16], strides = [1, 1, 1]} : vector<2x8x32xf32> to vector<2x8x16xf32>
    "tpu.trace_start"() <{level = 10 : i32, message = "bqd,bkd->bqk"}> : () -> ()
    %cst_13 = arith.constant dense<0.000000e+00> : vector<2x8x8xf32>
    %22 = tpu.matmul %19, %20, %cst_13 {dimension_numbers = #tpu.dot_dimension_numbers<[2], [2], [1], [1], [0, 0, 0, 1, 1, 1], [0], [0]>} : vector<2x8x16xf32>, vector<2x8x16xf32>, vector<2x8x8xf32> -> vector<2x8x8xf32>
    "tpu.trace_stop"() : () -> ()
    %cst_14 = arith.constant dense<0xFF800000> : vector<2x8xf32>
    %23 = vector.multi_reduction <maximumf>, %22, %cst_14 [2] : vector<2x8x8xf32> to vector<2x8xf32>
    %24 = vector.shape_cast %23 : vector<2x8xf32> to vector<2x8x1xf32>
    %25 = vector.broadcast %24 : vector<2x8x1xf32> to vector<2x8x8xf32>
    %26 = arith.subf %22, %25 : vector<2x8x8xf32>
    %27 = math.exp %26 : vector<2x8x8xf32>
    %cst_15 = arith.constant dense<0.000000e+00> : vector<2x8xf32>
    %28 = vector.multi_reduction <add>, %27, %cst_15 [2] : vector<2x8x8xf32> to vector<2x8xf32>
    %29 = vector.shape_cast %28 : vector<2x8xf32> to vector<2x8x1xf32>
    %30 = tpu.reciprocal %29 {approx = true} : vector<2x8x1xf32> -> vector<2x8x1xf32>
    %31 = vector.broadcast %30 : vector<2x8x1xf32> to vector<2x8x8xf32>
    %32 = arith.mulf %27, %31 : vector<2x8x8xf32>
    "tpu.trace_start"() <{level = 10 : i32, message = "bqk,bkd->bqd"}> : () -> ()
    %cst_16 = arith.constant dense<0.000000e+00> : vector<2x8x16xf32>
    %33 = tpu.matmul %32, %21, %cst_16 {dimension_numbers = #tpu.dot_dimension_numbers<[2], [1], [1], [2], [0, 0, 0, 1, 1, 2], [0], [0]>} : vector<2x8x8xf32>, vector<2x8x16xf32>, vector<2x8x16xf32> -> vector<2x8x16xf32>
    "tpu.trace_stop"() : () -> ()
    %34 = vector.extract_strided_slice %16 {offsets = [0, 0, 16], sizes = [2, 8, 16], strides = [1, 1, 1]} : vector<2x8x32xf32> to vector<2x8x16xf32>
    %35 = vector.extract_strided_slice %17 {offsets = [0, 0, 16], sizes = [2, 8, 16], strides = [1, 1, 1]} : vector<2x8x32xf32> to vector<2x8x16xf32>
    %36 = vector.extract_strided_slice %18 {offsets = [0, 0, 16], sizes = [2, 8, 16], strides = [1, 1, 1]} : vector<2x8x32xf32> to vector<2x8x16xf32>
    "tpu.trace_start"() <{level = 10 : i32, message = "bqd,bkd->bqk"}> : () -> ()
    %cst_17 = arith.constant dense<0.000000e+00> : vector<2x8x8xf32>
    %37 = tpu.matmul %34, %35, %cst_17 {dimension_numbers = #tpu.dot_dimension_numbers<[2], [2], [1], [1], [0, 0, 0, 1, 1, 1], [0], [0]>} : vector<2x8x16xf32>, vector<2x8x16xf32>, vector<2x8x8xf32> -> vector<2x8x8xf32>
    "tpu.trace_stop"() : () -> ()
    %cst_18 = arith.constant dense<0xFF800000> : vector<2x8xf32>
    %38 = vector.multi_reduction <maximumf>, %37, %cst_18 [2] : vector<2x8x8xf32> to vector<2x8xf32>
    %39 = vector.shape_cast %38 : vector<2x8xf32> to vector<2x8x1xf32>
    %40 = vector.broadcast %39 : vector<2x8x1xf32> to vector<2x8x8xf32>
    %41 = arith.subf %37, %40 : vector<2x8x8xf32>
    %42 = math.exp %41 : vector<2x8x8xf32>
    %cst_19 = arith.constant dense<0.000000e+00> : vector<2x8xf32>
    %43 = vector.multi_reduction <add>, %42, %cst_19 [2] : vector<2x8x8xf32> to vector<2x8xf32>
    %44 = vector.shape_cast %43 : vector<2x8xf32> to vector<2x8x1xf32>
    %45 = tpu.reciprocal %44 {approx = true} : vector<2x8x1xf32> -> vector<2x8x1xf32>
    %46 = vector.broadcast %45 : vector<2x8x1xf32> to vector<2x8x8xf32>
    %47 = arith.mulf %42, %46 : vector<2x8x8xf32>
    "tpu.trace_start"() <{level = 10 : i32, message = "bqk,bkd->bqd"}> : () -> ()
    %cst_20 = arith.constant dense<0.000000e+00> : vector<2x8x16xf32>
    %48 = tpu.matmul %47, %36, %cst_20 {dimension_numbers = #tpu.dot_dimension_numbers<[2], [1], [1], [2], [0, 0, 0, 1, 1, 2], [0], [0]>} : vector<2x8x8xf32>, vector<2x8x16xf32>, vector<2x8x16xf32> -> vector<2x8x16xf32>
    "tpu.trace_stop"() : () -> ()
    %49 = tpu.concatenate %33, %48 in 2 : vector<2x8x16xf32>, vector<2x8x16xf32> -> vector<2x8x32xf32>
    %50 = vector.shape_cast %49 : vector<2x8x32xf32> to vector<16x32xf32>
    %c0_21 = arith.constant 0 : index
    %c0_22 = arith.constant 0 : index
    %c0_23 = arith.constant 0 : index
    %51 = vector.load %arg6[%c0_21, %c0_22, %c0_23] : memref<2x32x32xf32, #tpu.memory_space<vmem>>, vector<1x32x32xf32>
    %52 = vector.shape_cast %51 : vector<1x32x32xf32> to vector<32x32xf32>
    %cst_24 = arith.constant dense<0.000000e+00> : vector<16x32xf32>
    %53 = tpu.matmul %50, %52, %cst_24 {dimension_numbers = #tpu.dot_dimension_numbers<[1], [0], [0], [1], [0, 0, 1, 1], [], []>} : vector<16x32xf32>, vector<32x32xf32>, vector<16x32xf32> -> vector<16x32xf32>
    %c0_25 = arith.constant 0 : index
    %c0_26 = arith.constant 0 : index
    %c0_27 = arith.constant 0 : index
    %54 = vector.load %arg7[%c0_25, %c0_26, %c0_27] : memref<2x1x32xf32, #tpu.memory_space<vmem>>, vector<1x1x32xf32>
    %55 = vector.shape_cast %54 : vector<1x1x32xf32> to vector<1x32xf32>
    %56 = vector.broadcast %55 : vector<1x32xf32> to vector<16x32xf32>
    %57 = arith.addf %53, %56 : vector<16x32xf32>
    %58 = arith.addf %5, %57 : vector<16x32xf32>
    %c0_28 = arith.constant 0 : index
    %c0_29 = arith.constant 0 : index
    %c0_30 = arith.constant 0 : index
    %59 = vector.load %arg8[%c0_28, %c0_29, %c0_30] : memref<2x1x32xf32, #tpu.memory_space<vmem>>, vector<1x1x32xf32>
    %60 = vector.shape_cast %59 : vector<1x1x32xf32> to vector<1x32xf32>
    %c0_31 = arith.constant 0 : index
    %c0_32 = arith.constant 0 : index
    %c0_33 = arith.constant 0 : index
    %61 = vector.load %arg9[%c0_31, %c0_32, %c0_33] : memref<2x1x32xf32, #tpu.memory_space<vmem>>, vector<1x1x32xf32>
    %62 = vector.shape_cast %61 : vector<1x1x32xf32> to vector<1x32xf32>
    %cst_34 = arith.constant dense<0.000000e+00> : vector<16xf32>
    %63 = vector.multi_reduction <add>, %58, %cst_34 [1] : vector<16x32xf32> to vector<16xf32>
    %64 = vector.shape_cast %63 : vector<16xf32> to vector<16x1xf32>
    %cst_35 = arith.constant 3.200000e+01 : f32
    %65 = vector.broadcast %cst_35 : f32 to vector<16x1xf32>
    %66 = arith.divf %64, %65 : vector<16x1xf32>
    %67 = vector.broadcast %66 : vector<16x1xf32> to vector<16x32xf32>
    %68 = arith.subf %58, %67 : vector<16x32xf32>
    %69 = arith.mulf %68, %68 : vector<16x32xf32>
    %cst_36 = arith.constant dense<0.000000e+00> : vector<16xf32>
    %70 = vector.multi_reduction <add>, %69, %cst_36 [1] : vector<16x32xf32> to vector<16xf32>
    %71 = vector.shape_cast %70 : vector<16xf32> to vector<16x1xf32>
    %cst_37 = arith.constant 3.200000e+01 : f32
    %72 = vector.broadcast %cst_37 : f32 to vector<16x1xf32>
    %73 = arith.divf %71, %72 : vector<16x1xf32>
    %cst_38 = arith.constant 9.99999974E-6 : f32
    %74 = vector.broadcast %cst_38 : f32 to vector<16x1xf32>
    %75 = arith.addf %73, %74 : vector<16x1xf32>
    %76 = math.rsqrt %75 : vector<16x1xf32>
    %77 = vector.broadcast %76 : vector<16x1xf32> to vector<16x32xf32>
    %78 = arith.mulf %68, %77 : vector<16x32xf32>
    %79 = vector.broadcast %60 : vector<1x32xf32> to vector<16x32xf32>
    %80 = arith.mulf %78, %79 : vector<16x32xf32>
    %81 = vector.broadcast %62 : vector<1x32xf32> to vector<16x32xf32>
    %82 = arith.addf %80, %81 : vector<16x32xf32>
    %83 = arith.truncf %82 : vector<16x32xf32> to vector<16x32xbf16>
    %c0_39 = arith.constant 0 : index
    %c0_40 = arith.constant 0 : index
    %c0_41 = arith.constant 0 : index
    %84 = vector.load %arg10[%c0_39, %c0_40, %c0_41] : memref<2x32x2048xbf16, #tpu.memory_space<vmem>>, vector<1x32x2048xbf16>
    %85 = vector.shape_cast %84 : vector<1x32x2048xbf16> to vector<32x2048xbf16>
    %cst_42 = arith.constant dense<0.000000e+00> : vector<16x2048xf32>
    %86 = tpu.matmul %83, %85, %cst_42 {dimension_numbers = #tpu.dot_dimension_numbers<[1], [0], [0], [1], [0, 0, 1, 1], [], []>} : vector<16x32xbf16>, vector<32x2048xbf16>, vector<16x2048xf32> -> vector<16x2048xf32>
    %c0_43 = arith.constant 0 : index
    %c0_44 = arith.constant 0 : index
    %c0_45 = arith.constant 0 : index
    %87 = vector.load %arg11[%c0_43, %c0_44, %c0_45] : memref<2x1x2048xf32, #tpu.memory_space<vmem>>, vector<1x1x2048xf32>
    %88 = vector.shape_cast %87 : vector<1x1x2048xf32> to vector<1x2048xf32>
    %89 = vector.broadcast %88 : vector<1x2048xf32> to vector<16x2048xf32>
    %90 = arith.addf %86, %89 : vector<16x2048xf32>
    %cst_46 = arith.constant 0.000000e+00 : f32
    %91 = vector.broadcast %cst_46 : f32 to vector<16x2048xf32>
    %92 = arith.maximumf %90, %91 : vector<16x2048xf32>
    %93 = arith.truncf %92 : vector<16x2048xf32> to vector<16x2048xbf16>
    %c0_47 = arith.constant 0 : index
    %c0_48 = arith.constant 0 : index
    %c0_49 = arith.constant 0 : index
    %94 = vector.load %arg12[%c0_47, %c0_48, %c0_49] : memref<2x2048x32xbf16, #tpu.memory_space<vmem>>, vector<1x2048x32xbf16>
    %95 = vector.shape_cast %94 : vector<1x2048x32xbf16> to vector<2048x32xbf16>
    %cst_50 = arith.constant dense<0.000000e+00> : vector<16x32xf32>
    %96 = tpu.matmul %93, %95, %cst_50 {dimension_numbers = #tpu.dot_dimension_numbers<[1], [0], [0], [1], [0, 0, 1, 1], [], []>} : vector<16x2048xbf16>, vector<2048x32xbf16>, vector<16x32xf32> -> vector<16x32xf32>
    %c0_51 = arith.constant 0 : index
    %c0_52 = arith.constant 0 : index
    %c0_53 = arith.constant 0 : index
    %97 = vector.load %arg13[%c0_51, %c0_52, %c0_53] : memref<2x1x32xf32, #tpu.memory_space<vmem>>, vector<1x1x32xf32>
    %98 = vector.shape_cast %97 : vector<1x1x32xf32> to vector<1x32xf32>
    %99 = vector.broadcast %98 : vector<1x32xf32> to vector<16x32xf32>
    %100 = arith.addf %96, %99 : vector<16x32xf32>
    %101 = arith.addf %82, %100 : vector<16x32xf32>
    %c0_54 = arith.constant 0 : index
    %c0_55 = arith.constant 0 : index
    %c0_56 = arith.constant 0 : index
    %102 = vector.load %arg14[%c0_54, %c0_55, %c0_56] : memref<2x1x32xf32, #tpu.memory_space<vmem>>, vector<1x1x32xf32>
    %103 = vector.shape_cast %102 : vector<1x1x32xf32> to vector<1x32xf32>
    %c0_57 = arith.constant 0 : index
    %c0_58 = arith.constant 0 : index
    %c0_59 = arith.constant 0 : index
    %104 = vector.load %arg15[%c0_57, %c0_58, %c0_59] : memref<2x1x32xf32, #tpu.memory_space<vmem>>, vector<1x1x32xf32>
    %105 = vector.shape_cast %104 : vector<1x1x32xf32> to vector<1x32xf32>
    %cst_60 = arith.constant dense<0.000000e+00> : vector<16xf32>
    %106 = vector.multi_reduction <add>, %101, %cst_60 [1] : vector<16x32xf32> to vector<16xf32>
    %107 = vector.shape_cast %106 : vector<16xf32> to vector<16x1xf32>
    %cst_61 = arith.constant 3.200000e+01 : f32
    %108 = vector.broadcast %cst_61 : f32 to vector<16x1xf32>
    %109 = arith.divf %107, %108 : vector<16x1xf32>
    %110 = vector.broadcast %109 : vector<16x1xf32> to vector<16x32xf32>
    %111 = arith.subf %101, %110 : vector<16x32xf32>
    %112 = arith.mulf %111, %111 : vector<16x32xf32>
    %cst_62 = arith.constant dense<0.000000e+00> : vector<16xf32>
    %113 = vector.multi_reduction <add>, %112, %cst_62 [1] : vector<16x32xf32> to vector<16xf32>
    %114 = vector.shape_cast %113 : vector<16xf32> to vector<16x1xf32>
    %cst_63 = arith.constant 3.200000e+01 : f32
    %115 = vector.broadcast %cst_63 : f32 to vector<16x1xf32>
    %116 = arith.divf %114, %115 : vector<16x1xf32>
    %cst_64 = arith.constant 9.99999974E-6 : f32
    %117 = vector.broadcast %cst_64 : f32 to vector<16x1xf32>
    %118 = arith.addf %116, %117 : vector<16x1xf32>
    %119 = math.rsqrt %118 : vector<16x1xf32>
    %120 = vector.broadcast %119 : vector<16x1xf32> to vector<16x32xf32>
    %121 = arith.mulf %111, %120 : vector<16x32xf32>
    %122 = vector.broadcast %103 : vector<1x32xf32> to vector<16x32xf32>
    %123 = arith.mulf %121, %122 : vector<16x32xf32>
    %124 = vector.broadcast %105 : vector<1x32xf32> to vector<16x32xf32>
    %125 = arith.addf %123, %124 : vector<16x32xf32>
    %c1 = arith.constant 1 : index
    %c0_65 = arith.constant 0 : index
    %c0_66 = arith.constant 0 : index
    %126 = vector.load %arg4[%c1, %c0_65, %c0_66] : memref<2x32x96xf32, #tpu.memory_space<vmem>>, vector<1x32x96xf32>
    %127 = vector.shape_cast %126 : vector<1x32x96xf32> to vector<32x96xf32>
    %cst_67 = arith.constant dense<0.000000e+00> : vector<16x96xf32>
    %128 = tpu.matmul %125, %127, %cst_67 {dimension_numbers = #tpu.dot_dimension_numbers<[1], [0], [0], [1], [0, 0, 1, 1], [], []>} : vector<16x32xf32>, vector<32x96xf32>, vector<16x96xf32> -> vector<16x96xf32>
    %c1_68 = arith.constant 1 : index
    %c0_69 = arith.constant 0 : index
    %c0_70 = arith.constant 0 : index
    %129 = vector.load %arg5[%c1_68, %c0_69, %c0_70] : memref<2x1x96xf32, #tpu.memory_space<vmem>>, vector<1x1x96xf32>
    %130 = vector.shape_cast %129 : vector<1x1x96xf32> to vector<1x96xf32>
    %131 = vector.broadcast %130 : vector<1x96xf32> to vector<16x96xf32>
    %132 = arith.addf %128, %131 : vector<16x96xf32>
    %133 = vector.shape_cast %132 : vector<16x96xf32> to vector<2x8x96xf32>
    %134 = vector.extract_strided_slice %133 {offsets = [0, 0, 0], sizes = [2, 8, 32], strides = [1, 1, 1]} : vector<2x8x96xf32> to vector<2x8x32xf32>
    %cst_71 = arith.constant 2.500000e-01 : f32
    %135 = vector.broadcast %cst_71 : f32 to vector<2x8x32xf32>
    %136 = arith.mulf %134, %135 : vector<2x8x32xf32>
    %137 = vector.extract_strided_slice %133 {offsets = [0, 0, 32], sizes = [2, 8, 32], strides = [1, 1, 1]} : vector<2x8x96xf32> to vector<2x8x32xf32>
    %138 = vector.extract_strided_slice %133 {offsets = [0, 0, 64], sizes = [2, 8, 32], strides = [1, 1, 1]} : vector<2x8x96xf32> to vector<2x8x32xf32>
    %139 = vector.extract_strided_slice %136 {offsets = [0, 0, 0], sizes = [2, 8, 16], strides = [1, 1, 1]} : vector<2x8x32xf32> to vector<2x8x16xf32>
    %140 = vector.extract_strided_slice %137 {offsets = [0, 0, 0], sizes = [2, 8, 16], strides = [1, 1, 1]} : vector<2x8x32xf32> to vector<2x8x16xf32>
    %141 = vector.extract_strided_slice %138 {offsets = [0, 0, 0], sizes = [2, 8, 16], strides = [1, 1, 1]} : vector<2x8x32xf32> to vector<2x8x16xf32>
    "tpu.trace_start"() <{level = 10 : i32, message = "bqd,bkd->bqk"}> : () -> ()
    %cst_72 = arith.constant dense<0.000000e+00> : vector<2x8x8xf32>
    %142 = tpu.matmul %139, %140, %cst_72 {dimension_numbers = #tpu.dot_dimension_numbers<[2], [2], [1], [1], [0, 0, 0, 1, 1, 1], [0], [0]>} : vector<2x8x16xf32>, vector<2x8x16xf32>, vector<2x8x8xf32> -> vector<2x8x8xf32>
    "tpu.trace_stop"() : () -> ()
    %cst_73 = arith.constant dense<0xFF800000> : vector<2x8xf32>
    %143 = vector.multi_reduction <maximumf>, %142, %cst_73 [2] : vector<2x8x8xf32> to vector<2x8xf32>
    %144 = vector.shape_cast %143 : vector<2x8xf32> to vector<2x8x1xf32>
    %145 = vector.broadcast %144 : vector<2x8x1xf32> to vector<2x8x8xf32>
    %146 = arith.subf %142, %145 : vector<2x8x8xf32>
    %147 = math.exp %146 : vector<2x8x8xf32>
    %cst_74 = arith.constant dense<0.000000e+00> : vector<2x8xf32>
    %148 = vector.multi_reduction <add>, %147, %cst_74 [2] : vector<2x8x8xf32> to vector<2x8xf32>
    %149 = vector.shape_cast %148 : vector<2x8xf32> to vector<2x8x1xf32>
    %150 = tpu.reciprocal %149 {approx = true} : vector<2x8x1xf32> -> vector<2x8x1xf32>
    %151 = vector.broadcast %150 : vector<2x8x1xf32> to vector<2x8x8xf32>
    %152 = arith.mulf %147, %151 : vector<2x8x8xf32>
    "tpu.trace_start"() <{level = 10 : i32, message = "bqk,bkd->bqd"}> : () -> ()
    %cst_75 = arith.constant dense<0.000000e+00> : vector<2x8x16xf32>
    %153 = tpu.matmul %152, %141, %cst_75 {dimension_numbers = #tpu.dot_dimension_numbers<[2], [1], [1], [2], [0, 0, 0, 1, 1, 2], [0], [0]>} : vector<2x8x8xf32>, vector<2x8x16xf32>, vector<2x8x16xf32> -> vector<2x8x16xf32>
    "tpu.trace_stop"() : () -> ()
    %154 = vector.extract_strided_slice %136 {offsets = [0, 0, 16], sizes = [2, 8, 16], strides = [1, 1, 1]} : vector<2x8x32xf32> to vector<2x8x16xf32>
    %155 = vector.extract_strided_slice %137 {offsets = [0, 0, 16], sizes = [2, 8, 16], strides = [1, 1, 1]} : vector<2x8x32xf32> to vector<2x8x16xf32>
    %156 = vector.extract_strided_slice %138 {offsets = [0, 0, 16], sizes = [2, 8, 16], strides = [1, 1, 1]} : vector<2x8x32xf32> to vector<2x8x16xf32>
    "tpu.trace_start"() <{level = 10 : i32, message = "bqd,bkd->bqk"}> : () -> ()
    %cst_76 = arith.constant dense<0.000000e+00> : vector<2x8x8xf32>
    %157 = tpu.matmul %154, %155, %cst_76 {dimension_numbers = #tpu.dot_dimension_numbers<[2], [2], [1], [1], [0, 0, 0, 1, 1, 1], [0], [0]>} : vector<2x8x16xf32>, vector<2x8x16xf32>, vector<2x8x8xf32> -> vector<2x8x8xf32>
    "tpu.trace_stop"() : () -> ()
    %cst_77 = arith.constant dense<0xFF800000> : vector<2x8xf32>
    %158 = vector.multi_reduction <maximumf>, %157, %cst_77 [2] : vector<2x8x8xf32> to vector<2x8xf32>
    %159 = vector.shape_cast %158 : vector<2x8xf32> to vector<2x8x1xf32>
    %160 = vector.broadcast %159 : vector<2x8x1xf32> to vector<2x8x8xf32>
    %161 = arith.subf %157, %160 : vector<2x8x8xf32>
    %162 = math.exp %161 : vector<2x8x8xf32>
    %cst_78 = arith.constant dense<0.000000e+00> : vector<2x8xf32>
    %163 = vector.multi_reduction <add>, %162, %cst_78 [2] : vector<2x8x8xf32> to vector<2x8xf32>
    %164 = vector.shape_cast %163 : vector<2x8xf32> to vector<2x8x1xf32>
    %165 = tpu.reciprocal %164 {approx = true} : vector<2x8x1xf32> -> vector<2x8x1xf32>
    %166 = vector.broadcast %165 : vector<2x8x1xf32> to vector<2x8x8xf32>
    %167 = arith.mulf %162, %166 : vector<2x8x8xf32>
    "tpu.trace_start"() <{level = 10 : i32, message = "bqk,bkd->bqd"}> : () -> ()
    %cst_79 = arith.constant dense<0.000000e+00> : vector<2x8x16xf32>
    %168 = tpu.matmul %167, %156, %cst_79 {dimension_numbers = #tpu.dot_dimension_numbers<[2], [1], [1], [2], [0, 0, 0, 1, 1, 2], [0], [0]>} : vector<2x8x8xf32>, vector<2x8x16xf32>, vector<2x8x16xf32> -> vector<2x8x16xf32>
    "tpu.trace_stop"() : () -> ()
    %169 = tpu.concatenate %153, %168 in 2 : vector<2x8x16xf32>, vector<2x8x16xf32> -> vector<2x8x32xf32>
    %170 = vector.shape_cast %169 : vector<2x8x32xf32> to vector<16x32xf32>
    %c1_80 = arith.constant 1 : index
    %c0_81 = arith.constant 0 : index
    %c0_82 = arith.constant 0 : index
    %171 = vector.load %arg6[%c1_80, %c0_81, %c0_82] : memref<2x32x32xf32, #tpu.memory_space<vmem>>, vector<1x32x32xf32>
    %172 = vector.shape_cast %171 : vector<1x32x32xf32> to vector<32x32xf32>
    %cst_83 = arith.constant dense<0.000000e+00> : vector<16x32xf32>
    %173 = tpu.matmul %170, %172, %cst_83 {dimension_numbers = #tpu.dot_dimension_numbers<[1], [0], [0], [1], [0, 0, 1, 1], [], []>} : vector<16x32xf32>, vector<32x32xf32>, vector<16x32xf32> -> vector<16x32xf32>
    %c1_84 = arith.constant 1 : index
    %c0_85 = arith.constant 0 : index
    %c0_86 = arith.constant 0 : index
    %174 = vector.load %arg7[%c1_84, %c0_85, %c0_86] : memref<2x1x32xf32, #tpu.memory_space<vmem>>, vector<1x1x32xf32>
    %175 = vector.shape_cast %174 : vector<1x1x32xf32> to vector<1x32xf32>
    %176 = vector.broadcast %175 : vector<1x32xf32> to vector<16x32xf32>
    %177 = arith.addf %173, %176 : vector<16x32xf32>
    %178 = arith.addf %125, %177 : vector<16x32xf32>
    %c1_87 = arith.constant 1 : index
    %c0_88 = arith.constant 0 : index
    %c0_89 = arith.constant 0 : index
    %179 = vector.load %arg8[%c1_87, %c0_88, %c0_89] : memref<2x1x32xf32, #tpu.memory_space<vmem>>, vector<1x1x32xf32>
    %180 = vector.shape_cast %179 : vector<1x1x32xf32> to vector<1x32xf32>
    %c1_90 = arith.constant 1 : index
    %c0_91 = arith.constant 0 : index
    %c0_92 = arith.constant 0 : index
    %181 = vector.load %arg9[%c1_90, %c0_91, %c0_92] : memref<2x1x32xf32, #tpu.memory_space<vmem>>, vector<1x1x32xf32>
    %182 = vector.shape_cast %181 : vector<1x1x32xf32> to vector<1x32xf32>
    %cst_93 = arith.constant dense<0.000000e+00> : vector<16xf32>
    %183 = vector.multi_reduction <add>, %178, %cst_93 [1] : vector<16x32xf32> to vector<16xf32>
    %184 = vector.shape_cast %183 : vector<16xf32> to vector<16x1xf32>
    %cst_94 = arith.constant 3.200000e+01 : f32
    %185 = vector.broadcast %cst_94 : f32 to vector<16x1xf32>
    %186 = arith.divf %184, %185 : vector<16x1xf32>
    %187 = vector.broadcast %186 : vector<16x1xf32> to vector<16x32xf32>
    %188 = arith.subf %178, %187 : vector<16x32xf32>
    %189 = arith.mulf %188, %188 : vector<16x32xf32>
    %cst_95 = arith.constant dense<0.000000e+00> : vector<16xf32>
    %190 = vector.multi_reduction <add>, %189, %cst_95 [1] : vector<16x32xf32> to vector<16xf32>
    %191 = vector.shape_cast %190 : vector<16xf32> to vector<16x1xf32>
    %cst_96 = arith.constant 3.200000e+01 : f32
    %192 = vector.broadcast %cst_96 : f32 to vector<16x1xf32>
    %193 = arith.divf %191, %192 : vector<16x1xf32>
    %cst_97 = arith.constant 9.99999974E-6 : f32
    %194 = vector.broadcast %cst_97 : f32 to vector<16x1xf32>
    %195 = arith.addf %193, %194 : vector<16x1xf32>
    %196 = math.rsqrt %195 : vector<16x1xf32>
    %197 = vector.broadcast %196 : vector<16x1xf32> to vector<16x32xf32>
    %198 = arith.mulf %188, %197 : vector<16x32xf32>
    %199 = vector.broadcast %180 : vector<1x32xf32> to vector<16x32xf32>
    %200 = arith.mulf %198, %199 : vector<16x32xf32>
    %201 = vector.broadcast %182 : vector<1x32xf32> to vector<16x32xf32>
    %202 = arith.addf %200, %201 : vector<16x32xf32>
    %203 = arith.truncf %202 : vector<16x32xf32> to vector<16x32xbf16>
    %c1_98 = arith.constant 1 : index
    %c0_99 = arith.constant 0 : index
    %c0_100 = arith.constant 0 : index
    %204 = vector.load %arg10[%c1_98, %c0_99, %c0_100] : memref<2x32x2048xbf16, #tpu.memory_space<vmem>>, vector<1x32x2048xbf16>
    %205 = vector.shape_cast %204 : vector<1x32x2048xbf16> to vector<32x2048xbf16>
    %cst_101 = arith.constant dense<0.000000e+00> : vector<16x2048xf32>
    %206 = tpu.matmul %203, %205, %cst_101 {dimension_numbers = #tpu.dot_dimension_numbers<[1], [0], [0], [1], [0, 0, 1, 1], [], []>} : vector<16x32xbf16>, vector<32x2048xbf16>, vector<16x2048xf32> -> vector<16x2048xf32>
    %c1_102 = arith.constant 1 : index
    %c0_103 = arith.constant 0 : index
    %c0_104 = arith.constant 0 : index
    %207 = vector.load %arg11[%c1_102, %c0_103, %c0_104] : memref<2x1x2048xf32, #tpu.memory_space<vmem>>, vector<1x1x2048xf32>
    %208 = vector.shape_cast %207 : vector<1x1x2048xf32> to vector<1x2048xf32>
    %209 = vector.broadcast %208 : vector<1x2048xf32> to vector<16x2048xf32>
    %210 = arith.addf %206, %209 : vector<16x2048xf32>
    %cst_105 = arith.constant 0.000000e+00 : f32
    %211 = vector.broadcast %cst_105 : f32 to vector<16x2048xf32>
    %212 = arith.maximumf %210, %211 : vector<16x2048xf32>
    %213 = arith.truncf %212 : vector<16x2048xf32> to vector<16x2048xbf16>
    %c1_106 = arith.constant 1 : index
    %c0_107 = arith.constant 0 : index
    %c0_108 = arith.constant 0 : index
    %214 = vector.load %arg12[%c1_106, %c0_107, %c0_108] : memref<2x2048x32xbf16, #tpu.memory_space<vmem>>, vector<1x2048x32xbf16>
    %215 = vector.shape_cast %214 : vector<1x2048x32xbf16> to vector<2048x32xbf16>
    %cst_109 = arith.constant dense<0.000000e+00> : vector<16x32xf32>
    %216 = tpu.matmul %213, %215, %cst_109 {dimension_numbers = #tpu.dot_dimension_numbers<[1], [0], [0], [1], [0, 0, 1, 1], [], []>} : vector<16x2048xbf16>, vector<2048x32xbf16>, vector<16x32xf32> -> vector<16x32xf32>
    %c1_110 = arith.constant 1 : index
    %c0_111 = arith.constant 0 : index
    %c0_112 = arith.constant 0 : index
    %217 = vector.load %arg13[%c1_110, %c0_111, %c0_112] : memref<2x1x32xf32, #tpu.memory_space<vmem>>, vector<1x1x32xf32>
    %218 = vector.shape_cast %217 : vector<1x1x32xf32> to vector<1x32xf32>
    %219 = vector.broadcast %218 : vector<1x32xf32> to vector<16x32xf32>
    %220 = arith.addf %216, %219 : vector<16x32xf32>
    %221 = arith.addf %202, %220 : vector<16x32xf32>
    %c1_113 = arith.constant 1 : index
    %c0_114 = arith.constant 0 : index
    %c0_115 = arith.constant 0 : index
    %222 = vector.load %arg14[%c1_113, %c0_114, %c0_115] : memref<2x1x32xf32, #tpu.memory_space<vmem>>, vector<1x1x32xf32>
    %223 = vector.shape_cast %222 : vector<1x1x32xf32> to vector<1x32xf32>
    %c1_116 = arith.constant 1 : index
    %c0_117 = arith.constant 0 : index
    %c0_118 = arith.constant 0 : index
    %224 = vector.load %arg15[%c1_116, %c0_117, %c0_118] : memref<2x1x32xf32, #tpu.memory_space<vmem>>, vector<1x1x32xf32>
    %225 = vector.shape_cast %224 : vector<1x1x32xf32> to vector<1x32xf32>
    %cst_119 = arith.constant dense<0.000000e+00> : vector<16xf32>
    %226 = vector.multi_reduction <add>, %221, %cst_119 [1] : vector<16x32xf32> to vector<16xf32>
    %227 = vector.shape_cast %226 : vector<16xf32> to vector<16x1xf32>
    %cst_120 = arith.constant 3.200000e+01 : f32
    %228 = vector.broadcast %cst_120 : f32 to vector<16x1xf32>
    %229 = arith.divf %227, %228 : vector<16x1xf32>
    %230 = vector.broadcast %229 : vector<16x1xf32> to vector<16x32xf32>
    %231 = arith.subf %221, %230 : vector<16x32xf32>
    %232 = arith.mulf %231, %231 : vector<16x32xf32>
    %cst_121 = arith.constant dense<0.000000e+00> : vector<16xf32>
    %233 = vector.multi_reduction <add>, %232, %cst_121 [1] : vector<16x32xf32> to vector<16xf32>
    %234 = vector.shape_cast %233 : vector<16xf32> to vector<16x1xf32>
    %cst_122 = arith.constant 3.200000e+01 : f32
    %235 = vector.broadcast %cst_122 : f32 to vector<16x1xf32>
    %236 = arith.divf %234, %235 : vector<16x1xf32>
    %cst_123 = arith.constant 9.99999974E-6 : f32
    %237 = vector.broadcast %cst_123 : f32 to vector<16x1xf32>
    %238 = arith.addf %236, %237 : vector<16x1xf32>
    %239 = math.rsqrt %238 : vector<16x1xf32>
    %240 = vector.broadcast %239 : vector<16x1xf32> to vector<16x32xf32>
    %241 = arith.mulf %231, %240 : vector<16x32xf32>
    %242 = vector.broadcast %223 : vector<1x32xf32> to vector<16x32xf32>
    %243 = arith.mulf %241, %242 : vector<16x32xf32>
    %244 = vector.broadcast %225 : vector<1x32xf32> to vector<16x32xf32>
    %245 = arith.addf %243, %244 : vector<16x32xf32>
    %246 = vector.shape_cast %245 : vector<16x32xf32> to vector<2x8x32xf32>
    %cst_124 = arith.constant dense<0.000000e+00> : vector<2x32xf32>
    %247 = vector.multi_reduction <add>, %246, %cst_124 [1] : vector<2x8x32xf32> to vector<2x32xf32>
    %cst_125 = arith.constant 8.000000e+00 : f32
    %248 = vector.broadcast %cst_125 : f32 to vector<2x32xf32>
    %249 = arith.divf %247, %248 : vector<2x32xf32>
    %c0_126 = arith.constant 0 : index
    %c0_127 = arith.constant 0 : index
    %250 = vector.load %arg16[%c0_126, %c0_127] : memref<32x10xf32, #tpu.memory_space<vmem>>, vector<32x10xf32>
    %cst_128 = arith.constant dense<0.000000e+00> : vector<2x10xf32>
    %251 = tpu.matmul %249, %250, %cst_128 {dimension_numbers = #tpu.dot_dimension_numbers<[1], [0], [0], [1], [0, 0, 1, 1], [], []>} : vector<2x32xf32>, vector<32x10xf32>, vector<2x10xf32> -> vector<2x10xf32>
    %c0_129 = arith.constant 0 : index
    %c0_130 = arith.constant 0 : index
    %252 = vector.load %arg17[%c0_129, %c0_130] : memref<1x10xf32, #tpu.memory_space<vmem>>, vector<1x10xf32>
    %253 = vector.broadcast %252 : vector<1x10xf32> to vector<2x10xf32>
    %254 = arith.addf %251, %253 : vector<2x10xf32>
    %c0_131 = arith.constant 0 : index
    %c0_132 = arith.constant 0 : index
    %c0_133 = arith.constant 0 : index
    %255 = vector.load %arg18[%c0_131, %c0_132, %c0_133] : memref<1x2x10xf32, #tpu.memory_space<vmem>>, vector<1x2x10xf32>
    %256 = vector.shape_cast %255 : vector<1x2x10xf32> to vector<2x10xf32>
    %257 = vector.shape_cast %254 : vector<2x10xf32> to vector<1x2x10xf32>
    tpu.vector_store %arg18[%c0_131, %c0_132, %c0_133], %257 {strides = array<i32>} : memref<1x2x10xf32, #tpu.memory_space<vmem>>, vector<1x2x10xf32>,
    return
  }
  func.func @transform_0(%arg0: i32) -> (i32, i32) {
    %c0_i32 = arith.constant 0 : i32
    %c0_i32_0 = arith.constant 0 : i32
    return %arg0, %c0_i32 : i32, i32
  }
  func.func @transform_1(%arg0: i32) -> (i32, i32) {
    %c0_i32 = arith.constant 0 : i32
    %c0_i32_0 = arith.constant 0 : i32
    %c0_i32_1 = arith.constant 0 : i32
    return %c0_i32, %c0_i32_0 : i32, i32
  }
  func.func @transform_2(%arg0: i32) -> (i32, i32) {
    %c0_i32 = arith.constant 0 : i32
    %c0_i32_0 = arith.constant 0 : i32
    %c0_i32_1 = arith.constant 0 : i32
    return %c0_i32, %c0_i32_0 : i32, i32
  }
  func.func @transform_3(%arg0: i32) -> (i32, i32, i32) {
    %c0_i32 = arith.constant 0 : i32
    %c0_i32_0 = arith.constant 0 : i32
    %c0_i32_1 = arith.constant 0 : i32
    %c0_i32_2 = arith.constant 0 : i32
    return %c0_i32, %c0_i32_0, %c0_i32_1 : i32, i32, i32
  }
  func.func @transform_4(%arg0: i32) -> (i32, i32, i32) {
    %c0_i32 = arith.constant 0 : i32
    %c0_i32_0 = arith.constant 0 : i32
    %c0_i32_1 = arith.constant 0 : i32
    %c0_i32_2 = arith.constant 0 : i32
    return %c0_i32, %c0_i32_0, %c0_i32_1 : i32, i32, i32
  }
  func.func @transform_5(%arg0: i32) -> (i32, i32, i32) {
    %c0_i32 = arith.constant 0 : i32
    %c0_i32_0 = arith.constant 0 : i32
    %c0_i32_1 = arith.constant 0 : i32
    %c0_i32_2 = arith.constant 0 : i32
    return %c0_i32, %c0_i32_0, %c0_i32_1 : i32, i32, i32
  }
  func.func @transform_6(%arg0: i32) -> (i32, i32, i32) {
    %c0_i32 = arith.constant 0 : i32
    %c0_i32_0 = arith.constant 0 : i32
    %c0_i32_1 = arith.constant 0 : i32
    %c0_i32_2 = arith.constant 0 : i32
    return %c0_i32, %c0_i32_0, %c0_i32_1 : i32, i32, i32
  }
  func.func @transform_7(%arg0: i32) -> (i32, i32, i32) {
    %c0_i32 = arith.constant 0 : i32
    %c0_i32_0 = arith.constant 0 : i32
    %c0_i32_1 = arith.constant 0 : i32
    %c0_i32_2 = arith.constant 0 : i32
    return %c0_i32, %c0_i32_0, %c0_i32_1 : i32, i32, i32
  }
  func.func @transform_8(%arg0: i32) -> (i32, i32, i32) {
    %c0_i32 = arith.constant 0 : i32
    %c0_i32_0 = arith.constant 0 : i32
    %c0_i32_1 = arith.constant 0 : i32
    %c0_i32_2 = arith.constant 0 : i32
    return %c0_i32, %c0_i32_0, %c0_i32_1 : i32, i32, i32
  }
  func.func @transform_9(%arg0: i32) -> (i32, i32, i32) {
    %c0_i32 = arith.constant 0 : i32
    %c0_i32_0 = arith.constant 0 : i32
    %c0_i32_1 = arith.constant 0 : i32
    %c0_i32_2 = arith.constant 0 : i32
    return %c0_i32, %c0_i32_0, %c0_i32_1 : i32, i32, i32
  }
  func.func @transform_10(%arg0: i32) -> (i32, i32, i32) {
    %c0_i32 = arith.constant 0 : i32
    %c0_i32_0 = arith.constant 0 : i32
    %c0_i32_1 = arith.constant 0 : i32
    %c0_i32_2 = arith.constant 0 : i32
    return %c0_i32, %c0_i32_0, %c0_i32_1 : i32, i32, i32
  }
  func.func @transform_11(%arg0: i32) -> (i32, i32, i32) {
    %c0_i32 = arith.constant 0 : i32
    %c0_i32_0 = arith.constant 0 : i32
    %c0_i32_1 = arith.constant 0 : i32
    %c0_i32_2 = arith.constant 0 : i32
    return %c0_i32, %c0_i32_0, %c0_i32_1 : i32, i32, i32
  }
  func.func @transform_12(%arg0: i32) -> (i32, i32, i32) {
    %c0_i32 = arith.constant 0 : i32
    %c0_i32_0 = arith.constant 0 : i32
    %c0_i32_1 = arith.constant 0 : i32
    %c0_i32_2 = arith.constant 0 : i32
    return %c0_i32, %c0_i32_0, %c0_i32_1 : i32, i32, i32
  }
  func.func @transform_13(%arg0: i32) -> (i32, i32, i32) {
    %c0_i32 = arith.constant 0 : i32
    %c0_i32_0 = arith.constant 0 : i32
    %c0_i32_1 = arith.constant 0 : i32
    %c0_i32_2 = arith.constant 0 : i32
    return %c0_i32, %c0_i32_0, %c0_i32_1 : i32, i32, i32
  }
  func.func @transform_14(%arg0: i32) -> (i32, i32, i32) {
    %c0_i32 = arith.constant 0 : i32
    %c0_i32_0 = arith.constant 0 : i32
    %c0_i32_1 = arith.constant 0 : i32
    %c0_i32_2 = arith.constant 0 : i32
    return %c0_i32, %c0_i32_0, %c0_i32_1 : i32, i32, i32
  }
  func.func @transform_15(%arg0: i32) -> (i32, i32) {
    %c0_i32 = arith.constant 0 : i32
    %c0_i32_0 = arith.constant 0 : i32
    %c0_i32_1 = arith.constant 0 : i32
    return %c0_i32, %c0_i32_0 : i32, i32
  }
  func.func @transform_16(%arg0: i32) -> (i32, i32) {
    %c0_i32 = arith.constant 0 : i32
    %c0_i32_0 = arith.constant 0 : i32
    %c0_i32_1 = arith.constant 0 : i32
    return %c0_i32, %c0_i32_0 : i32, i32
  }
  func.func @transform_17(%arg0: i32) -> (i32, i32, i32) {
    %c0_i32 = arith.constant 0 : i32
    %c0_i32_0 = arith.constant 0 : i32
    %c0_i32_1 = arith.constant 0 : i32
    return %arg0, %c0_i32, %c0_i32_0 : i32, i32, i32
  }
}

</mosaic_0001>

<llo_original>
// kernel: tpu_custom_call.1
$region0: #{tpu_custom_call.1}
  #allocation0 [shape = 'u32[]', space=smem, size = 0x4, offset = 0x4, fixed_abs, tag = 'smem constant byte address 0x4 - core index']
  #allocation1 [shape = 'u32[144,128]{1,0:T(1,128)}', space=vmem, size = 0x12000, scoped, tag = 'internal scratch']
  %s0 = inlined_call_operand.vmem [shape: f32[32,12], index: 0, kind: input, shape index: {}]
  %s1 = inlined_call_operand.vmem [shape: f32[12,32], index: 1, kind: input, shape index: {}]
  %s2 = inlined_call_operand.vmem [shape: f32[1,32], index: 2, kind: input, shape index: {}]
  %s3 = inlined_call_operand.vmem [shape: f32[2,32,96], index: 3, kind: input, shape index: {}]
  %s4 = inlined_call_operand.vmem [shape: f32[2,1,96], index: 4, kind: input, shape index: {}]
  %s5 = inlined_call_operand.vmem [shape: f32[2,32,32], index: 5, kind: input, shape index: {}]
  %s6 = inlined_call_operand.vmem [shape: f32[2,1,32], index: 6, kind: input, shape index: {}]
  %s7 = inlined_call_operand.vmem [shape: f32[2,1,32], index: 7, kind: input, shape index: {}]
  %s8 = inlined_call_operand.vmem [shape: f32[2,1,32], index: 8, kind: input, shape index: {}]
  %s9 = inlined_call_operand.vmem [shape: bf16[2,32,2048], index: 9, kind: input, shape index: {}]
  %s10 = inlined_call_operand.vmem [shape: f32[2,1,2048], index: 10, kind: input, shape index: {}]
  %s11 = inlined_call_operand.vmem [shape: bf16[2,2048,32], index: 11, kind: input, shape index: {}]
  %s12 = inlined_call_operand.vmem [shape: f32[2,1,32], index: 12, kind: input, shape index: {}]
  %s13 = inlined_call_operand.vmem [shape: f32[2,1,32], index: 13, kind: input, shape index: {}]
  %s14 = inlined_call_operand.vmem [shape: f32[2,1,32], index: 14, kind: input, shape index: {}]
  %s15 = inlined_call_operand.vmem [shape: f32[32,10], index: 15, kind: input, shape index: {}]
  %s16 = inlined_call_operand.vmem [shape: f32[1,10], index: 16, kind: input, shape index: {}]
  %s17 = inlined_call_operand.hbm [shape: f32[2,2,10], index: 17, kind: output, shape index: {}]
  %s18 = sld [smem:[#allocation0]]
  $region101: #{tpu_custom_call.1} parent=0
    _
  %s20 = ssub.s32 1, %s18
  %s21 = scalar_select 0, %s20, %s18
  $region1: #{tpu_custom_call.1} parent=0
    #allocation2 [shape = 'u8[2048]{0}', space=vmem, size = 0x800, scoped, tag = 'output window, operand 0']
    #allocation3 [shape = 's32[2]{0}', space=sflag, size = 0x8, scoped, tag = 'scoped memory for tpu_custom_call.1']
    %22 = vsyncpa [#allocation3], 0
    %s23 = scalar_lea.sflag [#allocation3], 1
    %24 = vsyncpa %s23, 0
    loop: start=0, step=1, limit=4
    $region2: #{tpu_custom_call.1} parent=1 // loop_pre_header
      _
    $region3: #{tpu_custom_call.1} parent=1 // loop_header
      %s26 = sphi 0, %s30
      %p27 = scmp.ge.s32.totalorder %s26, 4
      %s36 = sphi 0, %s38
      %s39 = sphi 0, %s36
      %s40 = sphi 0, %s39
      %s56 = sphi 0, %s40
      %s60 = sphi 0, %s60
      %s62 = sphi 0, %s60
      %s63 = sphi 0, %s62
      %s77 = sphi 0, %s63
      %s81 = sphi 0, %s81
      %s83 = sphi 0, %s81
      %s84 = sphi 0, %s83
      %s98 = sphi 0, %s84
      %s102 = sphi 0, %s102
      %s104 = sphi 0, %s102
      %s105 = sphi 0, %s104
      %s119 = sphi 0, %s105
      %s123 = sphi 0, %s123
      %s125 = sphi 0, %s123
      %s126 = sphi 0, %s125
      %s140 = sphi 0, %s126
      %s144 = sphi 0, %s144
      %s146 = sphi 0, %s144
      %s147 = sphi 0, %s146
      %s161 = sphi 0, %s147
      %s165 = sphi 0, %s165
      %s167 = sphi 0, %s165
      %s168 = sphi 0, %s167
      %s182 = sphi 0, %s168
      %s186 = sphi 0, %s186
      %s188 = sphi 0, %s186
      %s189 = sphi 0, %s188
      %s203 = sphi 0, %s189
      %s207 = sphi 0, %s207
      %s209 = sphi 0, %s207
      %s210 = sphi 0, %s209
      %s224 = sphi 0, %s210
      %s228 = sphi 0, %s228
      %s230 = sphi 0, %s228
      %s231 = sphi 0, %s230
      %s245 = sphi 0, %s231
      %s249 = sphi 0, %s249
      %s251 = sphi 0, %s249
      %s252 = sphi 0, %s251
      %s266 = sphi 0, %s252
      %s270 = sphi 0, %s270
      %s272 = sphi 0, %s270
      %s273 = sphi 0, %s272
      %s287 = sphi 0, %s273
      %s291 = sphi 0, %s291
      %s293 = sphi 0, %s291
      %s294 = sphi 0, %s293
      %s308 = sphi 0, %s294
      %s312 = sphi 0, %s312
      %s314 = sphi 0, %s312
      %s315 = sphi 0, %s314
      %s329 = sphi 0, %s315
      %s333 = sphi 0, %s333
      %s335 = sphi 0, %s333
      %s336 = sphi 0, %s335
      %s350 = sphi 0, %s336
      %s354 = sphi 0, %s354
      %s356 = sphi 0, %s354
      %s357 = sphi 0, %s356
      %s371 = sphi 0, %s357
      %s375 = sphi 0, %s375
      %s377 = sphi 0, %s375
      %s378 = sphi 0, %s377
      %s392 = sphi 0, %s378
      %s398 = sphi 0, %s400
      %s401 = sphi 0, %s398
      %s402 = sphi 0, %s401
      %s418 = sphi 0, %s402
    $region4: #{tpu_custom_call.1} parent=1 // loop_header_branch
      %29 = sbr.rel (%p27) target = $region8
    $region5: #{tpu_custom_call.1} parent=1 // loop_body
      %s31 = ssub.s32 %s26, 1
      %s32 = ssub.s32 %s26, 2
      %s33 = sadd.s32 %s26, 1
      %s34 = ssub.s32 %s26, %s33
      %p35 = scmp.eq.s32.totalorder %s34, 0
      %s37 = sadd.s32 %s36, 1
      %s38 = scalar_select %p35, %s36, %s37
      %p41 = pneg %p35
      %p42 = scmp.eq.s32.totalorder %s26, 1
      %p43 = por %p41, %p42
      %p44 = scmp.ne.s32.totalorder %s36, %s39
      %p45 = scmp.eq.s32.totalorder %s26, 0
      %p46 = por %p44, %p45
      %p47 = scmp.ne.s32.totalorder %s36, %s39
      %p48 = scmp.eq.s32.totalorder %s31, 1
      %p49 = por %p47, %p48
      %p50 = scmp.ne.s32.totalorder %s39, %s40
      %p51 = scmp.eq.s32.totalorder %s31, 0
      %p52 = por %p50, %p51
      %p53 = scmp.ne.s32.totalorder %s39, %s40
      %p54 = scmp.eq.s32.totalorder %s32, 1
      %p55 = por %p53, %p54
      %p57 = scmp.ne.s32.totalorder %s40, %s56
      %p58 = scmp.eq.s32.totalorder %s32, 0
      %p59 = por %p57, %p58
      %s61 = sadd.s32 %s60, 1
      %p64 = scmp.eq.s32.totalorder %s26, 1
      %p65 = scmp.ne.s32.totalorder %s60, %s62
      %p66 = scmp.eq.s32.totalorder %s26, 0
      %p67 = por %p65, %p66
      %p68 = scmp.ne.s32.totalorder %s60, %s62
      %p69 = scmp.eq.s32.totalorder %s31, 1
      %p70 = por %p68, %p69
      %p71 = scmp.ne.s32.totalorder %s62, %s63
      %p72 = scmp.eq.s32.totalorder %s31, 0
      %p73 = por %p71, %p72
      %p74 = scmp.ne.s32.totalorder %s62, %s63
      %p75 = scmp.eq.s32.totalorder %s32, 1
      %p76 = por %p74, %p75
      %p78 = scmp.ne.s32.totalorder %s63, %s77
      %p79 = scmp.eq.s32.totalorder %s32, 0
      %p80 = por %p78, %p79
      %s82 = sadd.s32 %s81, 1
      %p85 = scmp.eq.s32.totalorder %s26, 1
      %p86 = scmp.ne.s32.totalorder %s81, %s83
      %p87 = scmp.eq.s32.totalorder %s26, 0
      %p88 = por %p86, %p87
      %p89 = scmp.ne.s32.totalorder %s81, %s83
      %p90 = scmp.eq.s32.totalorder %s31, 1
      %p91 = por %p89, %p90
      %p92 = scmp.ne.s32.totalorder %s83, %s84
      %p93 = scmp.eq.s32.totalorder %s31, 0
      %p94 = por %p92, %p93
      %p95 = scmp.ne.s32.totalorder %s83, %s84
      %p96 = scmp.eq.s32.totalorder %s32, 1
      %p97 = por %p95, %p96
      %p99 = scmp.ne.s32.totalorder %s84, %s98
      %p100 = scmp.eq.s32.totalorder %s32, 0
      %p101 = por %p99, %p100
      %s103 = sadd.s32 %s102, 1
      %p106 = scmp.eq.s32.totalorder %s26, 1
      %p107 = scmp.ne.s32.totalorder %s102, %s104
      %p108 = scmp.eq.s32.totalorder %s26, 0
      %p109 = por %p107, %p108
      %p110 = scmp.ne.s32.totalorder %s102, %s104
      %p111 = scmp.eq.s32.totalorder %s31, 1
      %p112 = por %p110, %p111
      %p113 = scmp.ne.s32.totalorder %s104, %s105
      %p114 = scmp.eq.s32.totalorder %s31, 0
      %p115 = por %p113, %p114
      %p116 = scmp.ne.s32.totalorder %s104, %s105
      %p117 = scmp.eq.s32.totalorder %s32, 1
      %p118 = por %p116, %p117
      %p120 = scmp.ne.s32.totalorder %s105, %s119
      %p121 = scmp.eq.s32.totalorder %s32, 0
      %p122 = por %p120, %p121
      %s124 = sadd.s32 %s123, 1
      %p127 = scmp.eq.s32.totalorder %s26, 1
      %p128 = scmp.ne.s32.totalorder %s123, %s125
      %p129 = scmp.eq.s32.totalorder %s26, 0
      %p130 = por %p128, %p129
      %p131 = scmp.ne.s32.totalorder %s123, %s125
      %p132 = scmp.eq.s32.totalorder %s31, 1
      %p133 = por %p131, %p132
      %p134 = scmp.ne.s32.totalorder %s125, %s126
      %p135 = scmp.eq.s32.totalorder %s31, 0
      %p136 = por %p134, %p135
      %p137 = scmp.ne.s32.totalorder %s125, %s126
      %p138 = scmp.eq.s32.totalorder %s32, 1
      %p139 = por %p137, %p138
      %p141 = scmp.ne.s32.totalorder %s126, %s140
      %p142 = scmp.eq.s32.totalorder %s32, 0
      %p143 = por %p141, %p142
      %s145 = sadd.s32 %s144, 1
      %p148 = scmp.eq.s32.totalorder %s26, 1
      %p149 = scmp.ne.s32.totalorder %s144, %s146
      %p150 = scmp.eq.s32.totalorder %s26, 0
      %p151 = por %p149, %p150
      %p152 = scmp.ne.s32.totalorder %s144, %s146
      %p153 = scmp.eq.s32.totalorder %s31, 1
      %p154 = por %p152, %p153
      %p155 = scmp.ne.s32.totalorder %s146, %s147
      %p156 = scmp.eq.s32.totalorder %s31, 0
      %p157 = por %p155, %p156
      %p158 = scmp.ne.s32.totalorder %s146, %s147
      %p159 = scmp.eq.s32.totalorder %s32, 1
      %p160 = por %p158, %p159
      %p162 = scmp.ne.s32.totalorder %s147, %s161
      %p163 = scmp.eq.s32.totalorder %s32, 0
      %p164 = por %p162, %p163
      %s166 = sadd.s32 %s165, 1
      %p169 = scmp.eq.s32.totalorder %s26, 1
      %p170 = scmp.ne.s32.totalorder %s165, %s167
      %p171 = scmp.eq.s32.totalorder %s26, 0
      %p172 = por %p170, %p171
      %p173 = scmp.ne.s32.totalorder %s165, %s167
      %p174 = scmp.eq.s32.totalorder %s31, 1
      %p175 = por %p173, %p174
      %p176 = scmp.ne.s32.totalorder %s167, %s168
      %p177 = scmp.eq.s32.totalorder %s31, 0
      %p178 = por %p176, %p177
      %p179 = scmp.ne.s32.totalorder %s167, %s168
      %p180 = scmp.eq.s32.totalorder %s32, 1
      %p181 = por %p179, %p180
      %p183 = scmp.ne.s32.totalorder %s168, %s182
      %p184 = scmp.eq.s32.totalorder %s32, 0
      %p185 = por %p183, %p184
      %s187 = sadd.s32 %s186, 1
      %p190 = scmp.eq.s32.totalorder %s26, 1
      %p191 = scmp.ne.s32.totalorder %s186, %s188
      %p192 = scmp.eq.s32.totalorder %s26, 0
      %p193 = por %p191, %p192
      %p194 = scmp.ne.s32.totalorder %s186, %s188
      %p195 = scmp.eq.s32.totalorder %s31, 1
      %p196 = por %p194, %p195
      %p197 = scmp.ne.s32.totalorder %s188, %s189
      %p198 = scmp.eq.s32.totalorder %s31, 0
      %p199 = por %p197, %p198
      %p200 = scmp.ne.s32.totalorder %s188, %s189
      %p201 = scmp.eq.s32.totalorder %s32, 1
      %p202 = por %p200, %p201
      %p204 = scmp.ne.s32.totalorder %s189, %s203
      %p205 = scmp.eq.s32.totalorder %s32, 0
      %p206 = por %p204, %p205
      %s208 = sadd.s32 %s207, 1
      %p211 = scmp.eq.s32.totalorder %s26, 1
      %p212 = scmp.ne.s32.totalorder %s207, %s209
      %p213 = scmp.eq.s32.totalorder %s26, 0
      %p214 = por %p212, %p213
      %p215 = scmp.ne.s32.totalorder %s207, %s209
      %p216 = scmp.eq.s32.totalorder %s31, 1
      %p217 = por %p215, %p216
      %p218 = scmp.ne.s32.totalorder %s209, %s210
      %p219 = scmp.eq.s32.totalorder %s31, 0
      %p220 = por %p218, %p219
      %p221 = scmp.ne.s32.totalorder %s209, %s210
      %p222 = scmp.eq.s32.totalorder %s32, 1
      %p223 = por %p221, %p222
      %p225 = scmp.ne.s32.totalorder %s210, %s224
      %p226 = scmp.eq.s32.totalorder %s32, 0
      %p227 = por %p225, %p226
      %s229 = sadd.s32 %s228, 1
      %p232 = scmp.eq.s32.totalorder %s26, 1
      %p233 = scmp.ne.s32.totalorder %s228, %s230
      %p234 = scmp.eq.s32.totalorder %s26, 0
      %p235 = por %p233, %p234
      %p236 = scmp.ne.s32.totalorder %s228, %s230
      %p237 = scmp.eq.s32.totalorder %s31, 1
      %p238 = por %p236, %p237
      %p239 = scmp.ne.s32.totalorder %s230, %s231
      %p240 = scmp.eq.s32.totalorder %s31, 0
      %p241 = por %p239, %p240
      %p242 = scmp.ne.s32.totalorder %s230, %s231
      %p243 = scmp.eq.s32.totalorder %s32, 1
      %p244 = por %p242, %p243
      %p246 = scmp.ne.s32.totalorder %s231, %s245
      %p247 = scmp.eq.s32.totalorder %s32, 0
      %p248 = por %p246, %p247
      %s250 = sadd.s32 %s249, 1
      %p253 = scmp.eq.s32.totalorder %s26, 1
      %p254 = scmp.ne.s32.totalorder %s249, %s251
      %p255 = scmp.eq.s32.totalorder %s26, 0
      %p256 = por %p254, %p255
      %p257 = scmp.ne.s32.totalorder %s249, %s251
      %p258 = scmp.eq.s32.totalorder %s31, 1
      %p259 = por %p257, %p258
      %p260 = scmp.ne.s32.totalorder %s251, %s252
      %p261 = scmp.eq.s32.totalorder %s31, 0
      %p262 = por %p260, %p261
      %p263 = scmp.ne.s32.totalorder %s251, %s252
      %p264 = scmp.eq.s32.totalorder %s32, 1
      %p265 = por %p263, %p264
      %p267 = scmp.ne.s32.totalorder %s252, %s266
      %p268 = scmp.eq.s32.totalorder %s32, 0
      %p269 = por %p267, %p268
      %s271 = sadd.s32 %s270, 1
      %p274 = scmp.eq.s32.totalorder %s26, 1
      %p275 = scmp.ne.s32.totalorder %s270, %s272
      %p276 = scmp.eq.s32.totalorder %s26, 0
      %p277 = por %p275, %p276
      %p278 = scmp.ne.s32.totalorder %s270, %s272
      %p279 = scmp.eq.s32.totalorder %s31, 1
      %p280 = por %p278, %p279
      %p281 = scmp.ne.s32.totalorder %s272, %s273
      %p282 = scmp.eq.s32.totalorder %s31, 0
      %p283 = por %p281, %p282
      %p284 = scmp.ne.s32.totalorder %s272, %s273
      %p285 = scmp.eq.s32.totalorder %s32, 1
      %p286 = por %p284, %p285
      %p288 = scmp.ne.s32.totalorder %s273, %s287
      %p289 = scmp.eq.s32.totalorder %s32, 0
      %p290 = por %p288, %p289
      %s292 = sadd.s32 %s291, 1
      %p295 = scmp.eq.s32.totalorder %s26, 1
      %p296 = scmp.ne.s32.totalorder %s291, %s293
      %p297 = scmp.eq.s32.totalorder %s26, 0
      %p298 = por %p296, %p297
      %p299 = scmp.ne.s32.totalorder %s291, %s293
      %p300 = scmp.eq.s32.totalorder %s31, 1
      %p301 = por %p299, %p300
      %p302 = scmp.ne.s32.totalorder %s293, %s294
      %p303 = scmp.eq.s32.totalorder %s31, 0
      %p304 = por %p302, %p303
      %p305 = scmp.ne.s32.totalorder %s293, %s294
      %p306 = scmp.eq.s32.totalorder %s32, 1
      %p307 = por %p305, %p306
      %p309 = scmp.ne.s32.totalorder %s294, %s308
      %p310 = scmp.eq.s32.totalorder %s32, 0
      %p311 = por %p309, %p310
      %s313 = sadd.s32 %s312, 1
      %p316 = scmp.eq.s32.totalorder %s26, 1
      %p317 = scmp.ne.s32.totalorder %s312, %s314
      %p318 = scmp.eq.s32.totalorder %s26, 0
      %p319 = por %p317, %p318
      %p320 = scmp.ne.s32.totalorder %s312, %s314
      %p321 = scmp.eq.s32.totalorder %s31, 1
      %p322 = por %p320, %p321
      %p323 = scmp.ne.s32.totalorder %s314, %s315
      %p324 = scmp.eq.s32.totalorder %s31, 0
      %p325 = por %p323, %p324
      %p326 = scmp.ne.s32.totalorder %s314, %s315
      %p327 = scmp.eq.s32.totalorder %s32, 1
      %p328 = por %p326, %p327
      %p330 = scmp.ne.s32.totalorder %s315, %s329
      %p331 = scmp.eq.s32.totalorder %s32, 0
      %p332 = por %p330, %p331
      %s334 = sadd.s32 %s333, 1
      %p337 = scmp.eq.s32.totalorder %s26, 1
      %p338 = scmp.ne.s32.totalorder %s333, %s335
      %p339 = scmp.eq.s32.totalorder %s26, 0
      %p340 = por %p338, %p339
      %p341 = scmp.ne.s32.totalorder %s333, %s335
      %p342 = scmp.eq.s32.totalorder %s31, 1
      %p343 = por %p341, %p342
      %p344 = scmp.ne.s32.totalorder %s335, %s336
      %p345 = scmp.eq.s32.totalorder %s31, 0
      %p346 = por %p344, %p345
      %p347 = scmp.ne.s32.totalorder %s335, %s336
      %p348 = scmp.eq.s32.totalorder %s32, 1
      %p349 = por %p347, %p348
      %p351 = scmp.ne.s32.totalorder %s336, %s350
      %p352 = scmp.eq.s32.totalorder %s32, 0
      %p353 = por %p351, %p352
      %s355 = sadd.s32 %s354, 1
      %p358 = scmp.eq.s32.totalorder %s26, 1
      %p359 = scmp.ne.s32.totalorder %s354, %s356
      %p360 = scmp.eq.s32.totalorder %s26, 0
      %p361 = por %p359, %p360
      %p362 = scmp.ne.s32.totalorder %s354, %s356
      %p363 = scmp.eq.s32.totalorder %s31, 1
      %p364 = por %p362, %p363
      %p365 = scmp.ne.s32.totalorder %s356, %s357
      %p366 = scmp.eq.s32.totalorder %s31, 0
      %p367 = por %p365, %p366
      %p368 = scmp.ne.s32.totalorder %s356, %s357
      %p369 = scmp.eq.s32.totalorder %s32, 1
      %p370 = por %p368, %p369
      %p372 = scmp.ne.s32.totalorder %s357, %s371
      %p373 = scmp.eq.s32.totalorder %s32, 0
      %p374 = por %p372, %p373
      %s376 = sadd.s32 %s375, 1
      %p379 = scmp.eq.s32.totalorder %s26, 1
      %p380 = scmp.ne.s32.totalorder %s375, %s377
      %p381 = scmp.eq.s32.totalorder %s26, 0
      %p382 = por %p380, %p381
      %p383 = scmp.ne.s32.totalorder %s375, %s377
      %p384 = scmp.eq.s32.totalorder %s31, 1
      %p385 = por %p383, %p384
      %p386 = scmp.ne.s32.totalorder %s377, %s378
      %p387 = scmp.eq.s32.totalorder %s31, 0
      %p388 = por %p386, %p387
      %p389 = scmp.ne.s32.totalorder %s377, %s378
      %p390 = scmp.eq.s32.totalorder %s32, 1
      %p391 = por %p389, %p390
      %p393 = scmp.ne.s32.totalorder %s378, %s392
      %p394 = scmp.eq.s32.totalorder %s32, 0
      %p395 = por %p393, %p394
      %s396 = ssub.s32 %s26, %s33
      %p397 = scmp.eq.s32.totalorder %s396, 0
      %s399 = sadd.s32 %s398, 1
      %s400 = scalar_select %p397, %s398, %s399
      %p403 = pneg %p397
      %p404 = scmp.eq.s32.totalorder %s26, 1
      %p405 = por %p403, %p404
      %p406 = scmp.ne.s32.totalorder %s398, %s401
      %p407 = scmp.eq.s32.totalorder %s26, 0
      %p408 = por %p406, %p407
      %p409 = scmp.ne.s32.totalorder %s398, %s401
      %p410 = scmp.eq.s32.totalorder %s31, 1
      %p411 = por %p409, %p410
      %p412 = scmp.ne.s32.totalorder %s401, %s402
      %p413 = scmp.eq.s32.totalorder %s31, 0
      %p414 = por %p412, %p413
      %p415 = scmp.ne.s32.totalorder %s401, %s402
      %p416 = scmp.eq.s32.totalorder %s32, 1
      %p417 = por %p415, %p416
      %p419 = scmp.ne.s32.totalorder %s402, %s418
      %p420 = scmp.eq.s32.totalorder %s32, 0
      %p421 = por %p419, %p420
      %p422 = scmp.le.s32.totalorder 1, %s26
      %p423 = scmp.lt.s32.totalorder %s26, 3
      %p424 = pnand %p422, %p423
      %p425 = pneg %p424
      // Predicated region
      $region9: #{tpu_custom_call.1} parent=5 // pred_check
        _
      $region10: #{tpu_custom_call.1} parent=5 // pred_check_branch
        %427 = sbr.rel (%p424) target = $region12
      $region11: #{tpu_custom_call.1} parent=5 // pred_region
        %s428 = ssub.s32 %s26, 1
        // Predicated region
        $region13: #{tpu_custom_call.1} parent=11 // pred_check
          %p429 = pneg %p73
        $region14: #{tpu_custom_call.1} parent=11 // pred_check_branch
          %431 = sbr.rel (%p429) target = $region16
        $region15: #{tpu_custom_call.1} parent=11 // pred_region
          _
        $region16: #{tpu_custom_call.1} parent=11 // pred_fallthru
          _
        // Predicated region
        $region17: #{tpu_custom_call.1} parent=11 // pred_check
          %p432 = pneg %p94
        $region18: #{tpu_custom_call.1} parent=11 // pred_check_branch
          %434 = sbr.rel (%p432) target = $region20
        $region19: #{tpu_custom_call.1} parent=11 // pred_region
          _
        $region20: #{tpu_custom_call.1} parent=11 // pred_fallthru
          _
        // Predicated region
        $region21: #{tpu_custom_call.1} parent=11 // pred_check
          %p435 = pneg %p115
        $region22: #{tpu_custom_call.1} parent=11 // pred_check_branch
          %437 = sbr.rel (%p435) target = $region24
        $region23: #{tpu_custom_call.1} parent=11 // pred_region
          _
        $region24: #{tpu_custom_call.1} parent=11 // pred_fallthru
          _
        // Predicated region
        $region25: #{tpu_custom_call.1} parent=11 // pred_check
          %p438 = pneg %p136
        $region26: #{tpu_custom_call.1} parent=11 // pred_check_branch
          %440 = sbr.rel (%p438) target = $region28
        $region27: #{tpu_custom_call.1} parent=11 // pred_region
          _
        $region28: #{tpu_custom_call.1} parent=11 // pred_fallthru
          _
        // Predicated region
        $region29: #{tpu_custom_call.1} parent=11 // pred_check
          %p441 = pneg %p157
        $region30: #{tpu_custom_call.1} parent=11 // pred_check_branch
          %443 = sbr.rel (%p441) target = $region32
        $region31: #{tpu_custom_call.1} parent=11 // pred_region
          _
        $region32: #{tpu_custom_call.1} parent=11 // pred_fallthru
          _
        // Predicated region
        $region33: #{tpu_custom_call.1} parent=11 // pred_check
          %p444 = pneg %p178
        $region34: #{tpu_custom_call.1} parent=11 // pred_check_branch
          %446 = sbr.rel (%p444) target = $region36
        $region35: #{tpu_custom_call.1} parent=11 // pred_region
          _
        $region36: #{tpu_custom_call.1} parent=11 // pred_fallthru
          _
        // Predicated region
        $region37: #{tpu_custom_call.1} parent=11 // pred_check
          %p447 = pneg %p199
        $region38: #{tpu_custom_call.1} parent=11 // pred_check_branch
          %449 = sbr.rel (%p447) target = $region40
        $region39: #{tpu_custom_call.1} parent=11 // pred_region
          _
        $region40: #{tpu_custom_call.1} parent=11 // pred_fallthru
          _
        // Predicated region
        $region41: #{tpu_custom_call.1} parent=11 // pred_check
          %p450 = pneg %p220
        $region42: #{tpu_custom_call.1} parent=11 // pred_check_branch
          %452 = sbr.rel (%p450) target = $region44
        $region43: #{tpu_custom_call.1} parent=11 // pred_region
          _
        $region44: #{tpu_custom_call.1} parent=11 // pred_fallthru
          _
        // Predicated region
        $region45: #{tpu_custom_call.1} parent=11 // pred_check
          %p453 = pneg %p241
        $region46: #{tpu_custom_call.1} parent=11 // pred_check_branch
          %455 = sbr.rel (%p453) target = $region48
        $region47: #{tpu_custom_call.1} parent=11 // pred_region
          _
        $region48: #{tpu_custom_call.1} parent=11 // pred_fallthru
          _
        // Predicated region
        $region49: #{tpu_custom_call.1} parent=11 // pred_check
          %p456 = pneg %p262
        $region50: #{tpu_custom_call.1} parent=11 // pred_check_branch
          %458 = sbr.rel (%p456) target = $region52
        $region51: #{tpu_custom_call.1} parent=11 // pred_region
          _
        $region52: #{tpu_custom_call.1} parent=11 // pred_fallthru
          _
        // Predicated region
        $region53: #{tpu_custom_call.1} parent=11 // pred_check
          %p459 = pneg %p283
        $region54: #{tpu_custom_call.1} parent=11 // pred_check_branch
          %461 = sbr.rel (%p459) target = $region56
        $region55: #{tpu_custom_call.1} parent=11 // pred_region
          _
        $region56: #{tpu_custom_call.1} parent=11 // pred_fallthru
          _
        // Predicated region
        $region57: #{tpu_custom_call.1} parent=11 // pred_check
          %p462 = pneg %p304
        $region58: #{tpu_custom_call.1} parent=11 // pred_check_branch
          %464 = sbr.rel (%p462) target = $region60
        $region59: #{tpu_custom_call.1} parent=11 // pred_region
          _
        $region60: #{tpu_custom_call.1} parent=11 // pred_fallthru
          _
        // Predicated region
        $region61: #{tpu_custom_call.1} parent=11 // pred_check
          %p465 = pneg %p325
        $region62: #{tpu_custom_call.1} parent=11 // pred_check_branch
          %467 = sbr.rel (%p465) target = $region64
        $region63: #{tpu_custom_call.1} parent=11 // pred_region
          _
        $region64: #{tpu_custom_call.1} parent=11 // pred_fallthru
          _
        // Predicated region
        $region65: #{tpu_custom_call.1} parent=11 // pred_check
          %p468 = pneg %p346
        $region66: #{tpu_custom_call.1} parent=11 // pred_check_branch
          %470 = sbr.rel (%p468) target = $region68
        $region67: #{tpu_custom_call.1} parent=11 // pred_region
          _
        $region68: #{tpu_custom_call.1} parent=11 // pred_fallthru
          _
        // Predicated region
        $region69: #{tpu_custom_call.1} parent=11 // pred_check
          %p471 = pneg %p367
        $region70: #{tpu_custom_call.1} parent=11 // pred_check_branch
          %473 = sbr.rel (%p471) target = $region72
        $region71: #{tpu_custom_call.1} parent=11 // pred_region
          _
        $region72: #{tpu_custom_call.1} parent=11 // pred_fallthru
          _
        // Predicated region
        $region73: #{tpu_custom_call.1} parent=11 // pred_check
          %p474 = pneg %p388
        $region74: #{tpu_custom_call.1} parent=11 // pred_check_branch
          %476 = sbr.rel (%p474) target = $region76
        $region75: #{tpu_custom_call.1} parent=11 // pred_region
          _
        $region76: #{tpu_custom_call.1} parent=11 // pred_fallthru
          _
      $region12: #{tpu_custom_call.1} parent=5 // pred_fallthru
        _
      %p477 = scmp.lt.s32.totalorder %s26, 2
      // Predicated region
      $region77: #{tpu_custom_call.1} parent=5 // pred_check
        %p478 = pneg %p477
      $region78: #{tpu_custom_call.1} parent=5 // pred_check_branch
        %480 = sbr.rel (%p478) target = $region80
      $region79: #{tpu_custom_call.1} parent=5 // pred_region
        // Predicated region
        $region81: #{tpu_custom_call.1} parent=79 // pred_check
          %p481 = pneg %p46
        $region82: #{tpu_custom_call.1} parent=79 // pred_check_branch
          %483 = sbr.rel (%p481) target = $region84
        $region83: #{tpu_custom_call.1} parent=79 // pred_region
          %s484 = smul.u32 2, %s26
          %p485 = scmp.lt.s32.totalorder %s484, 3
          %s486 = scalar_select %p485, %s484, 3
          %s487 = smul.addr %s486, 8
          %s488 = scalar_lea.vmem %s0, %s487
          %s489 = smul.u32 2, %s26
        $region84: #{tpu_custom_call.1} parent=79 // pred_fallthru
          _
      $region80: #{tpu_custom_call.1} parent=5 // pred_fallthru
        _
      %p490 = scmp.le.s32.totalorder 1, %s26
      %p491 = scmp.lt.s32.totalorder %s26, 3
      %p492 = pnand %p490, %p491
      %p493 = pneg %p492
      // Predicated region
      $region85: #{tpu_custom_call.1} parent=5 // pred_check
        _
      $region86: #{tpu_custom_call.1} parent=5 // pred_check_branch
        %495 = sbr.rel (%p492) target = $region88
      $region87: #{tpu_custom_call.1} parent=5 // pred_region
        %s496 = ssub.s32 %s26, 1
        %s497 = smul.u32 2, %s31
        %p498 = scmp.lt.s32.totalorder %s497, 3
        %s499 = scalar_select %p498, %s497, 3
        %s500 = smul.addr %s499, 8
        %s501 = scalar_lea.vmem %s0, %s500
        %p502 = pneg %p52
        %p503 = pneg %p49
        %p504 = pneg %p73
        %p505 = pneg %p70
        %p506 = pneg %p94
        %p507 = pneg %p91
        %p508 = pneg %p115
        %p509 = pneg %p112
        %p510 = pneg %p136
        %p511 = pneg %p133
        %p512 = pneg %p157
        %p513 = pneg %p154
        %p514 = pneg %p178
        %p515 = pneg %p175
        %p516 = pneg %p199
        %p517 = pneg %p196
        %p518 = pneg %p220
        %p519 = pneg %p217
        %p520 = pneg %p241
        %p521 = pneg %p238
        %p522 = pneg %p262
        %p523 = pneg %p259
        %p524 = pneg %p283
        %p525 = pneg %p280
        %p526 = pneg %p304
        %p527 = pneg %p301
        %p528 = pneg %p325
        %p529 = pneg %p322
        %p530 = pneg %p346
        %p531 = pneg %p343
        %p532 = pneg %p367
        %p533 = pneg %p364
        %p534 = pneg %p388
        %p535 = pneg %p385
        %p536 = pneg %p414
        %p537 = pneg %p411
        %s538 = sand.u32 %s401, 1
        %s539 = scalar_lea.sflag [#allocation3], %s538
        %s540 = sand.u32 %s401, 1
        %s541 = smul.addr %s540, 2
        %s542 = scalar_lea.vmem [#allocation2], %s541
        %s543 = smul.u32 2, %s31
        %p544 = scmp.lt.s32.totalorder %s543, 3
        %s545 = scalar_select %p544, %s543, 3
        %s546 = smul.addr %s545, 8
        %s547 = scalar_lea.vmem %s0, %s546
        %s548 = smul.u32 2, %s31
        %v550 = vld [vmem:[%s547] sm:$0xff]
        %v551 = vld [vmem:[%s547 + $0x8] sm:$0xff]
        %v552 = vld [vmem:[%s1] sm:$0xff]
        %v553 = vld [vmem:[%s1 + $0x8] sm:$0xf]
        %v554 = vld [vmem:[%s2] sm:$0x1]
        %v556 = vlaneseq
        %v557 = vshrl.u32 %v556, 7
        %v558 = vsub.s32 0, %v557
        %v559 = vrot.slane %v554, %v558
        %vm561 = vcmask 97280
        %v563 = vsel %vm561, %v550, 0
        %v566 = vsel %vm561, %v551, 0
        %vm568 = vcmask 1043456
        %v570 = vsel %vm568, %v553, 0
        %572 = vmatprep.subr.mxu0 0.0
        %573 = vmatpush1.msra.mxu0 %v552
        %574 = vmatprep.subr.mxu0 0.0
        %575 = vmatpush1.msra.mxu0 %v570
        %576 = vmatprep.subr.mxu0 0.0
        %577 = vmatpush1.msra.mxu0 0.0
        %578 = vmatprep.subr.mxu0 0.0
        %579 = vmatpush1.msra.mxu0 0.0
        %580 = vmatprep.subr.mxu0 0.0
        %581 = vmatpush1.msra.mxu0 0.0
        %582 = vmatprep.subr.mxu0 0.0
        %583 = vmatpush1.msra.mxu0 0.0
        %584 = vmatprep.subr.mxu0 0.0
        %585 = vmatpush1.msra.mxu0 0.0
        %586 = vmatprep.subr.mxu0 0.0
        %587 = vmatpush1.msra.mxu0 0.0
        %588 = vmatprep.subr.mxu0 0.0
        %589 = vmatpush1.msra.mxu0 0.0
        %590 = vmatprep.subr.mxu0 0.0
        %591 = vmatpush1.msra.mxu0 0.0
        %592 = vmatprep.subr.mxu0 0.0
        %593 = vmatpush1.msra.mxu0 0.0
        %594 = vmatprep.subr.mxu0 0.0
        %595 = vmatpush1.msra.mxu0 0.0
        %596 = vmatprep.subr.mxu0 0.0
        %597 = vmatpush1.msra.mxu0 0.0
        %598 = vmatprep.subr.mxu0 0.0
        %599 = vmatpush1.msra.mxu0 0.0
        %600 = vmatprep.subr.mxu0 0.0
        %601 = vmatpush1.msra.mxu0 0.0
        %602 = vmatprep.subr.mxu0 0.0
        %603 = vmatpush1.msra.mxu0 0.0
        %604 = vmatprep.subr.mxu0 0.0
        %605 = vmatpush1.msra.mxu0 0.0
        %606 = vmatprep.subr.mxu0 0.0
        %607 = vmatpush1.msra.mxu0 0.0
        %608 = vmatprep.subr.mxu0 0.0
        %609 = vmatpush1.msra.mxu0 0.0
        %610 = vmatprep.subr.mxu0 0.0
        %611 = vmatpush1.msra.mxu0 0.0
        %612 = vmatprep.subr.mxu0 0.0
        %613 = vmatpush1.msra.mxu0 0.0
        %614 = vmatprep.subr.mxu0 0.0
        %615 = vmatpush1.msra.mxu0 0.0
        %616 = vmatprep.subr.mxu0 0.0
        %617 = vmatpush1.msra.mxu0 0.0
        %618 = vmatprep.subr.mxu0 0.0
        %619 = vmatpush1.msra.mxu0 0.0
        %620 = vmatprep.subr.mxu0 0.0
        %621 = vmatpush1.msra.mxu0 0.0
        %622 = vmatprep.subr.mxu0 0.0
        %623 = vmatpush1.msra.mxu0 0.0
        %624 = vmatprep.subr.mxu0 0.0
        %625 = vmatpush1.msra.mxu0 0.0
        %626 = vmatprep.subr.mxu0 0.0
        %627 = vmatpush1.msra.mxu0 0.0
        %628 = vmatprep.subr.mxu0 0.0
        %629 = vmatpush1.msra.mxu0 0.0
        %630 = vmatprep.subr.mxu0 0.0
        %631 = vmatpush1.msra.mxu0 0.0
        %632 = vmatprep.subr.mxu0 0.0
        %633 = vmatpush1.msra.mxu0 0.0
        %634 = vmatprep.subr.mxu0 0.0
        %635 = vmatpush1.msra.mxu0 0.0
        %636 = vmatprep.mubr.f32.mxu0 0.0
        %637 = vmatmul.mubr.f32.gmra.mrb[0].mxu0 %v563
        %v638 = vpop.f32.mrb[0].mxu0
        %v639 = vadd.f32 %v559, %v638
        %v640 = vpop.f32.mrb[0].mxu0
        %641 = vmatprep.mubr.f32.mxu0 0.0
        %642 = vmatmul.mubr.f32.gmra.mrb[0].mxu0 %v566
        %v643 = vpop.f32.mrb[0].mxu0
        %v644 = vadd.f32 %v559, %v643
        %v645 = vpop.f32.mrb[0].mxu0
        %646 = vdwg.mxu0
        %v647 = vld [vmem:[%s3] sm:$0xff]
        %v648 = vld [vmem:[%s3 + $0x8] sm:$0xff]
        %v649 = vld [vmem:[%s3 + $0x10] sm:$0xff]
        %v650 = vld [vmem:[%s3 + $0x18] sm:$0xff]
        %v651 = vld [vmem:[%s4] sm:$0x1]
        %v653 = vlaneseq
        %v654 = vshrl.u32 %v653, 7
        %v655 = vsub.s32 0, %v654
        %v656 = vrot.slane %v651, %v655
        %vm658 = vcmask 261120
        %v660 = vsel %vm658, %v639, 0
        %v663 = vsel %vm658, %v644, 0
        %665 = vmatprep.subr.mxu0 0.0
        %666 = vmatpush1.msra.mxu0 %v647
        %667 = vmatprep.subr.mxu0 0.0
        %668 = vmatpush1.msra.mxu0 %v648
        %669 = vmatprep.subr.mxu0 0.0
        %670 = vmatpush1.msra.mxu0 %v649
        %671 = vmatprep.subr.mxu0 0.0
        %672 = vmatpush1.msra.mxu0 %v650
        %673 = vmatprep.subr.mxu0 0.0
        %674 = vmatpush1.msra.mxu0 0.0
        %675 = vmatprep.subr.mxu0 0.0
        %676 = vmatpush1.msra.mxu0 0.0
        %677 = vmatprep.subr.mxu0 0.0
        %678 = vmatpush1.msra.mxu0 0.0
        %679 = vmatprep.subr.mxu0 0.0
        %680 = vmatpush1.msra.mxu0 0.0
        %681 = vmatprep.subr.mxu0 0.0
        %682 = vmatpush1.msra.mxu0 0.0
        %683 = vmatprep.subr.mxu0 0.0
        %684 = vmatpush1.msra.mxu0 0.0
        %685 = vmatprep.subr.mxu0 0.0
        %686 = vmatpush1.msra.mxu0 0.0
        %687 = vmatprep.subr.mxu0 0.0
        %688 = vmatpush1.msra.mxu0 0.0
        %689 = vmatprep.subr.mxu0 0.0
        %690 = vmatpush1.msra.mxu0 0.0
        %691 = vmatprep.subr.mxu0 0.0
        %692 = vmatpush1.msra.mxu0 0.0
        %693 = vmatprep.subr.mxu0 0.0
        %694 = vmatpush1.msra.mxu0 0.0
        %695 = vmatprep.subr.mxu0 0.0
        %696 = vmatpush1.msra.mxu0 0.0
        %697 = vmatprep.subr.mxu0 0.0
        %698 = vmatpush1.msra.mxu0 0.0
        %699 = vmatprep.subr.mxu0 0.0
        %700 = vmatpush1.msra.mxu0 0.0
        %701 = vmatprep.subr.mxu0 0.0
        %702 = vmatpush1.msra.mxu0 0.0
        %703 = vmatprep.subr.mxu0 0.0
        %704 = vmatpush1.msra.mxu0 0.0
        %705 = vmatprep.subr.mxu0 0.0
        %706 = vmatpush1.msra.mxu0 0.0
        %707 = vmatprep.subr.mxu0 0.0
        %708 = vmatpush1.msra.mxu0 0.0
        %709 = vmatprep.subr.mxu0 0.0
        %710 = vmatpush1.msra.mxu0 0.0
        %711 = vmatprep.subr.mxu0 0.0
        %712 = vmatpush1.msra.mxu0 0.0
        %713 = vmatprep.subr.mxu0 0.0
        %714 = vmatpush1.msra.mxu0 0.0
        %715 = vmatprep.subr.mxu0 0.0
        %716 = vmatpush1.msra.mxu0 0.0
        %717 = vmatprep.subr.mxu0 0.0
        %718 = vmatpush1.msra.mxu0 0.0
        %719 = vmatprep.subr.mxu0 0.0
        %720 = vmatpush1.msra.mxu0 0.0
        %721 = vmatprep.subr.mxu0 0.0
        %722 = vmatpush1.msra.mxu0 0.0
        %723 = vmatprep.subr.mxu0 0.0
        %724 = vmatpush1.msra.mxu0 0.0
        %725 = vmatprep.subr.mxu0 0.0
        %726 = vmatpush1.msra.mxu0 0.0
        %727 = vmatprep.subr.mxu0 0.0
        %728 = vmatpush1.msra.mxu0 0.0
        %729 = vmatprep.mubr.f32.mxu0 0.0
        %730 = vmatmul.mubr.f32.gmra.mrb[0].mxu0 %v660
        %v731 = vpop.f32.mrb[0].mxu0
        %v732 = vadd.f32 %v656, %v731
        %v733 = vpop.f32.mrb[0].mxu0
        %734 = vmatprep.mubr.f32.mxu0 0.0
        %735 = vmatmul.mubr.f32.gmra.mrb[0].mxu0 %v663
        %v736 = vpop.f32.mrb[0].mxu0
        %v737 = vadd.f32 %v656, %v736
        %v738 = vpop.f32.mrb[0].mxu0
        %739 = vdwg.mxu0
        %v740 = vmul.f32 %v732, 0.25
        %v741 = vmul.f32 %v737, 0.25
        %743 = vrot.lane.b32.xlu0 %v732, 96
        %v744 = vpop.permute.xlu0 %743
        %vm745 = vcmask 130048
        %v747 = vsel %vm745, %v740, 0
        %v749 = vsel %vm745, %v744, 0
        %751 = vmatprep.subr.mxu0 0.0
        %752 = vmatpush1.xpose.msra.mxu0 %v749
        %753 = vmatprep.subr.mxu0 0.0
        %754 = vmatpush1.xpose.msra.mxu0 0.0
        %755 = vmatprep.subr.mxu0 0.0
        %756 = vmatpush1.xpose.msra.mxu0 0.0
        %757 = vmatprep.subr.mxu0 0.0
        %758 = vmatpush1.xpose.msra.mxu0 0.0
        %759 = vmatprep.subr.mxu0 0.0
        %760 = vmatpush1.xpose.msra.mxu0 0.0
        %761 = vmatprep.subr.mxu0 0.0
        %762 = vmatpush1.xpose.msra.mxu0 0.0
        %763 = vmatprep.subr.mxu0 0.0
        %764 = vmatpush1.xpose.msra.mxu0 0.0
        %765 = vmatprep.subr.mxu0 0.0
        %766 = vmatpush1.xpose.msra.mxu0 0.0
        %767 = vmatprep.subr.mxu0 0.0
        %768 = vmatpush1.xpose.msra.mxu0 0.0
        %769 = vmatprep.subr.mxu0 0.0
        %770 = vmatpush1.xpose.msra.mxu0 0.0
        %771 = vmatprep.subr.mxu0 0.0
        %772 = vmatpush1.xpose.msra.mxu0 0.0
        %773 = vmatprep.subr.mxu0 0.0
        %774 = vmatpush1.xpose.msra.mxu0 0.0
        %775 = vmatprep.subr.mxu0 0.0
        %776 = vmatpush1.xpose.msra.mxu0 0.0
        %777 = vmatprep.subr.mxu0 0.0
        %778 = vmatpush1.xpose.msra.mxu0 0.0
        %779 = vmatprep.subr.mxu0 0.0
        %780 = vmatpush1.xpose.msra.mxu0 0.0
        %781 = vmatprep.subr.mxu0 0.0
        %782 = vmatpush1.xpose.msra.mxu0 0.0
        %783 = vmatprep.subr.mxu0 0.0
        %784 = vmatpush1.xpose.msra.mxu0 0.0
        %785 = vmatprep.subr.mxu0 0.0
        %786 = vmatpush1.xpose.msra.mxu0 0.0
        %787 = vmatprep.subr.mxu0 0.0
        %788 = vmatpush1.xpose.msra.mxu0 0.0
        %789 = vmatprep.subr.mxu0 0.0
        %790 = vmatpush1.xpose.msra.mxu0 0.0
        %791 = vmatprep.subr.mxu0 0.0
        %792 = vmatpush1.xpose.msra.mxu0 0.0
        %793 = vmatprep.subr.mxu0 0.0
        %794 = vmatpush1.xpose.msra.mxu0 0.0
        %795 = vmatprep.subr.mxu0 0.0
        %796 = vmatpush1.xpose.msra.mxu0 0.0
        %797 = vmatprep.subr.mxu0 0.0
        %798 = vmatpush1.xpose.msra.mxu0 0.0
        %799 = vmatprep.subr.mxu0 0.0
        %800 = vmatpush1.xpose.msra.mxu0 0.0
        %801 = vmatprep.subr.mxu0 0.0
        %802 = vmatpush1.xpose.msra.mxu0 0.0
        %803 = vmatprep.subr.mxu0 0.0
        %804 = vmatpush1.xpose.msra.mxu0 0.0
        %805 = vmatprep.subr.mxu0 0.0
        %806 = vmatpush1.xpose.msra.mxu0 0.0
        %807 = vmatprep.subr.mxu0 0.0
        %808 = vmatpush1.xpose.msra.mxu0 0.0
        %809 = vmatprep.subr.mxu0 0.0
        %810 = vmatpush1.xpose.msra.mxu0 0.0
        %811 = vmatprep.subr.mxu0 0.0
        %812 = vmatpush1.xpose.msra.mxu0 0.0
        %813 = vmatprep.subr.mxu0 0.0
        %814 = vmatpush1.xpose.msra.mxu0 0.0
        %815 = vmatprep.mubr.f32.mxu0 0.0
        %816 = vmatmul.mubr.f32.gmra.mrb[0].mxu0 %v747
        %v817 = vpop.f32.mrb[0].mxu0
        %v818 = vadd.f32 0.0, %v817
        %v819 = vpop.f32.mrb[0].mxu0
        %820 = vdwg.mxu0
        %822 = vrot.lane.b32.xlu0 %v737, 96
        %v823 = vpop.permute.xlu0 %822
        %v825 = vsel %vm745, %v741, 0
        %v827 = vsel %vm745, %v823, 0
        %829 = vmatprep.subr.mxu0 0.0
        %830 = vmatpush1.xpose.msra.mxu0 %v827
        %831 = vmatprep.subr.mxu0 0.0
        %832 = vmatpush1.xpose.msra.mxu0 0.0
        %833 = vmatprep.subr.mxu0 0.0
        %834 = vmatpush1.xpose.msra.mxu0 0.0
        %835 = vmatprep.subr.mxu0 0.0
        %836 = vmatpush1.xpose.msra.mxu0 0.0
        %837 = vmatprep.subr.mxu0 0.0
        %838 = vmatpush1.xpose.msra.mxu0 0.0
        %839 = vmatprep.subr.mxu0 0.0
        %840 = vmatpush1.xpose.msra.mxu0 0.0
        %841 = vmatprep.subr.mxu0 0.0
        %842 = vmatpush1.xpose.msra.mxu0 0.0
        %843 = vmatprep.subr.mxu0 0.0
        %844 = vmatpush1.xpose.msra.mxu0 0.0
        %845 = vmatprep.subr.mxu0 0.0
        %846 = vmatpush1.xpose.msra.mxu0 0.0
        %847 = vmatprep.subr.mxu0 0.0
        %848 = vmatpush1.xpose.msra.mxu0 0.0
        %849 = vmatprep.subr.mxu0 0.0
        %850 = vmatpush1.xpose.msra.mxu0 0.0
        %851 = vmatprep.subr.mxu0 0.0
        %852 = vmatpush1.xpose.msra.mxu0 0.0
        %853 = vmatprep.subr.mxu0 0.0
        %854 = vmatpush1.xpose.msra.mxu0 0.0
        %855 = vmatprep.subr.mxu0 0.0
        %856 = vmatpush1.xpose.msra.mxu0 0.0
        %857 = vmatprep.subr.mxu0 0.0
        %858 = vmatpush1.xpose.msra.mxu0 0.0
        %859 = vmatprep.subr.mxu0 0.0
        %860 = vmatpush1.xpose.msra.mxu0 0.0
        %861 = vmatprep.subr.mxu0 0.0
        %862 = vmatpush1.xpose.msra.mxu0 0.0
        %863 = vmatprep.subr.mxu0 0.0
        %864 = vmatpush1.xpose.msra.mxu0 0.0
        %865 = vmatprep.subr.mxu0 0.0
        %866 = vmatpush1.xpose.msra.mxu0 0.0
        %867 = vmatprep.subr.mxu0 0.0
        %868 = vmatpush1.xpose.msra.mxu0 0.0
        %869 = vmatprep.subr.mxu0 0.0
        %870 = vmatpush1.xpose.msra.mxu0 0.0
        %871 = vmatprep.subr.mxu0 0.0
        %872 = vmatpush1.xpose.msra.mxu0 0.0
        %873 = vmatprep.subr.mxu0 0.0
        %874 = vmatpush1.xpose.msra.mxu0 0.0
        %875 = vmatprep.subr.mxu0 0.0
        %876 = vmatpush1.xpose.msra.mxu0 0.0
        %877 = vmatprep.subr.mxu0 0.0
        %878 = vmatpush1.xpose.msra.mxu0 0.0
        %879 = vmatprep.subr.mxu0 0.0
        %880 = vmatpush1.xpose.msra.mxu0 0.0
        %881 = vmatprep.subr.mxu0 0.0
        %882 = vmatpush1.xpose.msra.mxu0 0.0
        %883 = vmatprep.subr.mxu0 0.0
        %884 = vmatpush1.xpose.msra.mxu0 0.0
        %885 = vmatprep.subr.mxu0 0.0
        %886 = vmatpush1.xpose.msra.mxu0 0.0
        %887 = vmatprep.subr.mxu0 0.0
        %888 = vmatpush1.xpose.msra.mxu0 0.0
        %889 = vmatprep.subr.mxu0 0.0
        %890 = vmatpush1.xpose.msra.mxu0 0.0
        %891 = vmatprep.subr.mxu0 0.0
        %892 = vmatpush1.xpose.msra.mxu0 0.0
        %893 = vmatprep.mubr.f32.mxu0 0.0
        %894 = vmatmul.mubr.f32.gmra.mrb[0].mxu0 %v825
        %v895 = vpop.f32.mrb[0].mxu0
        %v896 = vadd.f32 0.0, %v895
        %v897 = vpop.f32.mrb[0].mxu0
        %898 = vdwg.mxu0
        %vm899 = vcmask 64512
        %v900 = vsel %vm899, %v818, -inf
        %901 = vmax.xlane.f32.xlu0 %v900
        %v902 = vpop.xlane.xlu0 %901
        %v903 = vsel %vm899, %v896, -inf
        %904 = vmax.xlane.f32.xlu0 %v903
        %v905 = vpop.xlane.xlu0 %904
        %v906 = vsub.f32 %v818, %v902
        %v907 = vsub.f32 %v896, %v905
        %v908 = vmul.f32 %v906, 1.442695
        %v909 = vpow.pop %v908
        %v910 = vmul.f32 %v907, 1.442695
        %v911 = vpow.pop %v910
        %v912 = vsel %vm899, %v909, 0.0
        %913 = vadd.xlane.f32.xlu0 %v912
        %v914 = vpop.xlane.xlu0 %913
        %v915 = vsel %vm899, %v911, 0.0
        %916 = vadd.xlane.f32.xlu0 %v915
        %v917 = vpop.xlane.xlu0 %916
        %v918 = vrcp.pop %v914
        %v919 = vrcp.pop %v917
        %v920 = vmul.f32 %v909, %v918
        %v921 = vmul.f32 %v911, %v919
        %922 = vrot.lane.b32.xlu0 %v732, 64
        %v923 = vpop.permute.xlu0 %922
        %v926 = vsel %vm899, %v920, 0
        %928 = vmatprep.subr.mxu0 0.0
        %929 = vmatpush1.msra.mxu0 %v923
        %930 = vmatprep.subr.mxu0 0.0
        %931 = vmatpush1.msra.mxu0 0.0
        %932 = vmatprep.subr.mxu0 0.0
        %933 = vmatpush1.msra.mxu0 0.0
        %934 = vmatprep.subr.mxu0 0.0
        %935 = vmatpush1.msra.mxu0 0.0
        %936 = vmatprep.subr.mxu0 0.0
        %937 = vmatpush1.msra.mxu0 0.0
        %938 = vmatprep.subr.mxu0 0.0
        %939 = vmatpush1.msra.mxu0 0.0
        %940 = vmatprep.subr.mxu0 0.0
        %941 = vmatpush1.msra.mxu0 0.0
        %942 = vmatprep.subr.mxu0 0.0
        %943 = vmatpush1.msra.mxu0 0.0
        %944 = vmatprep.subr.mxu0 0.0
        %945 = vmatpush1.msra.mxu0 0.0
        %946 = vmatprep.subr.mxu0 0.0
        %947 = vmatpush1.msra.mxu0 0.0
        %948 = vmatprep.subr.mxu0 0.0
        %949 = vmatpush1.msra.mxu0 0.0
        %950 = vmatprep.subr.mxu0 0.0
        %951 = vmatpush1.msra.mxu0 0.0
        %952 = vmatprep.subr.mxu0 0.0
        %953 = vmatpush1.msra.mxu0 0.0
        %954 = vmatprep.subr.mxu0 0.0
        %955 = vmatpush1.msra.mxu0 0.0
        %956 = vmatprep.subr.mxu0 0.0
        %957 = vmatpush1.msra.mxu0 0.0
        %958 = vmatprep.subr.mxu0 0.0
        %959 = vmatpush1.msra.mxu0 0.0
        %960 = vmatprep.subr.mxu0 0.0
        %961 = vmatpush1.msra.mxu0 0.0
        %962 = vmatprep.subr.mxu0 0.0
        %963 = vmatpush1.msra.mxu0 0.0
        %964 = vmatprep.subr.mxu0 0.0
        %965 = vmatpush1.msra.mxu0 0.0
        %966 = vmatprep.subr.mxu0 0.0
        %967 = vmatpush1.msra.mxu0 0.0
        %968 = vmatprep.subr.mxu0 0.0
        %969 = vmatpush1.msra.mxu0 0.0
        %970 = vmatprep.subr.mxu0 0.0
        %971 = vmatpush1.msra.mxu0 0.0
        %972 = vmatprep.subr.mxu0 0.0
        %973 = vmatpush1.msra.mxu0 0.0
        %974 = vmatprep.subr.mxu0 0.0
        %975 = vmatpush1.msra.mxu0 0.0
        %976 = vmatprep.subr.mxu0 0.0
        %977 = vmatpush1.msra.mxu0 0.0
        %978 = vmatprep.subr.mxu0 0.0
        %979 = vmatpush1.msra.mxu0 0.0
        %980 = vmatprep.subr.mxu0 0.0
        %981 = vmatpush1.msra.mxu0 0.0
        %982 = vmatprep.subr.mxu0 0.0
        %983 = vmatpush1.msra.mxu0 0.0
        %984 = vmatprep.subr.mxu0 0.0
        %985 = vmatpush1.msra.mxu0 0.0
        %986 = vmatprep.subr.mxu0 0.0
        %987 = vmatpush1.msra.mxu0 0.0
        %988 = vmatprep.subr.mxu0 0.0
        %989 = vmatpush1.msra.mxu0 0.0
        %990 = vmatprep.subr.mxu0 0.0
        %991 = vmatpush1.msra.mxu0 0.0
        %992 = vmatprep.mubr.f32.mxu0 0.0
        %993 = vmatmul.mubr.f32.gmra.mrb[0].mxu0 %v926
        %v994 = vpop.f32.mrb[0].mxu0
        %v995 = vadd.f32 0.0, %v994
        %v996 = vpop.f32.mrb[0].mxu0
        %997 = vdwg.mxu0
        %998 = vrot.lane.b32.xlu0 %v737, 64
        %v999 = vpop.permute.xlu0 %998
        %v1002 = vsel %vm899, %v921, 0
        %1004 = vmatprep.subr.mxu0 0.0
        %1005 = vmatpush1.msra.mxu0 %v999
        %1006 = vmatprep.subr.mxu0 0.0
        %1007 = vmatpush1.msra.mxu0 0.0
        %1008 = vmatprep.subr.mxu0 0.0
        %1009 = vmatpush1.msra.mxu0 0.0
        %1010 = vmatprep.subr.mxu0 0.0
        %1011 = vmatpush1.msra.mxu0 0.0
        %1012 = vmatprep.subr.mxu0 0.0
        %1013 = vmatpush1.msra.mxu0 0.0
        %1014 = vmatprep.subr.mxu0 0.0
        %1015 = vmatpush1.msra.mxu0 0.0
        %1016 = vmatprep.subr.mxu0 0.0
        %1017 = vmatpush1.msra.mxu0 0.0
        %1018 = vmatprep.subr.mxu0 0.0
        %1019 = vmatpush1.msra.mxu0 0.0
        %1020 = vmatprep.subr.mxu0 0.0
        %1021 = vmatpush1.msra.mxu0 0.0
        %1022 = vmatprep.subr.mxu0 0.0
        %1023 = vmatpush1.msra.mxu0 0.0
        %1024 = vmatprep.subr.mxu0 0.0
        %1025 = vmatpush1.msra.mxu0 0.0
        %1026 = vmatprep.subr.mxu0 0.0
        %1027 = vmatpush1.msra.mxu0 0.0
        %1028 = vmatprep.subr.mxu0 0.0
        %1029 = vmatpush1.msra.mxu0 0.0
        %1030 = vmatprep.subr.mxu0 0.0
        %1031 = vmatpush1.msra.mxu0 0.0
        %1032 = vmatprep.subr.mxu0 0.0
        %1033 = vmatpush1.msra.mxu0 0.0
        %1034 = vmatprep.subr.mxu0 0.0
        %1035 = vmatpush1.msra.mxu0 0.0
        %1036 = vmatprep.subr.mxu0 0.0
        %1037 = vmatpush1.msra.mxu0 0.0
        %1038 = vmatprep.subr.mxu0 0.0
        %1039 = vmatpush1.msra.mxu0 0.0
        %1040 = vmatprep.subr.mxu0 0.0
        %1041 = vmatpush1.msra.mxu0 0.0
        %1042 = vmatprep.subr.mxu0 0.0
        %1043 = vmatpush1.msra.mxu0 0.0
        %1044 = vmatprep.subr.mxu0 0.0
        %1045 = vmatpush1.msra.mxu0 0.0
        %1046 = vmatprep.subr.mxu0 0.0
        %1047 = vmatpush1.msra.mxu0 0.0
        %1048 = vmatprep.subr.mxu0 0.0
        %1049 = vmatpush1.msra.mxu0 0.0
        %1050 = vmatprep.subr.mxu0 0.0
        %1051 = vmatpush1.msra.mxu0 0.0
        %1052 = vmatprep.subr.mxu0 0.0
        %1053 = vmatpush1.msra.mxu0 0.0
        %1054 = vmatprep.subr.mxu0 0.0
        %1055 = vmatpush1.msra.mxu0 0.0
        %1056 = vmatprep.subr.mxu0 0.0
        %1057 = vmatpush1.msra.mxu0 0.0
        %1058 = vmatprep.subr.mxu0 0.0
        %1059 = vmatpush1.msra.mxu0 0.0
        %1060 = vmatprep.subr.mxu0 0.0
        %1061 = vmatpush1.msra.mxu0 0.0
        %1062 = vmatprep.subr.mxu0 0.0
        %1063 = vmatpush1.msra.mxu0 0.0
        %1064 = vmatprep.subr.mxu0 0.0
        %1065 = vmatpush1.msra.mxu0 0.0
        %1066 = vmatprep.subr.mxu0 0.0
        %1067 = vmatpush1.msra.mxu0 0.0
        %1068 = vmatprep.mubr.f32.mxu0 0.0
        %1069 = vmatmul.mubr.f32.gmra.mrb[0].mxu0 %v1002
        %v1070 = vpop.f32.mrb[0].mxu0
        %v1071 = vadd.f32 0.0, %v1070
        %v1072 = vpop.f32.mrb[0].mxu0
        %1073 = vdwg.mxu0
        %1074 = vrot.lane.b32.xlu0 %v740, 112
        %v1075 = vpop.permute.xlu0 %1074
        %1076 = vrot.lane.b32.xlu0 %v732, 80
        %v1077 = vpop.permute.xlu0 %1076
        %v1078 = vsel %vm745, %v1075, 0
        %v1080 = vsel %vm745, %v1077, 0
        %1082 = vmatprep.subr.mxu0 0.0
        %1083 = vmatpush1.xpose.msra.mxu0 %v1080
        %1084 = vmatprep.subr.mxu0 0.0
        %1085 = vmatpush1.xpose.msra.mxu0 0.0
        %1086 = vmatprep.subr.mxu0 0.0
        %1087 = vmatpush1.xpose.msra.mxu0 0.0
        %1088 = vmatprep.subr.mxu0 0.0
        %1089 = vmatpush1.xpose.msra.mxu0 0.0
        %1090 = vmatprep.subr.mxu0 0.0
        %1091 = vmatpush1.xpose.msra.mxu0 0.0
        %1092 = vmatprep.subr.mxu0 0.0
        %1093 = vmatpush1.xpose.msra.mxu0 0.0
        %1094 = vmatprep.subr.mxu0 0.0
        %1095 = vmatpush1.xpose.msra.mxu0 0.0
        %1096 = vmatprep.subr.mxu0 0.0
        %1097 = vmatpush1.xpose.msra.mxu0 0.0
        %1098 = vmatprep.subr.mxu0 0.0
        %1099 = vmatpush1.xpose.msra.mxu0 0.0
        %1100 = vmatprep.subr.mxu0 0.0
        %1101 = vmatpush1.xpose.msra.mxu0 0.0
        %1102 = vmatprep.subr.mxu0 0.0
        %1103 = vmatpush1.xpose.msra.mxu0 0.0
        %1104 = vmatprep.subr.mxu0 0.0
        %1105 = vmatpush1.xpose.msra.mxu0 0.0
        %1106 = vmatprep.subr.mxu0 0.0
        %1107 = vmatpush1.xpose.msra.mxu0 0.0
        %1108 = vmatprep.subr.mxu0 0.0
        %1109 = vmatpush1.xpose.msra.mxu0 0.0
        %1110 = vmatprep.subr.mxu0 0.0
        %1111 = vmatpush1.xpose.msra.mxu0 0.0
        %1112 = vmatprep.subr.mxu0 0.0
        %1113 = vmatpush1.xpose.msra.mxu0 0.0
        %1114 = vmatprep.subr.mxu0 0.0
        %1115 = vmatpush1.xpose.msra.mxu0 0.0
        %1116 = vmatprep.subr.mxu0 0.0
        %1117 = vmatpush1.xpose.msra.mxu0 0.0
        %1118 = vmatprep.subr.mxu0 0.0
        %1119 = vmatpush1.xpose.msra.mxu0 0.0
        %1120 = vmatprep.subr.mxu0 0.0
        %1121 = vmatpush1.xpose.msra.mxu0 0.0
        %1122 = vmatprep.subr.mxu0 0.0
        %1123 = vmatpush1.xpose.msra.mxu0 0.0
        %1124 = vmatprep.subr.mxu0 0.0
        %1125 = vmatpush1.xpose.msra.mxu0 0.0
        %1126 = vmatprep.subr.mxu0 0.0
        %1127 = vmatpush1.xpose.msra.mxu0 0.0
        %1128 = vmatprep.subr.mxu0 0.0
        %1129 = vmatpush1.xpose.msra.mxu0 0.0
        %1130 = vmatprep.subr.mxu0 0.0
        %1131 = vmatpush1.xpose.msra.mxu0 0.0
        %1132 = vmatprep.subr.mxu0 0.0
        %1133 = vmatpush1.xpose.msra.mxu0 0.0
        %1134 = vmatprep.subr.mxu0 0.0
        %1135 = vmatpush1.xpose.msra.mxu0 0.0
        %1136 = vmatprep.subr.mxu0 0.0
        %1137 = vmatpush1.xpose.msra.mxu0 0.0
        %1138 = vmatprep.subr.mxu0 0.0
        %1139 = vmatpush1.xpose.msra.mxu0 0.0
        %1140 = vmatprep.subr.mxu0 0.0
        %1141 = vmatpush1.xpose.msra.mxu0 0.0
        %1142 = vmatprep.subr.mxu0 0.0
        %1143 = vmatpush1.xpose.msra.mxu0 0.0
        %1144 = vmatprep.subr.mxu0 0.0
        %1145 = vmatpush1.xpose.msra.mxu0 0.0
        %1146 = vmatprep.mubr.f32.mxu0 0.0
        %1147 = vmatmul.mubr.f32.gmra.mrb[0].mxu0 %v1078
        %v1148 = vpop.f32.mrb[0].mxu0
        %v1149 = vadd.f32 0.0, %v1148
        %v1150 = vpop.f32.mrb[0].mxu0
        %1151 = vdwg.mxu0
        %1152 = vrot.lane.b32.xlu0 %v741, 112
        %v1153 = vpop.permute.xlu0 %1152
        %1154 = vrot.lane.b32.xlu0 %v737, 80
        %v1155 = vpop.permute.xlu0 %1154
        %v1156 = vsel %vm745, %v1153, 0
        %v1158 = vsel %vm745, %v1155, 0
        %1160 = vmatprep.subr.mxu0 0.0
        %1161 = vmatpush1.xpose.msra.mxu0 %v1158
        %1162 = vmatprep.subr.mxu0 0.0
        %1163 = vmatpush1.xpose.msra.mxu0 0.0
        %1164 = vmatprep.subr.mxu0 0.0
        %1165 = vmatpush1.xpose.msra.mxu0 0.0
        %1166 = vmatprep.subr.mxu0 0.0
        %1167 = vmatpush1.xpose.msra.mxu0 0.0
        %1168 = vmatprep.subr.mxu0 0.0
        %1169 = vmatpush1.xpose.msra.mxu0 0.0
        %1170 = vmatprep.subr.mxu0 0.0
        %1171 = vmatpush1.xpose.msra.mxu0 0.0
        %1172 = vmatprep.subr.mxu0 0.0
        %1173 = vmatpush1.xpose.msra.mxu0 0.0
        %1174 = vmatprep.subr.mxu0 0.0
        %1175 = vmatpush1.xpose.msra.mxu0 0.0
        %1176 = vmatprep.subr.mxu0 0.0
        %1177 = vmatpush1.xpose.msra.mxu0 0.0
        %1178 = vmatprep.subr.mxu0 0.0
        %1179 = vmatpush1.xpose.msra.mxu0 0.0
        %1180 = vmatprep.subr.mxu0 0.0
        %1181 = vmatpush1.xpose.msra.mxu0 0.0
        %1182 = vmatprep.subr.mxu0 0.0
        %1183 = vmatpush1.xpose.msra.mxu0 0.0
        %1184 = vmatprep.subr.mxu0 0.0
        %1185 = vmatpush1.xpose.msra.mxu0 0.0
        %1186 = vmatprep.subr.mxu0 0.0
        %1187 = vmatpush1.xpose.msra.mxu0 0.0
        %1188 = vmatprep.subr.mxu0 0.0
        %1189 = vmatpush1.xpose.msra.mxu0 0.0
        %1190 = vmatprep.subr.mxu0 0.0
        %1191 = vmatpush1.xpose.msra.mxu0 0.0
        %1192 = vmatprep.subr.mxu0 0.0
        %1193 = vmatpush1.xpose.msra.mxu0 0.0
        %1194 = vmatprep.subr.mxu0 0.0
        %1195 = vmatpush1.xpose.msra.mxu0 0.0
        %1196 = vmatprep.subr.mxu0 0.0
        %1197 = vmatpush1.xpose.msra.mxu0 0.0
        %1198 = vmatprep.subr.mxu0 0.0
        %1199 = vmatpush1.xpose.msra.mxu0 0.0
        %1200 = vmatprep.subr.mxu0 0.0
        %1201 = vmatpush1.xpose.msra.mxu0 0.0
        %1202 = vmatprep.subr.mxu0 0.0
        %1203 = vmatpush1.xpose.msra.mxu0 0.0
        %1204 = vmatprep.subr.mxu0 0.0
        %1205 = vmatpush1.xpose.msra.mxu0 0.0
        %1206 = vmatprep.subr.mxu0 0.0
        %1207 = vmatpush1.xpose.msra.mxu0 0.0
        %1208 = vmatprep.subr.mxu0 0.0
        %1209 = vmatpush1.xpose.msra.mxu0 0.0
        %1210 = vmatprep.subr.mxu0 0.0
        %1211 = vmatpush1.xpose.msra.mxu0 0.0
        %1212 = vmatprep.subr.mxu0 0.0
        %1213 = vmatpush1.xpose.msra.mxu0 0.0
        %1214 = vmatprep.subr.mxu0 0.0
        %1215 = vmatpush1.xpose.msra.mxu0 0.0
        %1216 = vmatprep.subr.mxu0 0.0
        %1217 = vmatpush1.xpose.msra.mxu0 0.0
        %1218 = vmatprep.subr.mxu0 0.0
        %1219 = vmatpush1.xpose.msra.mxu0 0.0
        %1220 = vmatprep.subr.mxu0 0.0
        %1221 = vmatpush1.xpose.msra.mxu0 0.0
        %1222 = vmatprep.subr.mxu0 0.0
        %1223 = vmatpush1.xpose.msra.mxu0 0.0
        %1224 = vmatprep.mubr.f32.mxu0 0.0
        %1225 = vmatmul.mubr.f32.gmra.mrb[0].mxu0 %v1156
        %v1226 = vpop.f32.mrb[0].mxu0
        %v1227 = vadd.f32 0.0, %v1226
        %v1228 = vpop.f32.mrb[0].mxu0
        %1229 = vdwg.mxu0
        %v1230 = vsel %vm899, %v1149, -inf
        %1231 = vmax.xlane.f32.xlu0 %v1230
        %v1232 = vpop.xlane.xlu0 %1231
        %v1233 = vsel %vm899, %v1227, -inf
        %1234 = vmax.xlane.f32.xlu0 %v1233
        %v1235 = vpop.xlane.xlu0 %1234
        %v1236 = vsub.f32 %v1149, %v1232
        %v1237 = vsub.f32 %v1227, %v1235
        %v1238 = vmul.f32 %v1236, 1.442695
        %v1239 = vpow.pop %v1238
        %v1240 = vmul.f32 %v1237, 1.442695
        %v1241 = vpow.pop %v1240
        %v1242 = vsel %vm899, %v1239, 0.0
        %1243 = vadd.xlane.f32.xlu0 %v1242
        %v1244 = vpop.xlane.xlu0 %1243
        %v1245 = vsel %vm899, %v1241, 0.0
        %1246 = vadd.xlane.f32.xlu0 %v1245
        %v1247 = vpop.xlane.xlu0 %1246
        %v1248 = vrcp.pop %v1244
        %v1249 = vrcp.pop %v1247
        %v1250 = vmul.f32 %v1239, %v1248
        %v1251 = vmul.f32 %v1241, %v1249
        %1252 = vrot.lane.b32.xlu0 %v732, 48
        %v1253 = vpop.permute.xlu0 %1252
        %v1256 = vsel %vm899, %v1250, 0
        %1258 = vmatprep.subr.mxu0 0.0
        %1259 = vmatpush1.msra.mxu0 %v1253
        %1260 = vmatprep.subr.mxu0 0.0
        %1261 = vmatpush1.msra.mxu0 0.0
        %1262 = vmatprep.subr.mxu0 0.0
        %1263 = vmatpush1.msra.mxu0 0.0
        %1264 = vmatprep.subr.mxu0 0.0
        %1265 = vmatpush1.msra.mxu0 0.0
        %1266 = vmatprep.subr.mxu0 0.0
        %1267 = vmatpush1.msra.mxu0 0.0
        %1268 = vmatprep.subr.mxu0 0.0
        %1269 = vmatpush1.msra.mxu0 0.0
        %1270 = vmatprep.subr.mxu0 0.0
        %1271 = vmatpush1.msra.mxu0 0.0
        %1272 = vmatprep.subr.mxu0 0.0
        %1273 = vmatpush1.msra.mxu0 0.0
        %1274 = vmatprep.subr.mxu0 0.0
        %1275 = vmatpush1.msra.mxu0 0.0
        %1276 = vmatprep.subr.mxu0 0.0
        %1277 = vmatpush1.msra.mxu0 0.0
        %1278 = vmatprep.subr.mxu0 0.0
        %1279 = vmatpush1.msra.mxu0 0.0
        %1280 = vmatprep.subr.mxu0 0.0
        %1281 = vmatpush1.msra.mxu0 0.0
        %1282 = vmatprep.subr.mxu0 0.0
        %1283 = vmatpush1.msra.mxu0 0.0
        %1284 = vmatprep.subr.mxu0 0.0
        %1285 = vmatpush1.msra.mxu0 0.0
        %1286 = vmatprep.subr.mxu0 0.0
        %1287 = vmatpush1.msra.mxu0 0.0
        %1288 = vmatprep.subr.mxu0 0.0
        %1289 = vmatpush1.msra.mxu0 0.0
        %1290 = vmatprep.subr.mxu0 0.0
        %1291 = vmatpush1.msra.mxu0 0.0
        %1292 = vmatprep.subr.mxu0 0.0
        %1293 = vmatpush1.msra.mxu0 0.0
        %1294 = vmatprep.subr.mxu0 0.0
        %1295 = vmatpush1.msra.mxu0 0.0
        %1296 = vmatprep.subr.mxu0 0.0
        %1297 = vmatpush1.msra.mxu0 0.0
        %1298 = vmatprep.subr.mxu0 0.0
        %1299 = vmatpush1.msra.mxu0 0.0
        %1300 = vmatprep.subr.mxu0 0.0
        %1301 = vmatpush1.msra.mxu0 0.0
        %1302 = vmatprep.subr.mxu0 0.0
        %1303 = vmatpush1.msra.mxu0 0.0
        %1304 = vmatprep.subr.mxu0 0.0
        %1305 = vmatpush1.msra.mxu0 0.0
        %1306 = vmatprep.subr.mxu0 0.0
        %1307 = vmatpush1.msra.mxu0 0.0
        %1308 = vmatprep.subr.mxu0 0.0
        %1309 = vmatpush1.msra.mxu0 0.0
        %1310 = vmatprep.subr.mxu0 0.0
        %1311 = vmatpush1.msra.mxu0 0.0
        %1312 = vmatprep.subr.mxu0 0.0
        %1313 = vmatpush1.msra.mxu0 0.0
        %1314 = vmatprep.subr.mxu0 0.0
        %1315 = vmatpush1.msra.mxu0 0.0
        %1316 = vmatprep.subr.mxu0 0.0
        %1317 = vmatpush1.msra.mxu0 0.0
        %1318 = vmatprep.subr.mxu0 0.0
        %1319 = vmatpush1.msra.mxu0 0.0
        %1320 = vmatprep.subr.mxu0 0.0
        %1321 = vmatpush1.msra.mxu0 0.0
        %1322 = vmatprep.mubr.f32.mxu0 0.0
        %1323 = vmatmul.mubr.f32.gmra.mrb[0].mxu0 %v1256
        %v1324 = vpop.f32.mrb[0].mxu0
        %v1325 = vadd.f32 0.0, %v1324
        %v1326 = vpop.f32.mrb[0].mxu0
        %1327 = vdwg.mxu0
        %1328 = vrot.lane.b32.xlu0 %v737, 48
        %v1329 = vpop.permute.xlu0 %1328
        %v1332 = vsel %vm899, %v1251, 0
        %1334 = vmatprep.subr.mxu0 0.0
        %1335 = vmatpush1.msra.mxu0 %v1329
        %1336 = vmatprep.subr.mxu0 0.0
        %1337 = vmatpush1.msra.mxu0 0.0
        %1338 = vmatprep.subr.mxu0 0.0
        %1339 = vmatpush1.msra.mxu0 0.0
        %1340 = vmatprep.subr.mxu0 0.0
        %1341 = vmatpush1.msra.mxu0 0.0
        %1342 = vmatprep.subr.mxu0 0.0
        %1343 = vmatpush1.msra.mxu0 0.0
        %1344 = vmatprep.subr.mxu0 0.0
        %1345 = vmatpush1.msra.mxu0 0.0
        %1346 = vmatprep.subr.mxu0 0.0
        %1347 = vmatpush1.msra.mxu0 0.0
        %1348 = vmatprep.subr.mxu0 0.0
        %1349 = vmatpush1.msra.mxu0 0.0
        %1350 = vmatprep.subr.mxu0 0.0
        %1351 = vmatpush1.msra.mxu0 0.0
        %1352 = vmatprep.subr.mxu0 0.0
        %1353 = vmatpush1.msra.mxu0 0.0
        %1354 = vmatprep.subr.mxu0 0.0
        %1355 = vmatpush1.msra.mxu0 0.0
        %1356 = vmatprep.subr.mxu0 0.0
        %1357 = vmatpush1.msra.mxu0 0.0
        %1358 = vmatprep.subr.mxu0 0.0
        %1359 = vmatpush1.msra.mxu0 0.0
        %1360 = vmatprep.subr.mxu0 0.0
        %1361 = vmatpush1.msra.mxu0 0.0
        %1362 = vmatprep.subr.mxu0 0.0
        %1363 = vmatpush1.msra.mxu0 0.0
        %1364 = vmatprep.subr.mxu0 0.0
        %1365 = vmatpush1.msra.mxu0 0.0
        %1366 = vmatprep.subr.mxu0 0.0
        %1367 = vmatpush1.msra.mxu0 0.0
        %1368 = vmatprep.subr.mxu0 0.0
        %1369 = vmatpush1.msra.mxu0 0.0
        %1370 = vmatprep.subr.mxu0 0.0
        %1371 = vmatpush1.msra.mxu0 0.0
        %1372 = vmatprep.subr.mxu0 0.0
        %1373 = vmatpush1.msra.mxu0 0.0
        %1374 = vmatprep.subr.mxu0 0.0
        %1375 = vmatpush1.msra.mxu0 0.0
        %1376 = vmatprep.subr.mxu0 0.0
        %1377 = vmatpush1.msra.mxu0 0.0
        %1378 = vmatprep.subr.mxu0 0.0
        %1379 = vmatpush1.msra.mxu0 0.0
        %1380 = vmatprep.subr.mxu0 0.0
        %1381 = vmatpush1.msra.mxu0 0.0
        %1382 = vmatprep.subr.mxu0 0.0
        %1383 = vmatpush1.msra.mxu0 0.0
        %1384 = vmatprep.subr.mxu0 0.0
        %1385 = vmatpush1.msra.mxu0 0.0
        %1386 = vmatprep.subr.mxu0 0.0
        %1387 = vmatpush1.msra.mxu0 0.0
        %1388 = vmatprep.subr.mxu0 0.0
        %1389 = vmatpush1.msra.mxu0 0.0
        %1390 = vmatprep.subr.mxu0 0.0
        %1391 = vmatpush1.msra.mxu0 0.0
        %1392 = vmatprep.subr.mxu0 0.0
        %1393 = vmatpush1.msra.mxu0 0.0
        %1394 = vmatprep.subr.mxu0 0.0
        %1395 = vmatpush1.msra.mxu0 0.0
        %1396 = vmatprep.subr.mxu0 0.0
        %1397 = vmatpush1.msra.mxu0 0.0
        %1398 = vmatprep.mubr.f32.mxu0 0.0
        %1399 = vmatmul.mubr.f32.gmra.mrb[0].mxu0 %v1332
        %v1400 = vpop.f32.mrb[0].mxu0
        %v1401 = vadd.f32 0.0, %v1400
        %v1402 = vpop.f32.mrb[0].mxu0
        %1403 = vdwg.mxu0
        %1406 = vrot.lane.b32.xlu0 %v1325, 16
        %v1407 = vpop.permute.xlu0 %1406
        %1408 = vrot.lane.b32.xlu0 %v1401, 16
        %v1409 = vpop.permute.xlu0 %1408
        %v1412 = vsel %vm745, %v995, %v1407
        %v1413 = vsel %vm745, %v1071, %v1409
        %v1414 = vld [vmem:[%s5] sm:$0xff]
        %v1415 = vld [vmem:[%s5 + $0x8] sm:$0xff]
        %v1416 = vld [vmem:[%s5 + $0x10] sm:$0xff]
        %v1417 = vld [vmem:[%s5 + $0x18] sm:$0xff]
        %v1418 = vld [vmem:[%s6] sm:$0x1]
        %v1420 = vlaneseq
        %v1421 = vshrl.u32 %v1420, 7
        %v1422 = vsub.s32 0, %v1421
        %v1423 = vrot.slane %v1418, %v1422
        %v1426 = vsel %vm658, %v1412, 0
        %v1429 = vsel %vm658, %v1413, 0
        %1431 = vmatprep.subr.mxu0 0.0
        %1432 = vmatpush1.msra.mxu0 %v1414
        %1433 = vmatprep.subr.mxu0 0.0
        %1434 = vmatpush1.msra.mxu0 %v1415
        %1435 = vmatprep.subr.mxu0 0.0
        %1436 = vmatpush1.msra.mxu0 %v1416
        %1437 = vmatprep.subr.mxu0 0.0
        %1438 = vmatpush1.msra.mxu0 %v1417
        %1439 = vmatprep.subr.mxu0 0.0
        %1440 = vmatpush1.msra.mxu0 0.0
        %1441 = vmatprep.subr.mxu0 0.0
        %1442 = vmatpush1.msra.mxu0 0.0
        %1443 = vmatprep.subr.mxu0 0.0
        %1444 = vmatpush1.msra.mxu0 0.0
        %1445 = vmatprep.subr.mxu0 0.0
        %1446 = vmatpush1.msra.mxu0 0.0
        %1447 = vmatprep.subr.mxu0 0.0
        %1448 = vmatpush1.msra.mxu0 0.0
        %1449 = vmatprep.subr.mxu0 0.0
        %1450 = vmatpush1.msra.mxu0 0.0
        %1451 = vmatprep.subr.mxu0 0.0
        %1452 = vmatpush1.msra.mxu0 0.0
        %1453 = vmatprep.subr.mxu0 0.0
        %1454 = vmatpush1.msra.mxu0 0.0
        %1455 = vmatprep.subr.mxu0 0.0
        %1456 = vmatpush1.msra.mxu0 0.0
        %1457 = vmatprep.subr.mxu0 0.0
        %1458 = vmatpush1.msra.mxu0 0.0
        %1459 = vmatprep.subr.mxu0 0.0
        %1460 = vmatpush1.msra.mxu0 0.0
        %1461 = vmatprep.subr.mxu0 0.0
        %1462 = vmatpush1.msra.mxu0 0.0
        %1463 = vmatprep.subr.mxu0 0.0
        %1464 = vmatpush1.msra.mxu0 0.0
        %1465 = vmatprep.subr.mxu0 0.0
        %1466 = vmatpush1.msra.mxu0 0.0
        %1467 = vmatprep.subr.mxu0 0.0
        %1468 = vmatpush1.msra.mxu0 0.0
        %1469 = vmatprep.subr.mxu0 0.0
        %1470 = vmatpush1.msra.mxu0 0.0
        %1471 = vmatprep.subr.mxu0 0.0
        %1472 = vmatpush1.msra.mxu0 0.0
        %1473 = vmatprep.subr.mxu0 0.0
        %1474 = vmatpush1.msra.mxu0 0.0
        %1475 = vmatprep.subr.mxu0 0.0
        %1476 = vmatpush1.msra.mxu0 0.0
        %1477 = vmatprep.subr.mxu0 0.0
        %1478 = vmatpush1.msra.mxu0 0.0
        %1479 = vmatprep.subr.mxu0 0.0
        %1480 = vmatpush1.msra.mxu0 0.0
        %1481 = vmatprep.subr.mxu0 0.0
        %1482 = vmatpush1.msra.mxu0 0.0
        %1483 = vmatprep.subr.mxu0 0.0
        %1484 = vmatpush1.msra.mxu0 0.0
        %1485 = vmatprep.subr.mxu0 0.0
        %1486 = vmatpush1.msra.mxu0 0.0
        %1487 = vmatprep.subr.mxu0 0.0
        %1488 = vmatpush1.msra.mxu0 0.0
        %1489 = vmatprep.subr.mxu0 0.0
        %1490 = vmatpush1.msra.mxu0 0.0
        %1491 = vmatprep.subr.mxu0 0.0
        %1492 = vmatpush1.msra.mxu0 0.0
        %1493 = vmatprep.subr.mxu0 0.0
        %1494 = vmatpush1.msra.mxu0 0.0
        %1495 = vmatprep.mubr.f32.mxu0 0.0
        %1496 = vmatmul.mubr.f32.gmra.mrb[0].mxu0 %v1426
        %v1497 = vpop.f32.mrb[0].mxu0
        %v1498 = vadd.f32 %v1423, %v1497
        %v1499 = vpop.f32.mrb[0].mxu0
        %1500 = vmatprep.mubr.f32.mxu0 0.0
        %1501 = vmatmul.mubr.f32.gmra.mrb[0].mxu0 %v1429
        %v1502 = vpop.f32.mrb[0].mxu0
        %v1503 = vadd.f32 %v1423, %v1502
        %v1504 = vpop.f32.mrb[0].mxu0
        %1505 = vdwg.mxu0
        %v1506 = vadd.f32 %v639, %v1498
        %v1507 = vadd.f32 %v644, %v1503
        %v1508 = vld [vmem:[%s7] sm:$0x1]
        %v1509 = vld [vmem:[%s8] sm:$0x1]
        %v1510 = vsel %vm658, %v1506, 0.0
        %1511 = vadd.xlane.f32.xlu0 %v1510
        %v1512 = vpop.xlane.xlu0 %1511
        %v1513 = vsel %vm658, %v1507, 0.0
        %1514 = vadd.xlane.f32.xlu0 %v1513
        %v1515 = vpop.xlane.xlu0 %1514
        %v1516 = vrcp.pop 32.0
        %v1517 = vmul.f32 %v1512, %v1516
        %v1518 = vmul.f32 %v1515, %v1516
        %v1519 = vsub.f32 %v1506, %v1517
        %v1520 = vsub.f32 %v1507, %v1518
        %v1521 = vmul.f32 %v1519, %v1519
        %v1522 = vmul.f32 %v1520, %v1520
        %v1523 = vsel %vm658, %v1521, 0.0
        %1524 = vadd.xlane.f32.xlu0 %v1523
        %v1525 = vpop.xlane.xlu0 %1524
        %v1526 = vsel %vm658, %v1522, 0.0
        %1527 = vadd.xlane.f32.xlu0 %v1526
        %v1528 = vpop.xlane.xlu0 %1527
        %v1529 = vmul.f32 %v1525, %v1516
        %v1530 = vmul.f32 %v1528, %v1516
        %v1531 = vadd.f32 %v1529, 1e-05
        %v1532 = vadd.f32 %v1530, 1e-05
        %v1533 = vrsqrt.pop %v1531
        %v1534 = vrsqrt.pop %v1532
        %v1535 = vmul.f32 %v1519, %v1533
        %v1536 = vmul.f32 %v1520, %v1534
        %v1538 = vlaneseq
        %v1539 = vshrl.u32 %v1538, 7
        %v1540 = vsub.s32 0, %v1539
        %v1541 = vrot.slane %v1508, %v1540
        %v1543 = vmul.f32 %v1535, %v1541
        %v1544 = vmul.f32 %v1536, %v1541
        %v1546 = vlaneseq
        %v1547 = vshrl.u32 %v1546, 7
        %v1548 = vsub.s32 0, %v1547
        %v1549 = vrot.slane %v1509, %v1548
        %v1551 = vadd.f32 %v1543, %v1549
        %v1552 = vadd.f32 %v1544, %v1549
        %v1553 = vpack.c.bf16 %v1552, %v1551
        %v1554 = vld [vmem:[%s9] sm:$0xff]
        %v1555 = vld [vmem:[%s9 + $0x8] sm:$0xff]
        %v1556 = vld [vmem:[%s9 + $0x10] sm:$0xff]
        %v1557 = vld [vmem:[%s9 + $0x18] sm:$0xff]
        %v1558 = vld [vmem:[%s9 + $0x20] sm:$0xff]
        %v1559 = vld [vmem:[%s9 + $0x28] sm:$0xff]
        %v1560 = vld [vmem:[%s9 + $0x30] sm:$0xff]
        %v1561 = vld [vmem:[%s9 + $0x38] sm:$0xff]
        %v1562 = vld [vmem:[%s9 + $0x40] sm:$0xff]
        %v1563 = vld [vmem:[%s9 + $0x48] sm:$0xff]
        %v1564 = vld [vmem:[%s9 + $0x50] sm:$0xff]
        %v1565 = vld [vmem:[%s9 + $0x58] sm:$0xff]
        %v1566 = vld [vmem:[%s9 + $0x60] sm:$0xff]
        %v1567 = vld [vmem:[%s9 + $0x68] sm:$0xff]
        %v1568 = vld [vmem:[%s9 + $0x70] sm:$0xff]
        %v1569 = vld [vmem:[%s9 + $0x78] sm:$0xff]
        %v1570 = vld [vmem:[%s9 + $0x80] sm:$0xff]
        %v1571 = vld [vmem:[%s9 + $0x88] sm:$0xff]
        %v1572 = vld [vmem:[%s9 + $0x90] sm:$0xff]
        %v1573 = vld [vmem:[%s9 + $0x98] sm:$0xff]
        %v1574 = vld [vmem:[%s9 + $0xa0] sm:$0xff]
        %v1575 = vld [vmem:[%s9 + $0xa8] sm:$0xff]
        %v1576 = vld [vmem:[%s9 + $0xb0] sm:$0xff]
        %v1577 = vld [vmem:[%s9 + $0xb8] sm:$0xff]
        %v1578 = vld [vmem:[%s9 + $0xc0] sm:$0xff]
        %v1579 = vld [vmem:[%s9 + $0xc8] sm:$0xff]
        %v1580 = vld [vmem:[%s9 + $0xd0] sm:$0xff]
        %v1581 = vld [vmem:[%s9 + $0xd8] sm:$0xff]
        %v1582 = vld [vmem:[%s9 + $0xe0] sm:$0xff]
        %v1583 = vld [vmem:[%s9 + $0xe8] sm:$0xff]
        %v1584 = vld [vmem:[%s9 + $0xf0] sm:$0xff]
        %v1585 = vld [vmem:[%s9 + $0xf8] sm:$0xff]
        %v1586 = vld [vmem:[%s10] sm:$0xff]
        %v1587 = vld [vmem:[%s10 + $0x8] sm:$0xff]
        %v1590 = vlaneseq
        %v1591 = vshrl.u32 %v1590, 7
        %v1592 = vsub.s32 0, %v1591
        %v1593 = vrot.slane %v1586, %v1592
        %v1594 = vlaneseq
        %v1595 = vshrl.u32 %v1594, 7
        %v1596 = vsub.s32 1, %v1595
        %v1597 = vrot.slane %v1586, %v1596
        %v1598 = vlaneseq
        %v1599 = vshrl.u32 %v1598, 7
        %v1600 = vsub.s32 2, %v1599
        %v1601 = vrot.slane %v1586, %v1600
        %v1602 = vlaneseq
        %v1603 = vshrl.u32 %v1602, 7
        %v1604 = vsub.s32 3, %v1603
        %v1605 = vrot.slane %v1586, %v1604
        %v1606 = vlaneseq
        %v1607 = vshrl.u32 %v1606, 7
        %v1608 = vsub.s32 4, %v1607
        %v1609 = vrot.slane %v1586, %v1608
        %v1610 = vlaneseq
        %v1611 = vshrl.u32 %v1610, 7
        %v1612 = vsub.s32 5, %v1611
        %v1613 = vrot.slane %v1586, %v1612
        %v1614 = vlaneseq
        %v1615 = vshrl.u32 %v1614, 7
        %v1616 = vsub.s32 6, %v1615
        %v1617 = vrot.slane %v1586, %v1616
        %v1618 = vlaneseq
        %v1619 = vshrl.u32 %v1618, 7
        %v1620 = vsub.s32 7, %v1619
        %v1621 = vrot.slane %v1586, %v1620
        %v1622 = vlaneseq
        %v1623 = vshrl.u32 %v1622, 7
        %v1624 = vsub.s32 0, %v1623
        %v1625 = vrot.slane %v1587, %v1624
        %v1626 = vlaneseq
        %v1627 = vshrl.u32 %v1626, 7
        %v1628 = vsub.s32 1, %v1627
        %v1629 = vrot.slane %v1587, %v1628
        %v1630 = vlaneseq
        %v1631 = vshrl.u32 %v1630, 7
        %v1632 = vsub.s32 2, %v1631
        %v1633 = vrot.slane %v1587, %v1632
        %v1634 = vlaneseq
        %v1635 = vshrl.u32 %v1634, 7
        %v1636 = vsub.s32 3, %v1635
        %v1637 = vrot.slane %v1587, %v1636
        %v1638 = vlaneseq
        %v1639 = vshrl.u32 %v1638, 7
        %v1640 = vsub.s32 4, %v1639
        %v1641 = vrot.slane %v1587, %v1640
        %v1642 = vlaneseq
        %v1643 = vshrl.u32 %v1642, 7
        %v1644 = vsub.s32 5, %v1643
        %v1645 = vrot.slane %v1587, %v1644
        %v1646 = vlaneseq
        %v1647 = vshrl.u32 %v1646, 7
        %v1648 = vsub.s32 6, %v1647
        %v1649 = vrot.slane %v1587, %v1648
        %v1650 = vlaneseq
        %v1651 = vshrl.u32 %v1650, 7
        %v1652 = vsub.s32 7, %v1651
        %v1653 = vrot.slane %v1587, %v1652
        %v1702 = vunpack.c.l.b16 %v1554
        %v1703 = vunpack.c.h.b16 %v1554
        %v1704 = vunpack.c.l.b16 %v1555
        %v1705 = vunpack.c.h.b16 %v1555
        %v1706 = vunpack.c.l.b16 %v1556
        %v1707 = vunpack.c.h.b16 %v1556
        %v1708 = vunpack.c.l.b16 %v1557
        %v1709 = vunpack.c.h.b16 %v1557
        %v1710 = vunpack.c.l.b16 %v1558
        %v1711 = vunpack.c.h.b16 %v1558
        %v1712 = vunpack.c.l.b16 %v1559
        %v1713 = vunpack.c.h.b16 %v1559
        %v1714 = vunpack.c.l.b16 %v1560
        %v1715 = vunpack.c.h.b16 %v1560
        %v1716 = vunpack.c.l.b16 %v1561
        %v1717 = vunpack.c.h.b16 %v1561
        %v1718 = vunpack.c.l.b16 %v1562
        %v1719 = vunpack.c.h.b16 %v1562
        %v1720 = vunpack.c.l.b16 %v1563
        %v1721 = vunpack.c.h.b16 %v1563
        %v1722 = vunpack.c.l.b16 %v1564
        %v1723 = vunpack.c.h.b16 %v1564
        %v1724 = vunpack.c.l.b16 %v1565
        %v1725 = vunpack.c.h.b16 %v1565
        %v1726 = vunpack.c.l.b16 %v1566
        %v1727 = vunpack.c.h.b16 %v1566
        %v1728 = vunpack.c.l.b16 %v1567
        %v1729 = vunpack.c.h.b16 %v1567
        %v1730 = vunpack.c.l.b16 %v1568
        %v1731 = vunpack.c.h.b16 %v1568
        %v1732 = vunpack.c.l.b16 %v1569
        %v1733 = vunpack.c.h.b16 %v1569
        %v1734 = vunpack.c.l.b16 %v1570
        %v1735 = vunpack.c.h.b16 %v1570
        %v1736 = vunpack.c.l.b16 %v1571
        %v1737 = vunpack.c.h.b16 %v1571
        %v1738 = vunpack.c.l.b16 %v1572
        %v1739 = vunpack.c.h.b16 %v1572
        %v1740 = vunpack.c.l.b16 %v1573
        %v1741 = vunpack.c.h.b16 %v1573
        %v1742 = vunpack.c.l.b16 %v1574
        %v1743 = vunpack.c.h.b16 %v1574
        %v1744 = vunpack.c.l.b16 %v1575
        %v1745 = vunpack.c.h.b16 %v1575
        %v1746 = vunpack.c.l.b16 %v1576
        %v1747 = vunpack.c.h.b16 %v1576
        %v1748 = vunpack.c.l.b16 %v1577
        %v1749 = vunpack.c.h.b16 %v1577
        %v1750 = vunpack.c.l.b16 %v1578
        %v1751 = vunpack.c.h.b16 %v1578
        %v1752 = vunpack.c.l.b16 %v1579
        %v1753 = vunpack.c.h.b16 %v1579
        %v1754 = vunpack.c.l.b16 %v1580
        %v1755 = vunpack.c.h.b16 %v1580
        %v1756 = vunpack.c.l.b16 %v1581
        %v1757 = vunpack.c.h.b16 %v1581
        %v1758 = vunpack.c.l.b16 %v1582
        %v1759 = vunpack.c.h.b16 %v1582
        %v1760 = vunpack.c.l.b16 %v1583
        %v1761 = vunpack.c.h.b16 %v1583
        %v1762 = vunpack.c.l.b16 %v1584
        %v1763 = vunpack.c.h.b16 %v1584
        %v1764 = vunpack.c.l.b16 %v1585
        %v1765 = vunpack.c.h.b16 %v1585
        %v1766 = vpack.c.b16 %v1718, %v1702
        %v1767 = vpack.c.b16 %v1719, %v1703
        %v1768 = vpack.c.b16 %v1720, %v1704
        %v1769 = vpack.c.b16 %v1721, %v1705
        %v1770 = vpack.c.b16 %v1722, %v1706
        %v1771 = vpack.c.b16 %v1723, %v1707
        %v1772 = vpack.c.b16 %v1724, %v1708
        %v1773 = vpack.c.b16 %v1725, %v1709
        %v1774 = vpack.c.b16 %v1726, %v1710
        %v1775 = vpack.c.b16 %v1727, %v1711
        %v1776 = vpack.c.b16 %v1728, %v1712
        %v1777 = vpack.c.b16 %v1729, %v1713
        %v1778 = vpack.c.b16 %v1730, %v1714
        %v1779 = vpack.c.b16 %v1731, %v1715
        %v1780 = vpack.c.b16 %v1732, %v1716
        %v1781 = vpack.c.b16 %v1733, %v1717
        %v1782 = vpack.c.b16 %v1750, %v1734
        %v1783 = vpack.c.b16 %v1751, %v1735
        %v1784 = vpack.c.b16 %v1752, %v1736
        %v1785 = vpack.c.b16 %v1753, %v1737
        %v1786 = vpack.c.b16 %v1754, %v1738
        %v1787 = vpack.c.b16 %v1755, %v1739
        %v1788 = vpack.c.b16 %v1756, %v1740
        %v1789 = vpack.c.b16 %v1757, %v1741
        %v1790 = vpack.c.b16 %v1758, %v1742
        %v1791 = vpack.c.b16 %v1759, %v1743
        %v1792 = vpack.c.b16 %v1760, %v1744
        %v1793 = vpack.c.b16 %v1761, %v1745
        %v1794 = vpack.c.b16 %v1762, %v1746
        %v1795 = vpack.c.b16 %v1763, %v1747
        %v1796 = vpack.c.b16 %v1764, %v1748
        %v1797 = vpack.c.b16 %v1765, %v1749
        %v1831 = vsel %vm658, %v1553, 0
        %1833 = vmatprep.subr.bf16.mxu0 %v1767
        %1834 = vmatpush1.bf16.msra.mxu0 %v1766
        %1835 = vmatprep.subr.bf16.mxu0 %v1783
        %1836 = vmatpush1.bf16.msra.mxu0 %v1782
        %1837 = vmatprep.subr.bf16.mxu0 0
        %1838 = vmatpush1.bf16.msra.mxu0 0
        %1839 = vmatprep.subr.bf16.mxu0 0
        %1840 = vmatpush1.bf16.msra.mxu0 0
        %1841 = vmatprep.subr.bf16.mxu0 0
        %1842 = vmatpush1.bf16.msra.mxu0 0
        %1843 = vmatprep.subr.bf16.mxu0 0
        %1844 = vmatpush1.bf16.msra.mxu0 0
        %1845 = vmatprep.subr.bf16.mxu0 0
        %1846 = vmatpush1.bf16.msra.mxu0 0
        %1847 = vmatprep.subr.bf16.mxu0 0
        %1848 = vmatpush1.bf16.msra.mxu0 0
        %1849 = vmatprep.subr.bf16.mxu0 0
        %1850 = vmatpush1.bf16.msra.mxu0 0
        %1851 = vmatprep.subr.bf16.mxu0 0
        %1852 = vmatpush1.bf16.msra.mxu0 0
        %1853 = vmatprep.subr.bf16.mxu0 0
        %1854 = vmatpush1.bf16.msra.mxu0 0
        %1855 = vmatprep.subr.bf16.mxu0 0
        %1856 = vmatpush1.bf16.msra.mxu0 0
        %1857 = vmatprep.subr.bf16.mxu0 0
        %1858 = vmatpush1.bf16.msra.mxu0 0
        %1859 = vmatprep.subr.bf16.mxu0 0
        %1860 = vmatpush1.bf16.msra.mxu0 0
        %1861 = vmatprep.subr.bf16.mxu0 0
        %1862 = vmatpush1.bf16.msra.mxu0 0
        %1863 = vmatprep.subr.bf16.mxu0 0
        %1864 = vmatpush1.bf16.msra.mxu0 0
        %1865 = vmatprep.mubr.bf16.mxu0 0
        %1866 = vmatmul.mubr.bf16.gmra.mrb[0].mxu0 %v1831
        %v1867 = vpop.f32.mrb[0].mxu0
        %v1868 = vadd.f32 %v1593, %v1867
        %v1869 = vpop.f32.mrb[0].mxu0
        %v1870 = vadd.f32 %v1597, %v1869
        %v1871 = vpop.f32.mrb[0].mxu0
        %v1872 = vadd.f32 %v1593, %v1871
        %v1873 = vpop.f32.mrb[0].mxu0
        %v1874 = vadd.f32 %v1597, %v1873
        %1875 = vdwg.mxu0
        %1876 = vmatprep.subr.bf16.mxu0 %v1769
        %1877 = vmatpush1.bf16.msra.mxu0 %v1768
        %1878 = vmatprep.subr.bf16.mxu0 %v1785
        %1879 = vmatpush1.bf16.msra.mxu0 %v1784
        %1880 = vmatprep.subr.bf16.mxu0 0
        %1881 = vmatpush1.bf16.msra.mxu0 0
        %1882 = vmatprep.subr.bf16.mxu0 0
        %1883 = vmatpush1.bf16.msra.mxu0 0
        %1884 = vmatprep.subr.bf16.mxu0 0
        %1885 = vmatpush1.bf16.msra.mxu0 0
        %1886 = vmatprep.subr.bf16.mxu0 0
        %1887 = vmatpush1.bf16.msra.mxu0 0
        %1888 = vmatprep.subr.bf16.mxu0 0
        %1889 = vmatpush1.bf16.msra.mxu0 0
        %1890 = vmatprep.subr.bf16.mxu0 0
        %1891 = vmatpush1.bf16.msra.mxu0 0
        %1892 = vmatprep.subr.bf16.mxu0 0
        %1893 = vmatpush1.bf16.msra.mxu0 0
        %1894 = vmatprep.subr.bf16.mxu0 0
        %1895 = vmatpush1.bf16.msra.mxu0 0
        %1896 = vmatprep.subr.bf16.mxu0 0
        %1897 = vmatpush1.bf16.msra.mxu0 0
        %1898 = vmatprep.subr.bf16.mxu0 0
        %1899 = vmatpush1.bf16.msra.mxu0 0
        %1900 = vmatprep.subr.bf16.mxu0 0
        %1901 = vmatpush1.bf16.msra.mxu0 0
        %1902 = vmatprep.subr.bf16.mxu0 0
        %1903 = vmatpush1.bf16.msra.mxu0 0
        %1904 = vmatprep.subr.bf16.mxu0 0
        %1905 = vmatpush1.bf16.msra.mxu0 0
        %1906 = vmatprep.subr.bf16.mxu0 0
        %1907 = vmatpush1.bf16.msra.mxu0 0
        %1908 = vmatprep.mubr.bf16.mxu0 0
        %1909 = vmatmul.mubr.bf16.gmra.mrb[0].mxu0 %v1831
        %v1910 = vpop.f32.mrb[0].mxu0
        %v1911 = vadd.f32 %v1601, %v1910
        %v1912 = vpop.f32.mrb[0].mxu0
        %v1913 = vadd.f32 %v1605, %v1912
        %v1914 = vpop.f32.mrb[0].mxu0
        %v1915 = vadd.f32 %v1601, %v1914
        %v1916 = vpop.f32.mrb[0].mxu0
        %v1917 = vadd.f32 %v1605, %v1916
        %1918 = vdwg.mxu0
        %1919 = vmatprep.subr.bf16.mxu0 %v1771
        %1920 = vmatpush1.bf16.msra.mxu0 %v1770
        %1921 = vmatprep.subr.bf16.mxu0 %v1787
        %1922 = vmatpush1.bf16.msra.mxu0 %v1786
        %1923 = vmatprep.subr.bf16.mxu0 0
        %1924 = vmatpush1.bf16.msra.mxu0 0
        %1925 = vmatprep.subr.bf16.mxu0 0
        %1926 = vmatpush1.bf16.msra.mxu0 0
        %1927 = vmatprep.subr.bf16.mxu0 0
        %1928 = vmatpush1.bf16.msra.mxu0 0
        %1929 = vmatprep.subr.bf16.mxu0 0
        %1930 = vmatpush1.bf16.msra.mxu0 0
        %1931 = vmatprep.subr.bf16.mxu0 0
        %1932 = vmatpush1.bf16.msra.mxu0 0
        %1933 = vmatprep.subr.bf16.mxu0 0
        %1934 = vmatpush1.bf16.msra.mxu0 0
        %1935 = vmatprep.subr.bf16.mxu0 0
        %1936 = vmatpush1.bf16.msra.mxu0 0
        %1937 = vmatprep.subr.bf16.mxu0 0
        %1938 = vmatpush1.bf16.msra.mxu0 0
        %1939 = vmatprep.subr.bf16.mxu0 0
        %1940 = vmatpush1.bf16.msra.mxu0 0
        %1941 = vmatprep.subr.bf16.mxu0 0
        %1942 = vmatpush1.bf16.msra.mxu0 0
        %1943 = vmatprep.subr.bf16.mxu0 0
        %1944 = vmatpush1.bf16.msra.mxu0 0
        %1945 = vmatprep.subr.bf16.mxu0 0
        %1946 = vmatpush1.bf16.msra.mxu0 0
        %1947 = vmatprep.subr.bf16.mxu0 0
        %1948 = vmatpush1.bf16.msra.mxu0 0
        %1949 = vmatprep.subr.bf16.mxu0 0
        %1950 = vmatpush1.bf16.msra.mxu0 0
        %1951 = vmatprep.mubr.bf16.mxu0 0
        %1952 = vmatmul.mubr.bf16.gmra.mrb[0].mxu0 %v1831
        %v1953 = vpop.f32.mrb[0].mxu0
        %v1954 = vadd.f32 %v1609, %v1953
        %v1955 = vpop.f32.mrb[0].mxu0
        %v1956 = vadd.f32 %v1613, %v1955
        %v1957 = vpop.f32.mrb[0].mxu0
        %v1958 = vadd.f32 %v1609, %v1957
        %v1959 = vpop.f32.mrb[0].mxu0
        %v1960 = vadd.f32 %v1613, %v1959
        %1961 = vdwg.mxu0
        %1962 = vmatprep.subr.bf16.mxu0 %v1773
        %1963 = vmatpush1.bf16.msra.mxu0 %v1772
        %1964 = vmatprep.subr.bf16.mxu0 %v1789
        %1965 = vmatpush1.bf16.msra.mxu0 %v1788
        %1966 = vmatprep.subr.bf16.mxu0 0
        %1967 = vmatpush1.bf16.msra.mxu0 0
        %1968 = vmatprep.subr.bf16.mxu0 0
        %1969 = vmatpush1.bf16.msra.mxu0 0
        %1970 = vmatprep.subr.bf16.mxu0 0
        %1971 = vmatpush1.bf16.msra.mxu0 0
        %1972 = vmatprep.subr.bf16.mxu0 0
        %1973 = vmatpush1.bf16.msra.mxu0 0
        %1974 = vmatprep.subr.bf16.mxu0 0
        %1975 = vmatpush1.bf16.msra.mxu0 0
        %1976 = vmatprep.subr.bf16.mxu0 0
        %1977 = vmatpush1.bf16.msra.mxu0 0
        %1978 = vmatprep.subr.bf16.mxu0 0
        %1979 = vmatpush1.bf16.msra.mxu0 0
        %1980 = vmatprep.subr.bf16.mxu0 0
        %1981 = vmatpush1.bf16.msra.mxu0 0
        %1982 = vmatprep.subr.bf16.mxu0 0
        %1983 = vmatpush1.bf16.msra.mxu0 0
        %1984 = vmatprep.subr.bf16.mxu0 0
        %1985 = vmatpush1.bf16.msra.mxu0 0
        %1986 = vmatprep.subr.bf16.mxu0 0
        %1987 = vmatpush1.bf16.msra.mxu0 0
        %1988 = vmatprep.subr.bf16.mxu0 0
        %1989 = vmatpush1.bf16.msra.mxu0 0
        %1990 = vmatprep.subr.bf16.mxu0 0
        %1991 = vmatpush1.bf16.msra.mxu0 0
        %1992 = vmatprep.subr.bf16.mxu0 0
        %1993 = vmatpush1.bf16.msra.mxu0 0
        %1994 = vmatprep.mubr.bf16.mxu0 0
        %1995 = vmatmul.mubr.bf16.gmra.mrb[0].mxu0 %v1831
        %v1996 = vpop.f32.mrb[0].mxu0
        %v1997 = vadd.f32 %v1617, %v1996
        %v1998 = vpop.f32.mrb[0].mxu0
        %v1999 = vadd.f32 %v1621, %v1998
        %v2000 = vpop.f32.mrb[0].mxu0
        %v2001 = vadd.f32 %v1617, %v2000
        %v2002 = vpop.f32.mrb[0].mxu0
        %v2003 = vadd.f32 %v1621, %v2002
        %2004 = vdwg.mxu0
        %2005 = vmatprep.subr.bf16.mxu0 %v1775
        %2006 = vmatpush1.bf16.msra.mxu0 %v1774
        %2007 = vmatprep.subr.bf16.mxu0 %v1791
        %2008 = vmatpush1.bf16.msra.mxu0 %v1790
        %2009 = vmatprep.subr.bf16.mxu0 0
        %2010 = vmatpush1.bf16.msra.mxu0 0
        %2011 = vmatprep.subr.bf16.mxu0 0
        %2012 = vmatpush1.bf16.msra.mxu0 0
        %2013 = vmatprep.subr.bf16.mxu0 0
        %2014 = vmatpush1.bf16.msra.mxu0 0
        %2015 = vmatprep.subr.bf16.mxu0 0
        %2016 = vmatpush1.bf16.msra.mxu0 0
        %2017 = vmatprep.subr.bf16.mxu0 0
        %2018 = vmatpush1.bf16.msra.mxu0 0
        %2019 = vmatprep.subr.bf16.mxu0 0
        %2020 = vmatpush1.bf16.msra.mxu0 0
        %2021 = vmatprep.subr.bf16.mxu0 0
        %2022 = vmatpush1.bf16.msra.mxu0 0
        %2023 = vmatprep.subr.bf16.mxu0 0
        %2024 = vmatpush1.bf16.msra.mxu0 0
        %2025 = vmatprep.subr.bf16.mxu0 0
        %2026 = vmatpush1.bf16.msra.mxu0 0
        %2027 = vmatprep.subr.bf16.mxu0 0
        %2028 = vmatpush1.bf16.msra.mxu0 0
        %2029 = vmatprep.subr.bf16.mxu0 0
        %2030 = vmatpush1.bf16.msra.mxu0 0
        %2031 = vmatprep.subr.bf16.mxu0 0
        %2032 = vmatpush1.bf16.msra.mxu0 0
        %2033 = vmatprep.subr.bf16.mxu0 0
        %2034 = vmatpush1.bf16.msra.mxu0 0
        %2035 = vmatprep.subr.bf16.mxu0 0
        %2036 = vmatpush1.bf16.msra.mxu0 0
        %2037 = vmatprep.mubr.bf16.mxu0 0
        %2038 = vmatmul.mubr.bf16.gmra.mrb[0].mxu0 %v1831
        %v2039 = vpop.f32.mrb[0].mxu0
        %v2040 = vadd.f32 %v1625, %v2039
        %v2041 = vpop.f32.mrb[0].mxu0
        %v2042 = vadd.f32 %v1629, %v2041
        %v2043 = vpop.f32.mrb[0].mxu0
        %v2044 = vadd.f32 %v1625, %v2043
        %v2045 = vpop.f32.mrb[0].mxu0
        %v2046 = vadd.f32 %v1629, %v2045
        %2047 = vdwg.mxu0
        %2048 = vmatprep.subr.bf16.mxu0 %v1777
        %2049 = vmatpush1.bf16.msra.mxu0 %v1776
        %2050 = vmatprep.subr.bf16.mxu0 %v1793
        %2051 = vmatpush1.bf16.msra.mxu0 %v1792
        %2052 = vmatprep.subr.bf16.mxu0 0
        %2053 = vmatpush1.bf16.msra.mxu0 0
        %2054 = vmatprep.subr.bf16.mxu0 0
        %2055 = vmatpush1.bf16.msra.mxu0 0
        %2056 = vmatprep.subr.bf16.mxu0 0
        %2057 = vmatpush1.bf16.msra.mxu0 0
        %2058 = vmatprep.subr.bf16.mxu0 0
        %2059 = vmatpush1.bf16.msra.mxu0 0
        %2060 = vmatprep.subr.bf16.mxu0 0
        %2061 = vmatpush1.bf16.msra.mxu0 0
        %2062 = vmatprep.subr.bf16.mxu0 0
        %2063 = vmatpush1.bf16.msra.mxu0 0
        %2064 = vmatprep.subr.bf16.mxu0 0
        %2065 = vmatpush1.bf16.msra.mxu0 0
        %2066 = vmatprep.subr.bf16.mxu0 0
        %2067 = vmatpush1.bf16.msra.mxu0 0
        %2068 = vmatprep.subr.bf16.mxu0 0
        %2069 = vmatpush1.bf16.msra.mxu0 0
        %2070 = vmatprep.subr.bf16.mxu0 0
        %2071 = vmatpush1.bf16.msra.mxu0 0
        %2072 = vmatprep.subr.bf16.mxu0 0
        %2073 = vmatpush1.bf16.msra.mxu0 0
        %2074 = vmatprep.subr.bf16.mxu0 0
        %2075 = vmatpush1.bf16.msra.mxu0 0
        %2076 = vmatprep.subr.bf16.mxu0 0
        %2077 = vmatpush1.bf16.msra.mxu0 0
        %2078 = vmatprep.subr.bf16.mxu0 0
        %2079 = vmatpush1.bf16.msra.mxu0 0
        %2080 = vmatprep.mubr.bf16.mxu0 0
        %2081 = vmatmul.mubr.bf16.gmra.mrb[0].mxu0 %v1831
        %v2082 = vpop.f32.mrb[0].mxu0
        %v2083 = vadd.f32 %v1633, %v2082
        %v2084 = vpop.f32.mrb[0].mxu0
        %v2085 = vadd.f32 %v1637, %v2084
        %v2086 = vpop.f32.mrb[0].mxu0
        %v2087 = vadd.f32 %v1633, %v2086
        %v2088 = vpop.f32.mrb[0].mxu0
        %v2089 = vadd.f32 %v1637, %v2088
        %2090 = vdwg.mxu0
        %2091 = vmatprep.subr.bf16.mxu0 %v1779
        %2092 = vmatpush1.bf16.msra.mxu0 %v1778
        %2093 = vmatprep.subr.bf16.mxu0 %v1795
        %2094 = vmatpush1.bf16.msra.mxu0 %v1794
        %2095 = vmatprep.subr.bf16.mxu0 0
        %2096 = vmatpush1.bf16.msra.mxu0 0
        %2097 = vmatprep.subr.bf16.mxu0 0
        %2098 = vmatpush1.bf16.msra.mxu0 0
        %2099 = vmatprep.subr.bf16.mxu0 0
        %2100 = vmatpush1.bf16.msra.mxu0 0
        %2101 = vmatprep.subr.bf16.mxu0 0
        %2102 = vmatpush1.bf16.msra.mxu0 0
        %2103 = vmatprep.subr.bf16.mxu0 0
        %2104 = vmatpush1.bf16.msra.mxu0 0
        %2105 = vmatprep.subr.bf16.mxu0 0
        %2106 = vmatpush1.bf16.msra.mxu0 0
        %2107 = vmatprep.subr.bf16.mxu0 0
        %2108 = vmatpush1.bf16.msra.mxu0 0
        %2109 = vmatprep.subr.bf16.mxu0 0
        %2110 = vmatpush1.bf16.msra.mxu0 0
        %2111 = vmatprep.subr.bf16.mxu0 0
        %2112 = vmatpush1.bf16.msra.mxu0 0
        %2113 = vmatprep.subr.bf16.mxu0 0
        %2114 = vmatpush1.bf16.msra.mxu0 0
        %2115 = vmatprep.subr.bf16.mxu0 0
        %2116 = vmatpush1.bf16.msra.mxu0 0
        %2117 = vmatprep.subr.bf16.mxu0 0
        %2118 = vmatpush1.bf16.msra.mxu0 0
        %2119 = vmatprep.subr.bf16.mxu0 0
        %2120 = vmatpush1.bf16.msra.mxu0 0
        %2121 = vmatprep.subr.bf16.mxu0 0
        %2122 = vmatpush1.bf16.msra.mxu0 0
        %2123 = vmatprep.mubr.bf16.mxu0 0
        %2124 = vmatmul.mubr.bf16.gmra.mrb[0].mxu0 %v1831
        %v2125 = vpop.f32.mrb[0].mxu0
        %v2126 = vadd.f32 %v1641, %v2125
        %v2127 = vpop.f32.mrb[0].mxu0
        %v2128 = vadd.f32 %v1645, %v2127
        %v2129 = vpop.f32.mrb[0].mxu0
        %v2130 = vadd.f32 %v1641, %v2129
        %v2131 = vpop.f32.mrb[0].mxu0
        %v2132 = vadd.f32 %v1645, %v2131
        %2133 = vdwg.mxu0
        %2134 = vmatprep.subr.bf16.mxu0 %v1781
        %2135 = vmatpush1.bf16.msra.mxu0 %v1780
        %2136 = vmatprep.subr.bf16.mxu0 %v1797
        %2137 = vmatpush1.bf16.msra.mxu0 %v1796
        %2138 = vmatprep.subr.bf16.mxu0 0
        %2139 = vmatpush1.bf16.msra.mxu0 0
        %2140 = vmatprep.subr.bf16.mxu0 0
        %2141 = vmatpush1.bf16.msra.mxu0 0
        %2142 = vmatprep.subr.bf16.mxu0 0
        %2143 = vmatpush1.bf16.msra.mxu0 0
        %2144 = vmatprep.subr.bf16.mxu0 0
        %2145 = vmatpush1.bf16.msra.mxu0 0
        %2146 = vmatprep.subr.bf16.mxu0 0
        %2147 = vmatpush1.bf16.msra.mxu0 0
        %2148 = vmatprep.subr.bf16.mxu0 0
        %2149 = vmatpush1.bf16.msra.mxu0 0
        %2150 = vmatprep.subr.bf16.mxu0 0
        %2151 = vmatpush1.bf16.msra.mxu0 0
        %2152 = vmatprep.subr.bf16.mxu0 0
        %2153 = vmatpush1.bf16.msra.mxu0 0
        %2154 = vmatprep.subr.bf16.mxu0 0
        %2155 = vmatpush1.bf16.msra.mxu0 0
        %2156 = vmatprep.subr.bf16.mxu0 0
        %2157 = vmatpush1.bf16.msra.mxu0 0
        %2158 = vmatprep.subr.bf16.mxu0 0
        %2159 = vmatpush1.bf16.msra.mxu0 0
        %2160 = vmatprep.subr.bf16.mxu0 0
        %2161 = vmatpush1.bf16.msra.mxu0 0
        %2162 = vmatprep.subr.bf16.mxu0 0
        %2163 = vmatpush1.bf16.msra.mxu0 0
        %2164 = vmatprep.subr.bf16.mxu0 0
        %2165 = vmatpush1.bf16.msra.mxu0 0
        %2166 = vmatprep.mubr.bf16.mxu0 0
        %2167 = vmatmul.mubr.bf16.gmra.mrb[0].mxu0 %v1831
        %v2168 = vpop.f32.mrb[0].mxu0
        %v2169 = vadd.f32 %v1649, %v2168
        %v2170 = vpop.f32.mrb[0].mxu0
        %v2171 = vadd.f32 %v1653, %v2170
        %v2172 = vpop.f32.mrb[0].mxu0
        %v2173 = vadd.f32 %v1649, %v2172
        %v2174 = vpop.f32.mrb[0].mxu0
        %v2175 = vadd.f32 %v1653, %v2174
        %2176 = vdwg.mxu0
        %v2177 = vmax.f32 %v1868, 0.0
        %v2178 = vmax.f32 %v1870, 0.0
        %v2179 = vmax.f32 %v1911, 0.0
        %v2180 = vmax.f32 %v1913, 0.0
        %v2181 = vmax.f32 %v1954, 0.0
        %v2182 = vmax.f32 %v1956, 0.0
        %v2183 = vmax.f32 %v1997, 0.0
        %v2184 = vmax.f32 %v1999, 0.0
        %v2185 = vmax.f32 %v2040, 0.0
        %v2186 = vmax.f32 %v2042, 0.0
        %v2187 = vmax.f32 %v2083, 0.0
        %v2188 = vmax.f32 %v2085, 0.0
        %v2189 = vmax.f32 %v2126, 0.0
        %v2190 = vmax.f32 %v2128, 0.0
        %v2191 = vmax.f32 %v2169, 0.0
        %v2192 = vmax.f32 %v2171, 0.0
        %v2193 = vmax.f32 %v1872, 0.0
        %v2194 = vmax.f32 %v1874, 0.0
        %v2195 = vmax.f32 %v1915, 0.0
        %v2196 = vmax.f32 %v1917, 0.0
        %v2197 = vmax.f32 %v1958, 0.0
        %v2198 = vmax.f32 %v1960, 0.0
        %v2199 = vmax.f32 %v2001, 0.0
        %v2200 = vmax.f32 %v2003, 0.0
        %v2201 = vmax.f32 %v2044, 0.0
        %v2202 = vmax.f32 %v2046, 0.0
        %v2203 = vmax.f32 %v2087, 0.0
        %v2204 = vmax.f32 %v2089, 0.0
        %v2205 = vmax.f32 %v2130, 0.0
        %v2206 = vmax.f32 %v2132, 0.0
        %v2207 = vmax.f32 %v2173, 0.0
        %v2208 = vmax.f32 %v2175, 0.0
        %v2209 = vpack.c.bf16 %v2193, %v2177
        %v2210 = vpack.c.bf16 %v2194, %v2178
        %v2211 = vpack.c.bf16 %v2195, %v2179
        %v2212 = vpack.c.bf16 %v2196, %v2180
        %v2213 = vpack.c.bf16 %v2197, %v2181
        %v2214 = vpack.c.bf16 %v2198, %v2182
        %v2215 = vpack.c.bf16 %v2199, %v2183
        %v2216 = vpack.c.bf16 %v2200, %v2184
        %v2217 = vpack.c.bf16 %v2201, %v2185
        %v2218 = vpack.c.bf16 %v2202, %v2186
        %v2219 = vpack.c.bf16 %v2203, %v2187
        %v2220 = vpack.c.bf16 %v2204, %v2188
        %v2221 = vpack.c.bf16 %v2205, %v2189
        %v2222 = vpack.c.bf16 %v2206, %v2190
        %v2223 = vpack.c.bf16 %v2207, %v2191
        %v2224 = vpack.c.bf16 %v2208, %v2192
        %v2225 = vld [vmem:[%s11] sm:$0xf]
        %v2226 = vld [vmem:[%s11 + $0x4] sm:$0xf]
        %v2227 = vld [vmem:[%s11 + $0x8] sm:$0xf]
        %v2228 = vld [vmem:[%s11 + $0xc] sm:$0xf]
        %v2229 = vld [vmem:[%s11 + $0x10] sm:$0xf]
        %v2230 = vld [vmem:[%s11 + $0x14] sm:$0xf]
        %v2231 = vld [vmem:[%s11 + $0x18] sm:$0xf]
        %v2232 = vld [vmem:[%s11 + $0x1c] sm:$0xf]
        %v2233 = vld [vmem:[%s11 + $0x20] sm:$0xf]
        %v2234 = vld [vmem:[%s11 + $0x24] sm:$0xf]
        %v2235 = vld [vmem:[%s11 + $0x28] sm:$0xf]
        %v2236 = vld [vmem:[%s11 + $0x2c] sm:$0xf]
        %v2237 = vld [vmem:[%s11 + $0x30] sm:$0xf]
        %v2238 = vld [vmem:[%s11 + $0x34] sm:$0xf]
        %v2239 = vld [vmem:[%s11 + $0x38] sm:$0xf]
        %v2240 = vld [vmem:[%s11 + $0x3c] sm:$0xf]
        %v2241 = vld [vmem:[%s11 + $0x40] sm:$0xf]
        %v2242 = vld [vmem:[%s11 + $0x44] sm:$0xf]
        %v2243 = vld [vmem:[%s11 + $0x48] sm:$0xf]
        %v2244 = vld [vmem:[%s11 + $0x4c] sm:$0xf]
        %v2245 = vld [vmem:[%s11 + $0x50] sm:$0xf]
        %v2246 = vld [vmem:[%s11 + $0x54] sm:$0xf]
        %v2247 = vld [vmem:[%s11 + $0x58] sm:$0xf]
        %v2248 = vld [vmem:[%s11 + $0x5c] sm:$0xf]
        %v2249 = vld [vmem:[%s11 + $0x60] sm:$0xf]
        %v2250 = vld [vmem:[%s11 + $0x64] sm:$0xf]
        %v2251 = vld [vmem:[%s11 + $0x68] sm:$0xf]
        %v2252 = vld [vmem:[%s11 + $0x6c] sm:$0xf]
        %v2253 = vld [vmem:[%s11 + $0x70] sm:$0xf]
        %v2254 = vld [vmem:[%s11 + $0x74] sm:$0xf]
        %v2255 = vld [vmem:[%s11 + $0x78] sm:$0xf]
        %v2256 = vld [vmem:[%s11 + $0x7c] sm:$0xf]
        %v2257 = vld [vmem:[%s11 + $0x80] sm:$0xf]
        %v2258 = vld [vmem:[%s11 + $0x84] sm:$0xf]
        %v2259 = vld [vmem:[%s11 + $0x88] sm:$0xf]
        %v2260 = vld [vmem:[%s11 + $0x8c] sm:$0xf]
        %v2261 = vld [vmem:[%s11 + $0x90] sm:$0xf]
        %v2262 = vld [vmem:[%s11 + $0x94] sm:$0xf]
        %v2263 = vld [vmem:[%s11 + $0x98] sm:$0xf]
        %v2264 = vld [vmem:[%s11 + $0x9c] sm:$0xf]
        %v2265 = vld [vmem:[%s11 + $0xa0] sm:$0xf]
        %v2266 = vld [vmem:[%s11 + $0xa4] sm:$0xf]
        %v2267 = vld [vmem:[%s11 + $0xa8] sm:$0xf]
        %v2268 = vld [vmem:[%s11 + $0xac] sm:$0xf]
        %v2269 = vld [vmem:[%s11 + $0xb0] sm:$0xf]
        %v2270 = vld [vmem:[%s11 + $0xb4] sm:$0xf]
        %v2271 = vld [vmem:[%s11 + $0xb8] sm:$0xf]
        %v2272 = vld [vmem:[%s11 + $0xbc] sm:$0xf]
        %v2273 = vld [vmem:[%s11 + $0xc0] sm:$0xf]
        %v2274 = vld [vmem:[%s11 + $0xc4] sm:$0xf]
        %v2275 = vld [vmem:[%s11 + $0xc8] sm:$0xf]
        %v2276 = vld [vmem:[%s11 + $0xcc] sm:$0xf]
        %v2277 = vld [vmem:[%s11 + $0xd0] sm:$0xf]
        %v2278 = vld [vmem:[%s11 + $0xd4] sm:$0xf]
        %v2279 = vld [vmem:[%s11 + $0xd8] sm:$0xf]
        %v2280 = vld [vmem:[%s11 + $0xdc] sm:$0xf]
        %v2281 = vld [vmem:[%s11 + $0xe0] sm:$0xf]
        %v2282 = vld [vmem:[%s11 + $0xe4] sm:$0xf]
        %v2283 = vld [vmem:[%s11 + $0xe8] sm:$0xf]
        %v2284 = vld [vmem:[%s11 + $0xec] sm:$0xf]
        %v2285 = vld [vmem:[%s11 + $0xf0] sm:$0xf]
        %v2286 = vld [vmem:[%s11 + $0xf4] sm:$0xf]
        %v2287 = vld [vmem:[%s11 + $0xf8] sm:$0xf]
        %v2288 = vld [vmem:[%s11 + $0xfc] sm:$0xf]
        %v2289 = vld [vmem:[%s11 + $0x100] sm:$0xf]
        %v2290 = vld [vmem:[%s11 + $0x104] sm:$0xf]
        %v2291 = vld [vmem:[%s11 + $0x108] sm:$0xf]
        %v2292 = vld [vmem:[%s11 + $0x10c] sm:$0xf]
        %v2293 = vld [vmem:[%s11 + $0x110] sm:$0xf]
        %v2294 = vld [vmem:[%s11 + $0x114] sm:$0xf]
        %v2295 = vld [vmem:[%s11 + $0x118] sm:$0xf]
        %v2296 = vld [vmem:[%s11 + $0x11c] sm:$0xf]
        %v2297 = vld [vmem:[%s11 + $0x120] sm:$0xf]
        %v2298 = vld [vmem:[%s11 + $0x124] sm:$0xf]
        %v2299 = vld [vmem:[%s11 + $0x128] sm:$0xf]
        %v2300 = vld [vmem:[%s11 + $0x12c] sm:$0xf]
        %v2301 = vld [vmem:[%s11 + $0x130] sm:$0xf]
        %v2302 = vld [vmem:[%s11 + $0x134] sm:$0xf]
        %v2303 = vld [vmem:[%s11 + $0x138] sm:$0xf]
        %v2304 = vld [vmem:[%s11 + $0x13c] sm:$0xf]
        %v2305 = vld [vmem:[%s11 + $0x140] sm:$0xf]
        %v2306 = vld [vmem:[%s11 + $0x144] sm:$0xf]
        %v2307 = vld [vmem:[%s11 + $0x148] sm:$0xf]
        %v2308 = vld [vmem:[%s11 + $0x14c] sm:$0xf]
        %v2309 = vld [vmem:[%s11 + $0x150] sm:$0xf]
        %v2310 = vld [vmem:[%s11 + $0x154] sm:$0xf]
        %v2311 = vld [vmem:[%s11 + $0x158] sm:$0xf]
        %v2312 = vld [vmem:[%s11 + $0x15c] sm:$0xf]
        %v2313 = vld [vmem:[%s11 + $0x160] sm:$0xf]
        %v2314 = vld [vmem:[%s11 + $0x164] sm:$0xf]
        %v2315 = vld [vmem:[%s11 + $0x168] sm:$0xf]
        %v2316 = vld [vmem:[%s11 + $0x16c] sm:$0xf]
        %v2317 = vld [vmem:[%s11 + $0x170] sm:$0xf]
        %v2318 = vld [vmem:[%s11 + $0x174] sm:$0xf]
        %v2319 = vld [vmem:[%s11 + $0x178] sm:$0xf]
        %v2320 = vld [vmem:[%s11 + $0x17c] sm:$0xf]
        %v2321 = vld [vmem:[%s11 + $0x180] sm:$0xf]
        %v2322 = vld [vmem:[%s11 + $0x184] sm:$0xf]
        %v2323 = vld [vmem:[%s11 + $0x188] sm:$0xf]
        %v2324 = vld [vmem:[%s11 + $0x18c] sm:$0xf]
        %v2325 = vld [vmem:[%s11 + $0x190] sm:$0xf]
        %v2326 = vld [vmem:[%s11 + $0x194] sm:$0xf]
        %v2327 = vld [vmem:[%s11 + $0x198] sm:$0xf]
        %v2328 = vld [vmem:[%s11 + $0x19c] sm:$0xf]
        %v2329 = vld [vmem:[%s11 + $0x1a0] sm:$0xf]
        %v2330 = vld [vmem:[%s11 + $0x1a4] sm:$0xf]
        %v2331 = vld [vmem:[%s11 + $0x1a8] sm:$0xf]
        %v2332 = vld [vmem:[%s11 + $0x1ac] sm:$0xf]
        %v2333 = vld [vmem:[%s11 + $0x1b0] sm:$0xf]
        %v2334 = vld [vmem:[%s11 + $0x1b4] sm:$0xf]
        %v2335 = vld [vmem:[%s11 + $0x1b8] sm:$0xf]
        %v2336 = vld [vmem:[%s11 + $0x1bc] sm:$0xf]
        %v2337 = vld [vmem:[%s11 + $0x1c0] sm:$0xf]
        %v2338 = vld [vmem:[%s11 + $0x1c4] sm:$0xf]
        %v2339 = vld [vmem:[%s11 + $0x1c8] sm:$0xf]
        %v2340 = vld [vmem:[%s11 + $0x1cc] sm:$0xf]
        %v2341 = vld [vmem:[%s11 + $0x1d0] sm:$0xf]
        %v2342 = vld [vmem:[%s11 + $0x1d4] sm:$0xf]
        %v2343 = vld [vmem:[%s11 + $0x1d8] sm:$0xf]
        %v2344 = vld [vmem:[%s11 + $0x1dc] sm:$0xf]
        %v2345 = vld [vmem:[%s11 + $0x1e0] sm:$0xf]
        %v2346 = vld [vmem:[%s11 + $0x1e4] sm:$0xf]
        %v2347 = vld [vmem:[%s11 + $0x1e8] sm:$0xf]
        %v2348 = vld [vmem:[%s11 + $0x1ec] sm:$0xf]
        %v2349 = vld [vmem:[%s11 + $0x1f0] sm:$0xf]
        %v2350 = vld [vmem:[%s11 + $0x1f4] sm:$0xf]
        %v2351 = vld [vmem:[%s11 + $0x1f8] sm:$0xf]
        %v2352 = vld [vmem:[%s11 + $0x1fc] sm:$0xf]
        %v2353 = vld [vmem:[%s11 + $0x200] sm:$0xf]
        %v2354 = vld [vmem:[%s11 + $0x204] sm:$0xf]
        %v2355 = vld [vmem:[%s11 + $0x208] sm:$0xf]
        %v2356 = vld [vmem:[%s11 + $0x20c] sm:$0xf]
        %v2357 = vld [vmem:[%s11 + $0x210] sm:$0xf]
        %v2358 = vld [vmem:[%s11 + $0x214] sm:$0xf]
        %v2359 = vld [vmem:[%s11 + $0x218] sm:$0xf]
        %v2360 = vld [vmem:[%s11 + $0x21c] sm:$0xf]
        %v2361 = vld [vmem:[%s11 + $0x220] sm:$0xf]
        %v2362 = vld [vmem:[%s11 + $0x224] sm:$0xf]
        %v2363 = vld [vmem:[%s11 + $0x228] sm:$0xf]
        %v2364 = vld [vmem:[%s11 + $0x22c] sm:$0xf]
        %v2365 = vld [vmem:[%s11 + $0x230] sm:$0xf]
        %v2366 = vld [vmem:[%s11 + $0x234] sm:$0xf]
        %v2367 = vld [vmem:[%s11 + $0x238] sm:$0xf]
        %v2368 = vld [vmem:[%s11 + $0x23c] sm:$0xf]
        %v2369 = vld [vmem:[%s11 + $0x240] sm:$0xf]
        %v2370 = vld [vmem:[%s11 + $0x244] sm:$0xf]
        %v2371 = vld [vmem:[%s11 + $0x248] sm:$0xf]
        %v2372 = vld [vmem:[%s11 + $0x24c] sm:$0xf]
        %v2373 = vld [vmem:[%s11 + $0x250] sm:$0xf]
        %v2374 = vld [vmem:[%s11 + $0x254] sm:$0xf]
        %v2375 = vld [vmem:[%s11 + $0x258] sm:$0xf]
        %v2376 = vld [vmem:[%s11 + $0x25c] sm:$0xf]
        %v2377 = vld [vmem:[%s11 + $0x260] sm:$0xf]
        %v2378 = vld [vmem:[%s11 + $0x264] sm:$0xf]
        %v2379 = vld [vmem:[%s11 + $0x268] sm:$0xf]
        %v2380 = vld [vmem:[%s11 + $0x26c] sm:$0xf]
        %v2381 = vld [vmem:[%s11 + $0x270] sm:$0xf]
        %v2382 = vld [vmem:[%s11 + $0x274] sm:$0xf]
        %v2383 = vld [vmem:[%s11 + $0x278] sm:$0xf]
        %v2384 = vld [vmem:[%s11 + $0x27c] sm:$0xf]
        %v2385 = vld [vmem:[%s11 + $0x280] sm:$0xf]
        %v2386 = vld [vmem:[%s11 + $0x284] sm:$0xf]
        %v2387 = vld [vmem:[%s11 + $0x288] sm:$0xf]
        %v2388 = vld [vmem:[%s11 + $0x28c] sm:$0xf]
        %v2389 = vld [vmem:[%s11 + $0x290] sm:$0xf]
        %v2390 = vld [vmem:[%s11 + $0x294] sm:$0xf]
        %v2391 = vld [vmem:[%s11 + $0x298] sm:$0xf]
        %v2392 = vld [vmem:[%s11 + $0x29c] sm:$0xf]
        %v2393 = vld [vmem:[%s11 + $0x2a0] sm:$0xf]
        %v2394 = vld [vmem:[%s11 + $0x2a4] sm:$0xf]
        %v2395 = vld [vmem:[%s11 + $0x2a8] sm:$0xf]
        %v2396 = vld [vmem:[%s11 + $0x2ac] sm:$0xf]
        %v2397 = vld [vmem:[%s11 + $0x2b0] sm:$0xf]
        %v2398 = vld [vmem:[%s11 + $0x2b4] sm:$0xf]
        %v2399 = vld [vmem:[%s11 + $0x2b8] sm:$0xf]
        %v2400 = vld [vmem:[%s11 + $0x2bc] sm:$0xf]
        %v2401 = vld [vmem:[%s11 + $0x2c0] sm:$0xf]
        %v2402 = vld [vmem:[%s11 + $0x2c4] sm:$0xf]
        %v2403 = vld [vmem:[%s11 + $0x2c8] sm:$0xf]
        %v2404 = vld [vmem:[%s11 + $0x2cc] sm:$0xf]
        %v2405 = vld [vmem:[%s11 + $0x2d0] sm:$0xf]
        %v2406 = vld [vmem:[%s11 + $0x2d4] sm:$0xf]
        %v2407 = vld [vmem:[%s11 + $0x2d8] sm:$0xf]
        %v2408 = vld [vmem:[%s11 + $0x2dc] sm:$0xf]
        %v2409 = vld [vmem:[%s11 + $0x2e0] sm:$0xf]
        %v2410 = vld [vmem:[%s11 + $0x2e4] sm:$0xf]
        %v2411 = vld [vmem:[%s11 + $0x2e8] sm:$0xf]
        %v2412 = vld [vmem:[%s11 + $0x2ec] sm:$0xf]
        %v2413 = vld [vmem:[%s11 + $0x2f0] sm:$0xf]
        %v2414 = vld [vmem:[%s11 + $0x2f4] sm:$0xf]
        %v2415 = vld [vmem:[%s11 + $0x2f8] sm:$0xf]
        %v2416 = vld [vmem:[%s11 + $0x2fc] sm:$0xf]
        %v2417 = vld [vmem:[%s11 + $0x300] sm:$0xf]
        %v2418 = vld [vmem:[%s11 + $0x304] sm:$0xf]
        %v2419 = vld [vmem:[%s11 + $0x308] sm:$0xf]
        %v2420 = vld [vmem:[%s11 + $0x30c] sm:$0xf]
        %v2421 = vld [vmem:[%s11 + $0x310] sm:$0xf]
        %v2422 = vld [vmem:[%s11 + $0x314] sm:$0xf]
        %v2423 = vld [vmem:[%s11 + $0x318] sm:$0xf]
        %v2424 = vld [vmem:[%s11 + $0x31c] sm:$0xf]
        %v2425 = vld [vmem:[%s11 + $0x320] sm:$0xf]
        %v2426 = vld [vmem:[%s11 + $0x324] sm:$0xf]
        %v2427 = vld [vmem:[%s11 + $0x328] sm:$0xf]
        %v2428 = vld [vmem:[%s11 + $0x32c] sm:$0xf]
        %v2429 = vld [vmem:[%s11 + $0x330] sm:$0xf]
        %v2430 = vld [vmem:[%s11 + $0x334] sm:$0xf]
        %v2431 = vld [vmem:[%s11 + $0x338] sm:$0xf]
        %v2432 = vld [vmem:[%s11 + $0x33c] sm:$0xf]
        %v2433 = vld [vmem:[%s11 + $0x340] sm:$0xf]
        %v2434 = vld [vmem:[%s11 + $0x344] sm:$0xf]
        %v2435 = vld [vmem:[%s11 + $0x348] sm:$0xf]
        %v2436 = vld [vmem:[%s11 + $0x34c] sm:$0xf]
        %v2437 = vld [vmem:[%s11 + $0x350] sm:$0xf]
        %v2438 = vld [vmem:[%s11 + $0x354] sm:$0xf]
        %v2439 = vld [vmem:[%s11 + $0x358] sm:$0xf]
        %v2440 = vld [vmem:[%s11 + $0x35c] sm:$0xf]
        %v2441 = vld [vmem:[%s11 + $0x360] sm:$0xf]
        %v2442 = vld [vmem:[%s11 + $0x364] sm:$0xf]
        %v2443 = vld [vmem:[%s11 + $0x368] sm:$0xf]
        %v2444 = vld [vmem:[%s11 + $0x36c] sm:$0xf]
        %v2445 = vld [vmem:[%s11 + $0x370] sm:$0xf]
        %v2446 = vld [vmem:[%s11 + $0x374] sm:$0xf]
        %v2447 = vld [vmem:[%s11 + $0x378] sm:$0xf]
        %v2448 = vld [vmem:[%s11 + $0x37c] sm:$0xf]
        %v2449 = vld [vmem:[%s11 + $0x380] sm:$0xf]
        %v2450 = vld [vmem:[%s11 + $0x384] sm:$0xf]
        %v2451 = vld [vmem:[%s11 + $0x388] sm:$0xf]
        %v2452 = vld [vmem:[%s11 + $0x38c] sm:$0xf]
        %v2453 = vld [vmem:[%s11 + $0x390] sm:$0xf]
        %v2454 = vld [vmem:[%s11 + $0x394] sm:$0xf]
        %v2455 = vld [vmem:[%s11 + $0x398] sm:$0xf]
        %v2456 = vld [vmem:[%s11 + $0x39c] sm:$0xf]
        %v2457 = vld [vmem:[%s11 + $0x3a0] sm:$0xf]
        %v2458 = vld [vmem:[%s11 + $0x3a4] sm:$0xf]
        %v2459 = vld [vmem:[%s11 + $0x3a8] sm:$0xf]
        %v2460 = vld [vmem:[%s11 + $0x3ac] sm:$0xf]
        %v2461 = vld [vmem:[%s11 + $0x3b0] sm:$0xf]
        %v2462 = vld [vmem:[%s11 + $0x3b4] sm:$0xf]
        %v2463 = vld [vmem:[%s11 + $0x3b8] sm:$0xf]
        %v2464 = vld [vmem:[%s11 + $0x3bc] sm:$0xf]
        %v2465 = vld [vmem:[%s11 + $0x3c0] sm:$0xf]
        %v2466 = vld [vmem:[%s11 + $0x3c4] sm:$0xf]
        %v2467 = vld [vmem:[%s11 + $0x3c8] sm:$0xf]
        %v2468 = vld [vmem:[%s11 + $0x3cc] sm:$0xf]
        %v2469 = vld [vmem:[%s11 + $0x3d0] sm:$0xf]
        %v2470 = vld [vmem:[%s11 + $0x3d4] sm:$0xf]
        %v2471 = vld [vmem:[%s11 + $0x3d8] sm:$0xf]
        %v2472 = vld [vmem:[%s11 + $0x3dc] sm:$0xf]
        %v2473 = vld [vmem:[%s11 + $0x3e0] sm:$0xf]
        %v2474 = vld [vmem:[%s11 + $0x3e4] sm:$0xf]
        %v2475 = vld [vmem:[%s11 + $0x3e8] sm:$0xf]
        %v2476 = vld [vmem:[%s11 + $0x3ec] sm:$0xf]
        %v2477 = vld [vmem:[%s11 + $0x3f0] sm:$0xf]
        %v2478 = vld [vmem:[%s11 + $0x3f4] sm:$0xf]
        %v2479 = vld [vmem:[%s11 + $0x3f8] sm:$0xf]
        %v2480 = vld [vmem:[%s11 + $0x3fc] sm:$0xf]
        %v2481 = vld [vmem:[%s12] sm:$0x1]
        %v2483 = vlaneseq
        %v2484 = vshrl.u32 %v2483, 7
        %v2485 = vsub.s32 0, %v2484
        %v2486 = vrot.slane %v2481, %v2485
        %v2744 = vunpack.c.l.b16 %v2225
        %v2745 = vunpack.c.l.b16 %v2226
        %v2746 = vunpack.c.l.b16 %v2227
        %v2747 = vunpack.c.l.b16 %v2228
        %v2748 = vunpack.c.l.b16 %v2229
        %v2749 = vunpack.c.l.b16 %v2230
        %v2750 = vunpack.c.l.b16 %v2231
        %v2751 = vunpack.c.l.b16 %v2232
        %v2752 = vunpack.c.l.b16 %v2233
        %v2753 = vunpack.c.l.b16 %v2234
        %v2754 = vunpack.c.l.b16 %v2235
        %v2755 = vunpack.c.l.b16 %v2236
        %v2756 = vunpack.c.l.b16 %v2237
        %v2757 = vunpack.c.l.b16 %v2238
        %v2758 = vunpack.c.l.b16 %v2239
        %v2759 = vunpack.c.l.b16 %v2240
        %v2760 = vunpack.c.l.b16 %v2241
        %v2761 = vunpack.c.l.b16 %v2242
        %v2762 = vunpack.c.l.b16 %v2243
        %v2763 = vunpack.c.l.b16 %v2244
        %v2764 = vunpack.c.l.b16 %v2245
        %v2765 = vunpack.c.l.b16 %v2246
        %v2766 = vunpack.c.l.b16 %v2247
        %v2767 = vunpack.c.l.b16 %v2248
        %v2768 = vunpack.c.l.b16 %v2249
        %v2769 = vunpack.c.l.b16 %v2250
        %v2770 = vunpack.c.l.b16 %v2251
        %v2771 = vunpack.c.l.b16 %v2252
        %v2772 = vunpack.c.l.b16 %v2253
        %v2773 = vunpack.c.l.b16 %v2254
        %v2774 = vunpack.c.l.b16 %v2255
        %v2775 = vunpack.c.l.b16 %v2256
        %v2776 = vunpack.c.l.b16 %v2257
        %v2777 = vunpack.c.l.b16 %v2258
        %v2778 = vunpack.c.l.b16 %v2259
        %v2779 = vunpack.c.l.b16 %v2260
        %v2780 = vunpack.c.l.b16 %v2261
        %v2781 = vunpack.c.l.b16 %v2262
        %v2782 = vunpack.c.l.b16 %v2263
        %v2783 = vunpack.c.l.b16 %v2264
        %v2784 = vunpack.c.l.b16 %v2265
        %v2785 = vunpack.c.l.b16 %v2266
        %v2786 = vunpack.c.l.b16 %v2267
        %v2787 = vunpack.c.l.b16 %v2268
        %v2788 = vunpack.c.l.b16 %v2269
        %v2789 = vunpack.c.l.b16 %v2270
        %v2790 = vunpack.c.l.b16 %v2271
        %v2791 = vunpack.c.l.b16 %v2272
        %v2792 = vunpack.c.l.b16 %v2273
        %v2793 = vunpack.c.l.b16 %v2274
        %v2794 = vunpack.c.l.b16 %v2275
        %v2795 = vunpack.c.l.b16 %v2276
        %v2796 = vunpack.c.l.b16 %v2277
        %v2797 = vunpack.c.l.b16 %v2278
        %v2798 = vunpack.c.l.b16 %v2279
        %v2799 = vunpack.c.l.b16 %v2280
        %v2800 = vunpack.c.l.b16 %v2281
        %v2801 = vunpack.c.l.b16 %v2282
        %v2802 = vunpack.c.l.b16 %v2283
        %v2803 = vunpack.c.l.b16 %v2284
        %v2804 = vunpack.c.l.b16 %v2285
        %v2805 = vunpack.c.l.b16 %v2286
        %v2806 = vunpack.c.l.b16 %v2287
        %v2807 = vunpack.c.l.b16 %v2288
        %v2808 = vunpack.c.l.b16 %v2289
        %v2809 = vunpack.c.l.b16 %v2290
        %v2810 = vunpack.c.l.b16 %v2291
        %v2811 = vunpack.c.l.b16 %v2292
        %v2812 = vunpack.c.l.b16 %v2293
        %v2813 = vunpack.c.l.b16 %v2294
        %v2814 = vunpack.c.l.b16 %v2295
        %v2815 = vunpack.c.l.b16 %v2296
        %v2816 = vunpack.c.l.b16 %v2297
        %v2817 = vunpack.c.l.b16 %v2298
        %v2818 = vunpack.c.l.b16 %v2299
        %v2819 = vunpack.c.l.b16 %v2300
        %v2820 = vunpack.c.l.b16 %v2301
        %v2821 = vunpack.c.l.b16 %v2302
        %v2822 = vunpack.c.l.b16 %v2303
        %v2823 = vunpack.c.l.b16 %v2304
        %v2824 = vunpack.c.l.b16 %v2305
        %v2825 = vunpack.c.l.b16 %v2306
        %v2826 = vunpack.c.l.b16 %v2307
        %v2827 = vunpack.c.l.b16 %v2308
        %v2828 = vunpack.c.l.b16 %v2309
        %v2829 = vunpack.c.l.b16 %v2310
        %v2830 = vunpack.c.l.b16 %v2311
        %v2831 = vunpack.c.l.b16 %v2312
        %v2832 = vunpack.c.l.b16 %v2313
        %v2833 = vunpack.c.l.b16 %v2314
        %v2834 = vunpack.c.l.b16 %v2315
        %v2835 = vunpack.c.l.b16 %v2316
        %v2836 = vunpack.c.l.b16 %v2317
        %v2837 = vunpack.c.l.b16 %v2318
        %v2838 = vunpack.c.l.b16 %v2319
        %v2839 = vunpack.c.l.b16 %v2320
        %v2840 = vunpack.c.l.b16 %v2321
        %v2841 = vunpack.c.l.b16 %v2322
        %v2842 = vunpack.c.l.b16 %v2323
        %v2843 = vunpack.c.l.b16 %v2324
        %v2844 = vunpack.c.l.b16 %v2325
        %v2845 = vunpack.c.l.b16 %v2326
        %v2846 = vunpack.c.l.b16 %v2327
        %v2847 = vunpack.c.l.b16 %v2328
        %v2848 = vunpack.c.l.b16 %v2329
        %v2849 = vunpack.c.l.b16 %v2330
        %v2850 = vunpack.c.l.b16 %v2331
        %v2851 = vunpack.c.l.b16 %v2332
        %v2852 = vunpack.c.l.b16 %v2333
        %v2853 = vunpack.c.l.b16 %v2334
        %v2854 = vunpack.c.l.b16 %v2335
        %v2855 = vunpack.c.l.b16 %v2336
        %v2856 = vunpack.c.l.b16 %v2337
        %v2857 = vunpack.c.l.b16 %v2338
        %v2858 = vunpack.c.l.b16 %v2339
        %v2859 = vunpack.c.l.b16 %v2340
        %v2860 = vunpack.c.l.b16 %v2341
        %v2861 = vunpack.c.l.b16 %v2342
        %v2862 = vunpack.c.l.b16 %v2343
        %v2863 = vunpack.c.l.b16 %v2344
        %v2864 = vunpack.c.l.b16 %v2345
        %v2865 = vunpack.c.l.b16 %v2346
        %v2866 = vunpack.c.l.b16 %v2347
        %v2867 = vunpack.c.l.b16 %v2348
        %v2868 = vunpack.c.l.b16 %v2349
        %v2869 = vunpack.c.l.b16 %v2350
        %v2870 = vunpack.c.l.b16 %v2351
        %v2871 = vunpack.c.l.b16 %v2352
        %v2872 = vunpack.c.l.b16 %v2353
        %v2873 = vunpack.c.l.b16 %v2354
        %v2874 = vunpack.c.l.b16 %v2355
        %v2875 = vunpack.c.l.b16 %v2356
        %v2876 = vunpack.c.l.b16 %v2357
        %v2877 = vunpack.c.l.b16 %v2358
        %v2878 = vunpack.c.l.b16 %v2359
        %v2879 = vunpack.c.l.b16 %v2360
        %v2880 = vunpack.c.l.b16 %v2361
        %v2881 = vunpack.c.l.b16 %v2362
        %v2882 = vunpack.c.l.b16 %v2363
        %v2883 = vunpack.c.l.b16 %v2364
        %v2884 = vunpack.c.l.b16 %v2365
        %v2885 = vunpack.c.l.b16 %v2366
        %v2886 = vunpack.c.l.b16 %v2367
        %v2887 = vunpack.c.l.b16 %v2368
        %v2888 = vunpack.c.l.b16 %v2369
        %v2889 = vunpack.c.l.b16 %v2370
        %v2890 = vunpack.c.l.b16 %v2371
        %v2891 = vunpack.c.l.b16 %v2372
        %v2892 = vunpack.c.l.b16 %v2373
        %v2893 = vunpack.c.l.b16 %v2374
        %v2894 = vunpack.c.l.b16 %v2375
        %v2895 = vunpack.c.l.b16 %v2376
        %v2896 = vunpack.c.l.b16 %v2377
        %v2897 = vunpack.c.l.b16 %v2378
        %v2898 = vunpack.c.l.b16 %v2379
        %v2899 = vunpack.c.l.b16 %v2380
        %v2900 = vunpack.c.l.b16 %v2381
        %v2901 = vunpack.c.l.b16 %v2382
        %v2902 = vunpack.c.l.b16 %v2383
        %v2903 = vunpack.c.l.b16 %v2384
        %v2904 = vunpack.c.l.b16 %v2385
        %v2905 = vunpack.c.l.b16 %v2386
        %v2906 = vunpack.c.l.b16 %v2387
        %v2907 = vunpack.c.l.b16 %v2388
        %v2908 = vunpack.c.l.b16 %v2389
        %v2909 = vunpack.c.l.b16 %v2390
        %v2910 = vunpack.c.l.b16 %v2391
        %v2911 = vunpack.c.l.b16 %v2392
        %v2912 = vunpack.c.l.b16 %v2393
        %v2913 = vunpack.c.l.b16 %v2394
        %v2914 = vunpack.c.l.b16 %v2395
        %v2915 = vunpack.c.l.b16 %v2396
        %v2916 = vunpack.c.l.b16 %v2397
        %v2917 = vunpack.c.l.b16 %v2398
        %v2918 = vunpack.c.l.b16 %v2399
        %v2919 = vunpack.c.l.b16 %v2400
        %v2920 = vunpack.c.l.b16 %v2401
        %v2921 = vunpack.c.l.b16 %v2402
        %v2922 = vunpack.c.l.b16 %v2403
        %v2923 = vunpack.c.l.b16 %v2404
        %v2924 = vunpack.c.l.b16 %v2405
        %v2925 = vunpack.c.l.b16 %v2406
        %v2926 = vunpack.c.l.b16 %v2407
        %v2927 = vunpack.c.l.b16 %v2408
        %v2928 = vunpack.c.l.b16 %v2409
        %v2929 = vunpack.c.l.b16 %v2410
        %v2930 = vunpack.c.l.b16 %v2411
        %v2931 = vunpack.c.l.b16 %v2412
        %v2932 = vunpack.c.l.b16 %v2413
        %v2933 = vunpack.c.l.b16 %v2414
        %v2934 = vunpack.c.l.b16 %v2415
        %v2935 = vunpack.c.l.b16 %v2416
        %v2936 = vunpack.c.l.b16 %v2417
        %v2937 = vunpack.c.l.b16 %v2418
        %v2938 = vunpack.c.l.b16 %v2419
        %v2939 = vunpack.c.l.b16 %v2420
        %v2940 = vunpack.c.l.b16 %v2421
        %v2941 = vunpack.c.l.b16 %v2422
        %v2942 = vunpack.c.l.b16 %v2423
        %v2943 = vunpack.c.l.b16 %v2424
        %v2944 = vunpack.c.l.b16 %v2425
        %v2945 = vunpack.c.l.b16 %v2426
        %v2946 = vunpack.c.l.b16 %v2427
        %v2947 = vunpack.c.l.b16 %v2428
        %v2948 = vunpack.c.l.b16 %v2429
        %v2949 = vunpack.c.l.b16 %v2430
        %v2950 = vunpack.c.l.b16 %v2431
        %v2951 = vunpack.c.l.b16 %v2432
        %v2952 = vunpack.c.l.b16 %v2433
        %v2953 = vunpack.c.l.b16 %v2434
        %v2954 = vunpack.c.l.b16 %v2435
        %v2955 = vunpack.c.l.b16 %v2436
        %v2956 = vunpack.c.l.b16 %v2437
        %v2957 = vunpack.c.l.b16 %v2438
        %v2958 = vunpack.c.l.b16 %v2439
        %v2959 = vunpack.c.l.b16 %v2440
        %v2960 = vunpack.c.l.b16 %v2441
        %v2961 = vunpack.c.l.b16 %v2442
        %v2962 = vunpack.c.l.b16 %v2443
        %v2963 = vunpack.c.l.b16 %v2444
        %v2964 = vunpack.c.l.b16 %v2445
        %v2965 = vunpack.c.l.b16 %v2446
        %v2966 = vunpack.c.l.b16 %v2447
        %v2967 = vunpack.c.l.b16 %v2448
        %v2968 = vunpack.c.l.b16 %v2449
        %v2969 = vunpack.c.l.b16 %v2450
        %v2970 = vunpack.c.l.b16 %v2451
        %v2971 = vunpack.c.l.b16 %v2452
        %v2972 = vunpack.c.l.b16 %v2453
        %v2973 = vunpack.c.l.b16 %v2454
        %v2974 = vunpack.c.l.b16 %v2455
        %v2975 = vunpack.c.l.b16 %v2456
        %v2976 = vunpack.c.l.b16 %v2457
        %v2977 = vunpack.c.l.b16 %v2458
        %v2978 = vunpack.c.l.b16 %v2459
        %v2979 = vunpack.c.l.b16 %v2460
        %v2980 = vunpack.c.l.b16 %v2461
        %v2981 = vunpack.c.l.b16 %v2462
        %v2982 = vunpack.c.l.b16 %v2463
        %v2983 = vunpack.c.l.b16 %v2464
        %v2984 = vunpack.c.l.b16 %v2465
        %v2985 = vunpack.c.l.b16 %v2466
        %v2986 = vunpack.c.l.b16 %v2467
        %v2987 = vunpack.c.l.b16 %v2468
        %v2988 = vunpack.c.l.b16 %v2469
        %v2989 = vunpack.c.l.b16 %v2470
        %v2990 = vunpack.c.l.b16 %v2471
        %v2991 = vunpack.c.l.b16 %v2472
        %v2992 = vunpack.c.l.b16 %v2473
        %v2993 = vunpack.c.l.b16 %v2474
        %v2994 = vunpack.c.l.b16 %v2475
        %v2995 = vunpack.c.l.b16 %v2476
        %v2996 = vunpack.c.l.b16 %v2477
        %v2997 = vunpack.c.l.b16 %v2478
        %v2998 = vunpack.c.l.b16 %v2479
        %v2999 = vunpack.c.l.b16 %v2480
        %v3000 = vpack.c.b16 %v2745, %v2744
        %v3001 = vpack.c.b16 %v2747, %v2746
        %v3002 = vpack.c.b16 %v2749, %v2748
        %v3003 = vpack.c.b16 %v2751, %v2750
        %v3004 = vpack.c.b16 %v2753, %v2752
        %v3005 = vpack.c.b16 %v2755, %v2754
        %v3006 = vpack.c.b16 %v2757, %v2756
        %v3007 = vpack.c.b16 %v2759, %v2758
        %v3008 = vpack.c.b16 %v2761, %v2760
        %v3009 = vpack.c.b16 %v2763, %v2762
        %v3010 = vpack.c.b16 %v2765, %v2764
        %v3011 = vpack.c.b16 %v2767, %v2766
        %v3012 = vpack.c.b16 %v2769, %v2768
        %v3013 = vpack.c.b16 %v2771, %v2770
        %v3014 = vpack.c.b16 %v2773, %v2772
        %v3015 = vpack.c.b16 %v2775, %v2774
        %v3016 = vpack.c.b16 %v2777, %v2776
        %v3017 = vpack.c.b16 %v2779, %v2778
        %v3018 = vpack.c.b16 %v2781, %v2780
        %v3019 = vpack.c.b16 %v2783, %v2782
        %v3020 = vpack.c.b16 %v2785, %v2784
        %v3021 = vpack.c.b16 %v2787, %v2786
        %v3022 = vpack.c.b16 %v2789, %v2788
        %v3023 = vpack.c.b16 %v2791, %v2790
        %v3024 = vpack.c.b16 %v2793, %v2792
        %v3025 = vpack.c.b16 %v2795, %v2794
        %v3026 = vpack.c.b16 %v2797, %v2796
        %v3027 = vpack.c.b16 %v2799, %v2798
        %v3028 = vpack.c.b16 %v2801, %v2800
        %v3029 = vpack.c.b16 %v2803, %v2802
        %v3030 = vpack.c.b16 %v2805, %v2804
        %v3031 = vpack.c.b16 %v2807, %v2806
        %v3032 = vpack.c.b16 %v2809, %v2808
        %v3033 = vpack.c.b16 %v2811, %v2810
        %v3034 = vpack.c.b16 %v2813, %v2812
        %v3035 = vpack.c.b16 %v2815, %v2814
        %v3036 = vpack.c.b16 %v2817, %v2816
        %v3037 = vpack.c.b16 %v2819, %v2818
        %v3038 = vpack.c.b16 %v2821, %v2820
        %v3039 = vpack.c.b16 %v2823, %v2822
        %v3040 = vpack.c.b16 %v2825, %v2824
        %v3041 = vpack.c.b16 %v2827, %v2826
        %v3042 = vpack.c.b16 %v2829, %v2828
        %v3043 = vpack.c.b16 %v2831, %v2830
        %v3044 = vpack.c.b16 %v2833, %v2832
        %v3045 = vpack.c.b16 %v2835, %v2834
        %v3046 = vpack.c.b16 %v2837, %v2836
        %v3047 = vpack.c.b16 %v2839, %v2838
        %v3048 = vpack.c.b16 %v2841, %v2840
        %v3049 = vpack.c.b16 %v2843, %v2842
        %v3050 = vpack.c.b16 %v2845, %v2844
        %v3051 = vpack.c.b16 %v2847, %v2846
        %v3052 = vpack.c.b16 %v2849, %v2848
        %v3053 = vpack.c.b16 %v2851, %v2850
        %v3054 = vpack.c.b16 %v2853, %v2852
        %v3055 = vpack.c.b16 %v2855, %v2854
        %v3056 = vpack.c.b16 %v2857, %v2856
        %v3057 = vpack.c.b16 %v2859, %v2858
        %v3058 = vpack.c.b16 %v2861, %v2860
        %v3059 = vpack.c.b16 %v2863, %v2862
        %v3060 = vpack.c.b16 %v2865, %v2864
        %v3061 = vpack.c.b16 %v2867, %v2866
        %v3062 = vpack.c.b16 %v2869, %v2868
        %v3063 = vpack.c.b16 %v2871, %v2870
        %v3064 = vpack.c.b16 %v2873, %v2872
        %v3065 = vpack.c.b16 %v2875, %v2874
        %v3066 = vpack.c.b16 %v2877, %v2876
        %v3067 = vpack.c.b16 %v2879, %v2878
        %v3068 = vpack.c.b16 %v2881, %v2880
        %v3069 = vpack.c.b16 %v2883, %v2882
        %v3070 = vpack.c.b16 %v2885, %v2884
        %v3071 = vpack.c.b16 %v2887, %v2886
        %v3072 = vpack.c.b16 %v2889, %v2888
        %v3073 = vpack.c.b16 %v2891, %v2890
        %v3074 = vpack.c.b16 %v2893, %v2892
        %v3075 = vpack.c.b16 %v2895, %v2894
        %v3076 = vpack.c.b16 %v2897, %v2896
        %v3077 = vpack.c.b16 %v2899, %v2898
        %v3078 = vpack.c.b16 %v2901, %v2900
        %v3079 = vpack.c.b16 %v2903, %v2902
        %v3080 = vpack.c.b16 %v2905, %v2904
        %v3081 = vpack.c.b16 %v2907, %v2906
        %v3082 = vpack.c.b16 %v2909, %v2908
        %v3083 = vpack.c.b16 %v2911, %v2910
        %v3084 = vpack.c.b16 %v2913, %v2912
        %v3085 = vpack.c.b16 %v2915, %v2914
        %v3086 = vpack.c.b16 %v2917, %v2916
        %v3087 = vpack.c.b16 %v2919, %v2918
        %v3088 = vpack.c.b16 %v2921, %v2920
        %v3089 = vpack.c.b16 %v2923, %v2922
        %v3090 = vpack.c.b16 %v2925, %v2924
        %v3091 = vpack.c.b16 %v2927, %v2926
        %v3092 = vpack.c.b16 %v2929, %v2928
        %v3093 = vpack.c.b16 %v2931, %v2930
        %v3094 = vpack.c.b16 %v2933, %v2932
        %v3095 = vpack.c.b16 %v2935, %v2934
        %v3096 = vpack.c.b16 %v2937, %v2936
        %v3097 = vpack.c.b16 %v2939, %v2938
        %v3098 = vpack.c.b16 %v2941, %v2940
        %v3099 = vpack.c.b16 %v2943, %v2942
        %v3100 = vpack.c.b16 %v2945, %v2944
        %v3101 = vpack.c.b16 %v2947, %v2946
        %v3102 = vpack.c.b16 %v2949, %v2948
        %v3103 = vpack.c.b16 %v2951, %v2950
        %v3104 = vpack.c.b16 %v2953, %v2952
        %v3105 = vpack.c.b16 %v2955, %v2954
        %v3106 = vpack.c.b16 %v2957, %v2956
        %v3107 = vpack.c.b16 %v2959, %v2958
        %v3108 = vpack.c.b16 %v2961, %v2960
        %v3109 = vpack.c.b16 %v2963, %v2962
        %v3110 = vpack.c.b16 %v2965, %v2964
        %v3111 = vpack.c.b16 %v2967, %v2966
        %v3112 = vpack.c.b16 %v2969, %v2968
        %v3113 = vpack.c.b16 %v2971, %v2970
        %v3114 = vpack.c.b16 %v2973, %v2972
        %v3115 = vpack.c.b16 %v2975, %v2974
        %v3116 = vpack.c.b16 %v2977, %v2976
        %v3117 = vpack.c.b16 %v2979, %v2978
        %v3118 = vpack.c.b16 %v2981, %v2980
        %v3119 = vpack.c.b16 %v2983, %v2982
        %v3120 = vpack.c.b16 %v2985, %v2984
        %v3121 = vpack.c.b16 %v2987, %v2986
        %v3122 = vpack.c.b16 %v2989, %v2988
        %v3123 = vpack.c.b16 %v2991, %v2990
        %v3124 = vpack.c.b16 %v2993, %v2992
        %v3125 = vpack.c.b16 %v2995, %v2994
        %v3126 = vpack.c.b16 %v2997, %v2996
        %v3127 = vpack.c.b16 %v2999, %v2998
        %3256 = vmatprep.subr.bf16.mxu0 0
        %3257 = vmatpush1.bf16.msra.mxu0 %v3000
        %3258 = vmatprep.subr.bf16.mxu0 0
        %3259 = vmatpush1.bf16.msra.mxu0 %v3001
        %3260 = vmatprep.subr.bf16.mxu0 0
        %3261 = vmatpush1.bf16.msra.mxu0 %v3002
        %3262 = vmatprep.subr.bf16.mxu0 0
        %3263 = vmatpush1.bf16.msra.mxu0 %v3003
        %3264 = vmatprep.subr.bf16.mxu0 0
        %3265 = vmatpush1.bf16.msra.mxu0 %v3004
        %3266 = vmatprep.subr.bf16.mxu0 0
        %3267 = vmatpush1.bf16.msra.mxu0 %v3005
        %3268 = vmatprep.subr.bf16.mxu0 0
        %3269 = vmatpush1.bf16.msra.mxu0 %v3006
        %3270 = vmatprep.subr.bf16.mxu0 0
        %3271 = vmatpush1.bf16.msra.mxu0 %v3007
        %3272 = vmatprep.subr.bf16.mxu0 0
        %3273 = vmatpush1.bf16.msra.mxu0 %v3008
        %3274 = vmatprep.subr.bf16.mxu0 0
        %3275 = vmatpush1.bf16.msra.mxu0 %v3009
        %3276 = vmatprep.subr.bf16.mxu0 0
        %3277 = vmatpush1.bf16.msra.mxu0 %v3010
        %3278 = vmatprep.subr.bf16.mxu0 0
        %3279 = vmatpush1.bf16.msra.mxu0 %v3011
        %3280 = vmatprep.subr.bf16.mxu0 0
        %3281 = vmatpush1.bf16.msra.mxu0 %v3012
        %3282 = vmatprep.subr.bf16.mxu0 0
        %3283 = vmatpush1.bf16.msra.mxu0 %v3013
        %3284 = vmatprep.subr.bf16.mxu0 0
        %3285 = vmatpush1.bf16.msra.mxu0 %v3014
        %3286 = vmatprep.subr.bf16.mxu0 0
        %3287 = vmatpush1.bf16.msra.mxu0 %v3015
        %3288 = vmatprep.mubr.bf16.mxu0 %v2210
        %3289 = vmatmul.mubr.bf16.gmra.mrb[0].mxu0 %v2209
        %v3290 = vpop.f32.mrb[0].mxu0
        %v3291 = vadd.f32 %v2486, %v3290
        %v3292 = vpop.f32.mrb[0].mxu0
        %v3293 = vpop.f32.mrb[0].mxu0
        %v3294 = vadd.f32 %v2486, %v3293
        %v3295 = vpop.f32.mrb[0].mxu0
        %3296 = vdwg.mxu0
        %3297 = vmatprep.subr.bf16.mxu0 0
        %3298 = vmatpush1.bf16.msra.mxu0 %v3016
        %3299 = vmatprep.subr.bf16.mxu0 0
        %3300 = vmatpush1.bf16.msra.mxu0 %v3017
        %3301 = vmatprep.subr.bf16.mxu0 0
        %3302 = vmatpush1.bf16.msra.mxu0 %v3018
        %3303 = vmatprep.subr.bf16.mxu0 0
        %3304 = vmatpush1.bf16.msra.mxu0 %v3019
        %3305 = vmatprep.subr.bf16.mxu0 0
        %3306 = vmatpush1.bf16.msra.mxu0 %v3020
        %3307 = vmatprep.subr.bf16.mxu0 0
        %3308 = vmatpush1.bf16.msra.mxu0 %v3021
        %3309 = vmatprep.subr.bf16.mxu0 0
        %3310 = vmatpush1.bf16.msra.mxu0 %v3022
        %3311 = vmatprep.subr.bf16.mxu0 0
        %3312 = vmatpush1.bf16.msra.mxu0 %v3023
        %3313 = vmatprep.subr.bf16.mxu0 0
        %3314 = vmatpush1.bf16.msra.mxu0 %v3024
        %3315 = vmatprep.subr.bf16.mxu0 0
        %3316 = vmatpush1.bf16.msra.mxu0 %v3025
        %3317 = vmatprep.subr.bf16.mxu0 0
        %3318 = vmatpush1.bf16.msra.mxu0 %v3026
        %3319 = vmatprep.subr.bf16.mxu0 0
        %3320 = vmatpush1.bf16.msra.mxu0 %v3027
        %3321 = vmatprep.subr.bf16.mxu0 0
        %3322 = vmatpush1.bf16.msra.mxu0 %v3028
        %3323 = vmatprep.subr.bf16.mxu0 0
        %3324 = vmatpush1.bf16.msra.mxu0 %v3029
        %3325 = vmatprep.subr.bf16.mxu0 0
        %3326 = vmatpush1.bf16.msra.mxu0 %v3030
        %3327 = vmatprep.subr.bf16.mxu0 0
        %3328 = vmatpush1.bf16.msra.mxu0 %v3031
        %3329 = vmatprep.mubr.bf16.mxu0 %v2212
        %3330 = vmatmul.mubr.bf16.gmra.mrb[0].mxu0 %v2211
        %v3331 = vpop.f32.mrb[0].mxu0
        %v3332 = vadd.f32 %v3291, %v3331
        %v3333 = vpop.f32.mrb[0].mxu0
        %v3334 = vpop.f32.mrb[0].mxu0
        %v3335 = vadd.f32 %v3294, %v3334
        %v3336 = vpop.f32.mrb[0].mxu0
        %3337 = vdwg.mxu0
        %3338 = vmatprep.subr.bf16.mxu0 0
        %3339 = vmatpush1.bf16.msra.mxu0 %v3032
        %3340 = vmatprep.subr.bf16.mxu0 0
        %3341 = vmatpush1.bf16.msra.mxu0 %v3033
        %3342 = vmatprep.subr.bf16.mxu0 0
        %3343 = vmatpush1.bf16.msra.mxu0 %v3034
        %3344 = vmatprep.subr.bf16.mxu0 0
        %3345 = vmatpush1.bf16.msra.mxu0 %v3035
        %3346 = vmatprep.subr.bf16.mxu0 0
        %3347 = vmatpush1.bf16.msra.mxu0 %v3036
        %3348 = vmatprep.subr.bf16.mxu0 0
        %3349 = vmatpush1.bf16.msra.mxu0 %v3037
        %3350 = vmatprep.subr.bf16.mxu0 0
        %3351 = vmatpush1.bf16.msra.mxu0 %v3038
        %3352 = vmatprep.subr.bf16.mxu0 0
        %3353 = vmatpush1.bf16.msra.mxu0 %v3039
        %3354 = vmatprep.subr.bf16.mxu0 0
        %3355 = vmatpush1.bf16.msra.mxu0 %v3040
        %3356 = vmatprep.subr.bf16.mxu0 0
        %3357 = vmatpush1.bf16.msra.mxu0 %v3041
        %3358 = vmatprep.subr.bf16.mxu0 0
        %3359 = vmatpush1.bf16.msra.mxu0 %v3042
        %3360 = vmatprep.subr.bf16.mxu0 0
        %3361 = vmatpush1.bf16.msra.mxu0 %v3043
        %3362 = vmatprep.subr.bf16.mxu0 0
        %3363 = vmatpush1.bf16.msra.mxu0 %v3044
        %3364 = vmatprep.subr.bf16.mxu0 0
        %3365 = vmatpush1.bf16.msra.mxu0 %v3045
        %3366 = vmatprep.subr.bf16.mxu0 0
        %3367 = vmatpush1.bf16.msra.mxu0 %v3046
        %3368 = vmatprep.subr.bf16.mxu0 0
        %3369 = vmatpush1.bf16.msra.mxu0 %v3047
        %3370 = vmatprep.mubr.bf16.mxu0 %v2214
        %3371 = vmatmul.mubr.bf16.gmra.mrb[0].mxu0 %v2213
        %v3372 = vpop.f32.mrb[0].mxu0
        %v3373 = vadd.f32 %v3332, %v3372
        %v3374 = vpop.f32.mrb[0].mxu0
        %v3375 = vpop.f32.mrb[0].mxu0
        %v3376 = vadd.f32 %v3335, %v3375
        %v3377 = vpop.f32.mrb[0].mxu0
        %3378 = vdwg.mxu0
        %3379 = vmatprep.subr.bf16.mxu0 0
        %3380 = vmatpush1.bf16.msra.mxu0 %v3048
        %3381 = vmatprep.subr.bf16.mxu0 0
        %3382 = vmatpush1.bf16.msra.mxu0 %v3049
        %3383 = vmatprep.subr.bf16.mxu0 0
        %3384 = vmatpush1.bf16.msra.mxu0 %v3050
        %3385 = vmatprep.subr.bf16.mxu0 0
        %3386 = vmatpush1.bf16.msra.mxu0 %v3051
        %3387 = vmatprep.subr.bf16.mxu0 0
        %3388 = vmatpush1.bf16.msra.mxu0 %v3052
        %3389 = vmatprep.subr.bf16.mxu0 0
        %3390 = vmatpush1.bf16.msra.mxu0 %v3053
        %3391 = vmatprep.subr.bf16.mxu0 0
        %3392 = vmatpush1.bf16.msra.mxu0 %v3054
        %3393 = vmatprep.subr.bf16.mxu0 0
        %3394 = vmatpush1.bf16.msra.mxu0 %v3055
        %3395 = vmatprep.subr.bf16.mxu0 0
        %3396 = vmatpush1.bf16.msra.mxu0 %v3056
        %3397 = vmatprep.subr.bf16.mxu0 0
        %3398 = vmatpush1.bf16.msra.mxu0 %v3057
        %3399 = vmatprep.subr.bf16.mxu0 0
        %3400 = vmatpush1.bf16.msra.mxu0 %v3058
        %3401 = vmatprep.subr.bf16.mxu0 0
        %3402 = vmatpush1.bf16.msra.mxu0 %v3059
        %3403 = vmatprep.subr.bf16.mxu0 0
        %3404 = vmatpush1.bf16.msra.mxu0 %v3060
        %3405 = vmatprep.subr.bf16.mxu0 0
        %3406 = vmatpush1.bf16.msra.mxu0 %v3061
        %3407 = vmatprep.subr.bf16.mxu0 0
        %3408 = vmatpush1.bf16.msra.mxu0 %v3062
        %3409 = vmatprep.subr.bf16.mxu0 0
        %3410 = vmatpush1.bf16.msra.mxu0 %v3063
        %3411 = vmatprep.mubr.bf16.mxu0 %v2216
        %3412 = vmatmul.mubr.bf16.gmra.mrb[0].mxu0 %v2215
        %v3413 = vpop.f32.mrb[0].mxu0
        %v3414 = vadd.f32 %v3373, %v3413
        %v3415 = vpop.f32.mrb[0].mxu0
        %v3416 = vpop.f32.mrb[0].mxu0
        %v3417 = vadd.f32 %v3376, %v3416
        %v3418 = vpop.f32.mrb[0].mxu0
        %3419 = vdwg.mxu0
        %3420 = vmatprep.subr.bf16.mxu0 0
        %3421 = vmatpush1.bf16.msra.mxu0 %v3064
        %3422 = vmatprep.subr.bf16.mxu0 0
        %3423 = vmatpush1.bf16.msra.mxu0 %v3065
        %3424 = vmatprep.subr.bf16.mxu0 0
        %3425 = vmatpush1.bf16.msra.mxu0 %v3066
        %3426 = vmatprep.subr.bf16.mxu0 0
        %3427 = vmatpush1.bf16.msra.mxu0 %v3067
        %3428 = vmatprep.subr.bf16.mxu0 0
        %3429 = vmatpush1.bf16.msra.mxu0 %v3068
        %3430 = vmatprep.subr.bf16.mxu0 0
        %3431 = vmatpush1.bf16.msra.mxu0 %v3069
        %3432 = vmatprep.subr.bf16.mxu0 0
        %3433 = vmatpush1.bf16.msra.mxu0 %v3070
        %3434 = vmatprep.subr.bf16.mxu0 0
        %3435 = vmatpush1.bf16.msra.mxu0 %v3071
        %3436 = vmatprep.subr.bf16.mxu0 0
        %3437 = vmatpush1.bf16.msra.mxu0 %v3072
        %3438 = vmatprep.subr.bf16.mxu0 0
        %3439 = vmatpush1.bf16.msra.mxu0 %v3073
        %3440 = vmatprep.subr.bf16.mxu0 0
        %3441 = vmatpush1.bf16.msra.mxu0 %v3074
        %3442 = vmatprep.subr.bf16.mxu0 0
        %3443 = vmatpush1.bf16.msra.mxu0 %v3075
        %3444 = vmatprep.subr.bf16.mxu0 0
        %3445 = vmatpush1.bf16.msra.mxu0 %v3076
        %3446 = vmatprep.subr.bf16.mxu0 0
        %3447 = vmatpush1.bf16.msra.mxu0 %v3077
        %3448 = vmatprep.subr.bf16.mxu0 0
        %3449 = vmatpush1.bf16.msra.mxu0 %v3078
        %3450 = vmatprep.subr.bf16.mxu0 0
        %3451 = vmatpush1.bf16.msra.mxu0 %v3079
        %3452 = vmatprep.mubr.bf16.mxu0 %v2218
        %3453 = vmatmul.mubr.bf16.gmra.mrb[0].mxu0 %v2217
        %v3454 = vpop.f32.mrb[0].mxu0
        %v3455 = vadd.f32 %v3414, %v3454
        %v3456 = vpop.f32.mrb[0].mxu0
        %v3457 = vpop.f32.mrb[0].mxu0
        %v3458 = vadd.f32 %v3417, %v3457
        %v3459 = vpop.f32.mrb[0].mxu0
        %3460 = vdwg.mxu0
        %3461 = vmatprep.subr.bf16.mxu0 0
        %3462 = vmatpush1.bf16.msra.mxu0 %v3080
        %3463 = vmatprep.subr.bf16.mxu0 0
        %3464 = vmatpush1.bf16.msra.mxu0 %v3081
        %3465 = vmatprep.subr.bf16.mxu0 0
        %3466 = vmatpush1.bf16.msra.mxu0 %v3082
        %3467 = vmatprep.subr.bf16.mxu0 0
        %3468 = vmatpush1.bf16.msra.mxu0 %v3083
        %3469 = vmatprep.subr.bf16.mxu0 0
        %3470 = vmatpush1.bf16.msra.mxu0 %v3084
        %3471 = vmatprep.subr.bf16.mxu0 0
        %3472 = vmatpush1.bf16.msra.mxu0 %v3085
        %3473 = vmatprep.subr.bf16.mxu0 0
        %3474 = vmatpush1.bf16.msra.mxu0 %v3086
        %3475 = vmatprep.subr.bf16.mxu0 0
        %3476 = vmatpush1.bf16.msra.mxu0 %v3087
        %3477 = vmatprep.subr.bf16.mxu0 0
        %3478 = vmatpush1.bf16.msra.mxu0 %v3088
        %3479 = vmatprep.subr.bf16.mxu0 0
        %3480 = vmatpush1.bf16.msra.mxu0 %v3089
        %3481 = vmatprep.subr.bf16.mxu0 0
        %3482 = vmatpush1.bf16.msra.mxu0 %v3090
        %3483 = vmatprep.subr.bf16.mxu0 0
        %3484 = vmatpush1.bf16.msra.mxu0 %v3091
        %3485 = vmatprep.subr.bf16.mxu0 0
        %3486 = vmatpush1.bf16.msra.mxu0 %v3092
        %3487 = vmatprep.subr.bf16.mxu0 0
        %3488 = vmatpush1.bf16.msra.mxu0 %v3093
        %3489 = vmatprep.subr.bf16.mxu0 0
        %3490 = vmatpush1.bf16.msra.mxu0 %v3094
        %3491 = vmatprep.subr.bf16.mxu0 0
        %3492 = vmatpush1.bf16.msra.mxu0 %v3095
        %3493 = vmatprep.mubr.bf16.mxu0 %v2220
        %3494 = vmatmul.mubr.bf16.gmra.mrb[0].mxu0 %v2219
        %v3495 = vpop.f32.mrb[0].mxu0
        %v3496 = vadd.f32 %v3455, %v3495
        %v3497 = vpop.f32.mrb[0].mxu0
        %v3498 = vpop.f32.mrb[0].mxu0
        %v3499 = vadd.f32 %v3458, %v3498
        %v3500 = vpop.f32.mrb[0].mxu0
        %3501 = vdwg.mxu0
        %3502 = vmatprep.subr.bf16.mxu0 0
        %3503 = vmatpush1.bf16.msra.mxu0 %v3096
        %3504 = vmatprep.subr.bf16.mxu0 0
        %3505 = vmatpush1.bf16.msra.mxu0 %v3097
        %3506 = vmatprep.subr.bf16.mxu0 0
        %3507 = vmatpush1.bf16.msra.mxu0 %v3098
        %3508 = vmatprep.subr.bf16.mxu0 0
        %3509 = vmatpush1.bf16.msra.mxu0 %v3099
        %3510 = vmatprep.subr.bf16.mxu0 0
        %3511 = vmatpush1.bf16.msra.mxu0 %v3100
        %3512 = vmatprep.subr.bf16.mxu0 0
        %3513 = vmatpush1.bf16.msra.mxu0 %v3101
        %3514 = vmatprep.subr.bf16.mxu0 0
        %3515 = vmatpush1.bf16.msra.mxu0 %v3102
        %3516 = vmatprep.subr.bf16.mxu0 0
        %3517 = vmatpush1.bf16.msra.mxu0 %v3103
        %3518 = vmatprep.subr.bf16.mxu0 0
        %3519 = vmatpush1.bf16.msra.mxu0 %v3104
        %3520 = vmatprep.subr.bf16.mxu0 0
        %3521 = vmatpush1.bf16.msra.mxu0 %v3105
        %3522 = vmatprep.subr.bf16.mxu0 0
        %3523 = vmatpush1.bf16.msra.mxu0 %v3106
        %3524 = vmatprep.subr.bf16.mxu0 0
        %3525 = vmatpush1.bf16.msra.mxu0 %v3107
        %3526 = vmatprep.subr.bf16.mxu0 0
        %3527 = vmatpush1.bf16.msra.mxu0 %v3108
        %3528 = vmatprep.subr.bf16.mxu0 0
        %3529 = vmatpush1.bf16.msra.mxu0 %v3109
        %3530 = vmatprep.subr.bf16.mxu0 0
        %3531 = vmatpush1.bf16.msra.mxu0 %v3110
        %3532 = vmatprep.subr.bf16.mxu0 0
        %3533 = vmatpush1.bf16.msra.mxu0 %v3111
        %3534 = vmatprep.mubr.bf16.mxu0 %v2222
        %3535 = vmatmul.mubr.bf16.gmra.mrb[0].mxu0 %v2221
        %v3536 = vpop.f32.mrb[0].mxu0
        %v3537 = vadd.f32 %v3496, %v3536
        %v3538 = vpop.f32.mrb[0].mxu0
        %v3539 = vpop.f32.mrb[0].mxu0
        %v3540 = vadd.f32 %v3499, %v3539
        %v3541 = vpop.f32.mrb[0].mxu0
        %3542 = vdwg.mxu0
        %3543 = vmatprep.subr.bf16.mxu0 0
        %3544 = vmatpush1.bf16.msra.mxu0 %v3112
        %3545 = vmatprep.subr.bf16.mxu0 0
        %3546 = vmatpush1.bf16.msra.mxu0 %v3113
        %3547 = vmatprep.subr.bf16.mxu0 0
        %3548 = vmatpush1.bf16.msra.mxu0 %v3114
        %3549 = vmatprep.subr.bf16.mxu0 0
        %3550 = vmatpush1.bf16.msra.mxu0 %v3115
        %3551 = vmatprep.subr.bf16.mxu0 0
        %3552 = vmatpush1.bf16.msra.mxu0 %v3116
        %3553 = vmatprep.subr.bf16.mxu0 0
        %3554 = vmatpush1.bf16.msra.mxu0 %v3117
        %3555 = vmatprep.subr.bf16.mxu0 0
        %3556 = vmatpush1.bf16.msra.mxu0 %v3118
        %3557 = vmatprep.subr.bf16.mxu0 0
        %3558 = vmatpush1.bf16.msra.mxu0 %v3119
        %3559 = vmatprep.subr.bf16.mxu0 0
        %3560 = vmatpush1.bf16.msra.mxu0 %v3120
        %3561 = vmatprep.subr.bf16.mxu0 0
        %3562 = vmatpush1.bf16.msra.mxu0 %v3121
        %3563 = vmatprep.subr.bf16.mxu0 0
        %3564 = vmatpush1.bf16.msra.mxu0 %v3122
        %3565 = vmatprep.subr.bf16.mxu0 0
        %3566 = vmatpush1.bf16.msra.mxu0 %v3123
        %3567 = vmatprep.subr.bf16.mxu0 0
        %3568 = vmatpush1.bf16.msra.mxu0 %v3124
        %3569 = vmatprep.subr.bf16.mxu0 0
        %3570 = vmatpush1.bf16.msra.mxu0 %v3125
        %3571 = vmatprep.subr.bf16.mxu0 0
        %3572 = vmatpush1.bf16.msra.mxu0 %v3126
        %3573 = vmatprep.subr.bf16.mxu0 0
        %3574 = vmatpush1.bf16.msra.mxu0 %v3127
        %3575 = vmatprep.mubr.bf16.mxu0 %v2224
        %3576 = vmatmul.mubr.bf16.gmra.mrb[0].mxu0 %v2223
        %v3577 = vpop.f32.mrb[0].mxu0
        %v3578 = vadd.f32 %v3537, %v3577
        %v3579 = vpop.f32.mrb[0].mxu0
        %v3580 = vpop.f32.mrb[0].mxu0
        %v3581 = vadd.f32 %v3540, %v3580
        %v3582 = vpop.f32.mrb[0].mxu0
        %3583 = vdwg.mxu0
        %v3584 = vadd.f32 %v1551, %v3578
        %v3585 = vadd.f32 %v1552, %v3581
        %v3586 = vld [vmem:[%s13] sm:$0x1]
        %v3587 = vld [vmem:[%s14] sm:$0x1]
        %v3588 = vsel %vm658, %v3584, 0.0
        %3589 = vadd.xlane.f32.xlu0 %v3588
        %v3590 = vpop.xlane.xlu0 %3589
        %v3591 = vsel %vm658, %v3585, 0.0
        %3592 = vadd.xlane.f32.xlu0 %v3591
        %v3593 = vpop.xlane.xlu0 %3592
        %v3594 = vmul.f32 %v3590, %v1516
        %v3595 = vmul.f32 %v3593, %v1516
        %v3596 = vsub.f32 %v3584, %v3594
        %v3597 = vsub.f32 %v3585, %v3595
        %v3598 = vmul.f32 %v3596, %v3596
        %v3599 = vmul.f32 %v3597, %v3597
        %v3600 = vsel %vm658, %v3598, 0.0
        %3601 = vadd.xlane.f32.xlu0 %v3600
        %v3602 = vpop.xlane.xlu0 %3601
        %v3603 = vsel %vm658, %v3599, 0.0
        %3604 = vadd.xlane.f32.xlu0 %v3603
        %v3605 = vpop.xlane.xlu0 %3604
        %v3606 = vmul.f32 %v3602, %v1516
        %v3607 = vmul.f32 %v3605, %v1516
        %v3608 = vadd.f32 %v3606, 1e-05
        %v3609 = vadd.f32 %v3607, 1e-05
        %v3610 = vrsqrt.pop %v3608
        %v3611 = vrsqrt.pop %v3609
        %v3612 = vmul.f32 %v3596, %v3610
        %v3613 = vmul.f32 %v3597, %v3611
        %v3615 = vlaneseq
        %v3616 = vshrl.u32 %v3615, 7
        %v3617 = vsub.s32 0, %v3616
        %v3618 = vrot.slane %v3586, %v3617
        %v3620 = vmul.f32 %v3612, %v3618
        %v3621 = vmul.f32 %v3613, %v3618
        %v3623 = vlaneseq
        %v3624 = vshrl.u32 %v3623, 7
        %v3625 = vsub.s32 0, %v3624
        %v3626 = vrot.slane %v3587, %v3625
        %v3628 = vadd.f32 %v3620, %v3626
        %v3629 = vadd.f32 %v3621, %v3626
        %s3630 = scalar_lea.vmem %s3, 32
        %v3631 = vld [vmem:[%s3630] sm:$0xff]
        %v3632 = vld [vmem:[%s3630 + $0x8] sm:$0xff]
        %v3633 = vld [vmem:[%s3630 + $0x10] sm:$0xff]
        %v3634 = vld [vmem:[%s3630 + $0x18] sm:$0xff]
        %s3635 = scalar_lea.vmem %s4, 1
        %v3636 = vld [vmem:[%s3635] sm:$0x1]
        %v3638 = vlaneseq
        %v3639 = vshrl.u32 %v3638, 7
        %v3640 = vsub.s32 0, %v3639
        %v3641 = vrot.slane %v3636, %v3640
        %v3644 = vsel %vm658, %v3628, 0
        %v3647 = vsel %vm658, %v3629, 0
        %3649 = vmatprep.subr.mxu0 0.0
        %3650 = vmatpush1.msra.mxu0 %v3631
        %3651 = vmatprep.subr.mxu0 0.0
        %3652 = vmatpush1.msra.mxu0 %v3632
        %3653 = vmatprep.subr.mxu0 0.0
        %3654 = vmatpush1.msra.mxu0 %v3633
        %3655 = vmatprep.subr.mxu0 0.0
        %3656 = vmatpush1.msra.mxu0 %v3634
        %3657 = vmatprep.subr.mxu0 0.0
        %3658 = vmatpush1.msra.mxu0 0.0
        %3659 = vmatprep.subr.mxu0 0.0
        %3660 = vmatpush1.msra.mxu0 0.0
        %3661 = vmatprep.subr.mxu0 0.0
        %3662 = vmatpush1.msra.mxu0 0.0
        %3663 = vmatprep.subr.mxu0 0.0
        %3664 = vmatpush1.msra.mxu0 0.0
        %3665 = vmatprep.subr.mxu0 0.0
        %3666 = vmatpush1.msra.mxu0 0.0
        %3667 = vmatprep.subr.mxu0 0.0
        %3668 = vmatpush1.msra.mxu0 0.0
        %3669 = vmatprep.subr.mxu0 0.0
        %3670 = vmatpush1.msra.mxu0 0.0
        %3671 = vmatprep.subr.mxu0 0.0
        %3672 = vmatpush1.msra.mxu0 0.0
        %3673 = vmatprep.subr.mxu0 0.0
        %3674 = vmatpush1.msra.mxu0 0.0
        %3675 = vmatprep.subr.mxu0 0.0
        %3676 = vmatpush1.msra.mxu0 0.0
        %3677 = vmatprep.subr.mxu0 0.0
        %3678 = vmatpush1.msra.mxu0 0.0
        %3679 = vmatprep.subr.mxu0 0.0
        %3680 = vmatpush1.msra.mxu0 0.0
        %3681 = vmatprep.subr.mxu0 0.0
        %3682 = vmatpush1.msra.mxu0 0.0
        %3683 = vmatprep.subr.mxu0 0.0
        %3684 = vmatpush1.msra.mxu0 0.0
        %3685 = vmatprep.subr.mxu0 0.0
        %3686 = vmatpush1.msra.mxu0 0.0
        %3687 = vmatprep.subr.mxu0 0.0
        %3688 = vmatpush1.msra.mxu0 0.0
        %3689 = vmatprep.subr.mxu0 0.0
        %3690 = vmatpush1.msra.mxu0 0.0
        %3691 = vmatprep.subr.mxu0 0.0
        %3692 = vmatpush1.msra.mxu0 0.0
        %3693 = vmatprep.subr.mxu0 0.0
        %3694 = vmatpush1.msra.mxu0 0.0
        %3695 = vmatprep.subr.mxu0 0.0
        %3696 = vmatpush1.msra.mxu0 0.0
        %3697 = vmatprep.subr.mxu0 0.0
        %3698 = vmatpush1.msra.mxu0 0.0
        %3699 = vmatprep.subr.mxu0 0.0
        %3700 = vmatpush1.msra.mxu0 0.0
        %3701 = vmatprep.subr.mxu0 0.0
        %3702 = vmatpush1.msra.mxu0 0.0
        %3703 = vmatprep.subr.mxu0 0.0
        %3704 = vmatpush1.msra.mxu0 0.0
        %3705 = vmatprep.subr.mxu0 0.0
        %3706 = vmatpush1.msra.mxu0 0.0
        %3707 = vmatprep.subr.mxu0 0.0
        %3708 = vmatpush1.msra.mxu0 0.0
        %3709 = vmatprep.subr.mxu0 0.0
        %3710 = vmatpush1.msra.mxu0 0.0
        %3711 = vmatprep.subr.mxu0 0.0
        %3712 = vmatpush1.msra.mxu0 0.0
        %3713 = vmatprep.mubr.f32.mxu0 0.0
        %3714 = vmatmul.mubr.f32.gmra.mrb[0].mxu0 %v3644
        %v3715 = vpop.f32.mrb[0].mxu0
        %v3716 = vadd.f32 %v3641, %v3715
        %v3717 = vpop.f32.mrb[0].mxu0
        %3718 = vmatprep.mubr.f32.mxu0 0.0
        %3719 = vmatmul.mubr.f32.gmra.mrb[0].mxu0 %v3647
        %v3720 = vpop.f32.mrb[0].mxu0
        %v3721 = vadd.f32 %v3641, %v3720
        %v3722 = vpop.f32.mrb[0].mxu0
        %3723 = vdwg.mxu0
        %v3724 = vmul.f32 %v3716, 0.25
        %v3725 = vmul.f32 %v3721, 0.25
        %3727 = vrot.lane.b32.xlu0 %v3716, 96
        %v3728 = vpop.permute.xlu0 %3727
        %v3730 = vsel %vm745, %v3724, 0
        %v3732 = vsel %vm745, %v3728, 0
        %3734 = vmatprep.subr.mxu0 0.0
        %3735 = vmatpush1.xpose.msra.mxu0 %v3732
        %3736 = vmatprep.subr.mxu0 0.0
        %3737 = vmatpush1.xpose.msra.mxu0 0.0
        %3738 = vmatprep.subr.mxu0 0.0
        %3739 = vmatpush1.xpose.msra.mxu0 0.0
        %3740 = vmatprep.subr.mxu0 0.0
        %3741 = vmatpush1.xpose.msra.mxu0 0.0
        %3742 = vmatprep.subr.mxu0 0.0
        %3743 = vmatpush1.xpose.msra.mxu0 0.0
        %3744 = vmatprep.subr.mxu0 0.0
        %3745 = vmatpush1.xpose.msra.mxu0 0.0
        %3746 = vmatprep.subr.mxu0 0.0
        %3747 = vmatpush1.xpose.msra.mxu0 0.0
        %3748 = vmatprep.subr.mxu0 0.0
        %3749 = vmatpush1.xpose.msra.mxu0 0.0
        %3750 = vmatprep.subr.mxu0 0.0
        %3751 = vmatpush1.xpose.msra.mxu0 0.0
        %3752 = vmatprep.subr.mxu0 0.0
        %3753 = vmatpush1.xpose.msra.mxu0 0.0
        %3754 = vmatprep.subr.mxu0 0.0
        %3755 = vmatpush1.xpose.msra.mxu0 0.0
        %3756 = vmatprep.subr.mxu0 0.0
        %3757 = vmatpush1.xpose.msra.mxu0 0.0
        %3758 = vmatprep.subr.mxu0 0.0
        %3759 = vmatpush1.xpose.msra.mxu0 0.0
        %3760 = vmatprep.subr.mxu0 0.0
        %3761 = vmatpush1.xpose.msra.mxu0 0.0
        %3762 = vmatprep.subr.mxu0 0.0
        %3763 = vmatpush1.xpose.msra.mxu0 0.0
        %3764 = vmatprep.subr.mxu0 0.0
        %3765 = vmatpush1.xpose.msra.mxu0 0.0
        %3766 = vmatprep.subr.mxu0 0.0
        %3767 = vmatpush1.xpose.msra.mxu0 0.0
        %3768 = vmatprep.subr.mxu0 0.0
        %3769 = vmatpush1.xpose.msra.mxu0 0.0
        %3770 = vmatprep.subr.mxu0 0.0
        %3771 = vmatpush1.xpose.msra.mxu0 0.0
        %3772 = vmatprep.subr.mxu0 0.0
        %3773 = vmatpush1.xpose.msra.mxu0 0.0
        %3774 = vmatprep.subr.mxu0 0.0
        %3775 = vmatpush1.xpose.msra.mxu0 0.0
        %3776 = vmatprep.subr.mxu0 0.0
        %3777 = vmatpush1.xpose.msra.mxu0 0.0
        %3778 = vmatprep.subr.mxu0 0.0
        %3779 = vmatpush1.xpose.msra.mxu0 0.0
        %3780 = vmatprep.subr.mxu0 0.0
        %3781 = vmatpush1.xpose.msra.mxu0 0.0
        %3782 = vmatprep.subr.mxu0 0.0
        %3783 = vmatpush1.xpose.msra.mxu0 0.0
        %3784 = vmatprep.subr.mxu0 0.0
        %3785 = vmatpush1.xpose.msra.mxu0 0.0
        %3786 = vmatprep.subr.mxu0 0.0
        %3787 = vmatpush1.xpose.msra.mxu0 0.0
        %3788 = vmatprep.subr.mxu0 0.0
        %3789 = vmatpush1.xpose.msra.mxu0 0.0
        %3790 = vmatprep.subr.mxu0 0.0
        %3791 = vmatpush1.xpose.msra.mxu0 0.0
        %3792 = vmatprep.subr.mxu0 0.0
        %3793 = vmatpush1.xpose.msra.mxu0 0.0
        %3794 = vmatprep.subr.mxu0 0.0
        %3795 = vmatpush1.xpose.msra.mxu0 0.0
        %3796 = vmatprep.subr.mxu0 0.0
        %3797 = vmatpush1.xpose.msra.mxu0 0.0
        %3798 = vmatprep.mubr.f32.mxu0 0.0
        %3799 = vmatmul.mubr.f32.gmra.mrb[0].mxu0 %v3730
        %v3800 = vpop.f32.mrb[0].mxu0
        %v3801 = vadd.f32 0.0, %v3800
        %v3802 = vpop.f32.mrb[0].mxu0
        %3803 = vdwg.mxu0
        %3805 = vrot.lane.b32.xlu0 %v3721, 96
        %v3806 = vpop.permute.xlu0 %3805
        %v3808 = vsel %vm745, %v3725, 0
        %v3810 = vsel %vm745, %v3806, 0
        %3812 = vmatprep.subr.mxu0 0.0
        %3813 = vmatpush1.xpose.msra.mxu0 %v3810
        %3814 = vmatprep.subr.mxu0 0.0
        %3815 = vmatpush1.xpose.msra.mxu0 0.0
        %3816 = vmatprep.subr.mxu0 0.0
        %3817 = vmatpush1.xpose.msra.mxu0 0.0
        %3818 = vmatprep.subr.mxu0 0.0
        %3819 = vmatpush1.xpose.msra.mxu0 0.0
        %3820 = vmatprep.subr.mxu0 0.0
        %3821 = vmatpush1.xpose.msra.mxu0 0.0
        %3822 = vmatprep.subr.mxu0 0.0
        %3823 = vmatpush1.xpose.msra.mxu0 0.0
        %3824 = vmatprep.subr.mxu0 0.0
        %3825 = vmatpush1.xpose.msra.mxu0 0.0
        %3826 = vmatprep.subr.mxu0 0.0
        %3827 = vmatpush1.xpose.msra.mxu0 0.0
        %3828 = vmatprep.subr.mxu0 0.0
        %3829 = vmatpush1.xpose.msra.mxu0 0.0
        %3830 = vmatprep.subr.mxu0 0.0
        %3831 = vmatpush1.xpose.msra.mxu0 0.0
        %3832 = vmatprep.subr.mxu0 0.0
        %3833 = vmatpush1.xpose.msra.mxu0 0.0
        %3834 = vmatprep.subr.mxu0 0.0
        %3835 = vmatpush1.xpose.msra.mxu0 0.0
        %3836 = vmatprep.subr.mxu0 0.0
        %3837 = vmatpush1.xpose.msra.mxu0 0.0
        %3838 = vmatprep.subr.mxu0 0.0
        %3839 = vmatpush1.xpose.msra.mxu0 0.0
        %3840 = vmatprep.subr.mxu0 0.0
        %3841 = vmatpush1.xpose.msra.mxu0 0.0
        %3842 = vmatprep.subr.mxu0 0.0
        %3843 = vmatpush1.xpose.msra.mxu0 0.0
        %3844 = vmatprep.subr.mxu0 0.0
        %3845 = vmatpush1.xpose.msra.mxu0 0.0
        %3846 = vmatprep.subr.mxu0 0.0
        %3847 = vmatpush1.xpose.msra.mxu0 0.0
        %3848 = vmatprep.subr.mxu0 0.0
        %3849 = vmatpush1.xpose.msra.mxu0 0.0
        %3850 = vmatprep.subr.mxu0 0.0
        %3851 = vmatpush1.xpose.msra.mxu0 0.0
        %3852 = vmatprep.subr.mxu0 0.0
        %3853 = vmatpush1.xpose.msra.mxu0 0.0
        %3854 = vmatprep.subr.mxu0 0.0
        %3855 = vmatpush1.xpose.msra.mxu0 0.0
        %3856 = vmatprep.subr.mxu0 0.0
        %3857 = vmatpush1.xpose.msra.mxu0 0.0
        %3858 = vmatprep.subr.mxu0 0.0
        %3859 = vmatpush1.xpose.msra.mxu0 0.0
        %3860 = vmatprep.subr.mxu0 0.0
        %3861 = vmatpush1.xpose.msra.mxu0 0.0
        %3862 = vmatprep.subr.mxu0 0.0
        %3863 = vmatpush1.xpose.msra.mxu0 0.0
        %3864 = vmatprep.subr.mxu0 0.0
        %3865 = vmatpush1.xpose.msra.mxu0 0.0
        %3866 = vmatprep.subr.mxu0 0.0
        %3867 = vmatpush1.xpose.msra.mxu0 0.0
        %3868 = vmatprep.subr.mxu0 0.0
        %3869 = vmatpush1.xpose.msra.mxu0 0.0
        %3870 = vmatprep.subr.mxu0 0.0
        %3871 = vmatpush1.xpose.msra.mxu0 0.0
        %3872 = vmatprep.subr.mxu0 0.0
        %3873 = vmatpush1.xpose.msra.mxu0 0.0
        %3874 = vmatprep.subr.mxu0 0.0
        %3875 = vmatpush1.xpose.msra.mxu0 0.0
        %3876 = vmatprep.mubr.f32.mxu0 0.0
        %3877 = vmatmul.mubr.f32.gmra.mrb[0].mxu0 %v3808
        %v3878 = vpop.f32.mrb[0].mxu0
        %v3879 = vadd.f32 0.0, %v3878
        %v3880 = vpop.f32.mrb[0].mxu0
        %3881 = vdwg.mxu0
        %v3882 = vsel %vm899, %v3801, -inf
        %3883 = vmax.xlane.f32.xlu0 %v3882
        %v3884 = vpop.xlane.xlu0 %3883
        %v3885 = vsel %vm899, %v3879, -inf
        %3886 = vmax.xlane.f32.xlu0 %v3885
        %v3887 = vpop.xlane.xlu0 %3886
        %v3888 = vsub.f32 %v3801, %v3884
        %v3889 = vsub.f32 %v3879, %v3887
        %v3890 = vmul.f32 %v3888, 1.442695
        %v3891 = vpow.pop %v3890
        %v3892 = vmul.f32 %v3889, 1.442695
        %v3893 = vpow.pop %v3892
        %v3894 = vsel %vm899, %v3891, 0.0
        %3895 = vadd.xlane.f32.xlu0 %v3894
        %v3896 = vpop.xlane.xlu0 %3895
        %v3897 = vsel %vm899, %v3893, 0.0
        %3898 = vadd.xlane.f32.xlu0 %v3897
        %v3899 = vpop.xlane.xlu0 %3898
        %v3900 = vrcp.pop %v3896
        %v3901 = vrcp.pop %v3899
        %v3902 = vmul.f32 %v3891, %v3900
        %v3903 = vmul.f32 %v3893, %v3901
        %3904 = vrot.lane.b32.xlu0 %v3716, 64
        %v3905 = vpop.permute.xlu0 %3904
        %v3908 = vsel %vm899, %v3902, 0
        %3910 = vmatprep.subr.mxu0 0.0
        %3911 = vmatpush1.msra.mxu0 %v3905
        %3912 = vmatprep.subr.mxu0 0.0
        %3913 = vmatpush1.msra.mxu0 0.0
        %3914 = vmatprep.subr.mxu0 0.0
        %3915 = vmatpush1.msra.mxu0 0.0
        %3916 = vmatprep.subr.mxu0 0.0
        %3917 = vmatpush1.msra.mxu0 0.0
        %3918 = vmatprep.subr.mxu0 0.0
        %3919 = vmatpush1.msra.mxu0 0.0
        %3920 = vmatprep.subr.mxu0 0.0
        %3921 = vmatpush1.msra.mxu0 0.0
        %3922 = vmatprep.subr.mxu0 0.0
        %3923 = vmatpush1.msra.mxu0 0.0
        %3924 = vmatprep.subr.mxu0 0.0
        %3925 = vmatpush1.msra.mxu0 0.0
        %3926 = vmatprep.subr.mxu0 0.0
        %3927 = vmatpush1.msra.mxu0 0.0
        %3928 = vmatprep.subr.mxu0 0.0
        %3929 = vmatpush1.msra.mxu0 0.0
        %3930 = vmatprep.subr.mxu0 0.0
        %3931 = vmatpush1.msra.mxu0 0.0
        %3932 = vmatprep.subr.mxu0 0.0
        %3933 = vmatpush1.msra.mxu0 0.0
        %3934 = vmatprep.subr.mxu0 0.0
        %3935 = vmatpush1.msra.mxu0 0.0
        %3936 = vmatprep.subr.mxu0 0.0
        %3937 = vmatpush1.msra.mxu0 0.0
        %3938 = vmatprep.subr.mxu0 0.0
        %3939 = vmatpush1.msra.mxu0 0.0
        %3940 = vmatprep.subr.mxu0 0.0
        %3941 = vmatpush1.msra.mxu0 0.0
        %3942 = vmatprep.subr.mxu0 0.0
        %3943 = vmatpush1.msra.mxu0 0.0
        %3944 = vmatprep.subr.mxu0 0.0
        %3945 = vmatpush1.msra.mxu0 0.0
        %3946 = vmatprep.subr.mxu0 0.0
        %3947 = vmatpush1.msra.mxu0 0.0
        %3948 = vmatprep.subr.mxu0 0.0
        %3949 = vmatpush1.msra.mxu0 0.0
        %3950 = vmatprep.subr.mxu0 0.0
        %3951 = vmatpush1.msra.mxu0 0.0
        %3952 = vmatprep.subr.mxu0 0.0
        %3953 = vmatpush1.msra.mxu0 0.0
        %3954 = vmatprep.subr.mxu0 0.0
        %3955 = vmatpush1.msra.mxu0 0.0
        %3956 = vmatprep.subr.mxu0 0.0
        %3957 = vmatpush1.msra.mxu0 0.0
        %3958 = vmatprep.subr.mxu0 0.0
        %3959 = vmatpush1.msra.mxu0 0.0
        %3960 = vmatprep.subr.mxu0 0.0
        %3961 = vmatpush1.msra.mxu0 0.0
        %3962 = vmatprep.subr.mxu0 0.0
        %3963 = vmatpush1.msra.mxu0 0.0
        %3964 = vmatprep.subr.mxu0 0.0
        %3965 = vmatpush1.msra.mxu0 0.0
        %3966 = vmatprep.subr.mxu0 0.0
        %3967 = vmatpush1.msra.mxu0 0.0
        %3968 = vmatprep.subr.mxu0 0.0
        %3969 = vmatpush1.msra.mxu0 0.0
        %3970 = vmatprep.subr.mxu0 0.0
        %3971 = vmatpush1.msra.mxu0 0.0
        %3972 = vmatprep.subr.mxu0 0.0
        %3973 = vmatpush1.msra.mxu0 0.0
        %3974 = vmatprep.mubr.f32.mxu0 0.0
        %3975 = vmatmul.mubr.f32.gmra.mrb[0].mxu0 %v3908
        %v3976 = vpop.f32.mrb[0].mxu0
        %v3977 = vadd.f32 0.0, %v3976
        %v3978 = vpop.f32.mrb[0].mxu0
        %3979 = vdwg.mxu0
        %3980 = vrot.lane.b32.xlu0 %v3721, 64
        %v3981 = vpop.permute.xlu0 %3980
        %v3984 = vsel %vm899, %v3903, 0
        %3986 = vmatprep.subr.mxu0 0.0
        %3987 = vmatpush1.msra.mxu0 %v3981
        %3988 = vmatprep.subr.mxu0 0.0
        %3989 = vmatpush1.msra.mxu0 0.0
        %3990 = vmatprep.subr.mxu0 0.0
        %3991 = vmatpush1.msra.mxu0 0.0
        %3992 = vmatprep.subr.mxu0 0.0
        %3993 = vmatpush1.msra.mxu0 0.0
        %3994 = vmatprep.subr.mxu0 0.0
        %3995 = vmatpush1.msra.mxu0 0.0
        %3996 = vmatprep.subr.mxu0 0.0
        %3997 = vmatpush1.msra.mxu0 0.0
        %3998 = vmatprep.subr.mxu0 0.0
        %3999 = vmatpush1.msra.mxu0 0.0
        %4000 = vmatprep.subr.mxu0 0.0
        %4001 = vmatpush1.msra.mxu0 0.0
        %4002 = vmatprep.subr.mxu0 0.0
        %4003 = vmatpush1.msra.mxu0 0.0
        %4004 = vmatprep.subr.mxu0 0.0
        %4005 = vmatpush1.msra.mxu0 0.0
        %4006 = vmatprep.subr.mxu0 0.0
        %4007 = vmatpush1.msra.mxu0 0.0
        %4008 = vmatprep.subr.mxu0 0.0
        %4009 = vmatpush1.msra.mxu0 0.0
        %4010 = vmatprep.subr.mxu0 0.0
        %4011 = vmatpush1.msra.mxu0 0.0
        %4012 = vmatprep.subr.mxu0 0.0
        %4013 = vmatpush1.msra.mxu0 0.0
        %4014 = vmatprep.subr.mxu0 0.0
        %4015 = vmatpush1.msra.mxu0 0.0
        %4016 = vmatprep.subr.mxu0 0.0
        %4017 = vmatpush1.msra.mxu0 0.0
        %4018 = vmatprep.subr.mxu0 0.0
        %4019 = vmatpush1.msra.mxu0 0.0
        %4020 = vmatprep.subr.mxu0 0.0
        %4021 = vmatpush1.msra.mxu0 0.0
        %4022 = vmatprep.subr.mxu0 0.0
        %4023 = vmatpush1.msra.mxu0 0.0
        %4024 = vmatprep.subr.mxu0 0.0
        %4025 = vmatpush1.msra.mxu0 0.0
        %4026 = vmatprep.subr.mxu0 0.0
        %4027 = vmatpush1.msra.mxu0 0.0
        %4028 = vmatprep.subr.mxu0 0.0
        %4029 = vmatpush1.msra.mxu0 0.0
        %4030 = vmatprep.subr.mxu0 0.0
        %4031 = vmatpush1.msra.mxu0 0.0
        %4032 = vmatprep.subr.mxu0 0.0
        %4033 = vmatpush1.msra.mxu0 0.0
        %4034 = vmatprep.subr.mxu0 0.0
        %4035 = vmatpush1.msra.mxu0 0.0
        %4036 = vmatprep.subr.mxu0 0.0
        %4037 = vmatpush1.msra.mxu0 0.0
        %4038 = vmatprep.subr.mxu0 0.0
        %4039 = vmatpush1.msra.mxu0 0.0
        %4040 = vmatprep.subr.mxu0 0.0
        %4041 = vmatpush1.msra.mxu0 0.0
        %4042 = vmatprep.subr.mxu0 0.0
        %4043 = vmatpush1.msra.mxu0 0.0
        %4044 = vmatprep.subr.mxu0 0.0
        %4045 = vmatpush1.msra.mxu0 0.0
        %4046 = vmatprep.subr.mxu0 0.0
        %4047 = vmatpush1.msra.mxu0 0.0
        %4048 = vmatprep.subr.mxu0 0.0
        %4049 = vmatpush1.msra.mxu0 0.0
        %4050 = vmatprep.mubr.f32.mxu0 0.0
        %4051 = vmatmul.mubr.f32.gmra.mrb[0].mxu0 %v3984
        %v4052 = vpop.f32.mrb[0].mxu0
        %v4053 = vadd.f32 0.0, %v4052
        %v4054 = vpop.f32.mrb[0].mxu0
        %4055 = vdwg.mxu0
        %4056 = vrot.lane.b32.xlu0 %v3724, 112
        %v4057 = vpop.permute.xlu0 %4056
        %4058 = vrot.lane.b32.xlu0 %v3716, 80
        %v4059 = vpop.permute.xlu0 %4058
        %v4060 = vsel %vm745, %v4057, 0
        %v4062 = vsel %vm745, %v4059, 0
        %4064 = vmatprep.subr.mxu0 0.0
        %4065 = vmatpush1.xpose.msra.mxu0 %v4062
        %4066 = vmatprep.subr.mxu0 0.0
        %4067 = vmatpush1.xpose.msra.mxu0 0.0
        %4068 = vmatprep.subr.mxu0 0.0
        %4069 = vmatpush1.xpose.msra.mxu0 0.0
        %4070 = vmatprep.subr.mxu0 0.0
        %4071 = vmatpush1.xpose.msra.mxu0 0.0
        %4072 = vmatprep.subr.mxu0 0.0
        %4073 = vmatpush1.xpose.msra.mxu0 0.0
        %4074 = vmatprep.subr.mxu0 0.0
        %4075 = vmatpush1.xpose.msra.mxu0 0.0
        %4076 = vmatprep.subr.mxu0 0.0
        %4077 = vmatpush1.xpose.msra.mxu0 0.0
        %4078 = vmatprep.subr.mxu0 0.0
        %4079 = vmatpush1.xpose.msra.mxu0 0.0
        %4080 = vmatprep.subr.mxu0 0.0
        %4081 = vmatpush1.xpose.msra.mxu0 0.0
        %4082 = vmatprep.subr.mxu0 0.0
        %4083 = vmatpush1.xpose.msra.mxu0 0.0
        %4084 = vmatprep.subr.mxu0 0.0
        %4085 = vmatpush1.xpose.msra.mxu0 0.0
        %4086 = vmatprep.subr.mxu0 0.0
        %4087 = vmatpush1.xpose.msra.mxu0 0.0
        %4088 = vmatprep.subr.mxu0 0.0
        %4089 = vmatpush1.xpose.msra.mxu0 0.0
        %4090 = vmatprep.subr.mxu0 0.0
        %4091 = vmatpush1.xpose.msra.mxu0 0.0
        %4092 = vmatprep.subr.mxu0 0.0
        %4093 = vmatpush1.xpose.msra.mxu0 0.0
        %4094 = vmatprep.subr.mxu0 0.0
        %4095 = vmatpush1.xpose.msra.mxu0 0.0
        %4096 = vmatprep.subr.mxu0 0.0
        %4097 = vmatpush1.xpose.msra.mxu0 0.0
        %4098 = vmatprep.subr.mxu0 0.0
        %4099 = vmatpush1.xpose.msra.mxu0 0.0
        %4100 = vmatprep.subr.mxu0 0.0
        %4101 = vmatpush1.xpose.msra.mxu0 0.0
        %4102 = vmatprep.subr.mxu0 0.0
        %4103 = vmatpush1.xpose.msra.mxu0 0.0
        %4104 = vmatprep.subr.mxu0 0.0
        %4105 = vmatpush1.xpose.msra.mxu0 0.0
        %4106 = vmatprep.subr.mxu0 0.0
        %4107 = vmatpush1.xpose.msra.mxu0 0.0
        %4108 = vmatprep.subr.mxu0 0.0
        %4109 = vmatpush1.xpose.msra.mxu0 0.0
        %4110 = vmatprep.subr.mxu0 0.0
        %4111 = vmatpush1.xpose.msra.mxu0 0.0
        %4112 = vmatprep.subr.mxu0 0.0
        %4113 = vmatpush1.xpose.msra.mxu0 0.0
        %4114 = vmatprep.subr.mxu0 0.0
        %4115 = vmatpush1.xpose.msra.mxu0 0.0
        %4116 = vmatprep.subr.mxu0 0.0
        %4117 = vmatpush1.xpose.msra.mxu0 0.0
        %4118 = vmatprep.subr.mxu0 0.0
        %4119 = vmatpush1.xpose.msra.mxu0 0.0
        %4120 = vmatprep.subr.mxu0 0.0
        %4121 = vmatpush1.xpose.msra.mxu0 0.0
        %4122 = vmatprep.subr.mxu0 0.0
        %4123 = vmatpush1.xpose.msra.mxu0 0.0
        %4124 = vmatprep.subr.mxu0 0.0
        %4125 = vmatpush1.xpose.msra.mxu0 0.0
        %4126 = vmatprep.subr.mxu0 0.0
        %4127 = vmatpush1.xpose.msra.mxu0 0.0
        %4128 = vmatprep.mubr.f32.mxu0 0.0
        %4129 = vmatmul.mubr.f32.gmra.mrb[0].mxu0 %v4060
        %v4130 = vpop.f32.mrb[0].mxu0
        %v4131 = vadd.f32 0.0, %v4130
        %v4132 = vpop.f32.mrb[0].mxu0
        %4133 = vdwg.mxu0
        %4134 = vrot.lane.b32.xlu0 %v3725, 112
        %v4135 = vpop.permute.xlu0 %4134
        %4136 = vrot.lane.b32.xlu0 %v3721, 80
        %v4137 = vpop.permute.xlu0 %4136
        %v4138 = vsel %vm745, %v4135, 0
        %v4140 = vsel %vm745, %v4137, 0
        %4142 = vmatprep.subr.mxu0 0.0
        %4143 = vmatpush1.xpose.msra.mxu0 %v4140
        %4144 = vmatprep.subr.mxu0 0.0
        %4145 = vmatpush1.xpose.msra.mxu0 0.0
        %4146 = vmatprep.subr.mxu0 0.0
        %4147 = vmatpush1.xpose.msra.mxu0 0.0
        %4148 = vmatprep.subr.mxu0 0.0
        %4149 = vmatpush1.xpose.msra.mxu0 0.0
        %4150 = vmatprep.subr.mxu0 0.0
        %4151 = vmatpush1.xpose.msra.mxu0 0.0
        %4152 = vmatprep.subr.mxu0 0.0
        %4153 = vmatpush1.xpose.msra.mxu0 0.0
        %4154 = vmatprep.subr.mxu0 0.0
        %4155 = vmatpush1.xpose.msra.mxu0 0.0
        %4156 = vmatprep.subr.mxu0 0.0
        %4157 = vmatpush1.xpose.msra.mxu0 0.0
        %4158 = vmatprep.subr.mxu0 0.0
        %4159 = vmatpush1.xpose.msra.mxu0 0.0
        %4160 = vmatprep.subr.mxu0 0.0
        %4161 = vmatpush1.xpose.msra.mxu0 0.0
        %4162 = vmatprep.subr.mxu0 0.0
        %4163 = vmatpush1.xpose.msra.mxu0 0.0
        %4164 = vmatprep.subr.mxu0 0.0
        %4165 = vmatpush1.xpose.msra.mxu0 0.0
        %4166 = vmatprep.subr.mxu0 0.0
        %4167 = vmatpush1.xpose.msra.mxu0 0.0
        %4168 = vmatprep.subr.mxu0 0.0
        %4169 = vmatpush1.xpose.msra.mxu0 0.0
        %4170 = vmatprep.subr.mxu0 0.0
        %4171 = vmatpush1.xpose.msra.mxu0 0.0
        %4172 = vmatprep.subr.mxu0 0.0
        %4173 = vmatpush1.xpose.msra.mxu0 0.0
        %4174 = vmatprep.subr.mxu0 0.0
        %4175 = vmatpush1.xpose.msra.mxu0 0.0
        %4176 = vmatprep.subr.mxu0 0.0
        %4177 = vmatpush1.xpose.msra.mxu0 0.0
        %4178 = vmatprep.subr.mxu0 0.0
        %4179 = vmatpush1.xpose.msra.mxu0 0.0
        %4180 = vmatprep.subr.mxu0 0.0
        %4181 = vmatpush1.xpose.msra.mxu0 0.0
        %4182 = vmatprep.subr.mxu0 0.0
        %4183 = vmatpush1.xpose.msra.mxu0 0.0
        %4184 = vmatprep.subr.mxu0 0.0
        %4185 = vmatpush1.xpose.msra.mxu0 0.0
        %4186 = vmatprep.subr.mxu0 0.0
        %4187 = vmatpush1.xpose.msra.mxu0 0.0
        %4188 = vmatprep.subr.mxu0 0.0
        %4189 = vmatpush1.xpose.msra.mxu0 0.0
        %4190 = vmatprep.subr.mxu0 0.0
        %4191 = vmatpush1.xpose.msra.mxu0 0.0
        %4192 = vmatprep.subr.mxu0 0.0
        %4193 = vmatpush1.xpose.msra.mxu0 0.0
        %4194 = vmatprep.subr.mxu0 0.0
        %4195 = vmatpush1.xpose.msra.mxu0 0.0
        %4196 = vmatprep.subr.mxu0 0.0
        %4197 = vmatpush1.xpose.msra.mxu0 0.0
        %4198 = vmatprep.subr.mxu0 0.0
        %4199 = vmatpush1.xpose.msra.mxu0 0.0
        %4200 = vmatprep.subr.mxu0 0.0
        %4201 = vmatpush1.xpose.msra.mxu0 0.0
        %4202 = vmatprep.subr.mxu0 0.0
        %4203 = vmatpush1.xpose.msra.mxu0 0.0
        %4204 = vmatprep.subr.mxu0 0.0
        %4205 = vmatpush1.xpose.msra.mxu0 0.0
        %4206 = vmatprep.mubr.f32.mxu0 0.0
        %4207 = vmatmul.mubr.f32.gmra.mrb[0].mxu0 %v4138
        %v4208 = vpop.f32.mrb[0].mxu0
        %v4209 = vadd.f32 0.0, %v4208
        %v4210 = vpop.f32.mrb[0].mxu0
        %4211 = vdwg.mxu0
        %v4212 = vsel %vm899, %v4131, -inf
        %4213 = vmax.xlane.f32.xlu0 %v4212
        %v4214 = vpop.xlane.xlu0 %4213
        %v4215 = vsel %vm899, %v4209, -inf
        %4216 = vmax.xlane.f32.xlu0 %v4215
        %v4217 = vpop.xlane.xlu0 %4216
        %v4218 = vsub.f32 %v4131, %v4214
        %v4219 = vsub.f32 %v4209, %v4217
        %v4220 = vmul.f32 %v4218, 1.442695
        %v4221 = vpow.pop %v4220
        %v4222 = vmul.f32 %v4219, 1.442695
        %v4223 = vpow.pop %v4222
        %v4224 = vsel %vm899, %v4221, 0.0
        %4225 = vadd.xlane.f32.xlu0 %v4224
        %v4226 = vpop.xlane.xlu0 %4225
        %v4227 = vsel %vm899, %v4223, 0.0
        %4228 = vadd.xlane.f32.xlu0 %v4227
        %v4229 = vpop.xlane.xlu0 %4228
        %v4230 = vrcp.pop %v4226
        %v4231 = vrcp.pop %v4229
        %v4232 = vmul.f32 %v4221, %v4230
        %v4233 = vmul.f32 %v4223, %v4231
        %4234 = vrot.lane.b32.xlu0 %v3716, 48
        %v4235 = vpop.permute.xlu0 %4234
        %v4238 = vsel %vm899, %v4232, 0
        %4240 = vmatprep.subr.mxu0 0.0
        %4241 = vmatpush1.msra.mxu0 %v4235
        %4242 = vmatprep.subr.mxu0 0.0
        %4243 = vmatpush1.msra.mxu0 0.0
        %4244 = vmatprep.subr.mxu0 0.0
        %4245 = vmatpush1.msra.mxu0 0.0
        %4246 = vmatprep.subr.mxu0 0.0
        %4247 = vmatpush1.msra.mxu0 0.0
        %4248 = vmatprep.subr.mxu0 0.0
        %4249 = vmatpush1.msra.mxu0 0.0
        %4250 = vmatprep.subr.mxu0 0.0
        %4251 = vmatpush1.msra.mxu0 0.0
        %4252 = vmatprep.subr.mxu0 0.0
        %4253 = vmatpush1.msra.mxu0 0.0
        %4254 = vmatprep.subr.mxu0 0.0
        %4255 = vmatpush1.msra.mxu0 0.0
        %4256 = vmatprep.subr.mxu0 0.0
        %4257 = vmatpush1.msra.mxu0 0.0
        %4258 = vmatprep.subr.mxu0 0.0
        %4259 = vmatpush1.msra.mxu0 0.0
        %4260 = vmatprep.subr.mxu0 0.0
        %4261 = vmatpush1.msra.mxu0 0.0
        %4262 = vmatprep.subr.mxu0 0.0
        %4263 = vmatpush1.msra.mxu0 0.0
        %4264 = vmatprep.subr.mxu0 0.0
        %4265 = vmatpush1.msra.mxu0 0.0
        %4266 = vmatprep.subr.mxu0 0.0
        %4267 = vmatpush1.msra.mxu0 0.0
        %4268 = vmatprep.subr.mxu0 0.0
        %4269 = vmatpush1.msra.mxu0 0.0
        %4270 = vmatprep.subr.mxu0 0.0
        %4271 = vmatpush1.msra.mxu0 0.0
        %4272 = vmatprep.subr.mxu0 0.0
        %4273 = vmatpush1.msra.mxu0 0.0
        %4274 = vmatprep.subr.mxu0 0.0
        %4275 = vmatpush1.msra.mxu0 0.0
        %4276 = vmatprep.subr.mxu0 0.0
        %4277 = vmatpush1.msra.mxu0 0.0
        %4278 = vmatprep.subr.mxu0 0.0
        %4279 = vmatpush1.msra.mxu0 0.0
        %4280 = vmatprep.subr.mxu0 0.0
        %4281 = vmatpush1.msra.mxu0 0.0
        %4282 = vmatprep.subr.mxu0 0.0
        %4283 = vmatpush1.msra.mxu0 0.0
        %4284 = vmatprep.subr.mxu0 0.0
        %4285 = vmatpush1.msra.mxu0 0.0
        %4286 = vmatprep.subr.mxu0 0.0
        %4287 = vmatpush1.msra.mxu0 0.0
        %4288 = vmatprep.subr.mxu0 0.0
        %4289 = vmatpush1.msra.mxu0 0.0
        %4290 = vmatprep.subr.mxu0 0.0
        %4291 = vmatpush1.msra.mxu0 0.0
        %4292 = vmatprep.subr.mxu0 0.0
        %4293 = vmatpush1.msra.mxu0 0.0
        %4294 = vmatprep.subr.mxu0 0.0
        %4295 = vmatpush1.msra.mxu0 0.0
        %4296 = vmatprep.subr.mxu0 0.0
        %4297 = vmatpush1.msra.mxu0 0.0
        %4298 = vmatprep.subr.mxu0 0.0
        %4299 = vmatpush1.msra.mxu0 0.0
        %4300 = vmatprep.subr.mxu0 0.0
        %4301 = vmatpush1.msra.mxu0 0.0
        %4302 = vmatprep.subr.mxu0 0.0
        %4303 = vmatpush1.msra.mxu0 0.0
        %4304 = vmatprep.mubr.f32.mxu0 0.0
        %4305 = vmatmul.mubr.f32.gmra.mrb[0].mxu0 %v4238
        %v4306 = vpop.f32.mrb[0].mxu0
        %v4307 = vadd.f32 0.0, %v4306
        %v4308 = vpop.f32.mrb[0].mxu0
        %4309 = vdwg.mxu0
        %4310 = vrot.lane.b32.xlu0 %v3721, 48
        %v4311 = vpop.permute.xlu0 %4310
        %v4314 = vsel %vm899, %v4233, 0
        %4316 = vmatprep.subr.mxu0 0.0
        %4317 = vmatpush1.msra.mxu0 %v4311
        %4318 = vmatprep.subr.mxu0 0.0
        %4319 = vmatpush1.msra.mxu0 0.0
        %4320 = vmatprep.subr.mxu0 0.0
        %4321 = vmatpush1.msra.mxu0 0.0
        %4322 = vmatprep.subr.mxu0 0.0
        %4323 = vmatpush1.msra.mxu0 0.0
        %4324 = vmatprep.subr.mxu0 0.0
        %4325 = vmatpush1.msra.mxu0 0.0
        %4326 = vmatprep.subr.mxu0 0.0
        %4327 = vmatpush1.msra.mxu0 0.0
        %4328 = vmatprep.subr.mxu0 0.0
        %4329 = vmatpush1.msra.mxu0 0.0
        %4330 = vmatprep.subr.mxu0 0.0
        %4331 = vmatpush1.msra.mxu0 0.0
        %4332 = vmatprep.subr.mxu0 0.0
        %4333 = vmatpush1.msra.mxu0 0.0
        %4334 = vmatprep.subr.mxu0 0.0
        %4335 = vmatpush1.msra.mxu0 0.0
        %4336 = vmatprep.subr.mxu0 0.0
        %4337 = vmatpush1.msra.mxu0 0.0
        %4338 = vmatprep.subr.mxu0 0.0
        %4339 = vmatpush1.msra.mxu0 0.0
        %4340 = vmatprep.subr.mxu0 0.0
        %4341 = vmatpush1.msra.mxu0 0.0
        %4342 = vmatprep.subr.mxu0 0.0
        %4343 = vmatpush1.msra.mxu0 0.0
        %4344 = vmatprep.subr.mxu0 0.0
        %4345 = vmatpush1.msra.mxu0 0.0
        %4346 = vmatprep.subr.mxu0 0.0
        %4347 = vmatpush1.msra.mxu0 0.0
        %4348 = vmatprep.subr.mxu0 0.0
        %4349 = vmatpush1.msra.mxu0 0.0
        %4350 = vmatprep.subr.mxu0 0.0
        %4351 = vmatpush1.msra.mxu0 0.0
        %4352 = vmatprep.subr.mxu0 0.0
        %4353 = vmatpush1.msra.mxu0 0.0
        %4354 = vmatprep.subr.mxu0 0.0
        %4355 = vmatpush1.msra.mxu0 0.0
        %4356 = vmatprep.subr.mxu0 0.0
        %4357 = vmatpush1.msra.mxu0 0.0
        %4358 = vmatprep.subr.mxu0 0.0
        %4359 = vmatpush1.msra.mxu0 0.0
        %4360 = vmatprep.subr.mxu0 0.0
        %4361 = vmatpush1.msra.mxu0 0.0
        %4362 = vmatprep.subr.mxu0 0.0
        %4363 = vmatpush1.msra.mxu0 0.0
        %4364 = vmatprep.subr.mxu0 0.0
        %4365 = vmatpush1.msra.mxu0 0.0
        %4366 = vmatprep.subr.mxu0 0.0
        %4367 = vmatpush1.msra.mxu0 0.0
        %4368 = vmatprep.subr.mxu0 0.0
        %4369 = vmatpush1.msra.mxu0 0.0
        %4370 = vmatprep.subr.mxu0 0.0
        %4371 = vmatpush1.msra.mxu0 0.0
        %4372 = vmatprep.subr.mxu0 0.0
        %4373 = vmatpush1.msra.mxu0 0.0
        %4374 = vmatprep.subr.mxu0 0.0
        %4375 = vmatpush1.msra.mxu0 0.0
        %4376 = vmatprep.subr.mxu0 0.0
        %4377 = vmatpush1.msra.mxu0 0.0
        %4378 = vmatprep.subr.mxu0 0.0
        %4379 = vmatpush1.msra.mxu0 0.0
        %4380 = vmatprep.mubr.f32.mxu0 0.0
        %4381 = vmatmul.mubr.f32.gmra.mrb[0].mxu0 %v4314
        %v4382 = vpop.f32.mrb[0].mxu0
        %v4383 = vadd.f32 0.0, %v4382
        %v4384 = vpop.f32.mrb[0].mxu0
        %4385 = vdwg.mxu0
        %4388 = vrot.lane.b32.xlu0 %v4307, 16
        %v4389 = vpop.permute.xlu0 %4388
        %4390 = vrot.lane.b32.xlu0 %v4383, 16
        %v4391 = vpop.permute.xlu0 %4390
        %v4394 = vsel %vm745, %v3977, %v4389
        %v4395 = vsel %vm745, %v4053, %v4391
        %s4396 = scalar_lea.vmem %s5, 32
        %v4397 = vld [vmem:[%s4396] sm:$0xff]
        %v4398 = vld [vmem:[%s4396 + $0x8] sm:$0xff]
        %v4399 = vld [vmem:[%s4396 + $0x10] sm:$0xff]
        %v4400 = vld [vmem:[%s4396 + $0x18] sm:$0xff]
        %s4401 = scalar_lea.vmem %s6, 1
        %v4402 = vld [vmem:[%s4401] sm:$0x1]
        %v4404 = vlaneseq
        %v4405 = vshrl.u32 %v4404, 7
        %v4406 = vsub.s32 0, %v4405
        %v4407 = vrot.slane %v4402, %v4406
        %v4410 = vsel %vm658, %v4394, 0
        %v4413 = vsel %vm658, %v4395, 0
        %4415 = vmatprep.subr.mxu0 0.0
        %4416 = vmatpush1.msra.mxu0 %v4397
        %4417 = vmatprep.subr.mxu0 0.0
        %4418 = vmatpush1.msra.mxu0 %v4398
        %4419 = vmatprep.subr.mxu0 0.0
        %4420 = vmatpush1.msra.mxu0 %v4399
        %4421 = vmatprep.subr.mxu0 0.0
        %4422 = vmatpush1.msra.mxu0 %v4400
        %4423 = vmatprep.subr.mxu0 0.0
        %4424 = vmatpush1.msra.mxu0 0.0
        %4425 = vmatprep.subr.mxu0 0.0
        %4426 = vmatpush1.msra.mxu0 0.0
        %4427 = vmatprep.subr.mxu0 0.0
        %4428 = vmatpush1.msra.mxu0 0.0
        %4429 = vmatprep.subr.mxu0 0.0
        %4430 = vmatpush1.msra.mxu0 0.0
        %4431 = vmatprep.subr.mxu0 0.0
        %4432 = vmatpush1.msra.mxu0 0.0
        %4433 = vmatprep.subr.mxu0 0.0
        %4434 = vmatpush1.msra.mxu0 0.0
        %4435 = vmatprep.subr.mxu0 0.0
        %4436 = vmatpush1.msra.mxu0 0.0
        %4437 = vmatprep.subr.mxu0 0.0
        %4438 = vmatpush1.msra.mxu0 0.0
        %4439 = vmatprep.subr.mxu0 0.0
        %4440 = vmatpush1.msra.mxu0 0.0
        %4441 = vmatprep.subr.mxu0 0.0
        %4442 = vmatpush1.msra.mxu0 0.0
        %4443 = vmatprep.subr.mxu0 0.0
        %4444 = vmatpush1.msra.mxu0 0.0
        %4445 = vmatprep.subr.mxu0 0.0
        %4446 = vmatpush1.msra.mxu0 0.0
        %4447 = vmatprep.subr.mxu0 0.0
        %4448 = vmatpush1.msra.mxu0 0.0
        %4449 = vmatprep.subr.mxu0 0.0
        %4450 = vmatpush1.msra.mxu0 0.0
        %4451 = vmatprep.subr.mxu0 0.0
        %4452 = vmatpush1.msra.mxu0 0.0
        %4453 = vmatprep.subr.mxu0 0.0
        %4454 = vmatpush1.msra.mxu0 0.0
        %4455 = vmatprep.subr.mxu0 0.0
        %4456 = vmatpush1.msra.mxu0 0.0
        %4457 = vmatprep.subr.mxu0 0.0
        %4458 = vmatpush1.msra.mxu0 0.0
        %4459 = vmatprep.subr.mxu0 0.0
        %4460 = vmatpush1.msra.mxu0 0.0
        %4461 = vmatprep.subr.mxu0 0.0
        %4462 = vmatpush1.msra.mxu0 0.0
        %4463 = vmatprep.subr.mxu0 0.0
        %4464 = vmatpush1.msra.mxu0 0.0
        %4465 = vmatprep.subr.mxu0 0.0
        %4466 = vmatpush1.msra.mxu0 0.0
        %4467 = vmatprep.subr.mxu0 0.0
        %4468 = vmatpush1.msra.mxu0 0.0
        %4469 = vmatprep.subr.mxu0 0.0
        %4470 = vmatpush1.msra.mxu0 0.0
        %4471 = vmatprep.subr.mxu0 0.0
        %4472 = vmatpush1.msra.mxu0 0.0
        %4473 = vmatprep.subr.mxu0 0.0
        %4474 = vmatpush1.msra.mxu0 0.0
        %4475 = vmatprep.subr.mxu0 0.0
        %4476 = vmatpush1.msra.mxu0 0.0
        %4477 = vmatprep.subr.mxu0 0.0
        %4478 = vmatpush1.msra.mxu0 0.0
        %4479 = vmatprep.mubr.f32.mxu0 0.0
        %4480 = vmatmul.mubr.f32.gmra.mrb[0].mxu0 %v4410
        %v4481 = vpop.f32.mrb[0].mxu0
        %v4482 = vadd.f32 %v4407, %v4481
        %v4483 = vpop.f32.mrb[0].mxu0
        %4484 = vmatprep.mubr.f32.mxu0 0.0
        %4485 = vmatmul.mubr.f32.gmra.mrb[0].mxu0 %v4413
        %v4486 = vpop.f32.mrb[0].mxu0
        %v4487 = vadd.f32 %v4407, %v4486
        %v4488 = vpop.f32.mrb[0].mxu0
        %4489 = vdwg.mxu0
        %v4490 = vadd.f32 %v3628, %v4482
        %v4491 = vadd.f32 %v3629, %v4487
        %s4492 = scalar_lea.vmem %s7, 1
        %v4493 = vld [vmem:[%s4492] sm:$0x1]
        %s4494 = scalar_lea.vmem %s8, 1
        %v4495 = vld [vmem:[%s4494] sm:$0x1]
        %v4496 = vsel %vm658, %v4490, 0.0
        %4497 = vadd.xlane.f32.xlu0 %v4496
        %v4498 = vpop.xlane.xlu0 %4497
        %v4499 = vsel %vm658, %v4491, 0.0
        %4500 = vadd.xlane.f32.xlu0 %v4499
        %v4501 = vpop.xlane.xlu0 %4500
        %v4502 = vmul.f32 %v4498, %v1516
        %v4503 = vmul.f32 %v4501, %v1516
        %v4504 = vsub.f32 %v4490, %v4502
        %v4505 = vsub.f32 %v4491, %v4503
        %v4506 = vmul.f32 %v4504, %v4504
        %v4507 = vmul.f32 %v4505, %v4505
        %v4508 = vsel %vm658, %v4506, 0.0
        %4509 = vadd.xlane.f32.xlu0 %v4508
        %v4510 = vpop.xlane.xlu0 %4509
        %v4511 = vsel %vm658, %v4507, 0.0
        %4512 = vadd.xlane.f32.xlu0 %v4511
        %v4513 = vpop.xlane.xlu0 %4512
        %v4514 = vmul.f32 %v4510, %v1516
        %v4515 = vmul.f32 %v4513, %v1516
        %v4516 = vadd.f32 %v4514, 1e-05
        %v4517 = vadd.f32 %v4515, 1e-05
        %v4518 = vrsqrt.pop %v4516
        %v4519 = vrsqrt.pop %v4517
        %v4520 = vmul.f32 %v4504, %v4518
        %v4521 = vmul.f32 %v4505, %v4519
        %v4523 = vlaneseq
        %v4524 = vshrl.u32 %v4523, 7
        %v4525 = vsub.s32 0, %v4524
        %v4526 = vrot.slane %v4493, %v4525
        %v4528 = vmul.f32 %v4520, %v4526
        %v4529 = vmul.f32 %v4521, %v4526
        %v4531 = vlaneseq
        %v4532 = vshrl.u32 %v4531, 7
        %v4533 = vsub.s32 0, %v4532
        %v4534 = vrot.slane %v4495, %v4533
        %v4536 = vadd.f32 %v4528, %v4534
        %v4537 = vadd.f32 %v4529, %v4534
        %v4538 = vpack.c.bf16 %v4537, %v4536
        %s4539 = scalar_lea.vmem %s9, 256
        %v4540 = vld [vmem:[%s4539] sm:$0xff]
        %v4541 = vld [vmem:[%s4539 + $0x8] sm:$0xff]
        %v4542 = vld [vmem:[%s4539 + $0x10] sm:$0xff]
        %v4543 = vld [vmem:[%s4539 + $0x18] sm:$0xff]
        %v4544 = vld [vmem:[%s4539 + $0x20] sm:$0xff]
        %v4545 = vld [vmem:[%s4539 + $0x28] sm:$0xff]
        %v4546 = vld [vmem:[%s4539 + $0x30] sm:$0xff]
        %v4547 = vld [vmem:[%s4539 + $0x38] sm:$0xff]
        %v4548 = vld [vmem:[%s4539 + $0x40] sm:$0xff]
        %v4549 = vld [vmem:[%s4539 + $0x48] sm:$0xff]
        %v4550 = vld [vmem:[%s4539 + $0x50] sm:$0xff]
        %v4551 = vld [vmem:[%s4539 + $0x58] sm:$0xff]
        %v4552 = vld [vmem:[%s4539 + $0x60] sm:$0xff]
        %v4553 = vld [vmem:[%s4539 + $0x68] sm:$0xff]
        %v4554 = vld [vmem:[%s4539 + $0x70] sm:$0xff]
        %v4555 = vld [vmem:[%s4539 + $0x78] sm:$0xff]
        %v4556 = vld [vmem:[%s4539 + $0x80] sm:$0xff]
        %v4557 = vld [vmem:[%s4539 + $0x88] sm:$0xff]
        %v4558 = vld [vmem:[%s4539 + $0x90] sm:$0xff]
        %v4559 = vld [vmem:[%s4539 + $0x98] sm:$0xff]
        %v4560 = vld [vmem:[%s4539 + $0xa0] sm:$0xff]
        %v4561 = vld [vmem:[%s4539 + $0xa8] sm:$0xff]
        %v4562 = vld [vmem:[%s4539 + $0xb0] sm:$0xff]
        %v4563 = vld [vmem:[%s4539 + $0xb8] sm:$0xff]
        %v4564 = vld [vmem:[%s4539 + $0xc0] sm:$0xff]
        %v4565 = vld [vmem:[%s4539 + $0xc8] sm:$0xff]
        %v4566 = vld [vmem:[%s4539 + $0xd0] sm:$0xff]
        %v4567 = vld [vmem:[%s4539 + $0xd8] sm:$0xff]
        %v4568 = vld [vmem:[%s4539 + $0xe0] sm:$0xff]
        %v4569 = vld [vmem:[%s4539 + $0xe8] sm:$0xff]
        %v4570 = vld [vmem:[%s4539 + $0xf0] sm:$0xff]
        %v4571 = vld [vmem:[%s4539 + $0xf8] sm:$0xff]
        %s4572 = scalar_lea.vmem %s10, 16
        %v4573 = vld [vmem:[%s4572] sm:$0xff]
        %v4574 = vld [vmem:[%s4572 + $0x8] sm:$0xff]
        %v4577 = vlaneseq
        %v4578 = vshrl.u32 %v4577, 7
        %v4579 = vsub.s32 0, %v4578
        %v4580 = vrot.slane %v4573, %v4579
        %v4581 = vlaneseq
        %v4582 = vshrl.u32 %v4581, 7
        %v4583 = vsub.s32 1, %v4582
        %v4584 = vrot.slane %v4573, %v4583
        %v4585 = vlaneseq
        %v4586 = vshrl.u32 %v4585, 7
        %v4587 = vsub.s32 2, %v4586
        %v4588 = vrot.slane %v4573, %v4587
        %v4589 = vlaneseq
        %v4590 = vshrl.u32 %v4589, 7
        %v4591 = vsub.s32 3, %v4590
        %v4592 = vrot.slane %v4573, %v4591
        %v4593 = vlaneseq
        %v4594 = vshrl.u32 %v4593, 7
        %v4595 = vsub.s32 4, %v4594
        %v4596 = vrot.slane %v4573, %v4595
        %v4597 = vlaneseq
        %v4598 = vshrl.u32 %v4597, 7
        %v4599 = vsub.s32 5, %v4598
        %v4600 = vrot.slane %v4573, %v4599
        %v4601 = vlaneseq
        %v4602 = vshrl.u32 %v4601, 7
        %v4603 = vsub.s32 6, %v4602
        %v4604 = vrot.slane %v4573, %v4603
        %v4605 = vlaneseq
        %v4606 = vshrl.u32 %v4605, 7
        %v4607 = vsub.s32 7, %v4606
        %v4608 = vrot.slane %v4573, %v4607
        %v4609 = vlaneseq
        %v4610 = vshrl.u32 %v4609, 7
        %v4611 = vsub.s32 0, %v4610
        %v4612 = vrot.slane %v4574, %v4611
        %v4613 = vlaneseq
        %v4614 = vshrl.u32 %v4613, 7
        %v4615 = vsub.s32 1, %v4614
        %v4616 = vrot.slane %v4574, %v4615
        %v4617 = vlaneseq
        %v4618 = vshrl.u32 %v4617, 7
        %v4619 = vsub.s32 2, %v4618
        %v4620 = vrot.slane %v4574, %v4619
        %v4621 = vlaneseq
        %v4622 = vshrl.u32 %v4621, 7
        %v4623 = vsub.s32 3, %v4622
        %v4624 = vrot.slane %v4574, %v4623
        %v4625 = vlaneseq
        %v4626 = vshrl.u32 %v4625, 7
        %v4627 = vsub.s32 4, %v4626
        %v4628 = vrot.slane %v4574, %v4627
        %v4629 = vlaneseq
        %v4630 = vshrl.u32 %v4629, 7
        %v4631 = vsub.s32 5, %v4630
        %v4632 = vrot.slane %v4574, %v4631
        %v4633 = vlaneseq
        %v4634 = vshrl.u32 %v4633, 7
        %v4635 = vsub.s32 6, %v4634
        %v4636 = vrot.slane %v4574, %v4635
        %v4637 = vlaneseq
        %v4638 = vshrl.u32 %v4637, 7
        %v4639 = vsub.s32 7, %v4638
        %v4640 = vrot.slane %v4574, %v4639
        %v4689 = vunpack.c.l.b16 %v4540
        %v4690 = vunpack.c.h.b16 %v4540
        %v4691 = vunpack.c.l.b16 %v4541
        %v4692 = vunpack.c.h.b16 %v4541
        %v4693 = vunpack.c.l.b16 %v4542
        %v4694 = vunpack.c.h.b16 %v4542
        %v4695 = vunpack.c.l.b16 %v4543
        %v4696 = vunpack.c.h.b16 %v4543
        %v4697 = vunpack.c.l.b16 %v4544
        %v4698 = vunpack.c.h.b16 %v4544
        %v4699 = vunpack.c.l.b16 %v4545
        %v4700 = vunpack.c.h.b16 %v4545
        %v4701 = vunpack.c.l.b16 %v4546
        %v4702 = vunpack.c.h.b16 %v4546
        %v4703 = vunpack.c.l.b16 %v4547
        %v4704 = vunpack.c.h.b16 %v4547
        %v4705 = vunpack.c.l.b16 %v4548
        %v4706 = vunpack.c.h.b16 %v4548
        %v4707 = vunpack.c.l.b16 %v4549
        %v4708 = vunpack.c.h.b16 %v4549
        %v4709 = vunpack.c.l.b16 %v4550
        %v4710 = vunpack.c.h.b16 %v4550
        %v4711 = vunpack.c.l.b16 %v4551
        %v4712 = vunpack.c.h.b16 %v4551
        %v4713 = vunpack.c.l.b16 %v4552
        %v4714 = vunpack.c.h.b16 %v4552
        %v4715 = vunpack.c.l.b16 %v4553
        %v4716 = vunpack.c.h.b16 %v4553
        %v4717 = vunpack.c.l.b16 %v4554
        %v4718 = vunpack.c.h.b16 %v4554
        %v4719 = vunpack.c.l.b16 %v4555
        %v4720 = vunpack.c.h.b16 %v4555
        %v4721 = vunpack.c.l.b16 %v4556
        %v4722 = vunpack.c.h.b16 %v4556
        %v4723 = vunpack.c.l.b16 %v4557
        %v4724 = vunpack.c.h.b16 %v4557
        %v4725 = vunpack.c.l.b16 %v4558
        %v4726 = vunpack.c.h.b16 %v4558
        %v4727 = vunpack.c.l.b16 %v4559
        %v4728 = vunpack.c.h.b16 %v4559
        %v4729 = vunpack.c.l.b16 %v4560
        %v4730 = vunpack.c.h.b16 %v4560
        %v4731 = vunpack.c.l.b16 %v4561
        %v4732 = vunpack.c.h.b16 %v4561
        %v4733 = vunpack.c.l.b16 %v4562
        %v4734 = vunpack.c.h.b16 %v4562
        %v4735 = vunpack.c.l.b16 %v4563
        %v4736 = vunpack.c.h.b16 %v4563
        %v4737 = vunpack.c.l.b16 %v4564
        %v4738 = vunpack.c.h.b16 %v4564
        %v4739 = vunpack.c.l.b16 %v4565
        %v4740 = vunpack.c.h.b16 %v4565
        %v4741 = vunpack.c.l.b16 %v4566
        %v4742 = vunpack.c.h.b16 %v4566
        %v4743 = vunpack.c.l.b16 %v4567
        %v4744 = vunpack.c.h.b16 %v4567
        %v4745 = vunpack.c.l.b16 %v4568
        %v4746 = vunpack.c.h.b16 %v4568
        %v4747 = vunpack.c.l.b16 %v4569
        %v4748 = vunpack.c.h.b16 %v4569
        %v4749 = vunpack.c.l.b16 %v4570
        %v4750 = vunpack.c.h.b16 %v4570
        %v4751 = vunpack.c.l.b16 %v4571
        %v4752 = vunpack.c.h.b16 %v4571
        %v4753 = vpack.c.b16 %v4705, %v4689
        %v4754 = vpack.c.b16 %v4706, %v4690
        %v4755 = vpack.c.b16 %v4707, %v4691
        %v4756 = vpack.c.b16 %v4708, %v4692
        %v4757 = vpack.c.b16 %v4709, %v4693
        %v4758 = vpack.c.b16 %v4710, %v4694
        %v4759 = vpack.c.b16 %v4711, %v4695
        %v4760 = vpack.c.b16 %v4712, %v4696
        %v4761 = vpack.c.b16 %v4713, %v4697
        %v4762 = vpack.c.b16 %v4714, %v4698
        %v4763 = vpack.c.b16 %v4715, %v4699
        %v4764 = vpack.c.b16 %v4716, %v4700
        %v4765 = vpack.c.b16 %v4717, %v4701
        %v4766 = vpack.c.b16 %v4718, %v4702
        %v4767 = vpack.c.b16 %v4719, %v4703
        %v4768 = vpack.c.b16 %v4720, %v4704
        %v4769 = vpack.c.b16 %v4737, %v4721
        %v4770 = vpack.c.b16 %v4738, %v4722
        %v4771 = vpack.c.b16 %v4739, %v4723
        %v4772 = vpack.c.b16 %v4740, %v4724
        %v4773 = vpack.c.b16 %v4741, %v4725
        %v4774 = vpack.c.b16 %v4742, %v4726
        %v4775 = vpack.c.b16 %v4743, %v4727
        %v4776 = vpack.c.b16 %v4744, %v4728
        %v4777 = vpack.c.b16 %v4745, %v4729
        %v4778 = vpack.c.b16 %v4746, %v4730
        %v4779 = vpack.c.b16 %v4747, %v4731
        %v4780 = vpack.c.b16 %v4748, %v4732
        %v4781 = vpack.c.b16 %v4749, %v4733
        %v4782 = vpack.c.b16 %v4750, %v4734
        %v4783 = vpack.c.b16 %v4751, %v4735
        %v4784 = vpack.c.b16 %v4752, %v4736
        %v4818 = vsel %vm658, %v4538, 0
        %4820 = vmatprep.subr.bf16.mxu0 %v4754
        %4821 = vmatpush1.bf16.msra.mxu0 %v4753
        %4822 = vmatprep.subr.bf16.mxu0 %v4770
        %4823 = vmatpush1.bf16.msra.mxu0 %v4769
        %4824 = vmatprep.subr.bf16.mxu0 0
        %4825 = vmatpush1.bf16.msra.mxu0 0
        %4826 = vmatprep.subr.bf16.mxu0 0
        %4827 = vmatpush1.bf16.msra.mxu0 0
        %4828 = vmatprep.subr.bf16.mxu0 0
        %4829 = vmatpush1.bf16.msra.mxu0 0
        %4830 = vmatprep.subr.bf16.mxu0 0
        %4831 = vmatpush1.bf16.msra.mxu0 0
        %4832 = vmatprep.subr.bf16.mxu0 0
        %4833 = vmatpush1.bf16.msra.mxu0 0
        %4834 = vmatprep.subr.bf16.mxu0 0
        %4835 = vmatpush1.bf16.msra.mxu0 0
        %4836 = vmatprep.subr.bf16.mxu0 0
        %4837 = vmatpush1.bf16.msra.mxu0 0
        %4838 = vmatprep.subr.bf16.mxu0 0
        %4839 = vmatpush1.bf16.msra.mxu0 0
        %4840 = vmatprep.subr.bf16.mxu0 0
        %4841 = vmatpush1.bf16.msra.mxu0 0
        %4842 = vmatprep.subr.bf16.mxu0 0
        %4843 = vmatpush1.bf16.msra.mxu0 0
        %4844 = vmatprep.subr.bf16.mxu0 0
        %4845 = vmatpush1.bf16.msra.mxu0 0
        %4846 = vmatprep.subr.bf16.mxu0 0
        %4847 = vmatpush1.bf16.msra.mxu0 0
        %4848 = vmatprep.subr.bf16.mxu0 0
        %4849 = vmatpush1.bf16.msra.mxu0 0
        %4850 = vmatprep.subr.bf16.mxu0 0
        %4851 = vmatpush1.bf16.msra.mxu0 0
        %4852 = vmatprep.mubr.bf16.mxu0 0
        %4853 = vmatmul.mubr.bf16.gmra.mrb[0].mxu0 %v4818
        %v4854 = vpop.f32.mrb[0].mxu0
        %v4855 = vadd.f32 %v4580, %v4854
        %v4856 = vpop.f32.mrb[0].mxu0
        %v4857 = vadd.f32 %v4584, %v4856
        %v4858 = vpop.f32.mrb[0].mxu0
        %v4859 = vadd.f32 %v4580, %v4858
        %v4860 = vpop.f32.mrb[0].mxu0
        %v4861 = vadd.f32 %v4584, %v4860
        %4862 = vdwg.mxu0
        %4863 = vmatprep.subr.bf16.mxu0 %v4756
        %4864 = vmatpush1.bf16.msra.mxu0 %v4755
        %4865 = vmatprep.subr.bf16.mxu0 %v4772
        %4866 = vmatpush1.bf16.msra.mxu0 %v4771
        %4867 = vmatprep.subr.bf16.mxu0 0
        %4868 = vmatpush1.bf16.msra.mxu0 0
        %4869 = vmatprep.subr.bf16.mxu0 0
        %4870 = vmatpush1.bf16.msra.mxu0 0
        %4871 = vmatprep.subr.bf16.mxu0 0
        %4872 = vmatpush1.bf16.msra.mxu0 0
        %4873 = vmatprep.subr.bf16.mxu0 0
        %4874 = vmatpush1.bf16.msra.mxu0 0
        %4875 = vmatprep.subr.bf16.mxu0 0
        %4876 = vmatpush1.bf16.msra.mxu0 0
        %4877 = vmatprep.subr.bf16.mxu0 0
        %4878 = vmatpush1.bf16.msra.mxu0 0
        %4879 = vmatprep.subr.bf16.mxu0 0
        %4880 = vmatpush1.bf16.msra.mxu0 0
        %4881 = vmatprep.subr.bf16.mxu0 0
        %4882 = vmatpush1.bf16.msra.mxu0 0
        %4883 = vmatprep.subr.bf16.mxu0 0
        %4884 = vmatpush1.bf16.msra.mxu0 0
        %4885 = vmatprep.subr.bf16.mxu0 0
        %4886 = vmatpush1.bf16.msra.mxu0 0
        %4887 = vmatprep.subr.bf16.mxu0 0
        %4888 = vmatpush1.bf16.msra.mxu0 0
        %4889 = vmatprep.subr.bf16.mxu0 0
        %4890 = vmatpush1.bf16.msra.mxu0 0
        %4891 = vmatprep.subr.bf16.mxu0 0
        %4892 = vmatpush1.bf16.msra.mxu0 0
        %4893 = vmatprep.subr.bf16.mxu0 0
        %4894 = vmatpush1.bf16.msra.mxu0 0
        %4895 = vmatprep.mubr.bf16.mxu0 0
        %4896 = vmatmul.mubr.bf16.gmra.mrb[0].mxu0 %v4818
        %v4897 = vpop.f32.mrb[0].mxu0
        %v4898 = vadd.f32 %v4588, %v4897
        %v4899 = vpop.f32.mrb[0].mxu0
        %v4900 = vadd.f32 %v4592, %v4899
        %v4901 = vpop.f32.mrb[0].mxu0
        %v4902 = vadd.f32 %v4588, %v4901
        %v4903 = vpop.f32.mrb[0].mxu0
        %v4904 = vadd.f32 %v4592, %v4903
        %4905 = vdwg.mxu0
        %4906 = vmatprep.subr.bf16.mxu0 %v4758
        %4907 = vmatpush1.bf16.msra.mxu0 %v4757
        %4908 = vmatprep.subr.bf16.mxu0 %v4774
        %4909 = vmatpush1.bf16.msra.mxu0 %v4773
        %4910 = vmatprep.subr.bf16.mxu0 0
        %4911 = vmatpush1.bf16.msra.mxu0 0
        %4912 = vmatprep.subr.bf16.mxu0 0
        %4913 = vmatpush1.bf16.msra.mxu0 0
        %4914 = vmatprep.subr.bf16.mxu0 0
        %4915 = vmatpush1.bf16.msra.mxu0 0
        %4916 = vmatprep.subr.bf16.mxu0 0
        %4917 = vmatpush1.bf16.msra.mxu0 0
        %4918 = vmatprep.subr.bf16.mxu0 0
        %4919 = vmatpush1.bf16.msra.mxu0 0
        %4920 = vmatprep.subr.bf16.mxu0 0
        %4921 = vmatpush1.bf16.msra.mxu0 0
        %4922 = vmatprep.subr.bf16.mxu0 0
        %4923 = vmatpush1.bf16.msra.mxu0 0
        %4924 = vmatprep.subr.bf16.mxu0 0
        %4925 = vmatpush1.bf16.msra.mxu0 0
        %4926 = vmatprep.subr.bf16.mxu0 0
        %4927 = vmatpush1.bf16.msra.mxu0 0
        %4928 = vmatprep.subr.bf16.mxu0 0
        %4929 = vmatpush1.bf16.msra.mxu0 0
        %4930 = vmatprep.subr.bf16.mxu0 0
        %4931 = vmatpush1.bf16.msra.mxu0 0
        %4932 = vmatprep.subr.bf16.mxu0 0
        %4933 = vmatpush1.bf16.msra.mxu0 0
        %4934 = vmatprep.subr.bf16.mxu0 0
        %4935 = vmatpush1.bf16.msra.mxu0 0
        %4936 = vmatprep.subr.bf16.mxu0 0
        %4937 = vmatpush1.bf16.msra.mxu0 0
        %4938 = vmatprep.mubr.bf16.mxu0 0
        %4939 = vmatmul.mubr.bf16.gmra.mrb[0].mxu0 %v4818
        %v4940 = vpop.f32.mrb[0].mxu0
        %v4941 = vadd.f32 %v4596, %v4940
        %v4942 = vpop.f32.mrb[0].mxu0
        %v4943 = vadd.f32 %v4600, %v4942
        %v4944 = vpop.f32.mrb[0].mxu0
        %v4945 = vadd.f32 %v4596, %v4944
        %v4946 = vpop.f32.mrb[0].mxu0
        %v4947 = vadd.f32 %v4600, %v4946
        %4948 = vdwg.mxu0
        %4949 = vmatprep.subr.bf16.mxu0 %v4760
        %4950 = vmatpush1.bf16.msra.mxu0 %v4759
        %4951 = vmatprep.subr.bf16.mxu0 %v4776
        %4952 = vmatpush1.bf16.msra.mxu0 %v4775
        %4953 = vmatprep.subr.bf16.mxu0 0
        %4954 = vmatpush1.bf16.msra.mxu0 0
        %4955 = vmatprep.subr.bf16.mxu0 0
        %4956 = vmatpush1.bf16.msra.mxu0 0
        %4957 = vmatprep.subr.bf16.mxu0 0
        %4958 = vmatpush1.bf16.msra.mxu0 0
        %4959 = vmatprep.subr.bf16.mxu0 0
        %4960 = vmatpush1.bf16.msra.mxu0 0
        %4961 = vmatprep.subr.bf16.mxu0 0
        %4962 = vmatpush1.bf16.msra.mxu0 0
        %4963 = vmatprep.subr.bf16.mxu0 0
        %4964 = vmatpush1.bf16.msra.mxu0 0
        %4965 = vmatprep.subr.bf16.mxu0 0
        %4966 = vmatpush1.bf16.msra.mxu0 0
        %4967 = vmatprep.subr.bf16.mxu0 0
        %4968 = vmatpush1.bf16.msra.mxu0 0
        %4969 = vmatprep.subr.bf16.mxu0 0
        %4970 = vmatpush1.bf16.msra.mxu0 0
        %4971 = vmatprep.subr.bf16.mxu0 0
        %4972 = vmatpush1.bf16.msra.mxu0 0
        %4973 = vmatprep.subr.bf16.mxu0 0
        %4974 = vmatpush1.bf16.msra.mxu0 0
        %4975 = vmatprep.subr.bf16.mxu0 0
        %4976 = vmatpush1.bf16.msra.mxu0 0
        %4977 = vmatprep.subr.bf16.mxu0 0
        %4978 = vmatpush1.bf16.msra.mxu0 0
        %4979 = vmatprep.subr.bf16.mxu0 0
        %4980 = vmatpush1.bf16.msra.mxu0 0
        %4981 = vmatprep.mubr.bf16.mxu0 0
        %4982 = vmatmul.mubr.bf16.gmra.mrb[0].mxu0 %v4818
        %v4983 = vpop.f32.mrb[0].mxu0
        %v4984 = vadd.f32 %v4604, %v4983
        %v4985 = vpop.f32.mrb[0].mxu0
        %v4986 = vadd.f32 %v4608, %v4985
        %v4987 = vpop.f32.mrb[0].mxu0
        %v4988 = vadd.f32 %v4604, %v4987
        %v4989 = vpop.f32.mrb[0].mxu0
        %v4990 = vadd.f32 %v4608, %v4989
        %4991 = vdwg.mxu0
        %4992 = vmatprep.subr.bf16.mxu0 %v4762
        %4993 = vmatpush1.bf16.msra.mxu0 %v4761
        %4994 = vmatprep.subr.bf16.mxu0 %v4778
        %4995 = vmatpush1.bf16.msra.mxu0 %v4777
        %4996 = vmatprep.subr.bf16.mxu0 0
        %4997 = vmatpush1.bf16.msra.mxu0 0
        %4998 = vmatprep.subr.bf16.mxu0 0
        %4999 = vmatpush1.bf16.msra.mxu0 0
        %5000 = vmatprep.subr.bf16.mxu0 0
        %5001 = vmatpush1.bf16.msra.mxu0 0
        %5002 = vmatprep.subr.bf16.mxu0 0
        %5003 = vmatpush1.bf16.msra.mxu0 0
        %5004 = vmatprep.subr.bf16.mxu0 0
        %5005 = vmatpush1.bf16.msra.mxu0 0
        %5006 = vmatprep.subr.bf16.mxu0 0
        %5007 = vmatpush1.bf16.msra.mxu0 0
        %5008 = vmatprep.subr.bf16.mxu0 0
        %5009 = vmatpush1.bf16.msra.mxu0 0
        %5010 = vmatprep.subr.bf16.mxu0 0
        %5011 = vmatpush1.bf16.msra.mxu0 0
        %5012 = vmatprep.subr.bf16.mxu0 0
        %5013 = vmatpush1.bf16.msra.mxu0 0
        %5014 = vmatprep.subr.bf16.mxu0 0
        %5015 = vmatpush1.bf16.msra.mxu0 0
        %5016 = vmatprep.subr.bf16.mxu0 0
        %5017 = vmatpush1.bf16.msra.mxu0 0
        %5018 = vmatprep.subr.bf16.mxu0 0
        %5019 = vmatpush1.bf16.msra.mxu0 0
        %5020 = vmatprep.subr.bf16.mxu0 0
        %5021 = vmatpush1.bf16.msra.mxu0 0
        %5022 = vmatprep.subr.bf16.mxu0 0
        %5023 = vmatpush1.bf16.msra.mxu0 0
        %5024 = vmatprep.mubr.bf16.mxu0 0
        %5025 = vmatmul.mubr.bf16.gmra.mrb[0].mxu0 %v4818
        %v5026 = vpop.f32.mrb[0].mxu0
        %v5027 = vadd.f32 %v4612, %v5026
        %v5028 = vpop.f32.mrb[0].mxu0
        %v5029 = vadd.f32 %v4616, %v5028
        %v5030 = vpop.f32.mrb[0].mxu0
        %v5031 = vadd.f32 %v4612, %v5030
        %v5032 = vpop.f32.mrb[0].mxu0
        %v5033 = vadd.f32 %v4616, %v5032
        %5034 = vdwg.mxu0
        %5035 = vmatprep.subr.bf16.mxu0 %v4764
        %5036 = vmatpush1.bf16.msra.mxu0 %v4763
        %5037 = vmatprep.subr.bf16.mxu0 %v4780
        %5038 = vmatpush1.bf16.msra.mxu0 %v4779
        %5039 = vmatprep.subr.bf16.mxu0 0
        %5040 = vmatpush1.bf16.msra.mxu0 0
        %5041 = vmatprep.subr.bf16.mxu0 0
        %5042 = vmatpush1.bf16.msra.mxu0 0
        %5043 = vmatprep.subr.bf16.mxu0 0
        %5044 = vmatpush1.bf16.msra.mxu0 0
        %5045 = vmatprep.subr.bf16.mxu0 0
        %5046 = vmatpush1.bf16.msra.mxu0 0
        %5047 = vmatprep.subr.bf16.mxu0 0
        %5048 = vmatpush1.bf16.msra.mxu0 0
        %5049 = vmatprep.subr.bf16.mxu0 0
        %5050 = vmatpush1.bf16.msra.mxu0 0
        %5051 = vmatprep.subr.bf16.mxu0 0
        %5052 = vmatpush1.bf16.msra.mxu0 0
        %5053 = vmatprep.subr.bf16.mxu0 0
        %5054 = vmatpush1.bf16.msra.mxu0 0
        %5055 = vmatprep.subr.bf16.mxu0 0
        %5056 = vmatpush1.bf16.msra.mxu0 0
        %5057 = vmatprep.subr.bf16.mxu0 0
        %5058 = vmatpush1.bf16.msra.mxu0 0
        %5059 = vmatprep.subr.bf16.mxu0 0
        %5060 = vmatpush1.bf16.msra.mxu0 0
        %5061 = vmatprep.subr.bf16.mxu0 0
        %5062 = vmatpush1.bf16.msra.mxu0 0
        %5063 = vmatprep.subr.bf16.mxu0 0
        %5064 = vmatpush1.bf16.msra.mxu0 0
        %5065 = vmatprep.subr.bf16.mxu0 0
        %5066 = vmatpush1.bf16.msra.mxu0 0
        %5067 = vmatprep.mubr.bf16.mxu0 0
        %5068 = vmatmul.mubr.bf16.gmra.mrb[0].mxu0 %v4818
        %v5069 = vpop.f32.mrb[0].mxu0
        %v5070 = vadd.f32 %v4620, %v5069
        %v5071 = vpop.f32.mrb[0].mxu0
        %v5072 = vadd.f32 %v4624, %v5071
        %v5073 = vpop.f32.mrb[0].mxu0
        %v5074 = vadd.f32 %v4620, %v5073
        %v5075 = vpop.f32.mrb[0].mxu0
        %v5076 = vadd.f32 %v4624, %v5075
        %5077 = vdwg.mxu0
        %5078 = vmatprep.subr.bf16.mxu0 %v4766
        %5079 = vmatpush1.bf16.msra.mxu0 %v4765
        %5080 = vmatprep.subr.bf16.mxu0 %v4782
        %5081 = vmatpush1.bf16.msra.mxu0 %v4781
        %5082 = vmatprep.subr.bf16.mxu0 0
        %5083 = vmatpush1.bf16.msra.mxu0 0
        %5084 = vmatprep.subr.bf16.mxu0 0
        %5085 = vmatpush1.bf16.msra.mxu0 0
        %5086 = vmatprep.subr.bf16.mxu0 0
        %5087 = vmatpush1.bf16.msra.mxu0 0
        %5088 = vmatprep.subr.bf16.mxu0 0
        %5089 = vmatpush1.bf16.msra.mxu0 0
        %5090 = vmatprep.subr.bf16.mxu0 0
        %5091 = vmatpush1.bf16.msra.mxu0 0
        %5092 = vmatprep.subr.bf16.mxu0 0
        %5093 = vmatpush1.bf16.msra.mxu0 0
        %5094 = vmatprep.subr.bf16.mxu0 0
        %5095 = vmatpush1.bf16.msra.mxu0 0
        %5096 = vmatprep.subr.bf16.mxu0 0
        %5097 = vmatpush1.bf16.msra.mxu0 0
        %5098 = vmatprep.subr.bf16.mxu0 0
        %5099 = vmatpush1.bf16.msra.mxu0 0
        %5100 = vmatprep.subr.bf16.mxu0 0
        %5101 = vmatpush1.bf16.msra.mxu0 0
        %5102 = vmatprep.subr.bf16.mxu0 0
        %5103 = vmatpush1.bf16.msra.mxu0 0
        %5104 = vmatprep.subr.bf16.mxu0 0
        %5105 = vmatpush1.bf16.msra.mxu0 0
        %5106 = vmatprep.subr.bf16.mxu0 0
        %5107 = vmatpush1.bf16.msra.mxu0 0
        %5108 = vmatprep.subr.bf16.mxu0 0
        %5109 = vmatpush1.bf16.msra.mxu0 0
        %5110 = vmatprep.mubr.bf16.mxu0 0
        %5111 = vmatmul.mubr.bf16.gmra.mrb[0].mxu0 %v4818
        %v5112 = vpop.f32.mrb[0].mxu0
        %v5113 = vadd.f32 %v4628, %v5112
        %v5114 = vpop.f32.mrb[0].mxu0
        %v5115 = vadd.f32 %v4632, %v5114
        %v5116 = vpop.f32.mrb[0].mxu0
        %v5117 = vadd.f32 %v4628, %v5116
        %v5118 = vpop.f32.mrb[0].mxu0
        %v5119 = vadd.f32 %v4632, %v5118
        %5120 = vdwg.mxu0
        %5121 = vmatprep.subr.bf16.mxu0 %v4768
        %5122 = vmatpush1.bf16.msra.mxu0 %v4767
        %5123 = vmatprep.subr.bf16.mxu0 %v4784
        %5124 = vmatpush1.bf16.msra.mxu0 %v4783
        %5125 = vmatprep.subr.bf16.mxu0 0
        %5126 = vmatpush1.bf16.msra.mxu0 0
        %5127 = vmatprep.subr.bf16.mxu0 0
        %5128 = vmatpush1.bf16.msra.mxu0 0
        %5129 = vmatprep.subr.bf16.mxu0 0
        %5130 = vmatpush1.bf16.msra.mxu0 0
        %5131 = vmatprep.subr.bf16.mxu0 0
        %5132 = vmatpush1.bf16.msra.mxu0 0
        %5133 = vmatprep.subr.bf16.mxu0 0
        %5134 = vmatpush1.bf16.msra.mxu0 0
        %5135 = vmatprep.subr.bf16.mxu0 0
        %5136 = vmatpush1.bf16.msra.mxu0 0
        %5137 = vmatprep.subr.bf16.mxu0 0
        %5138 = vmatpush1.bf16.msra.mxu0 0
        %5139 = vmatprep.subr.bf16.mxu0 0
        %5140 = vmatpush1.bf16.msra.mxu0 0
        %5141 = vmatprep.subr.bf16.mxu0 0
        %5142 = vmatpush1.bf16.msra.mxu0 0
        %5143 = vmatprep.subr.bf16.mxu0 0
        %5144 = vmatpush1.bf16.msra.mxu0 0
        %5145 = vmatprep.subr.bf16.mxu0 0
        %5146 = vmatpush1.bf16.msra.mxu0 0
        %5147 = vmatprep.subr.bf16.mxu0 0
        %5148 = vmatpush1.bf16.msra.mxu0 0
        %5149 = vmatprep.subr.bf16.mxu0 0
        %5150 = vmatpush1.bf16.msra.mxu0 0
        %5151 = vmatprep.subr.bf16.mxu0 0
        %5152 = vmatpush1.bf16.msra.mxu0 0
        %5153 = vmatprep.mubr.bf16.mxu0 0
        %5154 = vmatmul.mubr.bf16.gmra.mrb[0].mxu0 %v4818
        %v5155 = vpop.f32.mrb[0].mxu0
        %v5156 = vadd.f32 %v4636, %v5155
        %v5157 = vpop.f32.mrb[0].mxu0
        %v5158 = vadd.f32 %v4640, %v5157
        %v5159 = vpop.f32.mrb[0].mxu0
        %v5160 = vadd.f32 %v4636, %v5159
        %v5161 = vpop.f32.mrb[0].mxu0
        %v5162 = vadd.f32 %v4640, %v5161
        %5163 = vdwg.mxu0
        %v5164 = vmax.f32 %v4855, 0.0
        %v5165 = vmax.f32 %v4857, 0.0
        %v5166 = vmax.f32 %v4898, 0.0
        %v5167 = vmax.f32 %v4900, 0.0
        %v5168 = vmax.f32 %v4941, 0.0
        %v5169 = vmax.f32 %v4943, 0.0
        %v5170 = vmax.f32 %v4984, 0.0
        %v5171 = vmax.f32 %v4986, 0.0
        %v5172 = vmax.f32 %v5027, 0.0
        %v5173 = vmax.f32 %v5029, 0.0
        %v5174 = vmax.f32 %v5070, 0.0
        %v5175 = vmax.f32 %v5072, 0.0
        %v5176 = vmax.f32 %v5113, 0.0
        %v5177 = vmax.f32 %v5115, 0.0
        %v5178 = vmax.f32 %v5156, 0.0
        %v5179 = vmax.f32 %v5158, 0.0
        %v5180 = vmax.f32 %v4859, 0.0
        %v5181 = vmax.f32 %v4861, 0.0
        %v5182 = vmax.f32 %v4902, 0.0
        %v5183 = vmax.f32 %v4904, 0.0
        %v5184 = vmax.f32 %v4945, 0.0
        %v5185 = vmax.f32 %v4947, 0.0
        %v5186 = vmax.f32 %v4988, 0.0
        %v5187 = vmax.f32 %v4990, 0.0
        %v5188 = vmax.f32 %v5031, 0.0
        %v5189 = vmax.f32 %v5033, 0.0
        %v5190 = vmax.f32 %v5074, 0.0
        %v5191 = vmax.f32 %v5076, 0.0
        %v5192 = vmax.f32 %v5117, 0.0
        %v5193 = vmax.f32 %v5119, 0.0
        %v5194 = vmax.f32 %v5160, 0.0
        %v5195 = vmax.f32 %v5162, 0.0
        %v5196 = vpack.c.bf16 %v5180, %v5164
        %v5197 = vpack.c.bf16 %v5181, %v5165
        %v5198 = vpack.c.bf16 %v5182, %v5166
        %v5199 = vpack.c.bf16 %v5183, %v5167
        %v5200 = vpack.c.bf16 %v5184, %v5168
        %v5201 = vpack.c.bf16 %v5185, %v5169
        %v5202 = vpack.c.bf16 %v5186, %v5170
        %v5203 = vpack.c.bf16 %v5187, %v5171
        %v5204 = vpack.c.bf16 %v5188, %v5172
        %v5205 = vpack.c.bf16 %v5189, %v5173
        %v5206 = vpack.c.bf16 %v5190, %v5174
        %v5207 = vpack.c.bf16 %v5191, %v5175
        %v5208 = vpack.c.bf16 %v5192, %v5176
        %v5209 = vpack.c.bf16 %v5193, %v5177
        %v5210 = vpack.c.bf16 %v5194, %v5178
        %v5211 = vpack.c.bf16 %v5195, %v5179
        %s5212 = scalar_lea.vmem %s11, 1024
        %v5213 = vld [vmem:[%s5212] sm:$0xf]
        %v5214 = vld [vmem:[%s5212 + $0x4] sm:$0xf]
        %v5215 = vld [vmem:[%s5212 + $0x8] sm:$0xf]
        %v5216 = vld [vmem:[%s5212 + $0xc] sm:$0xf]
        %v5217 = vld [vmem:[%s5212 + $0x10] sm:$0xf]
        %v5218 = vld [vmem:[%s5212 + $0x14] sm:$0xf]
        %v5219 = vld [vmem:[%s5212 + $0x18] sm:$0xf]
        %v5220 = vld [vmem:[%s5212 + $0x1c] sm:$0xf]
        %v5221 = vld [vmem:[%s5212 + $0x20] sm:$0xf]
        %v5222 = vld [vmem:[%s5212 + $0x24] sm:$0xf]
        %v5223 = vld [vmem:[%s5212 + $0x28] sm:$0xf]
        %v5224 = vld [vmem:[%s5212 + $0x2c] sm:$0xf]
        %v5225 = vld [vmem:[%s5212 + $0x30] sm:$0xf]
        %v5226 = vld [vmem:[%s5212 + $0x34] sm:$0xf]
        %v5227 = vld [vmem:[%s5212 + $0x38] sm:$0xf]
        %v5228 = vld [vmem:[%s5212 + $0x3c] sm:$0xf]
        %v5229 = vld [vmem:[%s5212 + $0x40] sm:$0xf]
        %v5230 = vld [vmem:[%s5212 + $0x44] sm:$0xf]
        %v5231 = vld [vmem:[%s5212 + $0x48] sm:$0xf]
        %v5232 = vld [vmem:[%s5212 + $0x4c] sm:$0xf]
        %v5233 = vld [vmem:[%s5212 + $0x50] sm:$0xf]
        %v5234 = vld [vmem:[%s5212 + $0x54] sm:$0xf]
        %v5235 = vld [vmem:[%s5212 + $0x58] sm:$0xf]
        %v5236 = vld [vmem:[%s5212 + $0x5c] sm:$0xf]
        %v5237 = vld [vmem:[%s5212 + $0x60] sm:$0xf]
        %v5238 = vld [vmem:[%s5212 + $0x64] sm:$0xf]
        %v5239 = vld [vmem:[%s5212 + $0x68] sm:$0xf]
        %v5240 = vld [vmem:[%s5212 + $0x6c] sm:$0xf]
        %v5241 = vld [vmem:[%s5212 + $0x70] sm:$0xf]
        %v5242 = vld [vmem:[%s5212 + $0x74] sm:$0xf]
        %v5243 = vld [vmem:[%s5212 + $0x78] sm:$0xf]
        %v5244 = vld [vmem:[%s5212 + $0x7c] sm:$0xf]
        %v5245 = vld [vmem:[%s5212 + $0x80] sm:$0xf]
        %v5246 = vld [vmem:[%s5212 + $0x84] sm:$0xf]
        %v5247 = vld [vmem:[%s5212 + $0x88] sm:$0xf]
        %v5248 = vld [vmem:[%s5212 + $0x8c] sm:$0xf]
        %v5249 = vld [vmem:[%s5212 + $0x90] sm:$0xf]
        %v5250 = vld [vmem:[%s5212 + $0x94] sm:$0xf]
        %v5251 = vld [vmem:[%s5212 + $0x98] sm:$0xf]
        %v5252 = vld [vmem:[%s5212 + $0x9c] sm:$0xf]
        %v5253 = vld [vmem:[%s5212 + $0xa0] sm:$0xf]
        %v5254 = vld [vmem:[%s5212 + $0xa4] sm:$0xf]
        %v5255 = vld [vmem:[%s5212 + $0xa8] sm:$0xf]
        %v5256 = vld [vmem:[%s5212 + $0xac] sm:$0xf]
        %v5257 = vld [vmem:[%s5212 + $0xb0] sm:$0xf]
        %v5258 = vld [vmem:[%s5212 + $0xb4] sm:$0xf]
        %v5259 = vld [vmem:[%s5212 + $0xb8] sm:$0xf]
        %v5260 = vld [vmem:[%s5212 + $0xbc] sm:$0xf]
        %v5261 = vld [vmem:[%s5212 + $0xc0] sm:$0xf]
        %v5262 = vld [vmem:[%s5212 + $0xc4] sm:$0xf]
        %v5263 = vld [vmem:[%s5212 + $0xc8] sm:$0xf]
        %v5264 = vld [vmem:[%s5212 + $0xcc] sm:$0xf]
        %v5265 = vld [vmem:[%s5212 + $0xd0] sm:$0xf]
        %v5266 = vld [vmem:[%s5212 + $0xd4] sm:$0xf]
        %v5267 = vld [vmem:[%s5212 + $0xd8] sm:$0xf]
        %v5268 = vld [vmem:[%s5212 + $0xdc] sm:$0xf]
        %v5269 = vld [vmem:[%s5212 + $0xe0] sm:$0xf]
        %v5270 = vld [vmem:[%s5212 + $0xe4] sm:$0xf]
        %v5271 = vld [vmem:[%s5212 + $0xe8] sm:$0xf]
        %v5272 = vld [vmem:[%s5212 + $0xec] sm:$0xf]
        %v5273 = vld [vmem:[%s5212 + $0xf0] sm:$0xf]
        %v5274 = vld [vmem:[%s5212 + $0xf4] sm:$0xf]
        %v5275 = vld [vmem:[%s5212 + $0xf8] sm:$0xf]
        %v5276 = vld [vmem:[%s5212 + $0xfc] sm:$0xf]
        %v5277 = vld [vmem:[%s5212 + $0x100] sm:$0xf]
        %v5278 = vld [vmem:[%s5212 + $0x104] sm:$0xf]
        %v5279 = vld [vmem:[%s5212 + $0x108] sm:$0xf]
        %v5280 = vld [vmem:[%s5212 + $0x10c] sm:$0xf]
        %v5281 = vld [vmem:[%s5212 + $0x110] sm:$0xf]
        %v5282 = vld [vmem:[%s5212 + $0x114] sm:$0xf]
        %v5283 = vld [vmem:[%s5212 + $0x118] sm:$0xf]
        %v5284 = vld [vmem:[%s5212 + $0x11c] sm:$0xf]
        %v5285 = vld [vmem:[%s5212 + $0x120] sm:$0xf]
        %v5286 = vld [vmem:[%s5212 + $0x124] sm:$0xf]
        %v5287 = vld [vmem:[%s5212 + $0x128] sm:$0xf]
        %v5288 = vld [vmem:[%s5212 + $0x12c] sm:$0xf]
        %v5289 = vld [vmem:[%s5212 + $0x130] sm:$0xf]
        %v5290 = vld [vmem:[%s5212 + $0x134] sm:$0xf]
        %v5291 = vld [vmem:[%s5212 + $0x138] sm:$0xf]
        %v5292 = vld [vmem:[%s5212 + $0x13c] sm:$0xf]
        %v5293 = vld [vmem:[%s5212 + $0x140] sm:$0xf]
        %v5294 = vld [vmem:[%s5212 + $0x144] sm:$0xf]
        %v5295 = vld [vmem:[%s5212 + $0x148] sm:$0xf]
        %v5296 = vld [vmem:[%s5212 + $0x14c] sm:$0xf]
        %v5297 = vld [vmem:[%s5212 + $0x150] sm:$0xf]
        %v5298 = vld [vmem:[%s5212 + $0x154] sm:$0xf]
        %v5299 = vld [vmem:[%s5212 + $0x158] sm:$0xf]
        %v5300 = vld [vmem:[%s5212 + $0x15c] sm:$0xf]
        %v5301 = vld [vmem:[%s5212 + $0x160] sm:$0xf]
        %v5302 = vld [vmem:[%s5212 + $0x164] sm:$0xf]
        %v5303 = vld [vmem:[%s5212 + $0x168] sm:$0xf]
        %v5304 = vld [vmem:[%s5212 + $0x16c] sm:$0xf]
        %v5305 = vld [vmem:[%s5212 + $0x170] sm:$0xf]
        %v5306 = vld [vmem:[%s5212 + $0x174] sm:$0xf]
        %v5307 = vld [vmem:[%s5212 + $0x178] sm:$0xf]
        %v5308 = vld [vmem:[%s5212 + $0x17c] sm:$0xf]
        %v5309 = vld [vmem:[%s5212 + $0x180] sm:$0xf]
        %v5310 = vld [vmem:[%s5212 + $0x184] sm:$0xf]
        %v5311 = vld [vmem:[%s5212 + $0x188] sm:$0xf]
        %v5312 = vld [vmem:[%s5212 + $0x18c] sm:$0xf]
        %v5313 = vld [vmem:[%s5212 + $0x190] sm:$0xf]
        %v5314 = vld [vmem:[%s5212 + $0x194] sm:$0xf]
        %v5315 = vld [vmem:[%s5212 + $0x198] sm:$0xf]
        %v5316 = vld [vmem:[%s5212 + $0x19c] sm:$0xf]
        %v5317 = vld [vmem:[%s5212 + $0x1a0] sm:$0xf]
        %v5318 = vld [vmem:[%s5212 + $0x1a4] sm:$0xf]
        %v5319 = vld [vmem:[%s5212 + $0x1a8] sm:$0xf]
        %v5320 = vld [vmem:[%s5212 + $0x1ac] sm:$0xf]
        %v5321 = vld [vmem:[%s5212 + $0x1b0] sm:$0xf]
        %v5322 = vld [vmem:[%s5212 + $0x1b4] sm:$0xf]
        %v5323 = vld [vmem:[%s5212 + $0x1b8] sm:$0xf]
        %v5324 = vld [vmem:[%s5212 + $0x1bc] sm:$0xf]
        %v5325 = vld [vmem:[%s5212 + $0x1c0] sm:$0xf]
        %v5326 = vld [vmem:[%s5212 + $0x1c4] sm:$0xf]
        %v5327 = vld [vmem:[%s5212 + $0x1c8] sm:$0xf]
        %v5328 = vld [vmem:[%s5212 + $0x1cc] sm:$0xf]
        %v5329 = vld [vmem:[%s5212 + $0x1d0] sm:$0xf]
        %v5330 = vld [vmem:[%s5212 + $0x1d4] sm:$0xf]
        %v5331 = vld [vmem:[%s5212 + $0x1d8] sm:$0xf]
        %v5332 = vld [vmem:[%s5212 + $0x1dc] sm:$0xf]
        %v5333 = vld [vmem:[%s5212 + $0x1e0] sm:$0xf]
        %v5334 = vld [vmem:[%s5212 + $0x1e4] sm:$0xf]
        %v5335 = vld [vmem:[%s5212 + $0x1e8] sm:$0xf]
        %v5336 = vld [vmem:[%s5212 + $0x1ec] sm:$0xf]
        %v5337 = vld [vmem:[%s5212 + $0x1f0] sm:$0xf]
        %v5338 = vld [vmem:[%s5212 + $0x1f4] sm:$0xf]
        %v5339 = vld [vmem:[%s5212 + $0x1f8] sm:$0xf]
        %v5340 = vld [vmem:[%s5212 + $0x1fc] sm:$0xf]
        %v5341 = vld [vmem:[%s5212 + $0x200] sm:$0xf]
        %v5342 = vld [vmem:[%s5212 + $0x204] sm:$0xf]
        %v5343 = vld [vmem:[%s5212 + $0x208] sm:$0xf]
        %v5344 = vld [vmem:[%s5212 + $0x20c] sm:$0xf]
        %v5345 = vld [vmem:[%s5212 + $0x210] sm:$0xf]
        %v5346 = vld [vmem:[%s5212 + $0x214] sm:$0xf]
        %v5347 = vld [vmem:[%s5212 + $0x218] sm:$0xf]
        %v5348 = vld [vmem:[%s5212 + $0x21c] sm:$0xf]
        %v5349 = vld [vmem:[%s5212 + $0x220] sm:$0xf]
        %v5350 = vld [vmem:[%s5212 + $0x224] sm:$0xf]
        %v5351 = vld [vmem:[%s5212 + $0x228] sm:$0xf]
        %v5352 = vld [vmem:[%s5212 + $0x22c] sm:$0xf]
        %v5353 = vld [vmem:[%s5212 + $0x230] sm:$0xf]
        %v5354 = vld [vmem:[%s5212 + $0x234] sm:$0xf]
        %v5355 = vld [vmem:[%s5212 + $0x238] sm:$0xf]
        %v5356 = vld [vmem:[%s5212 + $0x23c] sm:$0xf]
        %v5357 = vld [vmem:[%s5212 + $0x240] sm:$0xf]
        %v5358 = vld [vmem:[%s5212 + $0x244] sm:$0xf]
        %v5359 = vld [vmem:[%s5212 + $0x248] sm:$0xf]
        %v5360 = vld [vmem:[%s5212 + $0x24c] sm:$0xf]
        %v5361 = vld [vmem:[%s5212 + $0x250] sm:$0xf]
        %v5362 = vld [vmem:[%s5212 + $0x254] sm:$0xf]
        %v5363 = vld [vmem:[%s5212 + $0x258] sm:$0xf]
        %v5364 = vld [vmem:[%s5212 + $0x25c] sm:$0xf]
        %v5365 = vld [vmem:[%s5212 + $0x260] sm:$0xf]
        %v5366 = vld [vmem:[%s5212 + $0x264] sm:$0xf]
        %v5367 = vld [vmem:[%s5212 + $0x268] sm:$0xf]
        %v5368 = vld [vmem:[%s5212 + $0x26c] sm:$0xf]
        %v5369 = vld [vmem:[%s5212 + $0x270] sm:$0xf]
        %v5370 = vld [vmem:[%s5212 + $0x274] sm:$0xf]
        %v5371 = vld [vmem:[%s5212 + $0x278] sm:$0xf]
        %v5372 = vld [vmem:[%s5212 + $0x27c] sm:$0xf]
        %v5373 = vld [vmem:[%s5212 + $0x280] sm:$0xf]
        %v5374 = vld [vmem:[%s5212 + $0x284] sm:$0xf]
        %v5375 = vld [vmem:[%s5212 + $0x288] sm:$0xf]
        %v5376 = vld [vmem:[%s5212 + $0x28c] sm:$0xf]
        %v5377 = vld [vmem:[%s5212 + $0x290] sm:$0xf]
        %v5378 = vld [vmem:[%s5212 + $0x294] sm:$0xf]
        %v5379 = vld [vmem:[%s5212 + $0x298] sm:$0xf]
        %v5380 = vld [vmem:[%s5212 + $0x29c] sm:$0xf]
        %v5381 = vld [vmem:[%s5212 + $0x2a0] sm:$0xf]
        %v5382 = vld [vmem:[%s5212 + $0x2a4] sm:$0xf]
        %v5383 = vld [vmem:[%s5212 + $0x2a8] sm:$0xf]
        %v5384 = vld [vmem:[%s5212 + $0x2ac] sm:$0xf]
        %v5385 = vld [vmem:[%s5212 + $0x2b0] sm:$0xf]
        %v5386 = vld [vmem:[%s5212 + $0x2b4] sm:$0xf]
        %v5387 = vld [vmem:[%s5212 + $0x2b8] sm:$0xf]
        %v5388 = vld [vmem:[%s5212 + $0x2bc] sm:$0xf]
        %v5389 = vld [vmem:[%s5212 + $0x2c0] sm:$0xf]
        %v5390 = vld [vmem:[%s5212 + $0x2c4] sm:$0xf]
        %v5391 = vld [vmem:[%s5212 + $0x2c8] sm:$0xf]
        %v5392 = vld [vmem:[%s5212 + $0x2cc] sm:$0xf]
        %v5393 = vld [vmem:[%s5212 + $0x2d0] sm:$0xf]
        %v5394 = vld [vmem:[%s5212 + $0x2d4] sm:$0xf]
        %v5395 = vld [vmem:[%s5212 + $0x2d8] sm:$0xf]
        %v5396 = vld [vmem:[%s5212 + $0x2dc] sm:$0xf]
        %v5397 = vld [vmem:[%s5212 + $0x2e0] sm:$0xf]
        %v5398 = vld [vmem:[%s5212 + $0x2e4] sm:$0xf]
        %v5399 = vld [vmem:[%s5212 + $0x2e8] sm:$0xf]
        %v5400 = vld [vmem:[%s5212 + $0x2ec] sm:$0xf]
        %v5401 = vld [vmem:[%s5212 + $0x2f0] sm:$0xf]
        %v5402 = vld [vmem:[%s5212 + $0x2f4] sm:$0xf]
        %v5403 = vld [vmem:[%s5212 + $0x2f8] sm:$0xf]
        %v5404 = vld [vmem:[%s5212 + $0x2fc] sm:$0xf]
        %v5405 = vld [vmem:[%s5212 + $0x300] sm:$0xf]
        %v5406 = vld [vmem:[%s5212 + $0x304] sm:$0xf]
        %v5407 = vld [vmem:[%s5212 + $0x308] sm:$0xf]
        %v5408 = vld [vmem:[%s5212 + $0x30c] sm:$0xf]
        %v5409 = vld [vmem:[%s5212 + $0x310] sm:$0xf]
        %v5410 = vld [vmem:[%s5212 + $0x314] sm:$0xf]
        %v5411 = vld [vmem:[%s5212 + $0x318] sm:$0xf]
        %v5412 = vld [vmem:[%s5212 + $0x31c] sm:$0xf]
        %v5413 = vld [vmem:[%s5212 + $0x320] sm:$0xf]
        %v5414 = vld [vmem:[%s5212 + $0x324] sm:$0xf]
        %v5415 = vld [vmem:[%s5212 + $0x328] sm:$0xf]
        %v5416 = vld [vmem:[%s5212 + $0x32c] sm:$0xf]
        %v5417 = vld [vmem:[%s5212 + $0x330] sm:$0xf]
        %v5418 = vld [vmem:[%s5212 + $0x334] sm:$0xf]
        %v5419 = vld [vmem:[%s5212 + $0x338] sm:$0xf]
        %v5420 = vld [vmem:[%s5212 + $0x33c] sm:$0xf]
        %v5421 = vld [vmem:[%s5212 + $0x340] sm:$0xf]
        %v5422 = vld [vmem:[%s5212 + $0x344] sm:$0xf]
        %v5423 = vld [vmem:[%s5212 + $0x348] sm:$0xf]
        %v5424 = vld [vmem:[%s5212 + $0x34c] sm:$0xf]
        %v5425 = vld [vmem:[%s5212 + $0x350] sm:$0xf]
        %v5426 = vld [vmem:[%s5212 + $0x354] sm:$0xf]
        %v5427 = vld [vmem:[%s5212 + $0x358] sm:$0xf]
        %v5428 = vld [vmem:[%s5212 + $0x35c] sm:$0xf]
        %v5429 = vld [vmem:[%s5212 + $0x360] sm:$0xf]
        %v5430 = vld [vmem:[%s5212 + $0x364] sm:$0xf]
        %v5431 = vld [vmem:[%s5212 + $0x368] sm:$0xf]
        %v5432 = vld [vmem:[%s5212 + $0x36c] sm:$0xf]
        %v5433 = vld [vmem:[%s5212 + $0x370] sm:$0xf]
        %v5434 = vld [vmem:[%s5212 + $0x374] sm:$0xf]
        %v5435 = vld [vmem:[%s5212 + $0x378] sm:$0xf]
        %v5436 = vld [vmem:[%s5212 + $0x37c] sm:$0xf]
        %v5437 = vld [vmem:[%s5212 + $0x380] sm:$0xf]
        %v5438 = vld [vmem:[%s5212 + $0x384] sm:$0xf]
        %v5439 = vld [vmem:[%s5212 + $0x388] sm:$0xf]
        %v5440 = vld [vmem:[%s5212 + $0x38c] sm:$0xf]
        %v5441 = vld [vmem:[%s5212 + $0x390] sm:$0xf]
        %v5442 = vld [vmem:[%s5212 + $0x394] sm:$0xf]
        %v5443 = vld [vmem:[%s5212 + $0x398] sm:$0xf]
        %v5444 = vld [vmem:[%s5212 + $0x39c] sm:$0xf]
        %v5445 = vld [vmem:[%s5212 + $0x3a0] sm:$0xf]
        %v5446 = vld [vmem:[%s5212 + $0x3a4] sm:$0xf]
        %v5447 = vld [vmem:[%s5212 + $0x3a8] sm:$0xf]
        %v5448 = vld [vmem:[%s5212 + $0x3ac] sm:$0xf]
        %v5449 = vld [vmem:[%s5212 + $0x3b0] sm:$0xf]
        %v5450 = vld [vmem:[%s5212 + $0x3b4] sm:$0xf]
        %v5451 = vld [vmem:[%s5212 + $0x3b8] sm:$0xf]
        %v5452 = vld [vmem:[%s5212 + $0x3bc] sm:$0xf]
        %v5453 = vld [vmem:[%s5212 + $0x3c0] sm:$0xf]
        %v5454 = vld [vmem:[%s5212 + $0x3c4] sm:$0xf]
        %v5455 = vld [vmem:[%s5212 + $0x3c8] sm:$0xf]
        %v5456 = vld [vmem:[%s5212 + $0x3cc] sm:$0xf]
        %v5457 = vld [vmem:[%s5212 + $0x3d0] sm:$0xf]
        %v5458 = vld [vmem:[%s5212 + $0x3d4] sm:$0xf]
        %v5459 = vld [vmem:[%s5212 + $0x3d8] sm:$0xf]
        %v5460 = vld [vmem:[%s5212 + $0x3dc] sm:$0xf]
        %v5461 = vld [vmem:[%s5212 + $0x3e0] sm:$0xf]
        %v5462 = vld [vmem:[%s5212 + $0x3e4] sm:$0xf]
        %v5463 = vld [vmem:[%s5212 + $0x3e8] sm:$0xf]
        %v5464 = vld [vmem:[%s5212 + $0x3ec] sm:$0xf]
        %v5465 = vld [vmem:[%s5212 + $0x3f0] sm:$0xf]
        %v5466 = vld [vmem:[%s5212 + $0x3f4] sm:$0xf]
        %v5467 = vld [vmem:[%s5212 + $0x3f8] sm:$0xf]
        %v5468 = vld [vmem:[%s5212 + $0x3fc] sm:$0xf]
        %s5469 = scalar_lea.vmem %s12, 1
        %v5470 = vld [vmem:[%s5469] sm:$0x1]
        %v5472 = vlaneseq
        %v5473 = vshrl.u32 %v5472, 7
        %v5474 = vsub.s32 0, %v5473
        %v5475 = vrot.slane %v5470, %v5474
        %v5733 = vunpack.c.l.b16 %v5213
        %v5734 = vunpack.c.l.b16 %v5214
        %v5735 = vunpack.c.l.b16 %v5215
        %v5736 = vunpack.c.l.b16 %v5216
        %v5737 = vunpack.c.l.b16 %v5217
        %v5738 = vunpack.c.l.b16 %v5218
        %v5739 = vunpack.c.l.b16 %v5219
        %v5740 = vunpack.c.l.b16 %v5220
        %v5741 = vunpack.c.l.b16 %v5221
        %v5742 = vunpack.c.l.b16 %v5222
        %v5743 = vunpack.c.l.b16 %v5223
        %v5744 = vunpack.c.l.b16 %v5224
        %v5745 = vunpack.c.l.b16 %v5225
        %v5746 = vunpack.c.l.b16 %v5226
        %v5747 = vunpack.c.l.b16 %v5227
        %v5748 = vunpack.c.l.b16 %v5228
        %v5749 = vunpack.c.l.b16 %v5229
        %v5750 = vunpack.c.l.b16 %v5230
        %v5751 = vunpack.c.l.b16 %v5231
        %v5752 = vunpack.c.l.b16 %v5232
        %v5753 = vunpack.c.l.b16 %v5233
        %v5754 = vunpack.c.l.b16 %v5234
        %v5755 = vunpack.c.l.b16 %v5235
        %v5756 = vunpack.c.l.b16 %v5236
        %v5757 = vunpack.c.l.b16 %v5237
        %v5758 = vunpack.c.l.b16 %v5238
        %v5759 = vunpack.c.l.b16 %v5239
        %v5760 = vunpack.c.l.b16 %v5240
        %v5761 = vunpack.c.l.b16 %v5241
        %v5762 = vunpack.c.l.b16 %v5242
        %v5763 = vunpack.c.l.b16 %v5243
        %v5764 = vunpack.c.l.b16 %v5244
        %v5765 = vunpack.c.l.b16 %v5245
        %v5766 = vunpack.c.l.b16 %v5246
        %v5767 = vunpack.c.l.b16 %v5247
        %v5768 = vunpack.c.l.b16 %v5248
        %v5769 = vunpack.c.l.b16 %v5249
        %v5770 = vunpack.c.l.b16 %v5250
        %v5771 = vunpack.c.l.b16 %v5251
        %v5772 = vunpack.c.l.b16 %v5252
        %v5773 = vunpack.c.l.b16 %v5253
        %v5774 = vunpack.c.l.b16 %v5254
        %v5775 = vunpack.c.l.b16 %v5255
        %v5776 = vunpack.c.l.b16 %v5256
        %v5777 = vunpack.c.l.b16 %v5257
        %v5778 = vunpack.c.l.b16 %v5258
        %v5779 = vunpack.c.l.b16 %v5259
        %v5780 = vunpack.c.l.b16 %v5260
        %v5781 = vunpack.c.l.b16 %v5261
        %v5782 = vunpack.c.l.b16 %v5262
        %v5783 = vunpack.c.l.b16 %v5263
        %v5784 = vunpack.c.l.b16 %v5264
        %v5785 = vunpack.c.l.b16 %v5265
        %v5786 = vunpack.c.l.b16 %v5266
        %v5787 = vunpack.c.l.b16 %v5267
        %v5788 = vunpack.c.l.b16 %v5268
        %v5789 = vunpack.c.l.b16 %v5269
        %v5790 = vunpack.c.l.b16 %v5270
        %v5791 = vunpack.c.l.b16 %v5271
        %v5792 = vunpack.c.l.b16 %v5272
        %v5793 = vunpack.c.l.b16 %v5273
        %v5794 = vunpack.c.l.b16 %v5274
        %v5795 = vunpack.c.l.b16 %v5275
        %v5796 = vunpack.c.l.b16 %v5276
        %v5797 = vunpack.c.l.b16 %v5277
        %v5798 = vunpack.c.l.b16 %v5278
        %v5799 = vunpack.c.l.b16 %v5279
        %v5800 = vunpack.c.l.b16 %v5280
        %v5801 = vunpack.c.l.b16 %v5281
        %v5802 = vunpack.c.l.b16 %v5282
        %v5803 = vunpack.c.l.b16 %v5283
        %v5804 = vunpack.c.l.b16 %v5284
        %v5805 = vunpack.c.l.b16 %v5285
        %v5806 = vunpack.c.l.b16 %v5286
        %v5807 = vunpack.c.l.b16 %v5287
        %v5808 = vunpack.c.l.b16 %v5288
        %v5809 = vunpack.c.l.b16 %v5289
        %v5810 = vunpack.c.l.b16 %v5290
        %v5811 = vunpack.c.l.b16 %v5291
        %v5812 = vunpack.c.l.b16 %v5292
        %v5813 = vunpack.c.l.b16 %v5293
        %v5814 = vunpack.c.l.b16 %v5294
        %v5815 = vunpack.c.l.b16 %v5295
        %v5816 = vunpack.c.l.b16 %v5296
        %v5817 = vunpack.c.l.b16 %v5297
        %v5818 = vunpack.c.l.b16 %v5298
        %v5819 = vunpack.c.l.b16 %v5299
        %v5820 = vunpack.c.l.b16 %v5300
        %v5821 = vunpack.c.l.b16 %v5301
        %v5822 = vunpack.c.l.b16 %v5302
        %v5823 = vunpack.c.l.b16 %v5303
        %v5824 = vunpack.c.l.b16 %v5304
        %v5825 = vunpack.c.l.b16 %v5305
        %v5826 = vunpack.c.l.b16 %v5306
        %v5827 = vunpack.c.l.b16 %v5307
        %v5828 = vunpack.c.l.b16 %v5308
        %v5829 = vunpack.c.l.b16 %v5309
        %v5830 = vunpack.c.l.b16 %v5310
        %v5831 = vunpack.c.l.b16 %v5311
        %v5832 = vunpack.c.l.b16 %v5312
        %v5833 = vunpack.c.l.b16 %v5313
        %v5834 = vunpack.c.l.b16 %v5314
        %v5835 = vunpack.c.l.b16 %v5315
        %v5836 = vunpack.c.l.b16 %v5316
        %v5837 = vunpack.c.l.b16 %v5317
        %v5838 = vunpack.c.l.b16 %v5318
        %v5839 = vunpack.c.l.b16 %v5319
        %v5840 = vunpack.c.l.b16 %v5320
        %v5841 = vunpack.c.l.b16 %v5321
        %v5842 = vunpack.c.l.b16 %v5322
        %v5843 = vunpack.c.l.b16 %v5323
        %v5844 = vunpack.c.l.b16 %v5324
        %v5845 = vunpack.c.l.b16 %v5325
        %v5846 = vunpack.c.l.b16 %v5326
        %v5847 = vunpack.c.l.b16 %v5327
        %v5848 = vunpack.c.l.b16 %v5328
        %v5849 = vunpack.c.l.b16 %v5329
        %v5850 = vunpack.c.l.b16 %v5330
        %v5851 = vunpack.c.l.b16 %v5331
        %v5852 = vunpack.c.l.b16 %v5332
        %v5853 = vunpack.c.l.b16 %v5333
        %v5854 = vunpack.c.l.b16 %v5334
        %v5855 = vunpack.c.l.b16 %v5335
        %v5856 = vunpack.c.l.b16 %v5336
        %v5857 = vunpack.c.l.b16 %v5337
        %v5858 = vunpack.c.l.b16 %v5338
        %v5859 = vunpack.c.l.b16 %v5339
        %v5860 = vunpack.c.l.b16 %v5340
        %v5861 = vunpack.c.l.b16 %v5341
        %v5862 = vunpack.c.l.b16 %v5342
        %v5863 = vunpack.c.l.b16 %v5343
        %v5864 = vunpack.c.l.b16 %v5344
        %v5865 = vunpack.c.l.b16 %v5345
        %v5866 = vunpack.c.l.b16 %v5346
        %v5867 = vunpack.c.l.b16 %v5347
        %v5868 = vunpack.c.l.b16 %v5348
        %v5869 = vunpack.c.l.b16 %v5349
        %v5870 = vunpack.c.l.b16 %v5350
        %v5871 = vunpack.c.l.b16 %v5351
        %v5872 = vunpack.c.l.b16 %v5352
        %v5873 = vunpack.c.l.b16 %v5353
        %v5874 = vunpack.c.l.b16 %v5354
        %v5875 = vunpack.c.l.b16 %v5355
        %v5876 = vunpack.c.l.b16 %v5356
        %v5877 = vunpack.c.l.b16 %v5357
        %v5878 = vunpack.c.l.b16 %v5358
        %v5879 = vunpack.c.l.b16 %v5359
        %v5880 = vunpack.c.l.b16 %v5360
        %v5881 = vunpack.c.l.b16 %v5361
        %v5882 = vunpack.c.l.b16 %v5362
        %v5883 = vunpack.c.l.b16 %v5363
        %v5884 = vunpack.c.l.b16 %v5364
        %v5885 = vunpack.c.l.b16 %v5365
        %v5886 = vunpack.c.l.b16 %v5366
        %v5887 = vunpack.c.l.b16 %v5367
        %v5888 = vunpack.c.l.b16 %v5368
        %v5889 = vunpack.c.l.b16 %v5369
        %v5890 = vunpack.c.l.b16 %v5370
        %v5891 = vunpack.c.l.b16 %v5371
        %v5892 = vunpack.c.l.b16 %v5372
        %v5893 = vunpack.c.l.b16 %v5373
        %v5894 = vunpack.c.l.b16 %v5374
        %v5895 = vunpack.c.l.b16 %v5375
        %v5896 = vunpack.c.l.b16 %v5376
        %v5897 = vunpack.c.l.b16 %v5377
        %v5898 = vunpack.c.l.b16 %v5378
        %v5899 = vunpack.c.l.b16 %v5379
        %v5900 = vunpack.c.l.b16 %v5380
        %v5901 = vunpack.c.l.b16 %v5381
        %v5902 = vunpack.c.l.b16 %v5382
        %v5903 = vunpack.c.l.b16 %v5383
        %v5904 = vunpack.c.l.b16 %v5384
        %v5905 = vunpack.c.l.b16 %v5385
        %v5906 = vunpack.c.l.b16 %v5386
        %v5907 = vunpack.c.l.b16 %v5387
        %v5908 = vunpack.c.l.b16 %v5388
        %v5909 = vunpack.c.l.b16 %v5389
        %v5910 = vunpack.c.l.b16 %v5390
        %v5911 = vunpack.c.l.b16 %v5391
        %v5912 = vunpack.c.l.b16 %v5392
        %v5913 = vunpack.c.l.b16 %v5393
        %v5914 = vunpack.c.l.b16 %v5394
        %v5915 = vunpack.c.l.b16 %v5395
        %v5916 = vunpack.c.l.b16 %v5396
        %v5917 = vunpack.c.l.b16 %v5397
        %v5918 = vunpack.c.l.b16 %v5398
        %v5919 = vunpack.c.l.b16 %v5399
        %v5920 = vunpack.c.l.b16 %v5400
        %v5921 = vunpack.c.l.b16 %v5401
        %v5922 = vunpack.c.l.b16 %v5402
        %v5923 = vunpack.c.l.b16 %v5403
        %v5924 = vunpack.c.l.b16 %v5404
        %v5925 = vunpack.c.l.b16 %v5405
        %v5926 = vunpack.c.l.b16 %v5406
        %v5927 = vunpack.c.l.b16 %v5407
        %v5928 = vunpack.c.l.b16 %v5408
        %v5929 = vunpack.c.l.b16 %v5409
        %v5930 = vunpack.c.l.b16 %v5410
        %v5931 = vunpack.c.l.b16 %v5411
        %v5932 = vunpack.c.l.b16 %v5412
        %v5933 = vunpack.c.l.b16 %v5413
        %v5934 = vunpack.c.l.b16 %v5414
        %v5935 = vunpack.c.l.b16 %v5415
        %v5936 = vunpack.c.l.b16 %v5416
        %v5937 = vunpack.c.l.b16 %v5417
        %v5938 = vunpack.c.l.b16 %v5418
        %v5939 = vunpack.c.l.b16 %v5419
        %v5940 = vunpack.c.l.b16 %v5420
        %v5941 = vunpack.c.l.b16 %v5421
        %v5942 = vunpack.c.l.b16 %v5422
        %v5943 = vunpack.c.l.b16 %v5423
        %v5944 = vunpack.c.l.b16 %v5424
        %v5945 = vunpack.c.l.b16 %v5425
        %v5946 = vunpack.c.l.b16 %v5426
        %v5947 = vunpack.c.l.b16 %v5427
        %v5948 = vunpack.c.l.b16 %v5428
        %v5949 = vunpack.c.l.b16 %v5429
        %v5950 = vunpack.c.l.b16 %v5430
        %v5951 = vunpack.c.l.b16 %v5431
        %v5952 = vunpack.c.l.b16 %v5432
        %v5953 = vunpack.c.l.b16 %v5433
        %v5954 = vunpack.c.l.b16 %v5434
        %v5955 = vunpack.c.l.b16 %v5435
        %v5956 = vunpack.c.l.b16 %v5436
        %v5957 = vunpack.c.l.b16 %v5437
        %v5958 = vunpack.c.l.b16 %v5438
        %v5959 = vunpack.c.l.b16 %v5439
        %v5960 = vunpack.c.l.b16 %v5440
        %v5961 = vunpack.c.l.b16 %v5441
        %v5962 = vunpack.c.l.b16 %v5442
        %v5963 = vunpack.c.l.b16 %v5443
        %v5964 = vunpack.c.l.b16 %v5444
        %v5965 = vunpack.c.l.b16 %v5445
        %v5966 = vunpack.c.l.b16 %v5446
        %v5967 = vunpack.c.l.b16 %v5447
        %v5968 = vunpack.c.l.b16 %v5448
        %v5969 = vunpack.c.l.b16 %v5449
        %v5970 = vunpack.c.l.b16 %v5450
        %v5971 = vunpack.c.l.b16 %v5451
        %v5972 = vunpack.c.l.b16 %v5452
        %v5973 = vunpack.c.l.b16 %v5453
        %v5974 = vunpack.c.l.b16 %v5454
        %v5975 = vunpack.c.l.b16 %v5455
        %v5976 = vunpack.c.l.b16 %v5456
        %v5977 = vunpack.c.l.b16 %v5457
        %v5978 = vunpack.c.l.b16 %v5458
        %v5979 = vunpack.c.l.b16 %v5459
        %v5980 = vunpack.c.l.b16 %v5460
        %v5981 = vunpack.c.l.b16 %v5461
        %v5982 = vunpack.c.l.b16 %v5462
        %v5983 = vunpack.c.l.b16 %v5463
        %v5984 = vunpack.c.l.b16 %v5464
        %v5985 = vunpack.c.l.b16 %v5465
        %v5986 = vunpack.c.l.b16 %v5466
        %v5987 = vunpack.c.l.b16 %v5467
        %v5988 = vunpack.c.l.b16 %v5468
        %v5989 = vpack.c.b16 %v5734, %v5733
        %v5990 = vpack.c.b16 %v5736, %v5735
        %v5991 = vpack.c.b16 %v5738, %v5737
        %v5992 = vpack.c.b16 %v5740, %v5739
        %v5993 = vpack.c.b16 %v5742, %v5741
        %v5994 = vpack.c.b16 %v5744, %v5743
        %v5995 = vpack.c.b16 %v5746, %v5745
        %v5996 = vpack.c.b16 %v5748, %v5747
        %v5997 = vpack.c.b16 %v5750, %v5749
        %v5998 = vpack.c.b16 %v5752, %v5751
        %v5999 = vpack.c.b16 %v5754, %v5753
        %v6000 = vpack.c.b16 %v5756, %v5755
        %v6001 = vpack.c.b16 %v5758, %v5757
        %v6002 = vpack.c.b16 %v5760, %v5759
        %v6003 = vpack.c.b16 %v5762, %v5761
        %v6004 = vpack.c.b16 %v5764, %v5763
        %v6005 = vpack.c.b16 %v5766, %v5765
        %v6006 = vpack.c.b16 %v5768, %v5767
        %v6007 = vpack.c.b16 %v5770, %v5769
        %v6008 = vpack.c.b16 %v5772, %v5771
        %v6009 = vpack.c.b16 %v5774, %v5773
        %v6010 = vpack.c.b16 %v5776, %v5775
        %v6011 = vpack.c.b16 %v5778, %v5777
        %v6012 = vpack.c.b16 %v5780, %v5779
        %v6013 = vpack.c.b16 %v5782, %v5781
        %v6014 = vpack.c.b16 %v5784, %v5783
        %v6015 = vpack.c.b16 %v5786, %v5785
        %v6016 = vpack.c.b16 %v5788, %v5787
        %v6017 = vpack.c.b16 %v5790, %v5789
        %v6018 = vpack.c.b16 %v5792, %v5791
        %v6019 = vpack.c.b16 %v5794, %v5793
        %v6020 = vpack.c.b16 %v5796, %v5795
        %v6021 = vpack.c.b16 %v5798, %v5797
        %v6022 = vpack.c.b16 %v5800, %v5799
        %v6023 = vpack.c.b16 %v5802, %v5801
        %v6024 = vpack.c.b16 %v5804, %v5803
        %v6025 = vpack.c.b16 %v5806, %v5805
        %v6026 = vpack.c.b16 %v5808, %v5807
        %v6027 = vpack.c.b16 %v5810, %v5809
        %v6028 = vpack.c.b16 %v5812, %v5811
        %v6029 = vpack.c.b16 %v5814, %v5813
        %v6030 = vpack.c.b16 %v5816, %v5815
        %v6031 = vpack.c.b16 %v5818, %v5817
        %v6032 = vpack.c.b16 %v5820, %v5819
        %v6033 = vpack.c.b16 %v5822, %v5821
        %v6034 = vpack.c.b16 %v5824, %v5823
        %v6035 = vpack.c.b16 %v5826, %v5825
        %v6036 = vpack.c.b16 %v5828, %v5827
        %v6037 = vpack.c.b16 %v5830, %v5829
        %v6038 = vpack.c.b16 %v5832, %v5831
        %v6039 = vpack.c.b16 %v5834, %v5833
        %v6040 = vpack.c.b16 %v5836, %v5835
        %v6041 = vpack.c.b16 %v5838, %v5837
        %v6042 = vpack.c.b16 %v5840, %v5839
        %v6043 = vpack.c.b16 %v5842, %v5841
        %v6044 = vpack.c.b16 %v5844, %v5843
        %v6045 = vpack.c.b16 %v5846, %v5845
        %v6046 = vpack.c.b16 %v5848, %v5847
        %v6047 = vpack.c.b16 %v5850, %v5849
        %v6048 = vpack.c.b16 %v5852, %v5851
        %v6049 = vpack.c.b16 %v5854, %v5853
        %v6050 = vpack.c.b16 %v5856, %v5855
        %v6051 = vpack.c.b16 %v5858, %v5857
        %v6052 = vpack.c.b16 %v5860, %v5859
        %v6053 = vpack.c.b16 %v5862, %v5861
        %v6054 = vpack.c.b16 %v5864, %v5863
        %v6055 = vpack.c.b16 %v5866, %v5865
        %v6056 = vpack.c.b16 %v5868, %v5867
        %v6057 = vpack.c.b16 %v5870, %v5869
        %v6058 = vpack.c.b16 %v5872, %v5871
        %v6059 = vpack.c.b16 %v5874, %v5873
        %v6060 = vpack.c.b16 %v5876, %v5875
        %v6061 = vpack.c.b16 %v5878, %v5877
        %v6062 = vpack.c.b16 %v5880, %v5879
        %v6063 = vpack.c.b16 %v5882, %v5881
        %v6064 = vpack.c.b16 %v5884, %v5883
        %v6065 = vpack.c.b16 %v5886, %v5885
        %v6066 = vpack.c.b16 %v5888, %v5887
        %v6067 = vpack.c.b16 %v5890, %v5889
        %v6068 = vpack.c.b16 %v5892, %v5891
        %v6069 = vpack.c.b16 %v5894, %v5893
        %v6070 = vpack.c.b16 %v5896, %v5895
        %v6071 = vpack.c.b16 %v5898, %v5897
        %v6072 = vpack.c.b16 %v5900, %v5899
        %v6073 = vpack.c.b16 %v5902, %v5901
        %v6074 = vpack.c.b16 %v5904, %v5903
        %v6075 = vpack.c.b16 %v5906, %v5905
        %v6076 = vpack.c.b16 %v5908, %v5907
        %v6077 = vpack.c.b16 %v5910, %v5909
        %v6078 = vpack.c.b16 %v5912, %v5911
        %v6079 = vpack.c.b16 %v5914, %v5913
        %v6080 = vpack.c.b16 %v5916, %v5915
        %v6081 = vpack.c.b16 %v5918, %v5917
        %v6082 = vpack.c.b16 %v5920, %v5919
        %v6083 = vpack.c.b16 %v5922, %v5921
        %v6084 = vpack.c.b16 %v5924, %v5923
        %v6085 = vpack.c.b16 %v5926, %v5925
        %v6086 = vpack.c.b16 %v5928, %v5927
        %v6087 = vpack.c.b16 %v5930, %v5929
        %v6088 = vpack.c.b16 %v5932, %v5931
        %v6089 = vpack.c.b16 %v5934, %v5933
        %v6090 = vpack.c.b16 %v5936, %v5935
        %v6091 = vpack.c.b16 %v5938, %v5937
        %v6092 = vpack.c.b16 %v5940, %v5939
        %v6093 = vpack.c.b16 %v5942, %v5941
        %v6094 = vpack.c.b16 %v5944, %v5943
        %v6095 = vpack.c.b16 %v5946, %v5945
        %v6096 = vpack.c.b16 %v5948, %v5947
        %v6097 = vpack.c.b16 %v5950, %v5949
        %v6098 = vpack.c.b16 %v5952, %v5951
        %v6099 = vpack.c.b16 %v5954, %v5953
        %v6100 = vpack.c.b16 %v5956, %v5955
        %v6101 = vpack.c.b16 %v5958, %v5957
        %v6102 = vpack.c.b16 %v5960, %v5959
        %v6103 = vpack.c.b16 %v5962, %v5961
        %v6104 = vpack.c.b16 %v5964, %v5963
        %v6105 = vpack.c.b16 %v5966, %v5965
        %v6106 = vpack.c.b16 %v5968, %v5967
        %v6107 = vpack.c.b16 %v5970, %v5969
        %v6108 = vpack.c.b16 %v5972, %v5971
        %v6109 = vpack.c.b16 %v5974, %v5973
        %v6110 = vpack.c.b16 %v5976, %v5975
        %v6111 = vpack.c.b16 %v5978, %v5977
        %v6112 = vpack.c.b16 %v5980, %v5979
        %v6113 = vpack.c.b16 %v5982, %v5981
        %v6114 = vpack.c.b16 %v5984, %v5983
        %v6115 = vpack.c.b16 %v5986, %v5985
        %v6116 = vpack.c.b16 %v5988, %v5987
        %6245 = vmatprep.subr.bf16.mxu0 0
        %6246 = vmatpush1.bf16.msra.mxu0 %v5989
        %6247 = vmatprep.subr.bf16.mxu0 0
        %6248 = vmatpush1.bf16.msra.mxu0 %v5990
        %6249 = vmatprep.subr.bf16.mxu0 0
        %6250 = vmatpush1.bf16.msra.mxu0 %v5991
        %6251 = vmatprep.subr.bf16.mxu0 0
        %6252 = vmatpush1.bf16.msra.mxu0 %v5992
        %6253 = vmatprep.subr.bf16.mxu0 0
        %6254 = vmatpush1.bf16.msra.mxu0 %v5993
        %6255 = vmatprep.subr.bf16.mxu0 0
        %6256 = vmatpush1.bf16.msra.mxu0 %v5994
        %6257 = vmatprep.subr.bf16.mxu0 0
        %6258 = vmatpush1.bf16.msra.mxu0 %v5995
        %6259 = vmatprep.subr.bf16.mxu0 0
        %6260 = vmatpush1.bf16.msra.mxu0 %v5996
        %6261 = vmatprep.subr.bf16.mxu0 0
        %6262 = vmatpush1.bf16.msra.mxu0 %v5997
        %6263 = vmatprep.subr.bf16.mxu0 0
        %6264 = vmatpush1.bf16.msra.mxu0 %v5998
        %6265 = vmatprep.subr.bf16.mxu0 0
        %6266 = vmatpush1.bf16.msra.mxu0 %v5999
        %6267 = vmatprep.subr.bf16.mxu0 0
        %6268 = vmatpush1.bf16.msra.mxu0 %v6000
        %6269 = vmatprep.subr.bf16.mxu0 0
        %6270 = vmatpush1.bf16.msra.mxu0 %v6001
        %6271 = vmatprep.subr.bf16.mxu0 0
        %6272 = vmatpush1.bf16.msra.mxu0 %v6002
        %6273 = vmatprep.subr.bf16.mxu0 0
        %6274 = vmatpush1.bf16.msra.mxu0 %v6003
        %6275 = vmatprep.subr.bf16.mxu0 0
        %6276 = vmatpush1.bf16.msra.mxu0 %v6004
        %6277 = vmatprep.mubr.bf16.mxu0 %v5197
        %6278 = vmatmul.mubr.bf16.gmra.mrb[0].mxu0 %v5196
        %v6279 = vpop.f32.mrb[0].mxu0
        %v6280 = vadd.f32 %v5475, %v6279
        %v6281 = vpop.f32.mrb[0].mxu0
        %v6282 = vpop.f32.mrb[0].mxu0
        %v6283 = vadd.f32 %v5475, %v6282
        %v6284 = vpop.f32.mrb[0].mxu0
        %6285 = vdwg.mxu0
        %6286 = vmatprep.subr.bf16.mxu0 0
        %6287 = vmatpush1.bf16.msra.mxu0 %v6005
        %6288 = vmatprep.subr.bf16.mxu0 0
        %6289 = vmatpush1.bf16.msra.mxu0 %v6006
        %6290 = vmatprep.subr.bf16.mxu0 0
        %6291 = vmatpush1.bf16.msra.mxu0 %v6007
        %6292 = vmatprep.subr.bf16.mxu0 0
        %6293 = vmatpush1.bf16.msra.mxu0 %v6008
        %6294 = vmatprep.subr.bf16.mxu0 0
        %6295 = vmatpush1.bf16.msra.mxu0 %v6009
        %6296 = vmatprep.subr.bf16.mxu0 0
        %6297 = vmatpush1.bf16.msra.mxu0 %v6010
        %6298 = vmatprep.subr.bf16.mxu0 0
        %6299 = vmatpush1.bf16.msra.mxu0 %v6011
        %6300 = vmatprep.subr.bf16.mxu0 0
        %6301 = vmatpush1.bf16.msra.mxu0 %v6012
        %6302 = vmatprep.subr.bf16.mxu0 0
        %6303 = vmatpush1.bf16.msra.mxu0 %v6013
        %6304 = vmatprep.subr.bf16.mxu0 0
        %6305 = vmatpush1.bf16.msra.mxu0 %v6014
        %6306 = vmatprep.subr.bf16.mxu0 0
        %6307 = vmatpush1.bf16.msra.mxu0 %v6015
        %6308 = vmatprep.subr.bf16.mxu0 0
        %6309 = vmatpush1.bf16.msra.mxu0 %v6016
        %6310 = vmatprep.subr.bf16.mxu0 0
        %6311 = vmatpush1.bf16.msra.mxu0 %v6017
        %6312 = vmatprep.subr.bf16.mxu0 0
        %6313 = vmatpush1.bf16.msra.mxu0 %v6018
        %6314 = vmatprep.subr.bf16.mxu0 0
        %6315 = vmatpush1.bf16.msra.mxu0 %v6019
        %6316 = vmatprep.subr.bf16.mxu0 0
        %6317 = vmatpush1.bf16.msra.mxu0 %v6020
        %6318 = vmatprep.mubr.bf16.mxu0 %v5199
        %6319 = vmatmul.mubr.bf16.gmra.mrb[0].mxu0 %v5198
        %v6320 = vpop.f32.mrb[0].mxu0
        %v6321 = vadd.f32 %v6280, %v6320
        %v6322 = vpop.f32.mrb[0].mxu0
        %v6323 = vpop.f32.mrb[0].mxu0
        %v6324 = vadd.f32 %v6283, %v6323
        %v6325 = vpop.f32.mrb[0].mxu0
        %6326 = vdwg.mxu0
        %6327 = vmatprep.subr.bf16.mxu0 0
        %6328 = vmatpush1.bf16.msra.mxu0 %v6021
        %6329 = vmatprep.subr.bf16.mxu0 0
        %6330 = vmatpush1.bf16.msra.mxu0 %v6022
        %6331 = vmatprep.subr.bf16.mxu0 0
        %6332 = vmatpush1.bf16.msra.mxu0 %v6023
        %6333 = vmatprep.subr.bf16.mxu0 0
        %6334 = vmatpush1.bf16.msra.mxu0 %v6024
        %6335 = vmatprep.subr.bf16.mxu0 0
        %6336 = vmatpush1.bf16.msra.mxu0 %v6025
        %6337 = vmatprep.subr.bf16.mxu0 0
        %6338 = vmatpush1.bf16.msra.mxu0 %v6026
        %6339 = vmatprep.subr.bf16.mxu0 0
        %6340 = vmatpush1.bf16.msra.mxu0 %v6027
        %6341 = vmatprep.subr.bf16.mxu0 0
        %6342 = vmatpush1.bf16.msra.mxu0 %v6028
        %6343 = vmatprep.subr.bf16.mxu0 0
        %6344 = vmatpush1.bf16.msra.mxu0 %v6029
        %6345 = vmatprep.subr.bf16.mxu0 0
        %6346 = vmatpush1.bf16.msra.mxu0 %v6030
        %6347 = vmatprep.subr.bf16.mxu0 0
        %6348 = vmatpush1.bf16.msra.mxu0 %v6031
        %6349 = vmatprep.subr.bf16.mxu0 0
        %6350 = vmatpush1.bf16.msra.mxu0 %v6032
        %6351 = vmatprep.subr.bf16.mxu0 0
        %6352 = vmatpush1.bf16.msra.mxu0 %v6033
        %6353 = vmatprep.subr.bf16.mxu0 0
        %6354 = vmatpush1.bf16.msra.mxu0 %v6034
        %6355 = vmatprep.subr.bf16.mxu0 0
        %6356 = vmatpush1.bf16.msra.mxu0 %v6035
        %6357 = vmatprep.subr.bf16.mxu0 0
        %6358 = vmatpush1.bf16.msra.mxu0 %v6036
        %6359 = vmatprep.mubr.bf16.mxu0 %v5201
        %6360 = vmatmul.mubr.bf16.gmra.mrb[0].mxu0 %v5200
        %v6361 = vpop.f32.mrb[0].mxu0
        %v6362 = vadd.f32 %v6321, %v6361
        %v6363 = vpop.f32.mrb[0].mxu0
        %v6364 = vpop.f32.mrb[0].mxu0
        %v6365 = vadd.f32 %v6324, %v6364
        %v6366 = vpop.f32.mrb[0].mxu0
        %6367 = vdwg.mxu0
        %6368 = vmatprep.subr.bf16.mxu0 0
        %6369 = vmatpush1.bf16.msra.mxu0 %v6037
        %6370 = vmatprep.subr.bf16.mxu0 0
        %6371 = vmatpush1.bf16.msra.mxu0 %v6038
        %6372 = vmatprep.subr.bf16.mxu0 0
        %6373 = vmatpush1.bf16.msra.mxu0 %v6039
        %6374 = vmatprep.subr.bf16.mxu0 0
        %6375 = vmatpush1.bf16.msra.mxu0 %v6040
        %6376 = vmatprep.subr.bf16.mxu0 0
        %6377 = vmatpush1.bf16.msra.mxu0 %v6041
        %6378 = vmatprep.subr.bf16.mxu0 0
        %6379 = vmatpush1.bf16.msra.mxu0 %v6042
        %6380 = vmatprep.subr.bf16.mxu0 0
        %6381 = vmatpush1.bf16.msra.mxu0 %v6043
        %6382 = vmatprep.subr.bf16.mxu0 0
        %6383 = vmatpush1.bf16.msra.mxu0 %v6044
        %6384 = vmatprep.subr.bf16.mxu0 0
        %6385 = vmatpush1.bf16.msra.mxu0 %v6045
        %6386 = vmatprep.subr.bf16.mxu0 0
        %6387 = vmatpush1.bf16.msra.mxu0 %v6046
        %6388 = vmatprep.subr.bf16.mxu0 0
        %6389 = vmatpush1.bf16.msra.mxu0 %v6047
        %6390 = vmatprep.subr.bf16.mxu0 0
        %6391 = vmatpush1.bf16.msra.mxu0 %v6048
        %6392 = vmatprep.subr.bf16.mxu0 0
        %6393 = vmatpush1.bf16.msra.mxu0 %v6049
        %6394 = vmatprep.subr.bf16.mxu0 0
        %6395 = vmatpush1.bf16.msra.mxu0 %v6050
        %6396 = vmatprep.subr.bf16.mxu0 0
        %6397 = vmatpush1.bf16.msra.mxu0 %v6051
        %6398 = vmatprep.subr.bf16.mxu0 0
        %6399 = vmatpush1.bf16.msra.mxu0 %v6052
        %6400 = vmatprep.mubr.bf16.mxu0 %v5203
        %6401 = vmatmul.mubr.bf16.gmra.mrb[0].mxu0 %v5202
        %v6402 = vpop.f32.mrb[0].mxu0
        %v6403 = vadd.f32 %v6362, %v6402
        %v6404 = vpop.f32.mrb[0].mxu0
        %v6405 = vpop.f32.mrb[0].mxu0
        %v6406 = vadd.f32 %v6365, %v6405
        %v6407 = vpop.f32.mrb[0].mxu0
        %6408 = vdwg.mxu0
        %6409 = vmatprep.subr.bf16.mxu0 0
        %6410 = vmatpush1.bf16.msra.mxu0 %v6053
        %6411 = vmatprep.subr.bf16.mxu0 0
        %6412 = vmatpush1.bf16.msra.mxu0 %v6054
        %6413 = vmatprep.subr.bf16.mxu0 0
        %6414 = vmatpush1.bf16.msra.mxu0 %v6055
        %6415 = vmatprep.subr.bf16.mxu0 0
        %6416 = vmatpush1.bf16.msra.mxu0 %v6056
        %6417 = vmatprep.subr.bf16.mxu0 0
        %6418 = vmatpush1.bf16.msra.mxu0 %v6057
        %6419 = vmatprep.subr.bf16.mxu0 0
        %6420 = vmatpush1.bf16.msra.mxu0 %v6058
        %6421 = vmatprep.subr.bf16.mxu0 0
        %6422 = vmatpush1.bf16.msra.mxu0 %v6059
        %6423 = vmatprep.subr.bf16.mxu0 0
        %6424 = vmatpush1.bf16.msra.mxu0 %v6060
        %6425 = vmatprep.subr.bf16.mxu0 0
        %6426 = vmatpush1.bf16.msra.mxu0 %v6061
        %6427 = vmatprep.subr.bf16.mxu0 0
        %6428 = vmatpush1.bf16.msra.mxu0 %v6062
        %6429 = vmatprep.subr.bf16.mxu0 0
        %6430 = vmatpush1.bf16.msra.mxu0 %v6063
        %6431 = vmatprep.subr.bf16.mxu0 0
        %6432 = vmatpush1.bf16.msra.mxu0 %v6064
        %6433 = vmatprep.subr.bf16.mxu0 0
        %6434 = vmatpush1.bf16.msra.mxu0 %v6065
        %6435 = vmatprep.subr.bf16.mxu0 0
        %6436 = vmatpush1.bf16.msra.mxu0 %v6066
        %6437 = vmatprep.subr.bf16.mxu0 0
        %6438 = vmatpush1.bf16.msra.mxu0 %v6067
        %6439 = vmatprep.subr.bf16.mxu0 0
        %6440 = vmatpush1.bf16.msra.mxu0 %v6068
        %6441 = vmatprep.mubr.bf16.mxu0 %v5205
        %6442 = vmatmul.mubr.bf16.gmra.mrb[0].mxu0 %v5204
        %v6443 = vpop.f32.mrb[0].mxu0
        %v6444 = vadd.f32 %v6403, %v6443
        %v6445 = vpop.f32.mrb[0].mxu0
        %v6446 = vpop.f32.mrb[0].mxu0
        %v6447 = vadd.f32 %v6406, %v6446
        %v6448 = vpop.f32.mrb[0].mxu0
        %6449 = vdwg.mxu0
        %6450 = vmatprep.subr.bf16.mxu0 0
        %6451 = vmatpush1.bf16.msra.mxu0 %v6069
        %6452 = vmatprep.subr.bf16.mxu0 0
        %6453 = vmatpush1.bf16.msra.mxu0 %v6070
        %6454 = vmatprep.subr.bf16.mxu0 0
        %6455 = vmatpush1.bf16.msra.mxu0 %v6071
        %6456 = vmatprep.subr.bf16.mxu0 0
        %6457 = vmatpush1.bf16.msra.mxu0 %v6072
        %6458 = vmatprep.subr.bf16.mxu0 0
        %6459 = vmatpush1.bf16.msra.mxu0 %v6073
        %6460 = vmatprep.subr.bf16.mxu0 0
        %6461 = vmatpush1.bf16.msra.mxu0 %v6074
        %6462 = vmatprep.subr.bf16.mxu0 0
        %6463 = vmatpush1.bf16.msra.mxu0 %v6075
        %6464 = vmatprep.subr.bf16.mxu0 0
        %6465 = vmatpush1.bf16.msra.mxu0 %v6076
        %6466 = vmatprep.subr.bf16.mxu0 0
        %6467 = vmatpush1.bf16.msra.mxu0 %v6077
        %6468 = vmatprep.subr.bf16.mxu0 0
        %6469 = vmatpush1.bf16.msra.mxu0 %v6078
        %6470 = vmatprep.subr.bf16.mxu0 0
        %6471 = vmatpush1.bf16.msra.mxu0 %v6079
        %6472 = vmatprep.subr.bf16.mxu0 0
        %6473 = vmatpush1.bf16.msra.mxu0 %v6080
        %6474 = vmatprep.subr.bf16.mxu0 0
        %6475 = vmatpush1.bf16.msra.mxu0 %v6081
        %6476 = vmatprep.subr.bf16.mxu0 0
        %6477 = vmatpush1.bf16.msra.mxu0 %v6082
        %6478 = vmatprep.subr.bf16.mxu0 0
        %6479 = vmatpush1.bf16.msra.mxu0 %v6083
        %6480 = vmatprep.subr.bf16.mxu0 0
        %6481 = vmatpush1.bf16.msra.mxu0 %v6084
        %6482 = vmatprep.mubr.bf16.mxu0 %v5207
        %6483 = vmatmul.mubr.bf16.gmra.mrb[0].mxu0 %v5206
        %v6484 = vpop.f32.mrb[0].mxu0
        %v6485 = vadd.f32 %v6444, %v6484
        %v6486 = vpop.f32.mrb[0].mxu0
        %v6487 = vpop.f32.mrb[0].mxu0
        %v6488 = vadd.f32 %v6447, %v6487
        %v6489 = vpop.f32.mrb[0].mxu0
        %6490 = vdwg.mxu0
        %6491 = vmatprep.subr.bf16.mxu0 0
        %6492 = vmatpush1.bf16.msra.mxu0 %v6085
        %6493 = vmatprep.subr.bf16.mxu0 0
        %6494 = vmatpush1.bf16.msra.mxu0 %v6086
        %6495 = vmatprep.subr.bf16.mxu0 0
        %6496 = vmatpush1.bf16.msra.mxu0 %v6087
        %6497 = vmatprep.subr.bf16.mxu0 0
        %6498 = vmatpush1.bf16.msra.mxu0 %v6088
        %6499 = vmatprep.subr.bf16.mxu0 0
        %6500 = vmatpush1.bf16.msra.mxu0 %v6089
        %6501 = vmatprep.subr.bf16.mxu0 0
        %6502 = vmatpush1.bf16.msra.mxu0 %v6090
        %6503 = vmatprep.subr.bf16.mxu0 0
        %6504 = vmatpush1.bf16.msra.mxu0 %v6091
        %6505 = vmatprep.subr.bf16.mxu0 0
        %6506 = vmatpush1.bf16.msra.mxu0 %v6092
        %6507 = vmatprep.subr.bf16.mxu0 0
        %6508 = vmatpush1.bf16.msra.mxu0 %v6093
        %6509 = vmatprep.subr.bf16.mxu0 0
        %6510 = vmatpush1.bf16.msra.mxu0 %v6094
        %6511 = vmatprep.subr.bf16.mxu0 0
        %6512 = vmatpush1.bf16.msra.mxu0 %v6095
        %6513 = vmatprep.subr.bf16.mxu0 0
        %6514 = vmatpush1.bf16.msra.mxu0 %v6096
        %6515 = vmatprep.subr.bf16.mxu0 0
        %6516 = vmatpush1.bf16.msra.mxu0 %v6097
        %6517 = vmatprep.subr.bf16.mxu0 0
        %6518 = vmatpush1.bf16.msra.mxu0 %v6098
        %6519 = vmatprep.subr.bf16.mxu0 0
        %6520 = vmatpush1.bf16.msra.mxu0 %v6099
        %6521 = vmatprep.subr.bf16.mxu0 0
        %6522 = vmatpush1.bf16.msra.mxu0 %v6100
        %6523 = vmatprep.mubr.bf16.mxu0 %v5209
        %6524 = vmatmul.mubr.bf16.gmra.mrb[0].mxu0 %v5208
        %v6525 = vpop.f32.mrb[0].mxu0
        %v6526 = vadd.f32 %v6485, %v6525
        %v6527 = vpop.f32.mrb[0].mxu0
        %v6528 = vpop.f32.mrb[0].mxu0
        %v6529 = vadd.f32 %v6488, %v6528
        %v6530 = vpop.f32.mrb[0].mxu0
        %6531 = vdwg.mxu0
        %6532 = vmatprep.subr.bf16.mxu0 0
        %6533 = vmatpush1.bf16.msra.mxu0 %v6101
        %6534 = vmatprep.subr.bf16.mxu0 0
        %6535 = vmatpush1.bf16.msra.mxu0 %v6102
        %6536 = vmatprep.subr.bf16.mxu0 0
        %6537 = vmatpush1.bf16.msra.mxu0 %v6103
        %6538 = vmatprep.subr.bf16.mxu0 0
        %6539 = vmatpush1.bf16.msra.mxu0 %v6104
        %6540 = vmatprep.subr.bf16.mxu0 0
        %6541 = vmatpush1.bf16.msra.mxu0 %v6105
        %6542 = vmatprep.subr.bf16.mxu0 0
        %6543 = vmatpush1.bf16.msra.mxu0 %v6106
        %6544 = vmatprep.subr.bf16.mxu0 0
        %6545 = vmatpush1.bf16.msra.mxu0 %v6107
        %6546 = vmatprep.subr.bf16.mxu0 0
        %6547 = vmatpush1.bf16.msra.mxu0 %v6108
        %6548 = vmatprep.subr.bf16.mxu0 0
        %6549 = vmatpush1.bf16.msra.mxu0 %v6109
        %6550 = vmatprep.subr.bf16.mxu0 0
        %6551 = vmatpush1.bf16.msra.mxu0 %v6110
        %6552 = vmatprep.subr.bf16.mxu0 0
        %6553 = vmatpush1.bf16.msra.mxu0 %v6111
        %6554 = vmatprep.subr.bf16.mxu0 0
        %6555 = vmatpush1.bf16.msra.mxu0 %v6112
        %6556 = vmatprep.subr.bf16.mxu0 0
        %6557 = vmatpush1.bf16.msra.mxu0 %v6113
        %6558 = vmatprep.subr.bf16.mxu0 0
        %6559 = vmatpush1.bf16.msra.mxu0 %v6114
        %6560 = vmatprep.subr.bf16.mxu0 0
        %6561 = vmatpush1.bf16.msra.mxu0 %v6115
        %6562 = vmatprep.subr.bf16.mxu0 0
        %6563 = vmatpush1.bf16.msra.mxu0 %v6116
        %6564 = vmatprep.mubr.bf16.mxu0 %v5211
        %6565 = vmatmul.mubr.bf16.gmra.mrb[0].mxu0 %v5210
        %v6566 = vpop.f32.mrb[0].mxu0
        %v6567 = vadd.f32 %v6526, %v6566
        %v6568 = vpop.f32.mrb[0].mxu0
        %v6569 = vpop.f32.mrb[0].mxu0
        %v6570 = vadd.f32 %v6529, %v6569
        %v6571 = vpop.f32.mrb[0].mxu0
        %6572 = vdwg.mxu0
        %v6573 = vadd.f32 %v4536, %v6567
        %v6574 = vadd.f32 %v4537, %v6570
        %s6575 = scalar_lea.vmem %s13, 1
        %v6576 = vld [vmem:[%s6575] sm:$0x1]
        %s6577 = scalar_lea.vmem %s14, 1
        %v6578 = vld [vmem:[%s6577] sm:$0x1]
        %v6579 = vsel %vm658, %v6573, 0.0
        %6580 = vadd.xlane.f32.xlu0 %v6579
        %v6581 = vpop.xlane.xlu0 %6580
        %v6582 = vsel %vm658, %v6574, 0.0
        %6583 = vadd.xlane.f32.xlu0 %v6582
        %v6584 = vpop.xlane.xlu0 %6583
        %v6585 = vmul.f32 %v6581, %v1516
        %v6586 = vmul.f32 %v6584, %v1516
        %v6587 = vsub.f32 %v6573, %v6585
        %v6588 = vsub.f32 %v6574, %v6586
        %v6589 = vmul.f32 %v6587, %v6587
        %v6590 = vmul.f32 %v6588, %v6588
        %v6591 = vsel %vm658, %v6589, 0.0
        %6592 = vadd.xlane.f32.xlu0 %v6591
        %v6593 = vpop.xlane.xlu0 %6592
        %v6594 = vsel %vm658, %v6590, 0.0
        %6595 = vadd.xlane.f32.xlu0 %v6594
        %v6596 = vpop.xlane.xlu0 %6595
        %v6597 = vmul.f32 %v6593, %v1516
        %v6598 = vmul.f32 %v6596, %v1516
        %v6599 = vadd.f32 %v6597, 1e-05
        %v6600 = vadd.f32 %v6598, 1e-05
        %v6601 = vrsqrt.pop %v6599
        %v6602 = vrsqrt.pop %v6600
        %v6603 = vmul.f32 %v6587, %v6601
        %v6604 = vmul.f32 %v6588, %v6602
        %v6606 = vlaneseq
        %v6607 = vshrl.u32 %v6606, 7
        %v6608 = vsub.s32 0, %v6607
        %v6609 = vrot.slane %v6576, %v6608
        %v6611 = vmul.f32 %v6603, %v6609
        %v6612 = vmul.f32 %v6604, %v6609
        %v6614 = vlaneseq
        %v6615 = vshrl.u32 %v6614, 7
        %v6616 = vsub.s32 0, %v6615
        %v6617 = vrot.slane %v6578, %v6616
        %v6619 = vadd.f32 %v6611, %v6617
        %v6620 = vadd.f32 %v6612, %v6617
        %v6621 = vsel %vm658, %v6619, 0.0
        %v6622 = vrot.slane %v6621, 4
        %v6623 = vadd.f32 %v6621, %v6622
        %v6624 = vrot.slane %v6623, 2
        %v6625 = vadd.f32 %v6623, %v6624
        %v6626 = vrot.slane %v6625, 1
        %v6627 = vadd.f32 %v6625, %v6626
        %v6628 = vsel %vm658, %v6620, 0.0
        %v6629 = vrot.slane %v6628, 4
        %v6630 = vadd.f32 %v6628, %v6629
        %v6631 = vrot.slane %v6630, 2
        %v6632 = vadd.f32 %v6630, %v6631
        %v6633 = vrot.slane %v6632, 1
        %v6634 = vadd.f32 %v6632, %v6633
        %v6635 = vrcp.pop 8.0
        %v6636 = vmul.f32 %v6627, %v6635
        %v6637 = vmul.f32 %v6634, %v6635
        %v6638 = vld [vmem:[%s15] sm:$0xff]
        %v6639 = vld [vmem:[%s15 + $0x8] sm:$0xff]
        %v6640 = vld [vmem:[%s15 + $0x10] sm:$0xff]
        %v6641 = vld [vmem:[%s15 + $0x18] sm:$0xff]
        %v6642 = vld [vmem:[%s16] sm:$0x1]
        %v6644 = vlaneseq
        %v6645 = vshrl.u32 %v6644, 7
        %v6646 = vsub.s32 0, %v6645
        %v6647 = vrot.slane %v6642, %v6646
        %vm6651 = vcmask 1041409
        %v6652 = vsel %vm6651, %v6637, %v6636
        %v6653 = vsel %vm658, %v6652, 0
        %6655 = vmatprep.subr.mxu0 0.0
        %6656 = vmatpush1.msra.mxu0 %v6638
        %6657 = vmatprep.subr.mxu0 0.0
        %6658 = vmatpush1.msra.mxu0 %v6639
        %6659 = vmatprep.subr.mxu0 0.0
        %6660 = vmatpush1.msra.mxu0 %v6640
        %6661 = vmatprep.subr.mxu0 0.0
        %6662 = vmatpush1.msra.mxu0 %v6641
        %6663 = vmatprep.subr.mxu0 0.0
        %6664 = vmatpush1.msra.mxu0 0.0
        %6665 = vmatprep.subr.mxu0 0.0
        %6666 = vmatpush1.msra.mxu0 0.0
        %6667 = vmatprep.subr.mxu0 0.0
        %6668 = vmatpush1.msra.mxu0 0.0
        %6669 = vmatprep.subr.mxu0 0.0
        %6670 = vmatpush1.msra.mxu0 0.0
        %6671 = vmatprep.subr.mxu0 0.0
        %6672 = vmatpush1.msra.mxu0 0.0
        %6673 = vmatprep.subr.mxu0 0.0
        %6674 = vmatpush1.msra.mxu0 0.0
        %6675 = vmatprep.subr.mxu0 0.0
        %6676 = vmatpush1.msra.mxu0 0.0
        %6677 = vmatprep.subr.mxu0 0.0
        %6678 = vmatpush1.msra.mxu0 0.0
        %6679 = vmatprep.subr.mxu0 0.0
        %6680 = vmatpush1.msra.mxu0 0.0
        %6681 = vmatprep.subr.mxu0 0.0
        %6682 = vmatpush1.msra.mxu0 0.0
        %6683 = vmatprep.subr.mxu0 0.0
        %6684 = vmatpush1.msra.mxu0 0.0
        %6685 = vmatprep.subr.mxu0 0.0
        %6686 = vmatpush1.msra.mxu0 0.0
        %6687 = vmatprep.subr.mxu0 0.0
        %6688 = vmatpush1.msra.mxu0 0.0
        %6689 = vmatprep.subr.mxu0 0.0
        %6690 = vmatpush1.msra.mxu0 0.0
        %6691 = vmatprep.subr.mxu0 0.0
        %6692 = vmatpush1.msra.mxu0 0.0
        %6693 = vmatprep.subr.mxu0 0.0
        %6694 = vmatpush1.msra.mxu0 0.0
        %6695 = vmatprep.subr.mxu0 0.0
        %6696 = vmatpush1.msra.mxu0 0.0
        %6697 = vmatprep.subr.mxu0 0.0
        %6698 = vmatpush1.msra.mxu0 0.0
        %6699 = vmatprep.subr.mxu0 0.0
        %6700 = vmatpush1.msra.mxu0 0.0
        %6701 = vmatprep.subr.mxu0 0.0
        %6702 = vmatpush1.msra.mxu0 0.0
        %6703 = vmatprep.subr.mxu0 0.0
        %6704 = vmatpush1.msra.mxu0 0.0
        %6705 = vmatprep.subr.mxu0 0.0
        %6706 = vmatpush1.msra.mxu0 0.0
        %6707 = vmatprep.subr.mxu0 0.0
        %6708 = vmatpush1.msra.mxu0 0.0
        %6709 = vmatprep.subr.mxu0 0.0
        %6710 = vmatpush1.msra.mxu0 0.0
        %6711 = vmatprep.subr.mxu0 0.0
        %6712 = vmatpush1.msra.mxu0 0.0
        %6713 = vmatprep.subr.mxu0 0.0
        %6714 = vmatpush1.msra.mxu0 0.0
        %6715 = vmatprep.subr.mxu0 0.0
        %6716 = vmatpush1.msra.mxu0 0.0
        %6717 = vmatprep.subr.mxu0 0.0
        %6718 = vmatpush1.msra.mxu0 0.0
        %6719 = vmatprep.mubr.f32.mxu0 0.0
        %6720 = vmatmul.mubr.f32.gmra.mrb[0].mxu0 %v6653
        %v6721 = vpop.f32.mrb[0].mxu0
        %v6722 = vadd.f32 %v6647, %v6721
        %v6723 = vpop.f32.mrb[0].mxu0
        %6724 = vdwg.mxu0
        %vm6725 = vcmask 74752
        %6726 = vst.msk [vmem:[%s542] sm:$0x3] %vm6725, %v6722
        %s6727 = sand.u32 %s401, 1
        %s6728 = scalar_lea.sflag [#allocation3], %s6727
        %s6729 = sand.u32 %s401, 1
        %s6730 = smul.addr %s6729, 2
        %s6731 = scalar_lea.vmem [#allocation2], %s6730
        // Predicated region
        $region89: #{tpu_custom_call.1} parent=87 // pred_check
          %p6732 = pneg %p411
        $region90: #{tpu_custom_call.1} parent=87 // pred_check_branch
          %6734 = sbr.rel (%p6732) target = $region92
        $region91: #{tpu_custom_call.1} parent=87 // pred_region
          %s6736 = ssub.s32 32, 32
          %6737 = vsyncadd %s6728, %s6736
          %s6738 = smul.addr %s31, 32
          %s6739 = scalar_lea.hbm %s17, %s6738
          %s6741 = sshll.u32 %s6731, 4
          %s6742 = int_to_ptr.vmem [resolvable:$true] %s6741
          %6744 = dma.vmem_to_hbm [thread:$0]  %s6742, 32, %s6739, %s6728
        $region92: #{tpu_custom_call.1} parent=87 // pred_fallthru
          _
      $region88: #{tpu_custom_call.1} parent=5 // pred_fallthru
        _
      %p6745 = scmp.le.s32.totalorder 2, %s26
      // Predicated region
      $region93: #{tpu_custom_call.1} parent=5 // pred_check
        %p6746 = pneg %p6745
      $region94: #{tpu_custom_call.1} parent=5 // pred_check_branch
        %6748 = sbr.rel (%p6746) target = $region96
      $region95: #{tpu_custom_call.1} parent=5 // pred_region
        %s6749 = ssub.s32 %s26, 2
        // Predicated region
        $region97: #{tpu_custom_call.1} parent=95 // pred_check
          %p6750 = pneg %p417
        $region98: #{tpu_custom_call.1} parent=95 // pred_check_branch
          %6752 = sbr.rel (%p6750) target = $region100
        $region99: #{tpu_custom_call.1} parent=95 // pred_region
          %s6753 = sand.u32 %s402, 1
          %s6754 = scalar_lea.sflag [#allocation3], %s6753
          %s6755 = sand.u32 %s402, 1
          %s6756 = smul.addr %s6755, 2
          %s6757 = scalar_lea.vmem [#allocation2], %s6756
          %6758 = dma.done %s6754, 32
        $region100: #{tpu_custom_call.1} parent=95 // pred_fallthru
          _
      $region96: #{tpu_custom_call.1} parent=5 // pred_fallthru
        _
    $region6: #{tpu_custom_call.1} parent=1 // loop_footer
      %s30 = sadd.s32 1, %s26
    $region7: #{tpu_custom_call.1} parent=1 // loop_footer_branch
      %25 = sbr.rel target = $region3
    $region8: #{tpu_custom_call.1} parent=1 // loop_exit
      _
    %6759 = vsyncpa [#allocation3], 1
    %s6760 = scalar_lea.sflag [#allocation3], 1
    %6761 = vsyncpa %s6760, 1

</llo_original>
